<compile_context>
chip_gen: v6e
topology: v6e:2x2x1
jax: 0.10.0
libtpu: 0.0.40
codegen_flags: <defaults>
</compile_context>

<pallas_src>
import functools
import numpy as np
import jax
import jax.numpy as jnp
from jax import lax
from jax.experimental import pallas as pl
from jax.experimental.pallas import tpu as pltpu


def _round_up(v, m):
    return ((v + m - 1) // m) * m


# ---------------------------------------------------------------------------
# Fused forward kernel (one grid step processes Bt batch elements = R rows)
# ---------------------------------------------------------------------------
def _fused_kernel(x_ref, m_ref, tl_ref, w_in_ref, b_in_ref,
                  wd_ref, bd_ref, w1_ref, b1_ref,
                  ef_ref, wb_ref, bb_ref, o_ref, *,
                  T, R, num_layers, n_rank, nbsq, K_b, pad):
    f32 = jnp.float32
    bf16 = jnp.bfloat16
    m = m_ref[...]                                  # (R, 1) f32 mask
    t_loc = tl_ref[...]                             # (R, 1) int32 local time index (hoisted)

    # ---- conv_1x1 (pointwise; bf16 operands, f32 accumulate; no mask, as in PyTorch) ----
    act = jnp.dot(x_ref[...].astype(bf16), w_in_ref[...],
                  preferred_element_type=f32) + b_in_ref[...]          # (R, Cp) f32

    # ---- dilated residual stack ----
    # Shifted taps x[t-d] / x[t+d] built in-register (XLU roll + VALU select) and fed
    # as three accumulated (R,Cp)@(Cp,Cp) matmuls -- no scratch, no (T,3C) concat.
    for i in range(num_layers):
        d = 2 ** i
        xl = jnp.where(t_loc >= d, pltpu.roll(act, shift=d, axis=0), 0.0)           # x[t-d]
        xr = jnp.where(t_loc < T - d, pltpu.roll(act, shift=R - d, axis=0), 0.0)     # x[t+d]
        h = (jnp.dot(xl.astype(bf16), wd_ref[i, 0], preferred_element_type=f32)
             + jnp.dot(act.astype(bf16), wd_ref[i, 1], preferred_element_type=f32)
             + jnp.dot(xr.astype(bf16), wd_ref[i, 2], preferred_element_type=f32)
             + bd_ref[i])
        h = jnp.maximum(h, 0.0)
        y = jnp.dot(h.astype(bf16), w1_ref[i], preferred_element_type=f32) + b1_ref[i]
        # TODO(synk): nn.Dropout() inside DilatedResidualLayer is identity in eval mode.
        act = (act + y) * m

    # ---- RPGaussian bilinear pooling ----
    # E- and F-projections fused into ONE (R,Cp)@(Cp, 2*n_rank*nb^2) matmul, all ranks
    # stacked along the lane dim; z[t, i*nb+j] = (x@E)[t,i] * (x@F)[t,j].
    proj = jnp.dot(act.astype(bf16), ef_ref[...], preferred_element_type=f32)
    ncol = n_rank * nbsq
    prod = proj[:, :ncol] * proj[:, ncol:]
    z = prod[:, 0:nbsq]
    for r in range(1, n_rank):
        z = z + prod[:, r * nbsq:(r + 1) * nbsq]
    z = (z * (1.0 / n_rank)) * m                                       # (R, nbsq)
    # TODO(synk): on v5e (MXU-bound) the 16x-redundant lane-stacked E/F expansion could be
    # replaced by compact (R, n_rank*nb) projections + a lane repeat/tile before the product.

    # ---- conv_1x1_b (kernel 25, padding 12) as a K-tap accumulation loop ----
    # No (T, K_b*nbsq) im2col temporary: each tap is a shifted view of z feeding one
    # (R, nbsq)@(nbsq, Cout_pad) matmul.
    acc = None
    for k in range(K_b):
        off = k - pad
        if off == 0:
            tap = z
        elif off < 0:
            tap = jnp.where(t_loc >= -off, pltpu.roll(z, shift=-off, axis=0), 0.0)
        else:
            tap = jnp.where(t_loc < T - off, pltpu.roll(z, shift=R - off, axis=0), 0.0)
        term = jnp.dot(tap.astype(bf16), wb_ref[k], preferred_element_type=f32)
        acc = term if acc is None else acc + term
    # TODO(synk): self.drop (nn.Dropout(p=dropout)) is identity in eval/inference mode.
    # Single mask multiply (the reference's second multiply by a binary mask is a no-op).
    o_ref[...] = ((acc + bb_ref[...]) * m).astype(o_ref.dtype)          # lane-dense (R, 128)


def forward_pallas(x_nct, mask_nct, p):
    B, Din, T = x_nct.shape
    assert T % 8 == 0, "T must be a multiple of 8 (sublane tile)"
    L = p['num_layers']
    K_b = p['K_b']
    pad = (K_b - 1) // 2
    assert 2 ** (L - 1) < T and pad < T
    Cp = p['C_pad']
    n_rank = p['n_rank']
    nbsq = p['n_basis'] ** 2
    Cout_pad = p['wb_all'].shape[-1]

    # Pack several batch elements per grid step (amortizes per-step overhead at small T);
    # rows = (batch, time) flattened, lane dim = channels.
    Bt = next(bt for bt in (8, 4, 2, 1) if B % bt == 0)
    G = B // Bt
    R = Bt * T
    # TODO(synk): add a halo-overlapped T-tiling grid axis for very long sequences on v7x.

    x2 = jnp.transpose(x_nct, (0, 2, 1)).reshape(B * T, Din)
    m2 = jnp.transpose(mask_nct[:, 0:1, :], (0, 2, 1)).reshape(B * T, 1)
    tl2 = jnp.tile(jnp.arange(T, dtype=jnp.int32), B).reshape(B * T, 1)   # local time index

    kernel = functools.partial(_fused_kernel, T=T, R=R, num_layers=L,
                               n_rank=n_rank, nbsq=nbsq, K_b=K_b, pad=pad)

    args = (x2, m2, tl2, p['w_in'], p['b_in'], p['wd_all'], p['bd_all'],
            p['w1_all'], p['b1_all'], p['ef_all'], p['wb_all'], p['bb'])
    flops = 2 * B * T * (Din * Cp + L * (3 * Cp * Cp + Cp * Cp)
                         + Cp * 2 * n_rank * nbsq + K_b * nbsq * Cout_pad)
    bytes_accessed = int(sum(int(np.prod(a.shape)) * a.dtype.itemsize for a in args)
                         + B * T * Cout_pad * 4)

    def _w(shape):      # grid-invariant weight spec (full array, constant index_map)
        return pl.BlockSpec(shape, lambda g: (0,) * len(shape))

    y = pl.pallas_call(
        kernel,
        out_shape=jax.ShapeDtypeStruct((B * T, Cout_pad), jnp.float32),
        grid_spec=pltpu.PrefetchScalarGridSpec(
            num_scalar_prefetch=0, grid=(G,),
            in_specs=[
                pl.BlockSpec((R, Din), lambda g: (g, 0)),          # x rows
                pl.BlockSpec((R, 1), lambda g: (g, 0)),            # mask rows
                pl.BlockSpec((R, 1), lambda g: (g, 0)),            # local time index rows
                _w(p['w_in'].shape), _w(p['b_in'].shape),
                _w(p['wd_all'].shape), _w(p['bd_all'].shape),
                _w(p['w1_all'].shape), _w(p['b1_all'].shape),
                _w(p['ef_all'].shape), _w(p['wb_all'].shape), _w(p['bb'].shape),
            ],
            out_specs=pl.BlockSpec((R, Cout_pad), lambda g: (g, 0))),
        compiler_params=pltpu.CompilerParams(
            dimension_semantics=("parallel",),
            vmem_limit_bytes=48 * 1024 * 1024),   # <= ~56 MiB is safe on v7x; 128 MiB on v5e/v6e
        cost_estimate=pl.CostEstimate(flops=flops, transcendentals=0,
                                      bytes_accessed=bytes_accessed),
    )(*args)

    y = y.reshape(B, T, Cout_pad)[:, :, :p['num_classes']]       # drop lane padding
    return jnp.transpose(y, (0, 2, 1))                           # [B, num_classes, T]


# ---------------------------------------------------------------------------
# Parameters (deterministic, synthetic); kernel-layout weights precomputed once
# ---------------------------------------------------------------------------
def init_params(key, dim, num_f_maps, num_layers, num_classes):
    sqrt_dim = int(np.sqrt(num_f_maps))
    dim_factor = 2
    n_basis = dim_factor * sqrt_dim            # RPGaussian n_basis
    n_rank = 4
    K_b = 25
    keys = jax.random.split(key, 4 * num_layers + 2 * n_rank + 8)
    ki = iter(keys)

    def nrm(shape, scale=0.1):
        return scale * jax.random.normal(next(ki), shape, dtype=jnp.float32)

    p = {}
    # ---- raw PyTorch-layout params (used by the pure-JAX f32 reference) ----
    p['w_in_t'] = nrm((num_f_maps, dim, 1))            # Conv1d weight layout [Cout, Cin, K]
    p['b_in_raw'] = nrm((num_f_maps,))
    p['layers_t'] = []
    for i in range(num_layers):
        d = 2 ** i
        p['layers_t'].append((d, nrm((num_f_maps, num_f_maps, 3)), nrm((num_f_maps,)),
                              nrm((num_f_maps, num_f_maps, 1)), nrm((num_f_maps,))))
    sigma = float(sqrt_dim)                            # init_sigma = sqrt_dim
    p['pool_scale'] = float(np.sqrt(num_f_maps) / (1e-5 + abs(sigma)))
    E_list, F_list = [], []
    for _ in range(n_rank):
        Eq, _ = jnp.linalg.qr(jax.random.normal(next(ki), (num_f_maps, num_f_maps),
                                                dtype=jnp.float32))
        E_list.append(Eq[:, :n_basis])
        Fq, _ = jnp.linalg.qr(jax.random.normal(next(ki), (num_f_maps, num_f_maps),
                                                dtype=jnp.float32))
        F_list.append(Fq[:, :n_basis])
    p['E_list'], p['F_list'] = E_list, F_list
    p['n_basis'], p['n_rank'], p['K_b'] = n_basis, n_rank, K_b
    p['num_f_maps'], p['num_layers'], p['num_classes'] = num_f_maps, num_layers, num_classes
    p['wb_t'] = nrm((num_classes, n_basis ** 2, K_b))  # conv_1x1_b: Cin = n_basis^2
    p['bb_raw'] = nrm((num_classes,))

    # ---- kernel-layout weights: lane-padded, bf16 MXU operands, packed ONCE here ----
    C = num_f_maps
    Cp = _round_up(C, 128)                             # channels padded to 128 lanes
    nbsq = n_basis ** 2
    Cout_pad = _round_up(max(num_classes, 128), 128)
    bf16 = jnp.bfloat16
    p['C_pad'] = Cp

    w_in = jnp.zeros((dim, Cp), jnp.float32).at[:, :C].set(jnp.transpose(p['w_in_t'][:, :, 0]))
    p['w_in'] = w_in.astype(bf16)
    p['b_in'] = jnp.zeros((1, Cp), jnp.float32).at[0, :C].set(p['b_in_raw'])

    wd_all = jnp.zeros((num_layers, 3, Cp, Cp), jnp.float32)   # one (Cp,Cp) weight per tap
    bd_all = jnp.zeros((num_layers, 1, Cp), jnp.float32)
    w1_all = jnp.zeros((num_layers, Cp, Cp), jnp.float32)
    b1_all = jnp.zeros((num_layers, 1, Cp), jnp.float32)
    for i, (d, wd_t, bd, w1_t, b1) in enumerate(p['layers_t']):
        for k in range(3):                                     # taps: x[t-d], x[t], x[t+d]
            wd_all = wd_all.at[i, k, :C, :C].set(jnp.transpose(wd_t[:, :, k]))
        bd_all = bd_all.at[i, 0, :C].set(bd)
        w1_all = w1_all.at[i, :C, :C].set(jnp.transpose(w1_t[:, :, 0]))
        b1_all = b1_all.at[i, 0, :C].set(b1)
    p['wd_all'], p['w1_all'] = wd_all.astype(bf16), w1_all.astype(bf16)
    p['bd_all'], p['b1_all'] = bd_all, b1_all

    # Bilinear: z[t, i*nb+j] = (x@E)[t,i] * (x@F)[t,j]; ranks stacked along lanes,
    # E- and F-projections fused into one matmul weight (C_pad, 2*n_rank*nb^2).
    nb = n_basis
    er_cols = [jnp.repeat(p['pool_scale'] * E, nb, axis=1) for E in E_list]
    ft_cols = [jnp.tile(p['pool_scale'] * F, (1, nb)) for F in F_list]
    ef = jnp.concatenate(er_cols + ft_cols, axis=1)
    ef_pad = jnp.zeros((Cp, 2 * n_rank * nbsq), jnp.float32).at[:C, :].set(ef)
    p['ef_all'] = ef_pad.astype(bf16)

    # conv_1x1_b per-tap weights (K_b, nbsq, Cout_pad); output channels lane-padded to 128.
    wb = jnp.transpose(p['wb_t'], (2, 1, 0))                          # (K_b, nbsq, num_classes)
    wb_pad = jnp.zeros((K_b, nbsq, Cout_pad), jnp.float32).at[:, :, :num_classes].set(wb)
    p['wb_all'] = wb_pad.astype(bf16)
    p['bb'] = jnp.zeros((1, Cout_pad), jnp.float32).at[0, :num_classes].set(p['bb_raw'])
    return p


# ---------------------------------------------------------------------------
# Pure-JAX f32 reference (mirrors PyTorch forward, NCT layout)
# ---------------------------------------------------------------------------
def _conv1d_ref(x, w, b, padding, dilation=1):
    y = jax.lax.conv_general_dilated(
        x, w, window_strides=(1,), padding=[(padding, padding)],
        rhs_dilation=(dilation,), dimension_numbers=('NCH', 'OIH', 'NCH'))
    return y + b[None, :, None]


def forward_reference(x, mask, p):
    m = mask[:, 0:1, :]
    out = _conv1d_ref(x, p['w_in_t'], p['b_in_raw'], 0)
    for (d, wd_t, bd, w1_t, b1) in p['layers_t']:
        h = jax.nn.relu(_conv1d_ref(out, wd_t, bd, d, d))
        h = _conv1d_ref(h, w1_t, b1, 0)
        out = (out + h) * m
    B, C, T = out.shape
    xt = jnp.transpose(out, (0, 2, 1))
    nb = p['n_basis']
    z = 0.0
    for r in range(p['n_rank']):
        Er = p['pool_scale'] * p['E_list'][r]
        Fr = p['pool_scale'] * p['F_list'][r]
        xe = xt @ Er
        xf = xt @ Fr
        zr = jnp.einsum('bti,btj->btij', xe, xf).reshape(B, T, nb * nb)
        z = z + jnp.transpose(zr, (0, 2, 1))
    out2 = (z / float(p['n_rank'])) * m
    out2 = _conv1d_ref(out2, p['wb_t'], p['bb_raw'], (p['K_b'] - 1) // 2) * m
    return out2 * m


# ---------------------------------------------------------------------------
if __name__ == "__main__":
    B, Din, T = 2, 12, 32
    num_f_maps, num_layers, num_classes = 64, 2, 6     # sqrt_dim=8, n_basis=16, n_basis^2=256

    key = jax.random.PRNGKey(0)
    kx, kp = jax.random.split(key)
    params = init_params(kp, Din, num_f_maps, num_layers, num_classes)

    x = jax.random.normal(kx, (B, Din, T), dtype=jnp.float32)         # PyTorch NCT input
    mask = jnp.ones((B, 1, T), dtype=jnp.float32)
    mask = mask.at[1, :, T - 6:].set(0.0)                             # ragged second sequence

    y = jax.block_until_ready(forward_pallas(x, mask, params))

    y_ref = forward_reference(x, mask, params)
    # Kernel uses bf16 MXU operands (f32 accumulation) vs. an all-f32 reference, so the
    # tolerance is set relative to the output scale (typical bf16 error here is ~1-2%).
    scale = float(jnp.std(y_ref)) + 1e-6
    np.testing.assert_allclose(np.asarray(y), np.asarray(y_ref),
                               rtol=5e-2, atol=0.15 * scale)
    assert y.shape == (B, num_classes, T)
    print("KERNEL_OK")
</pallas_src>

<mosaic_0001>
module attributes {stable_mosaic.version = 11 : i64} {
  func.func @_fused_kernel(%arg0: i32, %arg1: memref<64x12xf32, #tpu.memory_space<vmem>>, %arg2: memref<64x1xf32, #tpu.memory_space<vmem>>, %arg3: memref<64x1xi32, #tpu.memory_space<vmem>>, %arg4: memref<12x128xbf16, #tpu.memory_space<vmem>>, %arg5: memref<1x128xf32, #tpu.memory_space<vmem>>, %arg6: memref<2x3x128x128xbf16, #tpu.memory_space<vmem>>, %arg7: memref<2x1x128xf32, #tpu.memory_space<vmem>>, %arg8: memref<2x128x128xbf16, #tpu.memory_space<vmem>>, %arg9: memref<2x1x128xf32, #tpu.memory_space<vmem>>, %arg10: memref<128x2048xbf16, #tpu.memory_space<vmem>>, %arg11: memref<25x256x128xbf16, #tpu.memory_space<vmem>>, %arg12: memref<1x128xf32, #tpu.memory_space<vmem>>, %arg13: memref<64x128xf32, #tpu.memory_space<vmem>>) attributes {dimension_semantics = [#tpu.dimension_semantics<parallel>], iteration_bounds = array<i64: 1>, scalar_prefetch = 0 : i64, scratch_operands = 0 : i64, tpu.core_type = #tpu.core_type<tc>, window_params = [{transform_indices = @transform_0, window_bounds = array<i64: 64, 12>}, {transform_indices = @transform_1, window_bounds = array<i64: 64, 1>}, {transform_indices = @transform_2, window_bounds = array<i64: 64, 1>}, {pipeline_mode = #tpu.pipeline_mode<synchronous>, transform_indices = @transform_3, window_bounds = array<i64: 12, 128>}, {pipeline_mode = #tpu.pipeline_mode<synchronous>, transform_indices = @transform_4, window_bounds = array<i64: 1, 128>}, {pipeline_mode = #tpu.pipeline_mode<synchronous>, transform_indices = @transform_5, window_bounds = array<i64: 2, 3, 128, 128>}, {pipeline_mode = #tpu.pipeline_mode<synchronous>, transform_indices = @transform_6, window_bounds = array<i64: 2, 1, 128>}, {pipeline_mode = #tpu.pipeline_mode<synchronous>, transform_indices = @transform_7, window_bounds = array<i64: 2, 128, 128>}, {pipeline_mode = #tpu.pipeline_mode<synchronous>, transform_indices = @transform_8, window_bounds = array<i64: 2, 1, 128>}, {pipeline_mode = #tpu.pipeline_mode<synchronous>, transform_indices = @transform_9, window_bounds = array<i64: 128, 2048>}, {pipeline_mode = #tpu.pipeline_mode<synchronous>, transform_indices = @transform_10, window_bounds = array<i64: 25, 256, 128>}, {pipeline_mode = #tpu.pipeline_mode<synchronous>, transform_indices = @transform_11, window_bounds = array<i64: 1, 128>}, {transform_indices = @transform_12, window_bounds = array<i64: 64, 128>}]} {
    %c0 = arith.constant 0 : index
    %c0_0 = arith.constant 0 : index
    %0 = vector.load %arg2[%c0, %c0_0] : memref<64x1xf32, #tpu.memory_space<vmem>>, vector<64x1xf32>
    %c0_1 = arith.constant 0 : index
    %c0_2 = arith.constant 0 : index
    %1 = vector.load %arg3[%c0_1, %c0_2] : memref<64x1xi32, #tpu.memory_space<vmem>>, vector<64x1xi32>
    %c0_3 = arith.constant 0 : index
    %c0_4 = arith.constant 0 : index
    %2 = vector.load %arg1[%c0_3, %c0_4] : memref<64x12xf32, #tpu.memory_space<vmem>>, vector<64x12xf32>
    %3 = arith.truncf %2 : vector<64x12xf32> to vector<64x12xbf16>
    %c0_5 = arith.constant 0 : index
    %c0_6 = arith.constant 0 : index
    %4 = vector.load %arg4[%c0_5, %c0_6] : memref<12x128xbf16, #tpu.memory_space<vmem>>, vector<12x128xbf16>
    %cst = arith.constant dense<0.000000e+00> : vector<64x128xf32>
    %5 = tpu.matmul %3, %4, %cst {dimension_numbers = #tpu.dot_dimension_numbers<[1], [0], [0], [1], [0, 0, 1, 1], [], []>} : vector<64x12xbf16>, vector<12x128xbf16>, vector<64x128xf32> -> vector<64x128xf32>
    %c0_7 = arith.constant 0 : index
    %c0_8 = arith.constant 0 : index
    %6 = vector.load %arg5[%c0_7, %c0_8] : memref<1x128xf32, #tpu.memory_space<vmem>>, vector<1x128xf32>
    %7 = vector.broadcast %6 : vector<1x128xf32> to vector<64x128xf32>
    %8 = arith.addf %5, %7 : vector<64x128xf32>
    %c1_i32 = arith.constant 1 : i32
    %9 = vector.broadcast %c1_i32 : i32 to vector<64x1xi32>
    %10 = arith.cmpi sge, %1, %9 : vector<64x1xi32>
    %c1_i32_9 = arith.constant 1 : i32
    %11 = tpu.dynamic_rotate %8 by %c1_i32_9 dim 0 : vector<64x128xf32>, i32 -> vector<64x128xf32>
    %cst_10 = arith.constant 0.000000e+00 : f32
    %12 = vector.shape_cast %10 : vector<64x1xi1> to vector<64x1xi1>
    %13 = vector.broadcast %12 : vector<64x1xi1> to vector<64x128xi1>
    %14 = vector.broadcast %cst_10 : f32 to vector<64x128xf32>
    %15 = arith.select %13, %11, %14 : vector<64x128xi1>, vector<64x128xf32>
    %c31_i32 = arith.constant 31 : i32
    %16 = vector.broadcast %c31_i32 : i32 to vector<64x1xi32>
    %17 = arith.cmpi slt, %1, %16 : vector<64x1xi32>
    %c63_i32 = arith.constant 63 : i32
    %18 = tpu.dynamic_rotate %8 by %c63_i32 dim 0 : vector<64x128xf32>, i32 -> vector<64x128xf32>
    %cst_11 = arith.constant 0.000000e+00 : f32
    %19 = vector.shape_cast %17 : vector<64x1xi1> to vector<64x1xi1>
    %20 = vector.broadcast %19 : vector<64x1xi1> to vector<64x128xi1>
    %21 = vector.broadcast %cst_11 : f32 to vector<64x128xf32>
    %22 = arith.select %20, %18, %21 : vector<64x128xi1>, vector<64x128xf32>
    %23 = arith.truncf %15 : vector<64x128xf32> to vector<64x128xbf16>
    %c0_12 = arith.constant 0 : index
    %c0_13 = arith.constant 0 : index
    %c0_14 = arith.constant 0 : index
    %c0_15 = arith.constant 0 : index
    %24 = vector.load %arg6[%c0_12, %c0_13, %c0_14, %c0_15] : memref<2x3x128x128xbf16, #tpu.memory_space<vmem>>, vector<1x1x128x128xbf16>
    %25 = vector.shape_cast %24 : vector<1x1x128x128xbf16> to vector<128x128xbf16>
    %cst_16 = arith.constant dense<0.000000e+00> : vector<64x128xf32>
    %26 = tpu.matmul %23, %25, %cst_16 {dimension_numbers = #tpu.dot_dimension_numbers<[1], [0], [0], [1], [0, 0, 1, 1], [], []>} : vector<64x128xbf16>, vector<128x128xbf16>, vector<64x128xf32> -> vector<64x128xf32>
    %27 = arith.truncf %8 : vector<64x128xf32> to vector<64x128xbf16>
    %c0_17 = arith.constant 0 : index
    %c1 = arith.constant 1 : index
    %c0_18 = arith.constant 0 : index
    %c0_19 = arith.constant 0 : index
    %28 = vector.load %arg6[%c0_17, %c1, %c0_18, %c0_19] : memref<2x3x128x128xbf16, #tpu.memory_space<vmem>>, vector<1x1x128x128xbf16>
    %29 = vector.shape_cast %28 : vector<1x1x128x128xbf16> to vector<128x128xbf16>
    %cst_20 = arith.constant dense<0.000000e+00> : vector<64x128xf32>
    %30 = tpu.matmul %27, %29, %cst_20 {dimension_numbers = #tpu.dot_dimension_numbers<[1], [0], [0], [1], [0, 0, 1, 1], [], []>} : vector<64x128xbf16>, vector<128x128xbf16>, vector<64x128xf32> -> vector<64x128xf32>
    %31 = arith.addf %26, %30 : vector<64x128xf32>
    %32 = arith.truncf %22 : vector<64x128xf32> to vector<64x128xbf16>
    %c0_21 = arith.constant 0 : index
    %c2 = arith.constant 2 : index
    %c0_22 = arith.constant 0 : index
    %c0_23 = arith.constant 0 : index
    %33 = vector.load %arg6[%c0_21, %c2, %c0_22, %c0_23] : memref<2x3x128x128xbf16, #tpu.memory_space<vmem>>, vector<1x1x128x128xbf16>
    %34 = vector.shape_cast %33 : vector<1x1x128x128xbf16> to vector<128x128xbf16>
    %cst_24 = arith.constant dense<0.000000e+00> : vector<64x128xf32>
    %35 = tpu.matmul %32, %34, %cst_24 {dimension_numbers = #tpu.dot_dimension_numbers<[1], [0], [0], [1], [0, 0, 1, 1], [], []>} : vector<64x128xbf16>, vector<128x128xbf16>, vector<64x128xf32> -> vector<64x128xf32>
    %36 = arith.addf %31, %35 : vector<64x128xf32>
    %c0_25 = arith.constant 0 : index
    %c0_26 = arith.constant 0 : index
    %c0_27 = arith.constant 0 : index
    %37 = vector.load %arg7[%c0_25, %c0_26, %c0_27] : memref<2x1x128xf32, #tpu.memory_space<vmem>>, vector<1x1x128xf32>
    %38 = vector.shape_cast %37 : vector<1x1x128xf32> to vector<1x128xf32>
    %39 = vector.broadcast %38 : vector<1x128xf32> to vector<64x128xf32>
    %40 = arith.addf %36, %39 : vector<64x128xf32>
    %cst_28 = arith.constant 0.000000e+00 : f32
    %41 = vector.broadcast %cst_28 : f32 to vector<64x128xf32>
    %42 = arith.maximumf %40, %41 : vector<64x128xf32>
    %43 = arith.truncf %42 : vector<64x128xf32> to vector<64x128xbf16>
    %c0_29 = arith.constant 0 : index
    %c0_30 = arith.constant 0 : index
    %c0_31 = arith.constant 0 : index
    %44 = vector.load %arg8[%c0_29, %c0_30, %c0_31] : memref<2x128x128xbf16, #tpu.memory_space<vmem>>, vector<1x128x128xbf16>
    %45 = vector.shape_cast %44 : vector<1x128x128xbf16> to vector<128x128xbf16>
    %cst_32 = arith.constant dense<0.000000e+00> : vector<64x128xf32>
    %46 = tpu.matmul %43, %45, %cst_32 {dimension_numbers = #tpu.dot_dimension_numbers<[1], [0], [0], [1], [0, 0, 1, 1], [], []>} : vector<64x128xbf16>, vector<128x128xbf16>, vector<64x128xf32> -> vector<64x128xf32>
    %c0_33 = arith.constant 0 : index
    %c0_34 = arith.constant 0 : index
    %c0_35 = arith.constant 0 : index
    %47 = vector.load %arg9[%c0_33, %c0_34, %c0_35] : memref<2x1x128xf32, #tpu.memory_space<vmem>>, vector<1x1x128xf32>
    %48 = vector.shape_cast %47 : vector<1x1x128xf32> to vector<1x128xf32>
    %49 = vector.broadcast %48 : vector<1x128xf32> to vector<64x128xf32>
    %50 = arith.addf %46, %49 : vector<64x128xf32>
    %51 = arith.addf %8, %50 : vector<64x128xf32>
    %52 = vector.broadcast %0 : vector<64x1xf32> to vector<64x128xf32>
    %53 = arith.mulf %51, %52 : vector<64x128xf32>
    %c2_i32 = arith.constant 2 : i32
    %54 = vector.broadcast %c2_i32 : i32 to vector<64x1xi32>
    %55 = arith.cmpi sge, %1, %54 : vector<64x1xi32>
    %c2_i32_36 = arith.constant 2 : i32
    %56 = tpu.dynamic_rotate %53 by %c2_i32_36 dim 0 : vector<64x128xf32>, i32 -> vector<64x128xf32>
    %cst_37 = arith.constant 0.000000e+00 : f32
    %57 = vector.shape_cast %55 : vector<64x1xi1> to vector<64x1xi1>
    %58 = vector.broadcast %57 : vector<64x1xi1> to vector<64x128xi1>
    %59 = vector.broadcast %cst_37 : f32 to vector<64x128xf32>
    %60 = arith.select %58, %56, %59 : vector<64x128xi1>, vector<64x128xf32>
    %c30_i32 = arith.constant 30 : i32
    %61 = vector.broadcast %c30_i32 : i32 to vector<64x1xi32>
    %62 = arith.cmpi slt, %1, %61 : vector<64x1xi32>
    %c62_i32 = arith.constant 62 : i32
    %63 = tpu.dynamic_rotate %53 by %c62_i32 dim 0 : vector<64x128xf32>, i32 -> vector<64x128xf32>
    %cst_38 = arith.constant 0.000000e+00 : f32
    %64 = vector.shape_cast %62 : vector<64x1xi1> to vector<64x1xi1>
    %65 = vector.broadcast %64 : vector<64x1xi1> to vector<64x128xi1>
    %66 = vector.broadcast %cst_38 : f32 to vector<64x128xf32>
    %67 = arith.select %65, %63, %66 : vector<64x128xi1>, vector<64x128xf32>
    %68 = arith.truncf %60 : vector<64x128xf32> to vector<64x128xbf16>
    %c1_39 = arith.constant 1 : index
    %c0_40 = arith.constant 0 : index
    %c0_41 = arith.constant 0 : index
    %c0_42 = arith.constant 0 : index
    %69 = vector.load %arg6[%c1_39, %c0_40, %c0_41, %c0_42] : memref<2x3x128x128xbf16, #tpu.memory_space<vmem>>, vector<1x1x128x128xbf16>
    %70 = vector.shape_cast %69 : vector<1x1x128x128xbf16> to vector<128x128xbf16>
    %cst_43 = arith.constant dense<0.000000e+00> : vector<64x128xf32>
    %71 = tpu.matmul %68, %70, %cst_43 {dimension_numbers = #tpu.dot_dimension_numbers<[1], [0], [0], [1], [0, 0, 1, 1], [], []>} : vector<64x128xbf16>, vector<128x128xbf16>, vector<64x128xf32> -> vector<64x128xf32>
    %72 = arith.truncf %53 : vector<64x128xf32> to vector<64x128xbf16>
    %c1_44 = arith.constant 1 : index
    %c1_45 = arith.constant 1 : index
    %c0_46 = arith.constant 0 : index
    %c0_47 = arith.constant 0 : index
    %73 = vector.load %arg6[%c1_44, %c1_45, %c0_46, %c0_47] : memref<2x3x128x128xbf16, #tpu.memory_space<vmem>>, vector<1x1x128x128xbf16>
    %74 = vector.shape_cast %73 : vector<1x1x128x128xbf16> to vector<128x128xbf16>
    %cst_48 = arith.constant dense<0.000000e+00> : vector<64x128xf32>
    %75 = tpu.matmul %72, %74, %cst_48 {dimension_numbers = #tpu.dot_dimension_numbers<[1], [0], [0], [1], [0, 0, 1, 1], [], []>} : vector<64x128xbf16>, vector<128x128xbf16>, vector<64x128xf32> -> vector<64x128xf32>
    %76 = arith.addf %71, %75 : vector<64x128xf32>
    %77 = arith.truncf %67 : vector<64x128xf32> to vector<64x128xbf16>
    %c1_49 = arith.constant 1 : index
    %c2_50 = arith.constant 2 : index
    %c0_51 = arith.constant 0 : index
    %c0_52 = arith.constant 0 : index
    %78 = vector.load %arg6[%c1_49, %c2_50, %c0_51, %c0_52] : memref<2x3x128x128xbf16, #tpu.memory_space<vmem>>, vector<1x1x128x128xbf16>
    %79 = vector.shape_cast %78 : vector<1x1x128x128xbf16> to vector<128x128xbf16>
    %cst_53 = arith.constant dense<0.000000e+00> : vector<64x128xf32>
    %80 = tpu.matmul %77, %79, %cst_53 {dimension_numbers = #tpu.dot_dimension_numbers<[1], [0], [0], [1], [0, 0, 1, 1], [], []>} : vector<64x128xbf16>, vector<128x128xbf16>, vector<64x128xf32> -> vector<64x128xf32>
    %81 = arith.addf %76, %80 : vector<64x128xf32>
    %c1_54 = arith.constant 1 : index
    %c0_55 = arith.constant 0 : index
    %c0_56 = arith.constant 0 : index
    %82 = vector.load %arg7[%c1_54, %c0_55, %c0_56] : memref<2x1x128xf32, #tpu.memory_space<vmem>>, vector<1x1x128xf32>
    %83 = vector.shape_cast %82 : vector<1x1x128xf32> to vector<1x128xf32>
    %84 = vector.broadcast %83 : vector<1x128xf32> to vector<64x128xf32>
    %85 = arith.addf %81, %84 : vector<64x128xf32>
    %cst_57 = arith.constant 0.000000e+00 : f32
    %86 = vector.broadcast %cst_57 : f32 to vector<64x128xf32>
    %87 = arith.maximumf %85, %86 : vector<64x128xf32>
    %88 = arith.truncf %87 : vector<64x128xf32> to vector<64x128xbf16>
    %c1_58 = arith.constant 1 : index
    %c0_59 = arith.constant 0 : index
    %c0_60 = arith.constant 0 : index
    %89 = vector.load %arg8[%c1_58, %c0_59, %c0_60] : memref<2x128x128xbf16, #tpu.memory_space<vmem>>, vector<1x128x128xbf16>
    %90 = vector.shape_cast %89 : vector<1x128x128xbf16> to vector<128x128xbf16>
    %cst_61 = arith.constant dense<0.000000e+00> : vector<64x128xf32>
    %91 = tpu.matmul %88, %90, %cst_61 {dimension_numbers = #tpu.dot_dimension_numbers<[1], [0], [0], [1], [0, 0, 1, 1], [], []>} : vector<64x128xbf16>, vector<128x128xbf16>, vector<64x128xf32> -> vector<64x128xf32>
    %c1_62 = arith.constant 1 : index
    %c0_63 = arith.constant 0 : index
    %c0_64 = arith.constant 0 : index
    %92 = vector.load %arg9[%c1_62, %c0_63, %c0_64] : memref<2x1x128xf32, #tpu.memory_space<vmem>>, vector<1x1x128xf32>
    %93 = vector.shape_cast %92 : vector<1x1x128xf32> to vector<1x128xf32>
    %94 = vector.broadcast %93 : vector<1x128xf32> to vector<64x128xf32>
    %95 = arith.addf %91, %94 : vector<64x128xf32>
    %96 = arith.addf %53, %95 : vector<64x128xf32>
    %97 = vector.broadcast %0 : vector<64x1xf32> to vector<64x128xf32>
    %98 = arith.mulf %96, %97 : vector<64x128xf32>
    %99 = arith.truncf %98 : vector<64x128xf32> to vector<64x128xbf16>
    %c0_65 = arith.constant 0 : index
    %c0_66 = arith.constant 0 : index
    %100 = vector.load %arg10[%c0_65, %c0_66] : memref<128x2048xbf16, #tpu.memory_space<vmem>>, vector<128x2048xbf16>
    %cst_67 = arith.constant dense<0.000000e+00> : vector<64x2048xf32>
    %101 = tpu.matmul %99, %100, %cst_67 {dimension_numbers = #tpu.dot_dimension_numbers<[1], [0], [0], [1], [0, 0, 1, 1], [], []>} : vector<64x128xbf16>, vector<128x2048xbf16>, vector<64x2048xf32> -> vector<64x2048xf32>
    %102 = vector.extract_strided_slice %101 {offsets = [0, 0], sizes = [64, 1024], strides = [1, 1]} : vector<64x2048xf32> to vector<64x1024xf32>
    %103 = vector.extract_strided_slice %101 {offsets = [0, 1024], sizes = [64, 1024], strides = [1, 1]} : vector<64x2048xf32> to vector<64x1024xf32>
    %104 = arith.mulf %102, %103 : vector<64x1024xf32>
    %105 = vector.extract_strided_slice %104 {offsets = [0, 0], sizes = [64, 256], strides = [1, 1]} : vector<64x1024xf32> to vector<64x256xf32>
    %106 = vector.extract_strided_slice %104 {offsets = [0, 256], sizes = [64, 256], strides = [1, 1]} : vector<64x1024xf32> to vector<64x256xf32>
    %107 = arith.addf %105, %106 : vector<64x256xf32>
    %108 = vector.extract_strided_slice %104 {offsets = [0, 512], sizes = [64, 256], strides = [1, 1]} : vector<64x1024xf32> to vector<64x256xf32>
    %109 = arith.addf %107, %108 : vector<64x256xf32>
    %110 = vector.extract_strided_slice %104 {offsets = [0, 768], sizes = [64, 256], strides = [1, 1]} : vector<64x1024xf32> to vector<64x256xf32>
    %111 = arith.addf %109, %110 : vector<64x256xf32>
    %cst_68 = arith.constant 2.500000e-01 : f32
    %112 = vector.broadcast %cst_68 : f32 to vector<64x256xf32>
    %113 = arith.mulf %111, %112 : vector<64x256xf32>
    %114 = vector.broadcast %0 : vector<64x1xf32> to vector<64x256xf32>
    %115 = arith.mulf %113, %114 : vector<64x256xf32>
    %c12_i32 = arith.constant 12 : i32
    %116 = vector.broadcast %c12_i32 : i32 to vector<64x1xi32>
    %117 = arith.cmpi sge, %1, %116 : vector<64x1xi32>
    %c12_i32_69 = arith.constant 12 : i32
    %118 = tpu.dynamic_rotate %115 by %c12_i32_69 dim 0 : vector<64x256xf32>, i32 -> vector<64x256xf32>
    %cst_70 = arith.constant 0.000000e+00 : f32
    %119 = vector.shape_cast %117 : vector<64x1xi1> to vector<64x1xi1>
    %120 = vector.broadcast %119 : vector<64x1xi1> to vector<64x256xi1>
    %121 = vector.broadcast %cst_70 : f32 to vector<64x256xf32>
    %122 = arith.select %120, %118, %121 : vector<64x256xi1>, vector<64x256xf32>
    %123 = arith.truncf %122 : vector<64x256xf32> to vector<64x256xbf16>
    %c0_71 = arith.constant 0 : index
    %c0_72 = arith.constant 0 : index
    %c0_73 = arith.constant 0 : index
    %124 = vector.load %arg11[%c0_71, %c0_72, %c0_73] : memref<25x256x128xbf16, #tpu.memory_space<vmem>>, vector<1x256x128xbf16>
    %125 = vector.shape_cast %124 : vector<1x256x128xbf16> to vector<256x128xbf16>
    %cst_74 = arith.constant dense<0.000000e+00> : vector<64x128xf32>
    %126 = tpu.matmul %123, %125, %cst_74 {dimension_numbers = #tpu.dot_dimension_numbers<[1], [0], [0], [1], [0, 0, 1, 1], [], []>} : vector<64x256xbf16>, vector<256x128xbf16>, vector<64x128xf32> -> vector<64x128xf32>
    %c11_i32 = arith.constant 11 : i32
    %127 = vector.broadcast %c11_i32 : i32 to vector<64x1xi32>
    %128 = arith.cmpi sge, %1, %127 : vector<64x1xi32>
    %c11_i32_75 = arith.constant 11 : i32
    %129 = tpu.dynamic_rotate %115 by %c11_i32_75 dim 0 : vector<64x256xf32>, i32 -> vector<64x256xf32>
    %cst_76 = arith.constant 0.000000e+00 : f32
    %130 = vector.shape_cast %128 : vector<64x1xi1> to vector<64x1xi1>
    %131 = vector.broadcast %130 : vector<64x1xi1> to vector<64x256xi1>
    %132 = vector.broadcast %cst_76 : f32 to vector<64x256xf32>
    %133 = arith.select %131, %129, %132 : vector<64x256xi1>, vector<64x256xf32>
    %134 = arith.truncf %133 : vector<64x256xf32> to vector<64x256xbf16>
    %c1_77 = arith.constant 1 : index
    %c0_78 = arith.constant 0 : index
    %c0_79 = arith.constant 0 : index
    %135 = vector.load %arg11[%c1_77, %c0_78, %c0_79] : memref<25x256x128xbf16, #tpu.memory_space<vmem>>, vector<1x256x128xbf16>
    %136 = vector.shape_cast %135 : vector<1x256x128xbf16> to vector<256x128xbf16>
    %cst_80 = arith.constant dense<0.000000e+00> : vector<64x128xf32>
    %137 = tpu.matmul %134, %136, %cst_80 {dimension_numbers = #tpu.dot_dimension_numbers<[1], [0], [0], [1], [0, 0, 1, 1], [], []>} : vector<64x256xbf16>, vector<256x128xbf16>, vector<64x128xf32> -> vector<64x128xf32>
    %138 = arith.addf %126, %137 : vector<64x128xf32>
    %c10_i32 = arith.constant 10 : i32
    %139 = vector.broadcast %c10_i32 : i32 to vector<64x1xi32>
    %140 = arith.cmpi sge, %1, %139 : vector<64x1xi32>
    %c10_i32_81 = arith.constant 10 : i32
    %141 = tpu.dynamic_rotate %115 by %c10_i32_81 dim 0 : vector<64x256xf32>, i32 -> vector<64x256xf32>
    %cst_82 = arith.constant 0.000000e+00 : f32
    %142 = vector.shape_cast %140 : vector<64x1xi1> to vector<64x1xi1>
    %143 = vector.broadcast %142 : vector<64x1xi1> to vector<64x256xi1>
    %144 = vector.broadcast %cst_82 : f32 to vector<64x256xf32>
    %145 = arith.select %143, %141, %144 : vector<64x256xi1>, vector<64x256xf32>
    %146 = arith.truncf %145 : vector<64x256xf32> to vector<64x256xbf16>
    %c2_83 = arith.constant 2 : index
    %c0_84 = arith.constant 0 : index
    %c0_85 = arith.constant 0 : index
    %147 = vector.load %arg11[%c2_83, %c0_84, %c0_85] : memref<25x256x128xbf16, #tpu.memory_space<vmem>>, vector<1x256x128xbf16>
    %148 = vector.shape_cast %147 : vector<1x256x128xbf16> to vector<256x128xbf16>
    %cst_86 = arith.constant dense<0.000000e+00> : vector<64x128xf32>
    %149 = tpu.matmul %146, %148, %cst_86 {dimension_numbers = #tpu.dot_dimension_numbers<[1], [0], [0], [1], [0, 0, 1, 1], [], []>} : vector<64x256xbf16>, vector<256x128xbf16>, vector<64x128xf32> -> vector<64x128xf32>
    %150 = arith.addf %138, %149 : vector<64x128xf32>
    %c9_i32 = arith.constant 9 : i32
    %151 = vector.broadcast %c9_i32 : i32 to vector<64x1xi32>
    %152 = arith.cmpi sge, %1, %151 : vector<64x1xi32>
    %c9_i32_87 = arith.constant 9 : i32
    %153 = tpu.dynamic_rotate %115 by %c9_i32_87 dim 0 : vector<64x256xf32>, i32 -> vector<64x256xf32>
    %cst_88 = arith.constant 0.000000e+00 : f32
    %154 = vector.shape_cast %152 : vector<64x1xi1> to vector<64x1xi1>
    %155 = vector.broadcast %154 : vector<64x1xi1> to vector<64x256xi1>
    %156 = vector.broadcast %cst_88 : f32 to vector<64x256xf32>
    %157 = arith.select %155, %153, %156 : vector<64x256xi1>, vector<64x256xf32>
    %158 = arith.truncf %157 : vector<64x256xf32> to vector<64x256xbf16>
    %c3 = arith.constant 3 : index
    %c0_89 = arith.constant 0 : index
    %c0_90 = arith.constant 0 : index
    %159 = vector.load %arg11[%c3, %c0_89, %c0_90] : memref<25x256x128xbf16, #tpu.memory_space<vmem>>, vector<1x256x128xbf16>
    %160 = vector.shape_cast %159 : vector<1x256x128xbf16> to vector<256x128xbf16>
    %cst_91 = arith.constant dense<0.000000e+00> : vector<64x128xf32>
    %161 = tpu.matmul %158, %160, %cst_91 {dimension_numbers = #tpu.dot_dimension_numbers<[1], [0], [0], [1], [0, 0, 1, 1], [], []>} : vector<64x256xbf16>, vector<256x128xbf16>, vector<64x128xf32> -> vector<64x128xf32>
    %162 = arith.addf %150, %161 : vector<64x128xf32>
    %c8_i32 = arith.constant 8 : i32
    %163 = vector.broadcast %c8_i32 : i32 to vector<64x1xi32>
    %164 = arith.cmpi sge, %1, %163 : vector<64x1xi32>
    %c8_i32_92 = arith.constant 8 : i32
    %165 = tpu.dynamic_rotate %115 by %c8_i32_92 dim 0 : vector<64x256xf32>, i32 -> vector<64x256xf32>
    %cst_93 = arith.constant 0.000000e+00 : f32
    %166 = vector.shape_cast %164 : vector<64x1xi1> to vector<64x1xi1>
    %167 = vector.broadcast %166 : vector<64x1xi1> to vector<64x256xi1>
    %168 = vector.broadcast %cst_93 : f32 to vector<64x256xf32>
    %169 = arith.select %167, %165, %168 : vector<64x256xi1>, vector<64x256xf32>
    %170 = arith.truncf %169 : vector<64x256xf32> to vector<64x256xbf16>
    %c4 = arith.constant 4 : index
    %c0_94 = arith.constant 0 : index
    %c0_95 = arith.constant 0 : index
    %171 = vector.load %arg11[%c4, %c0_94, %c0_95] : memref<25x256x128xbf16, #tpu.memory_space<vmem>>, vector<1x256x128xbf16>
    %172 = vector.shape_cast %171 : vector<1x256x128xbf16> to vector<256x128xbf16>
    %cst_96 = arith.constant dense<0.000000e+00> : vector<64x128xf32>
    %173 = tpu.matmul %170, %172, %cst_96 {dimension_numbers = #tpu.dot_dimension_numbers<[1], [0], [0], [1], [0, 0, 1, 1], [], []>} : vector<64x256xbf16>, vector<256x128xbf16>, vector<64x128xf32> -> vector<64x128xf32>
    %174 = arith.addf %162, %173 : vector<64x128xf32>
    %c7_i32 = arith.constant 7 : i32
    %175 = vector.broadcast %c7_i32 : i32 to vector<64x1xi32>
    %176 = arith.cmpi sge, %1, %175 : vector<64x1xi32>
    %c7_i32_97 = arith.constant 7 : i32
    %177 = tpu.dynamic_rotate %115 by %c7_i32_97 dim 0 : vector<64x256xf32>, i32 -> vector<64x256xf32>
    %cst_98 = arith.constant 0.000000e+00 : f32
    %178 = vector.shape_cast %176 : vector<64x1xi1> to vector<64x1xi1>
    %179 = vector.broadcast %178 : vector<64x1xi1> to vector<64x256xi1>
    %180 = vector.broadcast %cst_98 : f32 to vector<64x256xf32>
    %181 = arith.select %179, %177, %180 : vector<64x256xi1>, vector<64x256xf32>
    %182 = arith.truncf %181 : vector<64x256xf32> to vector<64x256xbf16>
    %c5 = arith.constant 5 : index
    %c0_99 = arith.constant 0 : index
    %c0_100 = arith.constant 0 : index
    %183 = vector.load %arg11[%c5, %c0_99, %c0_100] : memref<25x256x128xbf16, #tpu.memory_space<vmem>>, vector<1x256x128xbf16>
    %184 = vector.shape_cast %183 : vector<1x256x128xbf16> to vector<256x128xbf16>
    %cst_101 = arith.constant dense<0.000000e+00> : vector<64x128xf32>
    %185 = tpu.matmul %182, %184, %cst_101 {dimension_numbers = #tpu.dot_dimension_numbers<[1], [0], [0], [1], [0, 0, 1, 1], [], []>} : vector<64x256xbf16>, vector<256x128xbf16>, vector<64x128xf32> -> vector<64x128xf32>
    %186 = arith.addf %174, %185 : vector<64x128xf32>
    %c6_i32 = arith.constant 6 : i32
    %187 = vector.broadcast %c6_i32 : i32 to vector<64x1xi32>
    %188 = arith.cmpi sge, %1, %187 : vector<64x1xi32>
    %c6_i32_102 = arith.constant 6 : i32
    %189 = tpu.dynamic_rotate %115 by %c6_i32_102 dim 0 : vector<64x256xf32>, i32 -> vector<64x256xf32>
    %cst_103 = arith.constant 0.000000e+00 : f32
    %190 = vector.shape_cast %188 : vector<64x1xi1> to vector<64x1xi1>
    %191 = vector.broadcast %190 : vector<64x1xi1> to vector<64x256xi1>
    %192 = vector.broadcast %cst_103 : f32 to vector<64x256xf32>
    %193 = arith.select %191, %189, %192 : vector<64x256xi1>, vector<64x256xf32>
    %194 = arith.truncf %193 : vector<64x256xf32> to vector<64x256xbf16>
    %c6 = arith.constant 6 : index
    %c0_104 = arith.constant 0 : index
    %c0_105 = arith.constant 0 : index
    %195 = vector.load %arg11[%c6, %c0_104, %c0_105] : memref<25x256x128xbf16, #tpu.memory_space<vmem>>, vector<1x256x128xbf16>
    %196 = vector.shape_cast %195 : vector<1x256x128xbf16> to vector<256x128xbf16>
    %cst_106 = arith.constant dense<0.000000e+00> : vector<64x128xf32>
    %197 = tpu.matmul %194, %196, %cst_106 {dimension_numbers = #tpu.dot_dimension_numbers<[1], [0], [0], [1], [0, 0, 1, 1], [], []>} : vector<64x256xbf16>, vector<256x128xbf16>, vector<64x128xf32> -> vector<64x128xf32>
    %198 = arith.addf %186, %197 : vector<64x128xf32>
    %c5_i32 = arith.constant 5 : i32
    %199 = vector.broadcast %c5_i32 : i32 to vector<64x1xi32>
    %200 = arith.cmpi sge, %1, %199 : vector<64x1xi32>
    %c5_i32_107 = arith.constant 5 : i32
    %201 = tpu.dynamic_rotate %115 by %c5_i32_107 dim 0 : vector<64x256xf32>, i32 -> vector<64x256xf32>
    %cst_108 = arith.constant 0.000000e+00 : f32
    %202 = vector.shape_cast %200 : vector<64x1xi1> to vector<64x1xi1>
    %203 = vector.broadcast %202 : vector<64x1xi1> to vector<64x256xi1>
    %204 = vector.broadcast %cst_108 : f32 to vector<64x256xf32>
    %205 = arith.select %203, %201, %204 : vector<64x256xi1>, vector<64x256xf32>
    %206 = arith.truncf %205 : vector<64x256xf32> to vector<64x256xbf16>
    %c7 = arith.constant 7 : index
    %c0_109 = arith.constant 0 : index
    %c0_110 = arith.constant 0 : index
    %207 = vector.load %arg11[%c7, %c0_109, %c0_110] : memref<25x256x128xbf16, #tpu.memory_space<vmem>>, vector<1x256x128xbf16>
    %208 = vector.shape_cast %207 : vector<1x256x128xbf16> to vector<256x128xbf16>
    %cst_111 = arith.constant dense<0.000000e+00> : vector<64x128xf32>
    %209 = tpu.matmul %206, %208, %cst_111 {dimension_numbers = #tpu.dot_dimension_numbers<[1], [0], [0], [1], [0, 0, 1, 1], [], []>} : vector<64x256xbf16>, vector<256x128xbf16>, vector<64x128xf32> -> vector<64x128xf32>
    %210 = arith.addf %198, %209 : vector<64x128xf32>
    %c4_i32 = arith.constant 4 : i32
    %211 = vector.broadcast %c4_i32 : i32 to vector<64x1xi32>
    %212 = arith.cmpi sge, %1, %211 : vector<64x1xi32>
    %c4_i32_112 = arith.constant 4 : i32
    %213 = tpu.dynamic_rotate %115 by %c4_i32_112 dim 0 : vector<64x256xf32>, i32 -> vector<64x256xf32>
    %cst_113 = arith.constant 0.000000e+00 : f32
    %214 = vector.shape_cast %212 : vector<64x1xi1> to vector<64x1xi1>
    %215 = vector.broadcast %214 : vector<64x1xi1> to vector<64x256xi1>
    %216 = vector.broadcast %cst_113 : f32 to vector<64x256xf32>
    %217 = arith.select %215, %213, %216 : vector<64x256xi1>, vector<64x256xf32>
    %218 = arith.truncf %217 : vector<64x256xf32> to vector<64x256xbf16>
    %c8 = arith.constant 8 : index
    %c0_114 = arith.constant 0 : index
    %c0_115 = arith.constant 0 : index
    %219 = vector.load %arg11[%c8, %c0_114, %c0_115] : memref<25x256x128xbf16, #tpu.memory_space<vmem>>, vector<1x256x128xbf16>
    %220 = vector.shape_cast %219 : vector<1x256x128xbf16> to vector<256x128xbf16>
    %cst_116 = arith.constant dense<0.000000e+00> : vector<64x128xf32>
    %221 = tpu.matmul %218, %220, %cst_116 {dimension_numbers = #tpu.dot_dimension_numbers<[1], [0], [0], [1], [0, 0, 1, 1], [], []>} : vector<64x256xbf16>, vector<256x128xbf16>, vector<64x128xf32> -> vector<64x128xf32>
    %222 = arith.addf %210, %221 : vector<64x128xf32>
    %c3_i32 = arith.constant 3 : i32
    %223 = vector.broadcast %c3_i32 : i32 to vector<64x1xi32>
    %224 = arith.cmpi sge, %1, %223 : vector<64x1xi32>
    %c3_i32_117 = arith.constant 3 : i32
    %225 = tpu.dynamic_rotate %115 by %c3_i32_117 dim 0 : vector<64x256xf32>, i32 -> vector<64x256xf32>
    %cst_118 = arith.constant 0.000000e+00 : f32
    %226 = vector.shape_cast %224 : vector<64x1xi1> to vector<64x1xi1>
    %227 = vector.broadcast %226 : vector<64x1xi1> to vector<64x256xi1>
    %228 = vector.broadcast %cst_118 : f32 to vector<64x256xf32>
    %229 = arith.select %227, %225, %228 : vector<64x256xi1>, vector<64x256xf32>
    %230 = arith.truncf %229 : vector<64x256xf32> to vector<64x256xbf16>
    %c9 = arith.constant 9 : index
    %c0_119 = arith.constant 0 : index
    %c0_120 = arith.constant 0 : index
    %231 = vector.load %arg11[%c9, %c0_119, %c0_120] : memref<25x256x128xbf16, #tpu.memory_space<vmem>>, vector<1x256x128xbf16>
    %232 = vector.shape_cast %231 : vector<1x256x128xbf16> to vector<256x128xbf16>
    %cst_121 = arith.constant dense<0.000000e+00> : vector<64x128xf32>
    %233 = tpu.matmul %230, %232, %cst_121 {dimension_numbers = #tpu.dot_dimension_numbers<[1], [0], [0], [1], [0, 0, 1, 1], [], []>} : vector<64x256xbf16>, vector<256x128xbf16>, vector<64x128xf32> -> vector<64x128xf32>
    %234 = arith.addf %222, %233 : vector<64x128xf32>
    %c2_i32_122 = arith.constant 2 : i32
    %235 = vector.broadcast %c2_i32_122 : i32 to vector<64x1xi32>
    %236 = arith.cmpi sge, %1, %235 : vector<64x1xi32>
    %c2_i32_123 = arith.constant 2 : i32
    %237 = tpu.dynamic_rotate %115 by %c2_i32_123 dim 0 : vector<64x256xf32>, i32 -> vector<64x256xf32>
    %cst_124 = arith.constant 0.000000e+00 : f32
    %238 = vector.shape_cast %236 : vector<64x1xi1> to vector<64x1xi1>
    %239 = vector.broadcast %238 : vector<64x1xi1> to vector<64x256xi1>
    %240 = vector.broadcast %cst_124 : f32 to vector<64x256xf32>
    %241 = arith.select %239, %237, %240 : vector<64x256xi1>, vector<64x256xf32>
    %242 = arith.truncf %241 : vector<64x256xf32> to vector<64x256xbf16>
    %c10 = arith.constant 10 : index
    %c0_125 = arith.constant 0 : index
    %c0_126 = arith.constant 0 : index
    %243 = vector.load %arg11[%c10, %c0_125, %c0_126] : memref<25x256x128xbf16, #tpu.memory_space<vmem>>, vector<1x256x128xbf16>
    %244 = vector.shape_cast %243 : vector<1x256x128xbf16> to vector<256x128xbf16>
    %cst_127 = arith.constant dense<0.000000e+00> : vector<64x128xf32>
    %245 = tpu.matmul %242, %244, %cst_127 {dimension_numbers = #tpu.dot_dimension_numbers<[1], [0], [0], [1], [0, 0, 1, 1], [], []>} : vector<64x256xbf16>, vector<256x128xbf16>, vector<64x128xf32> -> vector<64x128xf32>
    %246 = arith.addf %234, %245 : vector<64x128xf32>
    %c1_i32_128 = arith.constant 1 : i32
    %247 = vector.broadcast %c1_i32_128 : i32 to vector<64x1xi32>
    %248 = arith.cmpi sge, %1, %247 : vector<64x1xi32>
    %c1_i32_129 = arith.constant 1 : i32
    %249 = tpu.dynamic_rotate %115 by %c1_i32_129 dim 0 : vector<64x256xf32>, i32 -> vector<64x256xf32>
    %cst_130 = arith.constant 0.000000e+00 : f32
    %250 = vector.shape_cast %248 : vector<64x1xi1> to vector<64x1xi1>
    %251 = vector.broadcast %250 : vector<64x1xi1> to vector<64x256xi1>
    %252 = vector.broadcast %cst_130 : f32 to vector<64x256xf32>
    %253 = arith.select %251, %249, %252 : vector<64x256xi1>, vector<64x256xf32>
    %254 = arith.truncf %253 : vector<64x256xf32> to vector<64x256xbf16>
    %c11 = arith.constant 11 : index
    %c0_131 = arith.constant 0 : index
    %c0_132 = arith.constant 0 : index
    %255 = vector.load %arg11[%c11, %c0_131, %c0_132] : memref<25x256x128xbf16, #tpu.memory_space<vmem>>, vector<1x256x128xbf16>
    %256 = vector.shape_cast %255 : vector<1x256x128xbf16> to vector<256x128xbf16>
    %cst_133 = arith.constant dense<0.000000e+00> : vector<64x128xf32>
    %257 = tpu.matmul %254, %256, %cst_133 {dimension_numbers = #tpu.dot_dimension_numbers<[1], [0], [0], [1], [0, 0, 1, 1], [], []>} : vector<64x256xbf16>, vector<256x128xbf16>, vector<64x128xf32> -> vector<64x128xf32>
    %258 = arith.addf %246, %257 : vector<64x128xf32>
    %259 = arith.truncf %115 : vector<64x256xf32> to vector<64x256xbf16>
    %c12 = arith.constant 12 : index
    %c0_134 = arith.constant 0 : index
    %c0_135 = arith.constant 0 : index
    %260 = vector.load %arg11[%c12, %c0_134, %c0_135] : memref<25x256x128xbf16, #tpu.memory_space<vmem>>, vector<1x256x128xbf16>
    %261 = vector.shape_cast %260 : vector<1x256x128xbf16> to vector<256x128xbf16>
    %cst_136 = arith.constant dense<0.000000e+00> : vector<64x128xf32>
    %262 = tpu.matmul %259, %261, %cst_136 {dimension_numbers = #tpu.dot_dimension_numbers<[1], [0], [0], [1], [0, 0, 1, 1], [], []>} : vector<64x256xbf16>, vector<256x128xbf16>, vector<64x128xf32> -> vector<64x128xf32>
    %263 = arith.addf %258, %262 : vector<64x128xf32>
    %c31_i32_137 = arith.constant 31 : i32
    %264 = vector.broadcast %c31_i32_137 : i32 to vector<64x1xi32>
    %265 = arith.cmpi slt, %1, %264 : vector<64x1xi32>
    %c63_i32_138 = arith.constant 63 : i32
    %266 = tpu.dynamic_rotate %115 by %c63_i32_138 dim 0 : vector<64x256xf32>, i32 -> vector<64x256xf32>
    %cst_139 = arith.constant 0.000000e+00 : f32
    %267 = vector.shape_cast %265 : vector<64x1xi1> to vector<64x1xi1>
    %268 = vector.broadcast %267 : vector<64x1xi1> to vector<64x256xi1>
    %269 = vector.broadcast %cst_139 : f32 to vector<64x256xf32>
    %270 = arith.select %268, %266, %269 : vector<64x256xi1>, vector<64x256xf32>
    %271 = arith.truncf %270 : vector<64x256xf32> to vector<64x256xbf16>
    %c13 = arith.constant 13 : index
    %c0_140 = arith.constant 0 : index
    %c0_141 = arith.constant 0 : index
    %272 = vector.load %arg11[%c13, %c0_140, %c0_141] : memref<25x256x128xbf16, #tpu.memory_space<vmem>>, vector<1x256x128xbf16>
    %273 = vector.shape_cast %272 : vector<1x256x128xbf16> to vector<256x128xbf16>
    %cst_142 = arith.constant dense<0.000000e+00> : vector<64x128xf32>
    %274 = tpu.matmul %271, %273, %cst_142 {dimension_numbers = #tpu.dot_dimension_numbers<[1], [0], [0], [1], [0, 0, 1, 1], [], []>} : vector<64x256xbf16>, vector<256x128xbf16>, vector<64x128xf32> -> vector<64x128xf32>
    %275 = arith.addf %263, %274 : vector<64x128xf32>
    %c30_i32_143 = arith.constant 30 : i32
    %276 = vector.broadcast %c30_i32_143 : i32 to vector<64x1xi32>
    %277 = arith.cmpi slt, %1, %276 : vector<64x1xi32>
    %c62_i32_144 = arith.constant 62 : i32
    %278 = tpu.dynamic_rotate %115 by %c62_i32_144 dim 0 : vector<64x256xf32>, i32 -> vector<64x256xf32>
    %cst_145 = arith.constant 0.000000e+00 : f32
    %279 = vector.shape_cast %277 : vector<64x1xi1> to vector<64x1xi1>
    %280 = vector.broadcast %279 : vector<64x1xi1> to vector<64x256xi1>
    %281 = vector.broadcast %cst_145 : f32 to vector<64x256xf32>
    %282 = arith.select %280, %278, %281 : vector<64x256xi1>, vector<64x256xf32>
    %283 = arith.truncf %282 : vector<64x256xf32> to vector<64x256xbf16>
    %c14 = arith.constant 14 : index
    %c0_146 = arith.constant 0 : index
    %c0_147 = arith.constant 0 : index
    %284 = vector.load %arg11[%c14, %c0_146, %c0_147] : memref<25x256x128xbf16, #tpu.memory_space<vmem>>, vector<1x256x128xbf16>
    %285 = vector.shape_cast %284 : vector<1x256x128xbf16> to vector<256x128xbf16>
    %cst_148 = arith.constant dense<0.000000e+00> : vector<64x128xf32>
    %286 = tpu.matmul %283, %285, %cst_148 {dimension_numbers = #tpu.dot_dimension_numbers<[1], [0], [0], [1], [0, 0, 1, 1], [], []>} : vector<64x256xbf16>, vector<256x128xbf16>, vector<64x128xf32> -> vector<64x128xf32>
    %287 = arith.addf %275, %286 : vector<64x128xf32>
    %c29_i32 = arith.constant 29 : i32
    %288 = vector.broadcast %c29_i32 : i32 to vector<64x1xi32>
    %289 = arith.cmpi slt, %1, %288 : vector<64x1xi32>
    %c61_i32 = arith.constant 61 : i32
    %290 = tpu.dynamic_rotate %115 by %c61_i32 dim 0 : vector<64x256xf32>, i32 -> vector<64x256xf32>
    %cst_149 = arith.constant 0.000000e+00 : f32
    %291 = vector.shape_cast %289 : vector<64x1xi1> to vector<64x1xi1>
    %292 = vector.broadcast %291 : vector<64x1xi1> to vector<64x256xi1>
    %293 = vector.broadcast %cst_149 : f32 to vector<64x256xf32>
    %294 = arith.select %292, %290, %293 : vector<64x256xi1>, vector<64x256xf32>
    %295 = arith.truncf %294 : vector<64x256xf32> to vector<64x256xbf16>
    %c15 = arith.constant 15 : index
    %c0_150 = arith.constant 0 : index
    %c0_151 = arith.constant 0 : index
    %296 = vector.load %arg11[%c15, %c0_150, %c0_151] : memref<25x256x128xbf16, #tpu.memory_space<vmem>>, vector<1x256x128xbf16>
    %297 = vector.shape_cast %296 : vector<1x256x128xbf16> to vector<256x128xbf16>
    %cst_152 = arith.constant dense<0.000000e+00> : vector<64x128xf32>
    %298 = tpu.matmul %295, %297, %cst_152 {dimension_numbers = #tpu.dot_dimension_numbers<[1], [0], [0], [1], [0, 0, 1, 1], [], []>} : vector<64x256xbf16>, vector<256x128xbf16>, vector<64x128xf32> -> vector<64x128xf32>
    %299 = arith.addf %287, %298 : vector<64x128xf32>
    %c28_i32 = arith.constant 28 : i32
    %300 = vector.broadcast %c28_i32 : i32 to vector<64x1xi32>
    %301 = arith.cmpi slt, %1, %300 : vector<64x1xi32>
    %c60_i32 = arith.constant 60 : i32
    %302 = tpu.dynamic_rotate %115 by %c60_i32 dim 0 : vector<64x256xf32>, i32 -> vector<64x256xf32>
    %cst_153 = arith.constant 0.000000e+00 : f32
    %303 = vector.shape_cast %301 : vector<64x1xi1> to vector<64x1xi1>
    %304 = vector.broadcast %303 : vector<64x1xi1> to vector<64x256xi1>
    %305 = vector.broadcast %cst_153 : f32 to vector<64x256xf32>
    %306 = arith.select %304, %302, %305 : vector<64x256xi1>, vector<64x256xf32>
    %307 = arith.truncf %306 : vector<64x256xf32> to vector<64x256xbf16>
    %c16 = arith.constant 16 : index
    %c0_154 = arith.constant 0 : index
    %c0_155 = arith.constant 0 : index
    %308 = vector.load %arg11[%c16, %c0_154, %c0_155] : memref<25x256x128xbf16, #tpu.memory_space<vmem>>, vector<1x256x128xbf16>
    %309 = vector.shape_cast %308 : vector<1x256x128xbf16> to vector<256x128xbf16>
    %cst_156 = arith.constant dense<0.000000e+00> : vector<64x128xf32>
    %310 = tpu.matmul %307, %309, %cst_156 {dimension_numbers = #tpu.dot_dimension_numbers<[1], [0], [0], [1], [0, 0, 1, 1], [], []>} : vector<64x256xbf16>, vector<256x128xbf16>, vector<64x128xf32> -> vector<64x128xf32>
    %311 = arith.addf %299, %310 : vector<64x128xf32>
    %c27_i32 = arith.constant 27 : i32
    %312 = vector.broadcast %c27_i32 : i32 to vector<64x1xi32>
    %313 = arith.cmpi slt, %1, %312 : vector<64x1xi32>
    %c59_i32 = arith.constant 59 : i32
    %314 = tpu.dynamic_rotate %115 by %c59_i32 dim 0 : vector<64x256xf32>, i32 -> vector<64x256xf32>
    %cst_157 = arith.constant 0.000000e+00 : f32
    %315 = vector.shape_cast %313 : vector<64x1xi1> to vector<64x1xi1>
    %316 = vector.broadcast %315 : vector<64x1xi1> to vector<64x256xi1>
    %317 = vector.broadcast %cst_157 : f32 to vector<64x256xf32>
    %318 = arith.select %316, %314, %317 : vector<64x256xi1>, vector<64x256xf32>
    %319 = arith.truncf %318 : vector<64x256xf32> to vector<64x256xbf16>
    %c17 = arith.constant 17 : index
    %c0_158 = arith.constant 0 : index
    %c0_159 = arith.constant 0 : index
    %320 = vector.load %arg11[%c17, %c0_158, %c0_159] : memref<25x256x128xbf16, #tpu.memory_space<vmem>>, vector<1x256x128xbf16>
    %321 = vector.shape_cast %320 : vector<1x256x128xbf16> to vector<256x128xbf16>
    %cst_160 = arith.constant dense<0.000000e+00> : vector<64x128xf32>
    %322 = tpu.matmul %319, %321, %cst_160 {dimension_numbers = #tpu.dot_dimension_numbers<[1], [0], [0], [1], [0, 0, 1, 1], [], []>} : vector<64x256xbf16>, vector<256x128xbf16>, vector<64x128xf32> -> vector<64x128xf32>
    %323 = arith.addf %311, %322 : vector<64x128xf32>
    %c26_i32 = arith.constant 26 : i32
    %324 = vector.broadcast %c26_i32 : i32 to vector<64x1xi32>
    %325 = arith.cmpi slt, %1, %324 : vector<64x1xi32>
    %c58_i32 = arith.constant 58 : i32
    %326 = tpu.dynamic_rotate %115 by %c58_i32 dim 0 : vector<64x256xf32>, i32 -> vector<64x256xf32>
    %cst_161 = arith.constant 0.000000e+00 : f32
    %327 = vector.shape_cast %325 : vector<64x1xi1> to vector<64x1xi1>
    %328 = vector.broadcast %327 : vector<64x1xi1> to vector<64x256xi1>
    %329 = vector.broadcast %cst_161 : f32 to vector<64x256xf32>
    %330 = arith.select %328, %326, %329 : vector<64x256xi1>, vector<64x256xf32>
    %331 = arith.truncf %330 : vector<64x256xf32> to vector<64x256xbf16>
    %c18 = arith.constant 18 : index
    %c0_162 = arith.constant 0 : index
    %c0_163 = arith.constant 0 : index
    %332 = vector.load %arg11[%c18, %c0_162, %c0_163] : memref<25x256x128xbf16, #tpu.memory_space<vmem>>, vector<1x256x128xbf16>
    %333 = vector.shape_cast %332 : vector<1x256x128xbf16> to vector<256x128xbf16>
    %cst_164 = arith.constant dense<0.000000e+00> : vector<64x128xf32>
    %334 = tpu.matmul %331, %333, %cst_164 {dimension_numbers = #tpu.dot_dimension_numbers<[1], [0], [0], [1], [0, 0, 1, 1], [], []>} : vector<64x256xbf16>, vector<256x128xbf16>, vector<64x128xf32> -> vector<64x128xf32>
    %335 = arith.addf %323, %334 : vector<64x128xf32>
    %c25_i32 = arith.constant 25 : i32
    %336 = vector.broadcast %c25_i32 : i32 to vector<64x1xi32>
    %337 = arith.cmpi slt, %1, %336 : vector<64x1xi32>
    %c57_i32 = arith.constant 57 : i32
    %338 = tpu.dynamic_rotate %115 by %c57_i32 dim 0 : vector<64x256xf32>, i32 -> vector<64x256xf32>
    %cst_165 = arith.constant 0.000000e+00 : f32
    %339 = vector.shape_cast %337 : vector<64x1xi1> to vector<64x1xi1>
    %340 = vector.broadcast %339 : vector<64x1xi1> to vector<64x256xi1>
    %341 = vector.broadcast %cst_165 : f32 to vector<64x256xf32>
    %342 = arith.select %340, %338, %341 : vector<64x256xi1>, vector<64x256xf32>
    %343 = arith.truncf %342 : vector<64x256xf32> to vector<64x256xbf16>
    %c19 = arith.constant 19 : index
    %c0_166 = arith.constant 0 : index
    %c0_167 = arith.constant 0 : index
    %344 = vector.load %arg11[%c19, %c0_166, %c0_167] : memref<25x256x128xbf16, #tpu.memory_space<vmem>>, vector<1x256x128xbf16>
    %345 = vector.shape_cast %344 : vector<1x256x128xbf16> to vector<256x128xbf16>
    %cst_168 = arith.constant dense<0.000000e+00> : vector<64x128xf32>
    %346 = tpu.matmul %343, %345, %cst_168 {dimension_numbers = #tpu.dot_dimension_numbers<[1], [0], [0], [1], [0, 0, 1, 1], [], []>} : vector<64x256xbf16>, vector<256x128xbf16>, vector<64x128xf32> -> vector<64x128xf32>
    %347 = arith.addf %335, %346 : vector<64x128xf32>
    %c24_i32 = arith.constant 24 : i32
    %348 = vector.broadcast %c24_i32 : i32 to vector<64x1xi32>
    %349 = arith.cmpi slt, %1, %348 : vector<64x1xi32>
    %c56_i32 = arith.constant 56 : i32
    %350 = tpu.dynamic_rotate %115 by %c56_i32 dim 0 : vector<64x256xf32>, i32 -> vector<64x256xf32>
    %cst_169 = arith.constant 0.000000e+00 : f32
    %351 = vector.shape_cast %349 : vector<64x1xi1> to vector<64x1xi1>
    %352 = vector.broadcast %351 : vector<64x1xi1> to vector<64x256xi1>
    %353 = vector.broadcast %cst_169 : f32 to vector<64x256xf32>
    %354 = arith.select %352, %350, %353 : vector<64x256xi1>, vector<64x256xf32>
    %355 = arith.truncf %354 : vector<64x256xf32> to vector<64x256xbf16>
    %c20 = arith.constant 20 : index
    %c0_170 = arith.constant 0 : index
    %c0_171 = arith.constant 0 : index
    %356 = vector.load %arg11[%c20, %c0_170, %c0_171] : memref<25x256x128xbf16, #tpu.memory_space<vmem>>, vector<1x256x128xbf16>
    %357 = vector.shape_cast %356 : vector<1x256x128xbf16> to vector<256x128xbf16>
    %cst_172 = arith.constant dense<0.000000e+00> : vector<64x128xf32>
    %358 = tpu.matmul %355, %357, %cst_172 {dimension_numbers = #tpu.dot_dimension_numbers<[1], [0], [0], [1], [0, 0, 1, 1], [], []>} : vector<64x256xbf16>, vector<256x128xbf16>, vector<64x128xf32> -> vector<64x128xf32>
    %359 = arith.addf %347, %358 : vector<64x128xf32>
    %c23_i32 = arith.constant 23 : i32
    %360 = vector.broadcast %c23_i32 : i32 to vector<64x1xi32>
    %361 = arith.cmpi slt, %1, %360 : vector<64x1xi32>
    %c55_i32 = arith.constant 55 : i32
    %362 = tpu.dynamic_rotate %115 by %c55_i32 dim 0 : vector<64x256xf32>, i32 -> vector<64x256xf32>
    %cst_173 = arith.constant 0.000000e+00 : f32
    %363 = vector.shape_cast %361 : vector<64x1xi1> to vector<64x1xi1>
    %364 = vector.broadcast %363 : vector<64x1xi1> to vector<64x256xi1>
    %365 = vector.broadcast %cst_173 : f32 to vector<64x256xf32>
    %366 = arith.select %364, %362, %365 : vector<64x256xi1>, vector<64x256xf32>
    %367 = arith.truncf %366 : vector<64x256xf32> to vector<64x256xbf16>
    %c21 = arith.constant 21 : index
    %c0_174 = arith.constant 0 : index
    %c0_175 = arith.constant 0 : index
    %368 = vector.load %arg11[%c21, %c0_174, %c0_175] : memref<25x256x128xbf16, #tpu.memory_space<vmem>>, vector<1x256x128xbf16>
    %369 = vector.shape_cast %368 : vector<1x256x128xbf16> to vector<256x128xbf16>
    %cst_176 = arith.constant dense<0.000000e+00> : vector<64x128xf32>
    %370 = tpu.matmul %367, %369, %cst_176 {dimension_numbers = #tpu.dot_dimension_numbers<[1], [0], [0], [1], [0, 0, 1, 1], [], []>} : vector<64x256xbf16>, vector<256x128xbf16>, vector<64x128xf32> -> vector<64x128xf32>
    %371 = arith.addf %359, %370 : vector<64x128xf32>
    %c22_i32 = arith.constant 22 : i32
    %372 = vector.broadcast %c22_i32 : i32 to vector<64x1xi32>
    %373 = arith.cmpi slt, %1, %372 : vector<64x1xi32>
    %c54_i32 = arith.constant 54 : i32
    %374 = tpu.dynamic_rotate %115 by %c54_i32 dim 0 : vector<64x256xf32>, i32 -> vector<64x256xf32>
    %cst_177 = arith.constant 0.000000e+00 : f32
    %375 = vector.shape_cast %373 : vector<64x1xi1> to vector<64x1xi1>
    %376 = vector.broadcast %375 : vector<64x1xi1> to vector<64x256xi1>
    %377 = vector.broadcast %cst_177 : f32 to vector<64x256xf32>
    %378 = arith.select %376, %374, %377 : vector<64x256xi1>, vector<64x256xf32>
    %379 = arith.truncf %378 : vector<64x256xf32> to vector<64x256xbf16>
    %c22 = arith.constant 22 : index
    %c0_178 = arith.constant 0 : index
    %c0_179 = arith.constant 0 : index
    %380 = vector.load %arg11[%c22, %c0_178, %c0_179] : memref<25x256x128xbf16, #tpu.memory_space<vmem>>, vector<1x256x128xbf16>
    %381 = vector.shape_cast %380 : vector<1x256x128xbf16> to vector<256x128xbf16>
    %cst_180 = arith.constant dense<0.000000e+00> : vector<64x128xf32>
    %382 = tpu.matmul %379, %381, %cst_180 {dimension_numbers = #tpu.dot_dimension_numbers<[1], [0], [0], [1], [0, 0, 1, 1], [], []>} : vector<64x256xbf16>, vector<256x128xbf16>, vector<64x128xf32> -> vector<64x128xf32>
    %383 = arith.addf %371, %382 : vector<64x128xf32>
    %c21_i32 = arith.constant 21 : i32
    %384 = vector.broadcast %c21_i32 : i32 to vector<64x1xi32>
    %385 = arith.cmpi slt, %1, %384 : vector<64x1xi32>
    %c53_i32 = arith.constant 53 : i32
    %386 = tpu.dynamic_rotate %115 by %c53_i32 dim 0 : vector<64x256xf32>, i32 -> vector<64x256xf32>
    %cst_181 = arith.constant 0.000000e+00 : f32
    %387 = vector.shape_cast %385 : vector<64x1xi1> to vector<64x1xi1>
    %388 = vector.broadcast %387 : vector<64x1xi1> to vector<64x256xi1>
    %389 = vector.broadcast %cst_181 : f32 to vector<64x256xf32>
    %390 = arith.select %388, %386, %389 : vector<64x256xi1>, vector<64x256xf32>
    %391 = arith.truncf %390 : vector<64x256xf32> to vector<64x256xbf16>
    %c23 = arith.constant 23 : index
    %c0_182 = arith.constant 0 : index
    %c0_183 = arith.constant 0 : index
    %392 = vector.load %arg11[%c23, %c0_182, %c0_183] : memref<25x256x128xbf16, #tpu.memory_space<vmem>>, vector<1x256x128xbf16>
    %393 = vector.shape_cast %392 : vector<1x256x128xbf16> to vector<256x128xbf16>
    %cst_184 = arith.constant dense<0.000000e+00> : vector<64x128xf32>
    %394 = tpu.matmul %391, %393, %cst_184 {dimension_numbers = #tpu.dot_dimension_numbers<[1], [0], [0], [1], [0, 0, 1, 1], [], []>} : vector<64x256xbf16>, vector<256x128xbf16>, vector<64x128xf32> -> vector<64x128xf32>
    %395 = arith.addf %383, %394 : vector<64x128xf32>
    %c20_i32 = arith.constant 20 : i32
    %396 = vector.broadcast %c20_i32 : i32 to vector<64x1xi32>
    %397 = arith.cmpi slt, %1, %396 : vector<64x1xi32>
    %c52_i32 = arith.constant 52 : i32
    %398 = tpu.dynamic_rotate %115 by %c52_i32 dim 0 : vector<64x256xf32>, i32 -> vector<64x256xf32>
    %cst_185 = arith.constant 0.000000e+00 : f32
    %399 = vector.shape_cast %397 : vector<64x1xi1> to vector<64x1xi1>
    %400 = vector.broadcast %399 : vector<64x1xi1> to vector<64x256xi1>
    %401 = vector.broadcast %cst_185 : f32 to vector<64x256xf32>
    %402 = arith.select %400, %398, %401 : vector<64x256xi1>, vector<64x256xf32>
    %403 = arith.truncf %402 : vector<64x256xf32> to vector<64x256xbf16>
    %c24 = arith.constant 24 : index
    %c0_186 = arith.constant 0 : index
    %c0_187 = arith.constant 0 : index
    %404 = vector.load %arg11[%c24, %c0_186, %c0_187] : memref<25x256x128xbf16, #tpu.memory_space<vmem>>, vector<1x256x128xbf16>
    %405 = vector.shape_cast %404 : vector<1x256x128xbf16> to vector<256x128xbf16>
    %cst_188 = arith.constant dense<0.000000e+00> : vector<64x128xf32>
    %406 = tpu.matmul %403, %405, %cst_188 {dimension_numbers = #tpu.dot_dimension_numbers<[1], [0], [0], [1], [0, 0, 1, 1], [], []>} : vector<64x256xbf16>, vector<256x128xbf16>, vector<64x128xf32> -> vector<64x128xf32>
    %407 = arith.addf %395, %406 : vector<64x128xf32>
    %c0_189 = arith.constant 0 : index
    %c0_190 = arith.constant 0 : index
    %408 = vector.load %arg12[%c0_189, %c0_190] : memref<1x128xf32, #tpu.memory_space<vmem>>, vector<1x128xf32>
    %409 = vector.broadcast %408 : vector<1x128xf32> to vector<64x128xf32>
    %410 = arith.addf %407, %409 : vector<64x128xf32>
    %411 = vector.broadcast %0 : vector<64x1xf32> to vector<64x128xf32>
    %412 = arith.mulf %410, %411 : vector<64x128xf32>
    %c0_191 = arith.constant 0 : index
    %c0_192 = arith.constant 0 : index
    %413 = vector.load %arg13[%c0_191, %c0_192] : memref<64x128xf32, #tpu.memory_space<vmem>>, vector<64x128xf32>
    tpu.vector_store %arg13[%c0_191, %c0_192], %412 {strides = array<i32>} : memref<64x128xf32, #tpu.memory_space<vmem>>, vector<64x128xf32>,
    return
  }
  func.func @transform_0(%arg0: i32) -> (i32, i32) {
    %c0_i32 = arith.constant 0 : i32
    %c0_i32_0 = arith.constant 0 : i32
    return %arg0, %c0_i32 : i32, i32
  }
  func.func @transform_1(%arg0: i32) -> (i32, i32) {
    %c0_i32 = arith.constant 0 : i32
    %c0_i32_0 = arith.constant 0 : i32
    return %arg0, %c0_i32 : i32, i32
  }
  func.func @transform_2(%arg0: i32) -> (i32, i32) {
    %c0_i32 = arith.constant 0 : i32
    %c0_i32_0 = arith.constant 0 : i32
    return %arg0, %c0_i32 : i32, i32
  }
  func.func @transform_3(%arg0: i32) -> (i32, i32) {
    %c0_i32 = arith.constant 0 : i32
    %c0_i32_0 = arith.constant 0 : i32
    %c0_i32_1 = arith.constant 0 : i32
    return %c0_i32, %c0_i32_0 : i32, i32
  }
  func.func @transform_4(%arg0: i32) -> (i32, i32) {
    %c0_i32 = arith.constant 0 : i32
    %c0_i32_0 = arith.constant 0 : i32
    %c0_i32_1 = arith.constant 0 : i32
    return %c0_i32, %c0_i32_0 : i32, i32
  }
  func.func @transform_5(%arg0: i32) -> (i32, i32, i32, i32) {
    %c0_i32 = arith.constant 0 : i32
    %c0_i32_0 = arith.constant 0 : i32
    %c0_i32_1 = arith.constant 0 : i32
    %c0_i32_2 = arith.constant 0 : i32
    %c0_i32_3 = arith.constant 0 : i32
    return %c0_i32, %c0_i32_0, %c0_i32_1, %c0_i32_2 : i32, i32, i32, i32
  }
  func.func @transform_6(%arg0: i32) -> (i32, i32, i32) {
    %c0_i32 = arith.constant 0 : i32
    %c0_i32_0 = arith.constant 0 : i32
    %c0_i32_1 = arith.constant 0 : i32
    %c0_i32_2 = arith.constant 0 : i32
    return %c0_i32, %c0_i32_0, %c0_i32_1 : i32, i32, i32
  }
  func.func @transform_7(%arg0: i32) -> (i32, i32, i32) {
    %c0_i32 = arith.constant 0 : i32
    %c0_i32_0 = arith.constant 0 : i32
    %c0_i32_1 = arith.constant 0 : i32
    %c0_i32_2 = arith.constant 0 : i32
    return %c0_i32, %c0_i32_0, %c0_i32_1 : i32, i32, i32
  }
  func.func @transform_8(%arg0: i32) -> (i32, i32, i32) {
    %c0_i32 = arith.constant 0 : i32
    %c0_i32_0 = arith.constant 0 : i32
    %c0_i32_1 = arith.constant 0 : i32
    %c0_i32_2 = arith.constant 0 : i32
    return %c0_i32, %c0_i32_0, %c0_i32_1 : i32, i32, i32
  }
  func.func @transform_9(%arg0: i32) -> (i32, i32) {
    %c0_i32 = arith.constant 0 : i32
    %c0_i32_0 = arith.constant 0 : i32
    %c0_i32_1 = arith.constant 0 : i32
    return %c0_i32, %c0_i32_0 : i32, i32
  }
  func.func @transform_10(%arg0: i32) -> (i32, i32, i32) {
    %c0_i32 = arith.constant 0 : i32
    %c0_i32_0 = arith.constant 0 : i32
    %c0_i32_1 = arith.constant 0 : i32
    %c0_i32_2 = arith.constant 0 : i32
    return %c0_i32, %c0_i32_0, %c0_i32_1 : i32, i32, i32
  }
  func.func @transform_11(%arg0: i32) -> (i32, i32) {
    %c0_i32 = arith.constant 0 : i32
    %c0_i32_0 = arith.constant 0 : i32
    %c0_i32_1 = arith.constant 0 : i32
    return %c0_i32, %c0_i32_0 : i32, i32
  }
  func.func @transform_12(%arg0: i32) -> (i32, i32) {
    %c0_i32 = arith.constant 0 : i32
    %c0_i32_0 = arith.constant 0 : i32
    return %arg0, %c0_i32 : i32, i32
  }
}

</mosaic_0001>

<llo_original>
// kernel: tpu_custom_call.1
$region0: #{tpu_custom_call.1}
  #allocation0 [shape = 'u32[]', space=smem, size = 0x4, offset = 0x4, fixed_abs, tag = 'smem constant byte address 0x4 - core index']
  #allocation1 [shape = 'u32[144,128]{1,0:T(1,128)}', space=vmem, size = 0x12000, scoped, tag = 'internal scratch']
  %s0 = inlined_call_operand.vmem [shape: f32[64,12], index: 0, kind: input, shape index: {}]
  %s1 = inlined_call_operand.vmem [shape: f32[64,1], index: 1, kind: input, shape index: {}]
  %s2 = inlined_call_operand.vmem [shape: s32[64,1], index: 2, kind: input, shape index: {}]
  %s3 = inlined_call_operand.hbm [shape: bf16[12,128], index: 3, kind: input, shape index: {}]
  %s4 = inlined_call_operand.hbm [shape: f32[1,128], index: 4, kind: input, shape index: {}]
  %s5 = inlined_call_operand.hbm [shape: bf16[2,3,128,128], index: 5, kind: input, shape index: {}]
  %s6 = inlined_call_operand.hbm [shape: f32[2,1,128], index: 6, kind: input, shape index: {}]
  %s7 = inlined_call_operand.hbm [shape: bf16[2,128,128], index: 7, kind: input, shape index: {}]
  %s8 = inlined_call_operand.hbm [shape: f32[2,1,128], index: 8, kind: input, shape index: {}]
  %s9 = inlined_call_operand.hbm [shape: bf16[128,2048], index: 9, kind: input, shape index: {}]
  %s10 = inlined_call_operand.hbm [shape: bf16[25,256,128], index: 10, kind: input, shape index: {}]
  %s11 = inlined_call_operand.hbm [shape: f32[1,128], index: 11, kind: input, shape index: {}]
  %s12 = inlined_call_operand.hbm [shape: f32[64,128], index: 12, kind: output, shape index: {}]
  %s13 = sld [smem:[#allocation0]]
  $region94: #{tpu_custom_call.1} parent=0
    _
  %s15 = ssub.s32 1, %s13
  %s16 = scalar_select 0, %s15, %s13
  $region1: #{tpu_custom_call.1} parent=0
    #allocation2 [shape = 'u8[4096]{0}', space=vmem, size = 0x1000, scoped, tag = 'input window, operand 3, single buffered']
    #allocation3 [shape = 's32[1]{0}', space=sflag, size = 0x4, scoped, tag = 'scoped memory for tpu_custom_call.1']
    #allocation4 [shape = 's32[1]{0}', space=sflag, size = 0x4, scoped, tag = 'scoped memory for tpu_custom_call.1']
    #allocation5 [shape = 'u8[512]{0}', space=vmem, size = 0x400, scoped, tag = 'input window, operand 4, single buffered']
    #allocation6 [shape = 's32[1]{0}', space=sflag, size = 0x4, scoped, tag = 'scoped memory for tpu_custom_call.1']
    #allocation7 [shape = 'u8[196608]{0}', space=vmem, size = 0x30000, scoped, tag = 'input window, operand 5, single buffered']
    #allocation8 [shape = 'u8[1024]{0}', space=vmem, size = 0x400, scoped, tag = 'input window, operand 6, single buffered']
    #allocation9 [shape = 's32[1]{0}', space=sflag, size = 0x4, scoped, tag = 'scoped memory for tpu_custom_call.1']
    #allocation10 [shape = 'u8[65536]{0}', space=vmem, size = 0x10000, scoped, tag = 'input window, operand 7, single buffered']
    #allocation11 [shape = 'u8[1024]{0}', space=vmem, size = 0x400, scoped, tag = 'input window, operand 8, single buffered']
    #allocation12 [shape = 's32[1]{0}', space=sflag, size = 0x4, scoped, tag = 'scoped memory for tpu_custom_call.1']
    #allocation13 [shape = 'u8[524288]{0}', space=vmem, size = 0x80000, scoped, tag = 'input window, operand 9, single buffered']
    #allocation14 [shape = 'u8[1638400]{0}', space=vmem, size = 0x190000, scoped, tag = 'input window, operand 10, single buffered']
    #allocation15 [shape = 's32[1]{0}', space=sflag, size = 0x4, scoped, tag = 'scoped memory for tpu_custom_call.1']
    #allocation16 [shape = 'u8[512]{0}', space=vmem, size = 0x400, scoped, tag = 'input window, operand 11, single buffered']
    #allocation17 [shape = 'u8[32768]{0}', space=vmem, size = 0x8000, scoped, tag = 'output window, operand 0, single buffered']
    %17 = vsyncpa [#allocation3], 0
    %18 = vsyncpa [#allocation6], 0
    %19 = vsyncpa [#allocation9], 0
    %20 = vsyncpa [#allocation12], 0
    %21 = vsyncpa [#allocation15], 0
    %22 = vsyncpa [#allocation4], 0
    // Predicated region
    $region2: #{tpu_custom_call.1} parent=1 // pred_check
      _
    $region3: #{tpu_custom_call.1} parent=1 // pred_check_branch
      %24 = sbr.rel (0) target = $region5
    $region4: #{tpu_custom_call.1} parent=1 // pred_region
      _
    $region5: #{tpu_custom_call.1} parent=1 // pred_fallthru
      _
    // Predicated region
    $region6: #{tpu_custom_call.1} parent=1 // pred_check
      _
    $region7: #{tpu_custom_call.1} parent=1 // pred_check_branch
      %26 = sbr.rel (0) target = $region9
    $region8: #{tpu_custom_call.1} parent=1 // pred_region
      _
    $region9: #{tpu_custom_call.1} parent=1 // pred_fallthru
      _
    // Predicated region
    $region10: #{tpu_custom_call.1} parent=1 // pred_check
      _
    $region11: #{tpu_custom_call.1} parent=1 // pred_check_branch
      %28 = sbr.rel (0) target = $region13
    $region12: #{tpu_custom_call.1} parent=1 // pred_region
      _
    $region13: #{tpu_custom_call.1} parent=1 // pred_fallthru
      _
    // Predicated region
    $region14: #{tpu_custom_call.1} parent=1 // pred_check
      _
    $region15: #{tpu_custom_call.1} parent=1 // pred_check_branch
      %30 = sbr.rel (0) target = $region17
    $region16: #{tpu_custom_call.1} parent=1 // pred_region
      %s32 = ssub.s32 128, 128
      %33 = vsyncadd [#allocation3], %s32
      %s34 = sshll.u32 [#allocation2], 4
      %s35 = int_to_ptr.vmem [resolvable:$true] %s34
      %40 = dma.hbm_to_vmem [thread:$0]  %s3, 128, %s35, [#allocation3], 64, 64, 4
    $region17: #{tpu_custom_call.1} parent=1 // pred_fallthru
      _
    // Predicated region
    $region18: #{tpu_custom_call.1} parent=1 // pred_check
      _
    $region19: #{tpu_custom_call.1} parent=1 // pred_check_branch
      %42 = sbr.rel (0) target = $region21
    $region20: #{tpu_custom_call.1} parent=1 // pred_region
      %s44 = ssub.s32 16, 16
      %45 = vsyncadd [#allocation6], %s44
      %s47 = sshll.u32 [#allocation5], 4
      %s48 = int_to_ptr.vmem [resolvable:$true] %s47
      %50 = dma.hbm_to_vmem [thread:$0]  %s4, 16, %s48, [#allocation6]
    $region21: #{tpu_custom_call.1} parent=1 // pred_fallthru
      _
    // Predicated region
    $region22: #{tpu_custom_call.1} parent=1 // pred_check
      _
    $region23: #{tpu_custom_call.1} parent=1 // pred_check_branch
      %52 = sbr.rel (0) target = $region25
    $region24: #{tpu_custom_call.1} parent=1 // pred_region
      %s54 = ssub.s32 6144, 6144
      %55 = vsyncadd [#allocation6], %s54
      %s56 = sshll.u32 [#allocation7], 4
      %s57 = int_to_ptr.vmem [resolvable:$true] %s56
      %62 = dma.hbm_to_vmem [thread:$0]  %s5, 6144, %s57, [#allocation6], 64, 64, 4
    $region25: #{tpu_custom_call.1} parent=1 // pred_fallthru
      _
    // Predicated region
    $region26: #{tpu_custom_call.1} parent=1 // pred_check
      _
    $region27: #{tpu_custom_call.1} parent=1 // pred_check_branch
      %64 = sbr.rel (0) target = $region29
    $region28: #{tpu_custom_call.1} parent=1 // pred_region
      %s66 = ssub.s32 32, 32
      %67 = vsyncadd [#allocation9], %s66
      %s68 = sshll.u32 [#allocation8], 4
      %s69 = int_to_ptr.vmem [resolvable:$true] %s68
      %74 = dma.hbm_to_vmem [thread:$0]  %s6, 32, %s69, [#allocation9], 16, 16, 1
    $region29: #{tpu_custom_call.1} parent=1 // pred_fallthru
      _
    // Predicated region
    $region30: #{tpu_custom_call.1} parent=1 // pred_check
      _
    $region31: #{tpu_custom_call.1} parent=1 // pred_check_branch
      %76 = sbr.rel (0) target = $region33
    $region32: #{tpu_custom_call.1} parent=1 // pred_region
      %s78 = ssub.s32 2048, 2048
      %79 = vsyncadd [#allocation9], %s78
      %s80 = sshll.u32 [#allocation10], 4
      %s81 = int_to_ptr.vmem [resolvable:$true] %s80
      %86 = dma.hbm_to_vmem [thread:$0]  %s7, 2048, %s81, [#allocation9], 64, 64, 4
    $region33: #{tpu_custom_call.1} parent=1 // pred_fallthru
      _
    // Predicated region
    $region34: #{tpu_custom_call.1} parent=1 // pred_check
      _
    $region35: #{tpu_custom_call.1} parent=1 // pred_check_branch
      %88 = sbr.rel (0) target = $region37
    $region36: #{tpu_custom_call.1} parent=1 // pred_region
      %s90 = ssub.s32 32, 32
      %91 = vsyncadd [#allocation12], %s90
      %s92 = sshll.u32 [#allocation11], 4
      %s93 = int_to_ptr.vmem [resolvable:$true] %s92
      %98 = dma.hbm_to_vmem [thread:$0]  %s8, 32, %s93, [#allocation12], 16, 16, 1
    $region37: #{tpu_custom_call.1} parent=1 // pred_fallthru
      _
    // Predicated region
    $region38: #{tpu_custom_call.1} parent=1 // pred_check
      _
    $region39: #{tpu_custom_call.1} parent=1 // pred_check_branch
      %100 = sbr.rel (0) target = $region41
    $region40: #{tpu_custom_call.1} parent=1 // pred_region
      %s102 = ssub.s32 16384, 16384
      %103 = vsyncadd [#allocation12], %s102
      %s104 = sshll.u32 [#allocation13], 4
      %s105 = int_to_ptr.vmem [resolvable:$true] %s104
      %110 = dma.hbm_to_vmem [thread:$0]  %s9, 16384, %s105, [#allocation12], 1024, 1024, 64
    $region41: #{tpu_custom_call.1} parent=1 // pred_fallthru
      _
    // Predicated region
    $region42: #{tpu_custom_call.1} parent=1 // pred_check
      _
    $region43: #{tpu_custom_call.1} parent=1 // pred_check_branch
      %112 = sbr.rel (0) target = $region45
    $region44: #{tpu_custom_call.1} parent=1 // pred_region
      %s114 = ssub.s32 51200, 51200
      %115 = vsyncadd [#allocation15], %s114
      %s116 = sshll.u32 [#allocation14], 4
      %s117 = int_to_ptr.vmem [resolvable:$true] %s116
      %122 = dma.hbm_to_vmem [thread:$0]  %s10, 51200, %s117, [#allocation15], 64, 64, 4
    $region45: #{tpu_custom_call.1} parent=1 // pred_fallthru
      _
    // Predicated region
    $region46: #{tpu_custom_call.1} parent=1 // pred_check
      _
    $region47: #{tpu_custom_call.1} parent=1 // pred_check_branch
      %124 = sbr.rel (0) target = $region49
    $region48: #{tpu_custom_call.1} parent=1 // pred_region
      %s126 = ssub.s32 16, 16
      %127 = vsyncadd [#allocation15], %s126
      %s129 = sshll.u32 [#allocation16], 4
      %s130 = int_to_ptr.vmem [resolvable:$true] %s129
      %132 = dma.hbm_to_vmem [thread:$0]  %s11, 16, %s130, [#allocation15]
    $region49: #{tpu_custom_call.1} parent=1 // pred_fallthru
      _
    // Predicated region
    $region50: #{tpu_custom_call.1} parent=1 // pred_check
      _
    $region51: #{tpu_custom_call.1} parent=1 // pred_check_branch
      %134 = sbr.rel (0) target = $region53
    $region52: #{tpu_custom_call.1} parent=1 // pred_region
      %135 = dma.done [#allocation3], 128
    $region53: #{tpu_custom_call.1} parent=1 // pred_fallthru
      _
    // Predicated region
    $region54: #{tpu_custom_call.1} parent=1 // pred_check
      _
    $region55: #{tpu_custom_call.1} parent=1 // pred_check_branch
      %137 = sbr.rel (0) target = $region57
    $region56: #{tpu_custom_call.1} parent=1 // pred_region
      %138 = dma.done [#allocation6], 16
    $region57: #{tpu_custom_call.1} parent=1 // pred_fallthru
      _
    // Predicated region
    $region58: #{tpu_custom_call.1} parent=1 // pred_check
      _
    $region59: #{tpu_custom_call.1} parent=1 // pred_check_branch
      %140 = sbr.rel (0) target = $region61
    $region60: #{tpu_custom_call.1} parent=1 // pred_region
      %141 = dma.done [#allocation6], 6144
    $region61: #{tpu_custom_call.1} parent=1 // pred_fallthru
      _
    // Predicated region
    $region62: #{tpu_custom_call.1} parent=1 // pred_check
      _
    $region63: #{tpu_custom_call.1} parent=1 // pred_check_branch
      %143 = sbr.rel (0) target = $region65
    $region64: #{tpu_custom_call.1} parent=1 // pred_region
      %144 = dma.done [#allocation9], 32
    $region65: #{tpu_custom_call.1} parent=1 // pred_fallthru
      _
    // Predicated region
    $region66: #{tpu_custom_call.1} parent=1 // pred_check
      _
    $region67: #{tpu_custom_call.1} parent=1 // pred_check_branch
      %146 = sbr.rel (0) target = $region69
    $region68: #{tpu_custom_call.1} parent=1 // pred_region
      %147 = dma.done [#allocation9], 2048
    $region69: #{tpu_custom_call.1} parent=1 // pred_fallthru
      _
    // Predicated region
    $region70: #{tpu_custom_call.1} parent=1 // pred_check
      _
    $region71: #{tpu_custom_call.1} parent=1 // pred_check_branch
      %149 = sbr.rel (0) target = $region73
    $region72: #{tpu_custom_call.1} parent=1 // pred_region
      %150 = dma.done [#allocation12], 32
    $region73: #{tpu_custom_call.1} parent=1 // pred_fallthru
      _
    // Predicated region
    $region74: #{tpu_custom_call.1} parent=1 // pred_check
      _
    $region75: #{tpu_custom_call.1} parent=1 // pred_check_branch
      %152 = sbr.rel (0) target = $region77
    $region76: #{tpu_custom_call.1} parent=1 // pred_region
      %153 = dma.done [#allocation12], 16384
    $region77: #{tpu_custom_call.1} parent=1 // pred_fallthru
      _
    // Predicated region
    $region78: #{tpu_custom_call.1} parent=1 // pred_check
      _
    $region79: #{tpu_custom_call.1} parent=1 // pred_check_branch
      %155 = sbr.rel (0) target = $region81
    $region80: #{tpu_custom_call.1} parent=1 // pred_region
      %156 = dma.done [#allocation15], 51200
    $region81: #{tpu_custom_call.1} parent=1 // pred_fallthru
      _
    // Predicated region
    $region82: #{tpu_custom_call.1} parent=1 // pred_check
      _
    $region83: #{tpu_custom_call.1} parent=1 // pred_check_branch
      %158 = sbr.rel (0) target = $region85
    $region84: #{tpu_custom_call.1} parent=1 // pred_region
      %159 = dma.done [#allocation15], 16
    $region85: #{tpu_custom_call.1} parent=1 // pred_fallthru
      _
    %v161 = vld [vmem:[%s1] sm:$0xff]
    %v162 = vld [vmem:[%s1 + $0x8] sm:$0xff]
    %v163 = vld [vmem:[%s1 + $0x10] sm:$0xff]
    %v164 = vld [vmem:[%s1 + $0x18] sm:$0xff]
    %v165 = vld [vmem:[%s1 + $0x20] sm:$0xff]
    %v166 = vld [vmem:[%s1 + $0x28] sm:$0xff]
    %v167 = vld [vmem:[%s1 + $0x30] sm:$0xff]
    %v168 = vld [vmem:[%s1 + $0x38] sm:$0xff]
    %v169 = vld [vmem:[%s2] sm:$0xff]
    %v170 = vld [vmem:[%s2 + $0x8] sm:$0xff]
    %v171 = vld [vmem:[%s2 + $0x10] sm:$0xff]
    %v172 = vld [vmem:[%s2 + $0x18] sm:$0xff]
    %v173 = vld [vmem:[%s2 + $0x20] sm:$0xff]
    %v174 = vld [vmem:[%s2 + $0x28] sm:$0xff]
    %v175 = vld [vmem:[%s2 + $0x30] sm:$0xff]
    %v176 = vld [vmem:[%s2 + $0x38] sm:$0xff]
    %v177 = vld [vmem:[%s0] sm:$0xff]
    %v178 = vld [vmem:[%s0 + $0x8] sm:$0xff]
    %v179 = vld [vmem:[%s0 + $0x10] sm:$0xff]
    %v180 = vld [vmem:[%s0 + $0x18] sm:$0xff]
    %v181 = vld [vmem:[%s0 + $0x20] sm:$0xff]
    %v182 = vld [vmem:[%s0 + $0x28] sm:$0xff]
    %v183 = vld [vmem:[%s0 + $0x30] sm:$0xff]
    %v184 = vld [vmem:[%s0 + $0x38] sm:$0xff]
    %v185 = vpack.c.bf16 %v178, %v177
    %v186 = vpack.c.bf16 %v180, %v179
    %v187 = vpack.c.bf16 %v182, %v181
    %v188 = vpack.c.bf16 %v184, %v183
    %v189 = vld [vmem:[#allocation2] sm:$0xf]
    %v190 = vld [vmem:[#allocation2 + $0x4] sm:$0x3]
    %v191 = vld [vmem:[#allocation5] sm:$0x1]
    %v193 = vlaneseq
    %v194 = vshrl.u32 %v193, 7
    %v195 = vsub.s32 0, %v194
    %v196 = vrot.slane %v191, %v195
    %v200 = vunpack.c.l.b16 %v189
    %v201 = vunpack.c.l.b16 %v190
    %v202 = vpack.c.b16 %v201, %v200
    %vm203 = vcmask 97280
    %v205 = vsel %vm203, %v185, 0
    %v208 = vsel %vm203, %v186, 0
    %v211 = vsel %vm203, %v187, 0
    %v214 = vsel %vm203, %v188, 0
    %vm216 = vcmask 1045504
    %v218 = vsel %vm216, %v202, 0
    %220 = vmatprep.subr.bf16.mxu0 0
    %221 = vmatpush1.bf16.msra.mxu0 0
    %222 = vmatprep.subr.bf16.mxu0 0
    %223 = vmatpush1.bf16.msra.mxu0 0
    %224 = vmatprep.subr.bf16.mxu0 0
    %225 = vmatpush1.bf16.msra.mxu0 0
    %226 = vmatprep.subr.bf16.mxu0 0
    %227 = vmatpush1.bf16.msra.mxu0 0
    %228 = vmatprep.subr.bf16.mxu0 0
    %229 = vmatpush1.bf16.msra.mxu0 0
    %230 = vmatprep.subr.bf16.mxu0 0
    %231 = vmatpush1.bf16.msra.mxu0 0
    %232 = vmatprep.subr.bf16.mxu0 0
    %233 = vmatpush1.bf16.msra.mxu0 0
    %234 = vmatprep.subr.bf16.mxu0 0
    %235 = vmatpush1.bf16.msra.mxu0 %v218
    %236 = vmatprep.subr.bf16.mxu0 0
    %237 = vmatpush2.bf16.msra.mxu0 0
    %238 = vmatprep.subr.bf16.mxu0 0
    %239 = vmatpush2.bf16.msra.mxu0 0
    %240 = vmatprep.subr.bf16.mxu0 0
    %241 = vmatpush2.bf16.msra.mxu0 0
    %242 = vmatprep.subr.bf16.mxu0 0
    %243 = vmatpush2.bf16.msra.mxu0 0
    %244 = vmatprep.subr.bf16.mxu0 0
    %245 = vmatpush2.bf16.msra.mxu0 0
    %246 = vmatprep.subr.bf16.mxu0 0
    %247 = vmatpush2.bf16.msra.mxu0 0
    %248 = vmatprep.subr.bf16.mxu0 0
    %249 = vmatpush2.bf16.msra.mxu0 0
    %250 = vmatprep.subr.bf16.mxu0 0
    %251 = vmatpush2.bf16.msra.mxu0 0
    %252 = vmatprep.mubr.bf16.mxu0 0
    %253 = vmatmul.mubr.bf16.gmra.mxu0 %v205
    %v254 = vpop.f32.mrf.mxu0
    %v255 = vadd.f32 %v196, %v254
    %v256 = vpop.f32.mrf.mxu0
    %v257 = vpop.f32.mrf.mxu0
    %v258 = vadd.f32 %v196, %v257
    %v259 = vpop.f32.mrf.mxu0
    %260 = vmatprep.mubr.bf16.mxu0 0
    %261 = vmatmul.mubr.bf16.gmra.mxu0 %v208
    %v262 = vpop.f32.mrf.mxu0
    %v263 = vadd.f32 %v196, %v262
    %v264 = vpop.f32.mrf.mxu0
    %v265 = vpop.f32.mrf.mxu0
    %v266 = vadd.f32 %v196, %v265
    %v267 = vpop.f32.mrf.mxu0
    %268 = vmatprep.mubr.bf16.mxu0 0
    %269 = vmatmul.mubr.bf16.gmra.mxu0 %v211
    %v270 = vpop.f32.mrf.mxu0
    %v271 = vadd.f32 %v196, %v270
    %v272 = vpop.f32.mrf.mxu0
    %v273 = vpop.f32.mrf.mxu0
    %v274 = vadd.f32 %v196, %v273
    %v275 = vpop.f32.mrf.mxu0
    %276 = vmatprep.mubr.bf16.mxu0 0
    %277 = vmatmul.mubr.bf16.gmra.mxu0 %v214
    %v278 = vpop.f32.mrf.mxu0
    %v279 = vadd.f32 %v196, %v278
    %v280 = vpop.f32.mrf.mxu0
    %v281 = vpop.f32.mrf.mxu0
    %v282 = vadd.f32 %v196, %v281
    %v283 = vpop.f32.mrf.mxu0
    %284 = vdwg.mxu0
    %vm285 = vcmp.ge.s32.totalorder %v169, 1
    %vm286 = vcmp.ge.s32.totalorder %v170, 1
    %vm287 = vcmp.ge.s32.totalorder %v171, 1
    %vm288 = vcmp.ge.s32.totalorder %v172, 1
    %vm289 = vcmp.ge.s32.totalorder %v173, 1
    %vm290 = vcmp.ge.s32.totalorder %v174, 1
    %vm291 = vcmp.ge.s32.totalorder %v175, 1
    %vm292 = vcmp.ge.s32.totalorder %v176, 1
    %v293 = vrot.slane %v255, 7
    %v294 = vrot.slane %v258, 7
    %v295 = vrot.slane %v263, 7
    %v296 = vrot.slane %v266, 7
    %v297 = vrot.slane %v271, 7
    %v298 = vrot.slane %v274, 7
    %v299 = vrot.slane %v279, 7
    %v300 = vrot.slane %v282, 7
    %v301 = vlaneseq
    %v302 = vshrl.u32 %v301, 7
    %vm303 = vcmp.lt.s32.totalorder %v302, 1
    %v304 = vsel %vm303, %v299, %v300
    %v305 = vsel %vm303, %v298, %v299
    %v306 = vsel %vm303, %v297, %v298
    %v307 = vsel %vm303, %v296, %v297
    %v308 = vsel %vm303, %v295, %v296
    %v309 = vsel %vm303, %v294, %v295
    %v310 = vsel %vm303, %v293, %v294
    %v311 = vsel %vm303, %v300, %v293
    %v312 = vsel %vm285, 1, 0
    %v313 = vsel %vm286, 1, 0
    %v314 = vsel %vm287, 1, 0
    %v315 = vsel %vm288, 1, 0
    %v316 = vsel %vm289, 1, 0
    %v317 = vsel %vm290, 1, 0
    %v318 = vsel %vm291, 1, 0
    %v319 = vsel %vm292, 1, 0
    %320 = vset.pattern.permute.xlu0 0
    %321 = vperm.xlu0 %320, %v312
    %v322 = vpop.permute.xlu0 %321
    %323 = vset.pattern.permute.xlu0 0
    %324 = vperm.xlu0 %323, %v313
    %v325 = vpop.permute.xlu0 %324
    %326 = vset.pattern.permute.xlu0 0
    %327 = vperm.xlu0 %326, %v314
    %v328 = vpop.permute.xlu0 %327
    %329 = vset.pattern.permute.xlu0 0
    %330 = vperm.xlu0 %329, %v315
    %v331 = vpop.permute.xlu0 %330
    %332 = vset.pattern.permute.xlu0 0
    %333 = vperm.xlu0 %332, %v316
    %v334 = vpop.permute.xlu0 %333
    %335 = vset.pattern.permute.xlu0 0
    %336 = vperm.xlu0 %335, %v317
    %v337 = vpop.permute.xlu0 %336
    %338 = vset.pattern.permute.xlu0 0
    %339 = vperm.xlu0 %338, %v318
    %v340 = vpop.permute.xlu0 %339
    %341 = vset.pattern.permute.xlu0 0
    %342 = vperm.xlu0 %341, %v319
    %v343 = vpop.permute.xlu0 %342
    %vm344 = vcmp.eq.s32.totalorder %v322, 1
    %vm345 = vcmp.eq.s32.totalorder %v325, 1
    %vm346 = vcmp.eq.s32.totalorder %v328, 1
    %vm347 = vcmp.eq.s32.totalorder %v331, 1
    %vm348 = vcmp.eq.s32.totalorder %v334, 1
    %vm349 = vcmp.eq.s32.totalorder %v337, 1
    %vm350 = vcmp.eq.s32.totalorder %v340, 1
    %vm351 = vcmp.eq.s32.totalorder %v343, 1
    %v352 = vsel %vm344, %v311, 0.0
    %v353 = vsel %vm345, %v310, 0.0
    %v354 = vsel %vm346, %v309, 0.0
    %v355 = vsel %vm347, %v308, 0.0
    %v356 = vsel %vm348, %v307, 0.0
    %v357 = vsel %vm349, %v306, 0.0
    %v358 = vsel %vm350, %v305, 0.0
    %v359 = vsel %vm351, %v304, 0.0
    %vm360 = vcmp.lt.s32.totalorder %v169, 31
    %vm361 = vcmp.lt.s32.totalorder %v170, 31
    %vm362 = vcmp.lt.s32.totalorder %v171, 31
    %vm363 = vcmp.lt.s32.totalorder %v172, 31
    %vm364 = vcmp.lt.s32.totalorder %v173, 31
    %vm365 = vcmp.lt.s32.totalorder %v174, 31
    %vm366 = vcmp.lt.s32.totalorder %v175, 31
    %vm367 = vcmp.lt.s32.totalorder %v176, 31
    %v368 = vrot.slane %v255, 1
    %v369 = vrot.slane %v258, 1
    %v370 = vrot.slane %v263, 1
    %v371 = vrot.slane %v266, 1
    %v372 = vrot.slane %v271, 1
    %v373 = vrot.slane %v274, 1
    %v374 = vrot.slane %v279, 1
    %v375 = vrot.slane %v282, 1
    %vm376 = vcmp.lt.s32.totalorder %v302, 7
    %v377 = vsel %vm376, %v374, %v375
    %v378 = vsel %vm376, %v373, %v374
    %v379 = vsel %vm376, %v372, %v373
    %v380 = vsel %vm376, %v371, %v372
    %v381 = vsel %vm376, %v370, %v371
    %v382 = vsel %vm376, %v369, %v370
    %v383 = vsel %vm376, %v368, %v369
    %v384 = vsel %vm376, %v375, %v368
    %v385 = vsel %vm360, 1, 0
    %v386 = vsel %vm361, 1, 0
    %v387 = vsel %vm362, 1, 0
    %v388 = vsel %vm363, 1, 0
    %v389 = vsel %vm364, 1, 0
    %v390 = vsel %vm365, 1, 0
    %v391 = vsel %vm366, 1, 0
    %v392 = vsel %vm367, 1, 0
    %393 = vset.pattern.permute.xlu0 0
    %394 = vperm.xlu0 %393, %v385
    %v395 = vpop.permute.xlu0 %394
    %396 = vset.pattern.permute.xlu0 0
    %397 = vperm.xlu0 %396, %v386
    %v398 = vpop.permute.xlu0 %397
    %399 = vset.pattern.permute.xlu0 0
    %400 = vperm.xlu0 %399, %v387
    %v401 = vpop.permute.xlu0 %400
    %402 = vset.pattern.permute.xlu0 0
    %403 = vperm.xlu0 %402, %v388
    %v404 = vpop.permute.xlu0 %403
    %405 = vset.pattern.permute.xlu0 0
    %406 = vperm.xlu0 %405, %v389
    %v407 = vpop.permute.xlu0 %406
    %408 = vset.pattern.permute.xlu0 0
    %409 = vperm.xlu0 %408, %v390
    %v410 = vpop.permute.xlu0 %409
    %411 = vset.pattern.permute.xlu0 0
    %412 = vperm.xlu0 %411, %v391
    %v413 = vpop.permute.xlu0 %412
    %414 = vset.pattern.permute.xlu0 0
    %415 = vperm.xlu0 %414, %v392
    %v416 = vpop.permute.xlu0 %415
    %vm417 = vcmp.eq.s32.totalorder %v395, 1
    %vm418 = vcmp.eq.s32.totalorder %v398, 1
    %vm419 = vcmp.eq.s32.totalorder %v401, 1
    %vm420 = vcmp.eq.s32.totalorder %v404, 1
    %vm421 = vcmp.eq.s32.totalorder %v407, 1
    %vm422 = vcmp.eq.s32.totalorder %v410, 1
    %vm423 = vcmp.eq.s32.totalorder %v413, 1
    %vm424 = vcmp.eq.s32.totalorder %v416, 1
    %v425 = vsel %vm417, %v383, 0.0
    %v426 = vsel %vm418, %v382, 0.0
    %v427 = vsel %vm419, %v381, 0.0
    %v428 = vsel %vm420, %v380, 0.0
    %v429 = vsel %vm421, %v379, 0.0
    %v430 = vsel %vm422, %v378, 0.0
    %v431 = vsel %vm423, %v377, 0.0
    %v432 = vsel %vm424, %v384, 0.0
    %v433 = vpack.c.bf16 %v353, %v352
    %v434 = vpack.c.bf16 %v355, %v354
    %v435 = vpack.c.bf16 %v357, %v356
    %v436 = vpack.c.bf16 %v359, %v358
    %v437 = vld [vmem:[#allocation7] sm:$0xf]
    %v438 = vld [vmem:[#allocation7 + $0x4] sm:$0xf]
    %v439 = vld [vmem:[#allocation7 + $0x8] sm:$0xf]
    %v440 = vld [vmem:[#allocation7 + $0xc] sm:$0xf]
    %v441 = vld [vmem:[#allocation7 + $0x10] sm:$0xf]
    %v442 = vld [vmem:[#allocation7 + $0x14] sm:$0xf]
    %v443 = vld [vmem:[#allocation7 + $0x18] sm:$0xf]
    %v444 = vld [vmem:[#allocation7 + $0x1c] sm:$0xf]
    %v445 = vld [vmem:[#allocation7 + $0x20] sm:$0xf]
    %v446 = vld [vmem:[#allocation7 + $0x24] sm:$0xf]
    %v447 = vld [vmem:[#allocation7 + $0x28] sm:$0xf]
    %v448 = vld [vmem:[#allocation7 + $0x2c] sm:$0xf]
    %v449 = vld [vmem:[#allocation7 + $0x30] sm:$0xf]
    %v450 = vld [vmem:[#allocation7 + $0x34] sm:$0xf]
    %v451 = vld [vmem:[#allocation7 + $0x38] sm:$0xf]
    %v452 = vld [vmem:[#allocation7 + $0x3c] sm:$0xf]
    %v453 = vpack.c.bf16 %v258, %v255
    %v454 = vpack.c.bf16 %v266, %v263
    %v455 = vpack.c.bf16 %v274, %v271
    %v456 = vpack.c.bf16 %v282, %v279
    %s457 = scalar_lea.vmem [#allocation7], 64
    %v458 = vld [vmem:[%s457] sm:$0xf]
    %v459 = vld [vmem:[%s457 + $0x4] sm:$0xf]
    %v460 = vld [vmem:[%s457 + $0x8] sm:$0xf]
    %v461 = vld [vmem:[%s457 + $0xc] sm:$0xf]
    %v462 = vld [vmem:[%s457 + $0x10] sm:$0xf]
    %v463 = vld [vmem:[%s457 + $0x14] sm:$0xf]
    %v464 = vld [vmem:[%s457 + $0x18] sm:$0xf]
    %v465 = vld [vmem:[%s457 + $0x1c] sm:$0xf]
    %v466 = vld [vmem:[%s457 + $0x20] sm:$0xf]
    %v467 = vld [vmem:[%s457 + $0x24] sm:$0xf]
    %v468 = vld [vmem:[%s457 + $0x28] sm:$0xf]
    %v469 = vld [vmem:[%s457 + $0x2c] sm:$0xf]
    %v470 = vld [vmem:[%s457 + $0x30] sm:$0xf]
    %v471 = vld [vmem:[%s457 + $0x34] sm:$0xf]
    %v472 = vld [vmem:[%s457 + $0x38] sm:$0xf]
    %v473 = vld [vmem:[%s457 + $0x3c] sm:$0xf]
    %v490 = vunpack.c.l.b16 %v458
    %v491 = vunpack.c.l.b16 %v459
    %v492 = vunpack.c.l.b16 %v460
    %v493 = vunpack.c.l.b16 %v461
    %v494 = vunpack.c.l.b16 %v462
    %v495 = vunpack.c.l.b16 %v463
    %v496 = vunpack.c.l.b16 %v464
    %v497 = vunpack.c.l.b16 %v465
    %v498 = vunpack.c.l.b16 %v466
    %v499 = vunpack.c.l.b16 %v467
    %v500 = vunpack.c.l.b16 %v468
    %v501 = vunpack.c.l.b16 %v469
    %v502 = vunpack.c.l.b16 %v470
    %v503 = vunpack.c.l.b16 %v471
    %v504 = vunpack.c.l.b16 %v472
    %v505 = vunpack.c.l.b16 %v473
    %v506 = vpack.c.b16 %v491, %v490
    %v507 = vpack.c.b16 %v493, %v492
    %v508 = vpack.c.b16 %v495, %v494
    %v509 = vpack.c.b16 %v497, %v496
    %v510 = vpack.c.b16 %v499, %v498
    %v511 = vpack.c.b16 %v501, %v500
    %v512 = vpack.c.b16 %v503, %v502
    %v513 = vpack.c.b16 %v505, %v504
    %522 = vmatprep.subr.bf16.mxu0 0
    %523 = vmatpush1.bf16.msra.mxu0 %v513
    %524 = vmatprep.subr.bf16.mxu0 0
    %525 = vmatpush1.bf16.msra.mxu0 %v512
    %526 = vmatprep.subr.bf16.mxu0 0
    %527 = vmatpush1.bf16.msra.mxu0 %v511
    %528 = vmatprep.subr.bf16.mxu0 0
    %529 = vmatpush1.bf16.msra.mxu0 %v510
    %530 = vmatprep.subr.bf16.mxu0 0
    %531 = vmatpush1.bf16.msra.mxu0 %v509
    %532 = vmatprep.subr.bf16.mxu0 0
    %533 = vmatpush1.bf16.msra.mxu0 %v508
    %534 = vmatprep.subr.bf16.mxu0 0
    %535 = vmatpush1.bf16.msra.mxu0 %v507
    %536 = vmatprep.subr.bf16.mxu0 0
    %537 = vmatpush1.bf16.msra.mxu0 %v506
    %538 = vmatprep.subr.bf16.mxu0 0
    %539 = vmatpush2.bf16.msra.mxu0 0
    %540 = vmatprep.subr.bf16.mxu0 0
    %541 = vmatpush2.bf16.msra.mxu0 0
    %542 = vmatprep.subr.bf16.mxu0 0
    %543 = vmatpush2.bf16.msra.mxu0 0
    %544 = vmatprep.subr.bf16.mxu0 0
    %545 = vmatpush2.bf16.msra.mxu0 0
    %546 = vmatprep.subr.bf16.mxu0 0
    %547 = vmatpush2.bf16.msra.mxu0 0
    %548 = vmatprep.subr.bf16.mxu0 0
    %549 = vmatpush2.bf16.msra.mxu0 0
    %550 = vmatprep.subr.bf16.mxu0 0
    %551 = vmatpush2.bf16.msra.mxu0 0
    %552 = vmatprep.subr.bf16.mxu0 0
    %553 = vmatpush2.bf16.msra.mxu0 0
    %554 = vmatprep.mubr.bf16.mxu0 0
    %555 = vmatmul.mubr.bf16.gmra.mxu0 %v453
    %v556 = vpop.f32.mrf.mxu0
    %v557 = vadd.f32 0.0, %v556
    %v558 = vpop.f32.mrf.mxu0
    %v559 = vpop.f32.mrf.mxu0
    %v560 = vadd.f32 0.0, %v559
    %v561 = vpop.f32.mrf.mxu0
    %562 = vmatprep.mubr.bf16.mxu0 0
    %563 = vmatmul.mubr.bf16.gmra.mxu0 %v454
    %v564 = vpop.f32.mrf.mxu0
    %v565 = vadd.f32 0.0, %v564
    %v566 = vpop.f32.mrf.mxu0
    %v567 = vpop.f32.mrf.mxu0
    %v568 = vadd.f32 0.0, %v567
    %v569 = vpop.f32.mrf.mxu0
    %570 = vmatprep.mubr.bf16.mxu0 0
    %571 = vmatmul.mubr.bf16.gmra.mxu0 %v455
    %v572 = vpop.f32.mrf.mxu0
    %v573 = vadd.f32 0.0, %v572
    %v574 = vpop.f32.mrf.mxu0
    %v575 = vpop.f32.mrf.mxu0
    %v576 = vadd.f32 0.0, %v575
    %v577 = vpop.f32.mrf.mxu0
    %578 = vmatprep.mubr.bf16.mxu0 0
    %579 = vmatmul.mubr.bf16.gmra.mxu0 %v456
    %v580 = vpop.f32.mrf.mxu0
    %v581 = vadd.f32 0.0, %v580
    %v582 = vpop.f32.mrf.mxu0
    %v583 = vpop.f32.mrf.mxu0
    %v584 = vadd.f32 0.0, %v583
    %v585 = vpop.f32.mrf.mxu0
    %586 = vdwg.mxu0
    %v603 = vunpack.c.l.b16 %v437
    %v604 = vunpack.c.l.b16 %v438
    %v605 = vunpack.c.l.b16 %v439
    %v606 = vunpack.c.l.b16 %v440
    %v607 = vunpack.c.l.b16 %v441
    %v608 = vunpack.c.l.b16 %v442
    %v609 = vunpack.c.l.b16 %v443
    %v610 = vunpack.c.l.b16 %v444
    %v611 = vunpack.c.l.b16 %v445
    %v612 = vunpack.c.l.b16 %v446
    %v613 = vunpack.c.l.b16 %v447
    %v614 = vunpack.c.l.b16 %v448
    %v615 = vunpack.c.l.b16 %v449
    %v616 = vunpack.c.l.b16 %v450
    %v617 = vunpack.c.l.b16 %v451
    %v618 = vunpack.c.l.b16 %v452
    %v619 = vpack.c.b16 %v604, %v603
    %v620 = vpack.c.b16 %v606, %v605
    %v621 = vpack.c.b16 %v608, %v607
    %v622 = vpack.c.b16 %v610, %v609
    %v623 = vpack.c.b16 %v612, %v611
    %v624 = vpack.c.b16 %v614, %v613
    %v625 = vpack.c.b16 %v616, %v615
    %v626 = vpack.c.b16 %v618, %v617
    %635 = vmatprep.subr.bf16.mxu0 0
    %636 = vmatpush1.bf16.msra.mxu0 %v626
    %637 = vmatprep.subr.bf16.mxu0 0
    %638 = vmatpush1.bf16.msra.mxu0 %v625
    %639 = vmatprep.subr.bf16.mxu0 0
    %640 = vmatpush1.bf16.msra.mxu0 %v624
    %641 = vmatprep.subr.bf16.mxu0 0
    %642 = vmatpush1.bf16.msra.mxu0 %v623
    %643 = vmatprep.subr.bf16.mxu0 0
    %644 = vmatpush1.bf16.msra.mxu0 %v622
    %645 = vmatprep.subr.bf16.mxu0 0
    %646 = vmatpush1.bf16.msra.mxu0 %v621
    %647 = vmatprep.subr.bf16.mxu0 0
    %648 = vmatpush1.bf16.msra.mxu0 %v620
    %649 = vmatprep.subr.bf16.mxu0 0
    %650 = vmatpush1.bf16.msra.mxu0 %v619
    %651 = vmatprep.subr.bf16.mxu0 0
    %652 = vmatpush2.bf16.msra.mxu0 0
    %653 = vmatprep.subr.bf16.mxu0 0
    %654 = vmatpush2.bf16.msra.mxu0 0
    %655 = vmatprep.subr.bf16.mxu0 0
    %656 = vmatpush2.bf16.msra.mxu0 0
    %657 = vmatprep.subr.bf16.mxu0 0
    %658 = vmatpush2.bf16.msra.mxu0 0
    %659 = vmatprep.subr.bf16.mxu0 0
    %660 = vmatpush2.bf16.msra.mxu0 0
    %661 = vmatprep.subr.bf16.mxu0 0
    %662 = vmatpush2.bf16.msra.mxu0 0
    %663 = vmatprep.subr.bf16.mxu0 0
    %664 = vmatpush2.bf16.msra.mxu0 0
    %665 = vmatprep.subr.bf16.mxu0 0
    %666 = vmatpush2.bf16.msra.mxu0 0
    %667 = vmatprep.mubr.bf16.mxu0 0
    %668 = vmatmul.mubr.bf16.gmra.mxu0 %v433
    %v669 = vpop.f32.mrf.mxu0
    %v670 = vadd.f32 %v557, %v669
    %v671 = vpop.f32.mrf.mxu0
    %v672 = vpop.f32.mrf.mxu0
    %v673 = vadd.f32 %v560, %v672
    %v674 = vpop.f32.mrf.mxu0
    %675 = vmatprep.mubr.bf16.mxu0 0
    %676 = vmatmul.mubr.bf16.gmra.mxu0 %v434
    %v677 = vpop.f32.mrf.mxu0
    %v678 = vadd.f32 %v565, %v677
    %v679 = vpop.f32.mrf.mxu0
    %v680 = vpop.f32.mrf.mxu0
    %v681 = vadd.f32 %v568, %v680
    %v682 = vpop.f32.mrf.mxu0
    %683 = vmatprep.mubr.bf16.mxu0 0
    %684 = vmatmul.mubr.bf16.gmra.mxu0 %v435
    %v685 = vpop.f32.mrf.mxu0
    %v686 = vadd.f32 %v573, %v685
    %v687 = vpop.f32.mrf.mxu0
    %v688 = vpop.f32.mrf.mxu0
    %v689 = vadd.f32 %v576, %v688
    %v690 = vpop.f32.mrf.mxu0
    %691 = vmatprep.mubr.bf16.mxu0 0
    %692 = vmatmul.mubr.bf16.gmra.mxu0 %v436
    %v693 = vpop.f32.mrf.mxu0
    %v694 = vadd.f32 %v581, %v693
    %v695 = vpop.f32.mrf.mxu0
    %v696 = vpop.f32.mrf.mxu0
    %v697 = vadd.f32 %v584, %v696
    %v698 = vpop.f32.mrf.mxu0
    %699 = vdwg.mxu0
    %v700 = vpack.c.bf16 %v426, %v425
    %v701 = vpack.c.bf16 %v428, %v427
    %v702 = vpack.c.bf16 %v430, %v429
    %v703 = vpack.c.bf16 %v432, %v431
    %s704 = scalar_lea.vmem [#allocation7], 128
    %v705 = vld [vmem:[%s704] sm:$0xf]
    %v706 = vld [vmem:[%s704 + $0x4] sm:$0xf]
    %v707 = vld [vmem:[%s704 + $0x8] sm:$0xf]
    %v708 = vld [vmem:[%s704 + $0xc] sm:$0xf]
    %v709 = vld [vmem:[%s704 + $0x10] sm:$0xf]
    %v710 = vld [vmem:[%s704 + $0x14] sm:$0xf]
    %v711 = vld [vmem:[%s704 + $0x18] sm:$0xf]
    %v712 = vld [vmem:[%s704 + $0x1c] sm:$0xf]
    %v713 = vld [vmem:[%s704 + $0x20] sm:$0xf]
    %v714 = vld [vmem:[%s704 + $0x24] sm:$0xf]
    %v715 = vld [vmem:[%s704 + $0x28] sm:$0xf]
    %v716 = vld [vmem:[%s704 + $0x2c] sm:$0xf]
    %v717 = vld [vmem:[%s704 + $0x30] sm:$0xf]
    %v718 = vld [vmem:[%s704 + $0x34] sm:$0xf]
    %v719 = vld [vmem:[%s704 + $0x38] sm:$0xf]
    %v720 = vld [vmem:[%s704 + $0x3c] sm:$0xf]
    %v737 = vunpack.c.l.b16 %v705
    %v738 = vunpack.c.l.b16 %v706
    %v739 = vunpack.c.l.b16 %v707
    %v740 = vunpack.c.l.b16 %v708
    %v741 = vunpack.c.l.b16 %v709
    %v742 = vunpack.c.l.b16 %v710
    %v743 = vunpack.c.l.b16 %v711
    %v744 = vunpack.c.l.b16 %v712
    %v745 = vunpack.c.l.b16 %v713
    %v746 = vunpack.c.l.b16 %v714
    %v747 = vunpack.c.l.b16 %v715
    %v748 = vunpack.c.l.b16 %v716
    %v749 = vunpack.c.l.b16 %v717
    %v750 = vunpack.c.l.b16 %v718
    %v751 = vunpack.c.l.b16 %v719
    %v752 = vunpack.c.l.b16 %v720
    %v753 = vpack.c.b16 %v738, %v737
    %v754 = vpack.c.b16 %v740, %v739
    %v755 = vpack.c.b16 %v742, %v741
    %v756 = vpack.c.b16 %v744, %v743
    %v757 = vpack.c.b16 %v746, %v745
    %v758 = vpack.c.b16 %v748, %v747
    %v759 = vpack.c.b16 %v750, %v749
    %v760 = vpack.c.b16 %v752, %v751
    %769 = vmatprep.subr.bf16.mxu0 0
    %770 = vmatpush1.bf16.msra.mxu0 %v760
    %771 = vmatprep.subr.bf16.mxu0 0
    %772 = vmatpush1.bf16.msra.mxu0 %v759
    %773 = vmatprep.subr.bf16.mxu0 0
    %774 = vmatpush1.bf16.msra.mxu0 %v758
    %775 = vmatprep.subr.bf16.mxu0 0
    %776 = vmatpush1.bf16.msra.mxu0 %v757
    %777 = vmatprep.subr.bf16.mxu0 0
    %778 = vmatpush1.bf16.msra.mxu0 %v756
    %779 = vmatprep.subr.bf16.mxu0 0
    %780 = vmatpush1.bf16.msra.mxu0 %v755
    %781 = vmatprep.subr.bf16.mxu0 0
    %782 = vmatpush1.bf16.msra.mxu0 %v754
    %783 = vmatprep.subr.bf16.mxu0 0
    %784 = vmatpush1.bf16.msra.mxu0 %v753
    %785 = vmatprep.subr.bf16.mxu0 0
    %786 = vmatpush2.bf16.msra.mxu0 0
    %787 = vmatprep.subr.bf16.mxu0 0
    %788 = vmatpush2.bf16.msra.mxu0 0
    %789 = vmatprep.subr.bf16.mxu0 0
    %790 = vmatpush2.bf16.msra.mxu0 0
    %791 = vmatprep.subr.bf16.mxu0 0
    %792 = vmatpush2.bf16.msra.mxu0 0
    %793 = vmatprep.subr.bf16.mxu0 0
    %794 = vmatpush2.bf16.msra.mxu0 0
    %795 = vmatprep.subr.bf16.mxu0 0
    %796 = vmatpush2.bf16.msra.mxu0 0
    %797 = vmatprep.subr.bf16.mxu0 0
    %798 = vmatpush2.bf16.msra.mxu0 0
    %799 = vmatprep.subr.bf16.mxu0 0
    %800 = vmatpush2.bf16.msra.mxu0 0
    %801 = vmatprep.mubr.bf16.mxu0 0
    %802 = vmatmul.mubr.bf16.gmra.mxu0 %v700
    %v803 = vpop.f32.mrf.mxu0
    %v804 = vadd.f32 0.0, %v803
    %v805 = vpop.f32.mrf.mxu0
    %v806 = vpop.f32.mrf.mxu0
    %v807 = vadd.f32 0.0, %v806
    %v808 = vpop.f32.mrf.mxu0
    %809 = vmatprep.mubr.bf16.mxu0 0
    %810 = vmatmul.mubr.bf16.gmra.mxu0 %v701
    %v811 = vpop.f32.mrf.mxu0
    %v812 = vadd.f32 0.0, %v811
    %v813 = vpop.f32.mrf.mxu0
    %v814 = vpop.f32.mrf.mxu0
    %v815 = vadd.f32 0.0, %v814
    %v816 = vpop.f32.mrf.mxu0
    %817 = vmatprep.mubr.bf16.mxu0 0
    %818 = vmatmul.mubr.bf16.gmra.mxu0 %v702
    %v819 = vpop.f32.mrf.mxu0
    %v820 = vadd.f32 0.0, %v819
    %v821 = vpop.f32.mrf.mxu0
    %v822 = vpop.f32.mrf.mxu0
    %v823 = vadd.f32 0.0, %v822
    %v824 = vpop.f32.mrf.mxu0
    %825 = vmatprep.mubr.bf16.mxu0 0
    %826 = vmatmul.mubr.bf16.gmra.mxu0 %v703
    %v827 = vpop.f32.mrf.mxu0
    %v828 = vadd.f32 0.0, %v827
    %v829 = vpop.f32.mrf.mxu0
    %v830 = vpop.f32.mrf.mxu0
    %v831 = vadd.f32 0.0, %v830
    %v832 = vpop.f32.mrf.mxu0
    %833 = vdwg.mxu0
    %v834 = vadd.f32 %v670, %v804
    %v835 = vadd.f32 %v673, %v807
    %v836 = vadd.f32 %v678, %v812
    %v837 = vadd.f32 %v681, %v815
    %v838 = vadd.f32 %v686, %v820
    %v839 = vadd.f32 %v689, %v823
    %v840 = vadd.f32 %v694, %v828
    %v841 = vadd.f32 %v697, %v831
    %v842 = vld [vmem:[#allocation8] sm:$0x1]
    %v844 = vlaneseq
    %v845 = vshrl.u32 %v844, 7
    %v846 = vsub.s32 0, %v845
    %v847 = vrot.slane %v842, %v846
    %v849 = vadd.f32 %v834, %v847
    %v850 = vadd.f32 %v835, %v847
    %v851 = vadd.f32 %v836, %v847
    %v852 = vadd.f32 %v837, %v847
    %v853 = vadd.f32 %v838, %v847
    %v854 = vadd.f32 %v839, %v847
    %v855 = vadd.f32 %v840, %v847
    %v856 = vadd.f32 %v841, %v847
    %v857 = vmax.f32 %v849, 0.0
    %v858 = vmax.f32 %v850, 0.0
    %v859 = vmax.f32 %v851, 0.0
    %v860 = vmax.f32 %v852, 0.0
    %v861 = vmax.f32 %v853, 0.0
    %v862 = vmax.f32 %v854, 0.0
    %v863 = vmax.f32 %v855, 0.0
    %v864 = vmax.f32 %v856, 0.0
    %v865 = vpack.c.bf16 %v858, %v857
    %v866 = vpack.c.bf16 %v860, %v859
    %v867 = vpack.c.bf16 %v862, %v861
    %v868 = vpack.c.bf16 %v864, %v863
    %v869 = vld [vmem:[#allocation10] sm:$0xf]
    %v870 = vld [vmem:[#allocation10 + $0x4] sm:$0xf]
    %v871 = vld [vmem:[#allocation10 + $0x8] sm:$0xf]
    %v872 = vld [vmem:[#allocation10 + $0xc] sm:$0xf]
    %v873 = vld [vmem:[#allocation10 + $0x10] sm:$0xf]
    %v874 = vld [vmem:[#allocation10 + $0x14] sm:$0xf]
    %v875 = vld [vmem:[#allocation10 + $0x18] sm:$0xf]
    %v876 = vld [vmem:[#allocation10 + $0x1c] sm:$0xf]
    %v877 = vld [vmem:[#allocation10 + $0x20] sm:$0xf]
    %v878 = vld [vmem:[#allocation10 + $0x24] sm:$0xf]
    %v879 = vld [vmem:[#allocation10 + $0x28] sm:$0xf]
    %v880 = vld [vmem:[#allocation10 + $0x2c] sm:$0xf]
    %v881 = vld [vmem:[#allocation10 + $0x30] sm:$0xf]
    %v882 = vld [vmem:[#allocation10 + $0x34] sm:$0xf]
    %v883 = vld [vmem:[#allocation10 + $0x38] sm:$0xf]
    %v884 = vld [vmem:[#allocation10 + $0x3c] sm:$0xf]
    %v885 = vld [vmem:[#allocation11] sm:$0x1]
    %v887 = vlaneseq
    %v888 = vshrl.u32 %v887, 7
    %v889 = vsub.s32 0, %v888
    %v890 = vrot.slane %v885, %v889
    %v908 = vunpack.c.l.b16 %v869
    %v909 = vunpack.c.l.b16 %v870
    %v910 = vunpack.c.l.b16 %v871
    %v911 = vunpack.c.l.b16 %v872
    %v912 = vunpack.c.l.b16 %v873
    %v913 = vunpack.c.l.b16 %v874
    %v914 = vunpack.c.l.b16 %v875
    %v915 = vunpack.c.l.b16 %v876
    %v916 = vunpack.c.l.b16 %v877
    %v917 = vunpack.c.l.b16 %v878
    %v918 = vunpack.c.l.b16 %v879
    %v919 = vunpack.c.l.b16 %v880
    %v920 = vunpack.c.l.b16 %v881
    %v921 = vunpack.c.l.b16 %v882
    %v922 = vunpack.c.l.b16 %v883
    %v923 = vunpack.c.l.b16 %v884
    %v924 = vpack.c.b16 %v909, %v908
    %v925 = vpack.c.b16 %v911, %v910
    %v926 = vpack.c.b16 %v913, %v912
    %v927 = vpack.c.b16 %v915, %v914
    %v928 = vpack.c.b16 %v917, %v916
    %v929 = vpack.c.b16 %v919, %v918
    %v930 = vpack.c.b16 %v921, %v920
    %v931 = vpack.c.b16 %v923, %v922
    %940 = vmatprep.subr.bf16.mxu0 0
    %941 = vmatpush1.bf16.msra.mxu0 %v931
    %942 = vmatprep.subr.bf16.mxu0 0
    %943 = vmatpush1.bf16.msra.mxu0 %v930
    %944 = vmatprep.subr.bf16.mxu0 0
    %945 = vmatpush1.bf16.msra.mxu0 %v929
    %946 = vmatprep.subr.bf16.mxu0 0
    %947 = vmatpush1.bf16.msra.mxu0 %v928
    %948 = vmatprep.subr.bf16.mxu0 0
    %949 = vmatpush1.bf16.msra.mxu0 %v927
    %950 = vmatprep.subr.bf16.mxu0 0
    %951 = vmatpush1.bf16.msra.mxu0 %v926
    %952 = vmatprep.subr.bf16.mxu0 0
    %953 = vmatpush1.bf16.msra.mxu0 %v925
    %954 = vmatprep.subr.bf16.mxu0 0
    %955 = vmatpush1.bf16.msra.mxu0 %v924
    %956 = vmatprep.subr.bf16.mxu0 0
    %957 = vmatpush2.bf16.msra.mxu0 0
    %958 = vmatprep.subr.bf16.mxu0 0
    %959 = vmatpush2.bf16.msra.mxu0 0
    %960 = vmatprep.subr.bf16.mxu0 0
    %961 = vmatpush2.bf16.msra.mxu0 0
    %962 = vmatprep.subr.bf16.mxu0 0
    %963 = vmatpush2.bf16.msra.mxu0 0
    %964 = vmatprep.subr.bf16.mxu0 0
    %965 = vmatpush2.bf16.msra.mxu0 0
    %966 = vmatprep.subr.bf16.mxu0 0
    %967 = vmatpush2.bf16.msra.mxu0 0
    %968 = vmatprep.subr.bf16.mxu0 0
    %969 = vmatpush2.bf16.msra.mxu0 0
    %970 = vmatprep.subr.bf16.mxu0 0
    %971 = vmatpush2.bf16.msra.mxu0 0
    %972 = vmatprep.mubr.bf16.mxu0 0
    %973 = vmatmul.mubr.bf16.gmra.mxu0 %v865
    %v974 = vpop.f32.mrf.mxu0
    %v975 = vadd.f32 %v890, %v974
    %v976 = vpop.f32.mrf.mxu0
    %v977 = vpop.f32.mrf.mxu0
    %v978 = vadd.f32 %v890, %v977
    %v979 = vpop.f32.mrf.mxu0
    %980 = vmatprep.mubr.bf16.mxu0 0
    %981 = vmatmul.mubr.bf16.gmra.mxu0 %v866
    %v982 = vpop.f32.mrf.mxu0
    %v983 = vadd.f32 %v890, %v982
    %v984 = vpop.f32.mrf.mxu0
    %v985 = vpop.f32.mrf.mxu0
    %v986 = vadd.f32 %v890, %v985
    %v987 = vpop.f32.mrf.mxu0
    %988 = vmatprep.mubr.bf16.mxu0 0
    %989 = vmatmul.mubr.bf16.gmra.mxu0 %v867
    %v990 = vpop.f32.mrf.mxu0
    %v991 = vadd.f32 %v890, %v990
    %v992 = vpop.f32.mrf.mxu0
    %v993 = vpop.f32.mrf.mxu0
    %v994 = vadd.f32 %v890, %v993
    %v995 = vpop.f32.mrf.mxu0
    %996 = vmatprep.mubr.bf16.mxu0 0
    %997 = vmatmul.mubr.bf16.gmra.mxu0 %v868
    %v998 = vpop.f32.mrf.mxu0
    %v999 = vadd.f32 %v890, %v998
    %v1000 = vpop.f32.mrf.mxu0
    %v1001 = vpop.f32.mrf.mxu0
    %v1002 = vadd.f32 %v890, %v1001
    %v1003 = vpop.f32.mrf.mxu0
    %1004 = vdwg.mxu0
    %v1005 = vadd.f32 %v255, %v975
    %v1006 = vadd.f32 %v258, %v978
    %v1007 = vadd.f32 %v263, %v983
    %v1008 = vadd.f32 %v266, %v986
    %v1009 = vadd.f32 %v271, %v991
    %v1010 = vadd.f32 %v274, %v994
    %v1011 = vadd.f32 %v279, %v999
    %v1012 = vadd.f32 %v282, %v1002
    %1014 = vset.pattern.permute.xlu0 0
    %1015 = vperm.xlu0 %1014, %v161
    %v1016 = vpop.permute.xlu0 %1015
    %1019 = vset.pattern.permute.xlu0 0
    %1020 = vperm.xlu0 %1019, %v162
    %v1021 = vpop.permute.xlu0 %1020
    %1024 = vset.pattern.permute.xlu0 0
    %1025 = vperm.xlu0 %1024, %v163
    %v1026 = vpop.permute.xlu0 %1025
    %1029 = vset.pattern.permute.xlu0 0
    %1030 = vperm.xlu0 %1029, %v164
    %v1031 = vpop.permute.xlu0 %1030
    %1034 = vset.pattern.permute.xlu0 0
    %1035 = vperm.xlu0 %1034, %v165
    %v1036 = vpop.permute.xlu0 %1035
    %1039 = vset.pattern.permute.xlu0 0
    %1040 = vperm.xlu0 %1039, %v166
    %v1041 = vpop.permute.xlu0 %1040
    %1044 = vset.pattern.permute.xlu0 0
    %1045 = vperm.xlu0 %1044, %v167
    %v1046 = vpop.permute.xlu0 %1045
    %1049 = vset.pattern.permute.xlu0 0
    %1050 = vperm.xlu0 %1049, %v168
    %v1051 = vpop.permute.xlu0 %1050
    %v1053 = vmul.f32 %v1005, %v1016
    %v1054 = vmul.f32 %v1006, %v1021
    %v1055 = vmul.f32 %v1007, %v1026
    %v1056 = vmul.f32 %v1008, %v1031
    %v1057 = vmul.f32 %v1009, %v1036
    %v1058 = vmul.f32 %v1010, %v1041
    %v1059 = vmul.f32 %v1011, %v1046
    %v1060 = vmul.f32 %v1012, %v1051
    %vm1061 = vcmp.ge.s32.totalorder %v169, 2
    %vm1062 = vcmp.ge.s32.totalorder %v170, 2
    %vm1063 = vcmp.ge.s32.totalorder %v171, 2
    %vm1064 = vcmp.ge.s32.totalorder %v172, 2
    %vm1065 = vcmp.ge.s32.totalorder %v173, 2
    %vm1066 = vcmp.ge.s32.totalorder %v174, 2
    %vm1067 = vcmp.ge.s32.totalorder %v175, 2
    %vm1068 = vcmp.ge.s32.totalorder %v176, 2
    %v1069 = vrot.slane %v1053, 6
    %v1070 = vrot.slane %v1054, 6
    %v1071 = vrot.slane %v1055, 6
    %v1072 = vrot.slane %v1056, 6
    %v1073 = vrot.slane %v1057, 6
    %v1074 = vrot.slane %v1058, 6
    %v1075 = vrot.slane %v1059, 6
    %v1076 = vrot.slane %v1060, 6
    %vm1077 = vcmp.lt.s32.totalorder %v302, 2
    %v1078 = vsel %vm1077, %v1075, %v1076
    %v1079 = vsel %vm1077, %v1074, %v1075
    %v1080 = vsel %vm1077, %v1073, %v1074
    %v1081 = vsel %vm1077, %v1072, %v1073
    %v1082 = vsel %vm1077, %v1071, %v1072
    %v1083 = vsel %vm1077, %v1070, %v1071
    %v1084 = vsel %vm1077, %v1069, %v1070
    %v1085 = vsel %vm1077, %v1076, %v1069
    %v1086 = vsel %vm1061, 1, 0
    %v1087 = vsel %vm1062, 1, 0
    %v1088 = vsel %vm1063, 1, 0
    %v1089 = vsel %vm1064, 1, 0
    %v1090 = vsel %vm1065, 1, 0
    %v1091 = vsel %vm1066, 1, 0
    %v1092 = vsel %vm1067, 1, 0
    %v1093 = vsel %vm1068, 1, 0
    %1094 = vset.pattern.permute.xlu0 0
    %1095 = vperm.xlu0 %1094, %v1086
    %v1096 = vpop.permute.xlu0 %1095
    %1097 = vset.pattern.permute.xlu0 0
    %1098 = vperm.xlu0 %1097, %v1087
    %v1099 = vpop.permute.xlu0 %1098
    %1100 = vset.pattern.permute.xlu0 0
    %1101 = vperm.xlu0 %1100, %v1088
    %v1102 = vpop.permute.xlu0 %1101
    %1103 = vset.pattern.permute.xlu0 0
    %1104 = vperm.xlu0 %1103, %v1089
    %v1105 = vpop.permute.xlu0 %1104
    %1106 = vset.pattern.permute.xlu0 0
    %1107 = vperm.xlu0 %1106, %v1090
    %v1108 = vpop.permute.xlu0 %1107
    %1109 = vset.pattern.permute.xlu0 0
    %1110 = vperm.xlu0 %1109, %v1091
    %v1111 = vpop.permute.xlu0 %1110
    %1112 = vset.pattern.permute.xlu0 0
    %1113 = vperm.xlu0 %1112, %v1092
    %v1114 = vpop.permute.xlu0 %1113
    %1115 = vset.pattern.permute.xlu0 0
    %1116 = vperm.xlu0 %1115, %v1093
    %v1117 = vpop.permute.xlu0 %1116
    %vm1118 = vcmp.eq.s32.totalorder %v1096, 1
    %vm1119 = vcmp.eq.s32.totalorder %v1099, 1
    %vm1120 = vcmp.eq.s32.totalorder %v1102, 1
    %vm1121 = vcmp.eq.s32.totalorder %v1105, 1
    %vm1122 = vcmp.eq.s32.totalorder %v1108, 1
    %vm1123 = vcmp.eq.s32.totalorder %v1111, 1
    %vm1124 = vcmp.eq.s32.totalorder %v1114, 1
    %vm1125 = vcmp.eq.s32.totalorder %v1117, 1
    %v1126 = vsel %vm1118, %v1085, 0.0
    %v1127 = vsel %vm1119, %v1084, 0.0
    %v1128 = vsel %vm1120, %v1083, 0.0
    %v1129 = vsel %vm1121, %v1082, 0.0
    %v1130 = vsel %vm1122, %v1081, 0.0
    %v1131 = vsel %vm1123, %v1080, 0.0
    %v1132 = vsel %vm1124, %v1079, 0.0
    %v1133 = vsel %vm1125, %v1078, 0.0
    %vm1134 = vcmp.lt.s32.totalorder %v169, 30
    %vm1135 = vcmp.lt.s32.totalorder %v170, 30
    %vm1136 = vcmp.lt.s32.totalorder %v171, 30
    %vm1137 = vcmp.lt.s32.totalorder %v172, 30
    %vm1138 = vcmp.lt.s32.totalorder %v173, 30
    %vm1139 = vcmp.lt.s32.totalorder %v174, 30
    %vm1140 = vcmp.lt.s32.totalorder %v175, 30
    %vm1141 = vcmp.lt.s32.totalorder %v176, 30
    %v1142 = vrot.slane %v1053, 2
    %v1143 = vrot.slane %v1054, 2
    %v1144 = vrot.slane %v1055, 2
    %v1145 = vrot.slane %v1056, 2
    %v1146 = vrot.slane %v1057, 2
    %v1147 = vrot.slane %v1058, 2
    %v1148 = vrot.slane %v1059, 2
    %v1149 = vrot.slane %v1060, 2
    %vm1150 = vcmp.lt.s32.totalorder %v302, 6
    %v1151 = vsel %vm1150, %v1148, %v1149
    %v1152 = vsel %vm1150, %v1147, %v1148
    %v1153 = vsel %vm1150, %v1146, %v1147
    %v1154 = vsel %vm1150, %v1145, %v1146
    %v1155 = vsel %vm1150, %v1144, %v1145
    %v1156 = vsel %vm1150, %v1143, %v1144
    %v1157 = vsel %vm1150, %v1142, %v1143
    %v1158 = vsel %vm1150, %v1149, %v1142
    %v1159 = vsel %vm1134, 1, 0
    %v1160 = vsel %vm1135, 1, 0
    %v1161 = vsel %vm1136, 1, 0
    %v1162 = vsel %vm1137, 1, 0
    %v1163 = vsel %vm1138, 1, 0
    %v1164 = vsel %vm1139, 1, 0
    %v1165 = vsel %vm1140, 1, 0
    %v1166 = vsel %vm1141, 1, 0
    %1167 = vset.pattern.permute.xlu0 0
    %1168 = vperm.xlu0 %1167, %v1159
    %v1169 = vpop.permute.xlu0 %1168
    %1170 = vset.pattern.permute.xlu0 0
    %1171 = vperm.xlu0 %1170, %v1160
    %v1172 = vpop.permute.xlu0 %1171
    %1173 = vset.pattern.permute.xlu0 0
    %1174 = vperm.xlu0 %1173, %v1161
    %v1175 = vpop.permute.xlu0 %1174
    %1176 = vset.pattern.permute.xlu0 0
    %1177 = vperm.xlu0 %1176, %v1162
    %v1178 = vpop.permute.xlu0 %1177
    %1179 = vset.pattern.permute.xlu0 0
    %1180 = vperm.xlu0 %1179, %v1163
    %v1181 = vpop.permute.xlu0 %1180
    %1182 = vset.pattern.permute.xlu0 0
    %1183 = vperm.xlu0 %1182, %v1164
    %v1184 = vpop.permute.xlu0 %1183
    %1185 = vset.pattern.permute.xlu0 0
    %1186 = vperm.xlu0 %1185, %v1165
    %v1187 = vpop.permute.xlu0 %1186
    %1188 = vset.pattern.permute.xlu0 0
    %1189 = vperm.xlu0 %1188, %v1166
    %v1190 = vpop.permute.xlu0 %1189
    %vm1191 = vcmp.eq.s32.totalorder %v1169, 1
    %vm1192 = vcmp.eq.s32.totalorder %v1172, 1
    %vm1193 = vcmp.eq.s32.totalorder %v1175, 1
    %vm1194 = vcmp.eq.s32.totalorder %v1178, 1
    %vm1195 = vcmp.eq.s32.totalorder %v1181, 1
    %vm1196 = vcmp.eq.s32.totalorder %v1184, 1
    %vm1197 = vcmp.eq.s32.totalorder %v1187, 1
    %vm1198 = vcmp.eq.s32.totalorder %v1190, 1
    %v1199 = vsel %vm1191, %v1157, 0.0
    %v1200 = vsel %vm1192, %v1156, 0.0
    %v1201 = vsel %vm1193, %v1155, 0.0
    %v1202 = vsel %vm1194, %v1154, 0.0
    %v1203 = vsel %vm1195, %v1153, 0.0
    %v1204 = vsel %vm1196, %v1152, 0.0
    %v1205 = vsel %vm1197, %v1151, 0.0
    %v1206 = vsel %vm1198, %v1158, 0.0
    %v1207 = vpack.c.bf16 %v1127, %v1126
    %v1208 = vpack.c.bf16 %v1129, %v1128
    %v1209 = vpack.c.bf16 %v1131, %v1130
    %v1210 = vpack.c.bf16 %v1133, %v1132
    %s1211 = scalar_lea.vmem [#allocation7], 192
    %v1212 = vld [vmem:[%s1211] sm:$0xf]
    %v1213 = vld [vmem:[%s1211 + $0x4] sm:$0xf]
    %v1214 = vld [vmem:[%s1211 + $0x8] sm:$0xf]
    %v1215 = vld [vmem:[%s1211 + $0xc] sm:$0xf]
    %v1216 = vld [vmem:[%s1211 + $0x10] sm:$0xf]
    %v1217 = vld [vmem:[%s1211 + $0x14] sm:$0xf]
    %v1218 = vld [vmem:[%s1211 + $0x18] sm:$0xf]
    %v1219 = vld [vmem:[%s1211 + $0x1c] sm:$0xf]
    %v1220 = vld [vmem:[%s1211 + $0x20] sm:$0xf]
    %v1221 = vld [vmem:[%s1211 + $0x24] sm:$0xf]
    %v1222 = vld [vmem:[%s1211 + $0x28] sm:$0xf]
    %v1223 = vld [vmem:[%s1211 + $0x2c] sm:$0xf]
    %v1224 = vld [vmem:[%s1211 + $0x30] sm:$0xf]
    %v1225 = vld [vmem:[%s1211 + $0x34] sm:$0xf]
    %v1226 = vld [vmem:[%s1211 + $0x38] sm:$0xf]
    %v1227 = vld [vmem:[%s1211 + $0x3c] sm:$0xf]
    %v1228 = vpack.c.bf16 %v1054, %v1053
    %v1229 = vpack.c.bf16 %v1056, %v1055
    %v1230 = vpack.c.bf16 %v1058, %v1057
    %v1231 = vpack.c.bf16 %v1060, %v1059
    %s1232 = scalar_lea.vmem [#allocation7], 256
    %v1233 = vld [vmem:[%s1232] sm:$0xf]
    %v1234 = vld [vmem:[%s1232 + $0x4] sm:$0xf]
    %v1235 = vld [vmem:[%s1232 + $0x8] sm:$0xf]
    %v1236 = vld [vmem:[%s1232 + $0xc] sm:$0xf]
    %v1237 = vld [vmem:[%s1232 + $0x10] sm:$0xf]
    %v1238 = vld [vmem:[%s1232 + $0x14] sm:$0xf]
    %v1239 = vld [vmem:[%s1232 + $0x18] sm:$0xf]
    %v1240 = vld [vmem:[%s1232 + $0x1c] sm:$0xf]
    %v1241 = vld [vmem:[%s1232 + $0x20] sm:$0xf]
    %v1242 = vld [vmem:[%s1232 + $0x24] sm:$0xf]
    %v1243 = vld [vmem:[%s1232 + $0x28] sm:$0xf]
    %v1244 = vld [vmem:[%s1232 + $0x2c] sm:$0xf]
    %v1245 = vld [vmem:[%s1232 + $0x30] sm:$0xf]
    %v1246 = vld [vmem:[%s1232 + $0x34] sm:$0xf]
    %v1247 = vld [vmem:[%s1232 + $0x38] sm:$0xf]
    %v1248 = vld [vmem:[%s1232 + $0x3c] sm:$0xf]
    %v1265 = vunpack.c.l.b16 %v1233
    %v1266 = vunpack.c.l.b16 %v1234
    %v1267 = vunpack.c.l.b16 %v1235
    %v1268 = vunpack.c.l.b16 %v1236
    %v1269 = vunpack.c.l.b16 %v1237
    %v1270 = vunpack.c.l.b16 %v1238
    %v1271 = vunpack.c.l.b16 %v1239
    %v1272 = vunpack.c.l.b16 %v1240
    %v1273 = vunpack.c.l.b16 %v1241
    %v1274 = vunpack.c.l.b16 %v1242
    %v1275 = vunpack.c.l.b16 %v1243
    %v1276 = vunpack.c.l.b16 %v1244
    %v1277 = vunpack.c.l.b16 %v1245
    %v1278 = vunpack.c.l.b16 %v1246
    %v1279 = vunpack.c.l.b16 %v1247
    %v1280 = vunpack.c.l.b16 %v1248
    %v1281 = vpack.c.b16 %v1266, %v1265
    %v1282 = vpack.c.b16 %v1268, %v1267
    %v1283 = vpack.c.b16 %v1270, %v1269
    %v1284 = vpack.c.b16 %v1272, %v1271
    %v1285 = vpack.c.b16 %v1274, %v1273
    %v1286 = vpack.c.b16 %v1276, %v1275
    %v1287 = vpack.c.b16 %v1278, %v1277
    %v1288 = vpack.c.b16 %v1280, %v1279
    %1297 = vmatprep.subr.bf16.mxu0 0
    %1298 = vmatpush1.bf16.msra.mxu0 %v1288
    %1299 = vmatprep.subr.bf16.mxu0 0
    %1300 = vmatpush1.bf16.msra.mxu0 %v1287
    %1301 = vmatprep.subr.bf16.mxu0 0
    %1302 = vmatpush1.bf16.msra.mxu0 %v1286
    %1303 = vmatprep.subr.bf16.mxu0 0
    %1304 = vmatpush1.bf16.msra.mxu0 %v1285
    %1305 = vmatprep.subr.bf16.mxu0 0
    %1306 = vmatpush1.bf16.msra.mxu0 %v1284
    %1307 = vmatprep.subr.bf16.mxu0 0
    %1308 = vmatpush1.bf16.msra.mxu0 %v1283
    %1309 = vmatprep.subr.bf16.mxu0 0
    %1310 = vmatpush1.bf16.msra.mxu0 %v1282
    %1311 = vmatprep.subr.bf16.mxu0 0
    %1312 = vmatpush1.bf16.msra.mxu0 %v1281
    %1313 = vmatprep.subr.bf16.mxu0 0
    %1314 = vmatpush2.bf16.msra.mxu0 0
    %1315 = vmatprep.subr.bf16.mxu0 0
    %1316 = vmatpush2.bf16.msra.mxu0 0
    %1317 = vmatprep.subr.bf16.mxu0 0
    %1318 = vmatpush2.bf16.msra.mxu0 0
    %1319 = vmatprep.subr.bf16.mxu0 0
    %1320 = vmatpush2.bf16.msra.mxu0 0
    %1321 = vmatprep.subr.bf16.mxu0 0
    %1322 = vmatpush2.bf16.msra.mxu0 0
    %1323 = vmatprep.subr.bf16.mxu0 0
    %1324 = vmatpush2.bf16.msra.mxu0 0
    %1325 = vmatprep.subr.bf16.mxu0 0
    %1326 = vmatpush2.bf16.msra.mxu0 0
    %1327 = vmatprep.subr.bf16.mxu0 0
    %1328 = vmatpush2.bf16.msra.mxu0 0
    %1329 = vmatprep.mubr.bf16.mxu0 0
    %1330 = vmatmul.mubr.bf16.gmra.mxu0 %v1228
    %v1331 = vpop.f32.mrf.mxu0
    %v1332 = vadd.f32 0.0, %v1331
    %v1333 = vpop.f32.mrf.mxu0
    %v1334 = vpop.f32.mrf.mxu0
    %v1335 = vadd.f32 0.0, %v1334
    %v1336 = vpop.f32.mrf.mxu0
    %1337 = vmatprep.mubr.bf16.mxu0 0
    %1338 = vmatmul.mubr.bf16.gmra.mxu0 %v1229
    %v1339 = vpop.f32.mrf.mxu0
    %v1340 = vadd.f32 0.0, %v1339
    %v1341 = vpop.f32.mrf.mxu0
    %v1342 = vpop.f32.mrf.mxu0
    %v1343 = vadd.f32 0.0, %v1342
    %v1344 = vpop.f32.mrf.mxu0
    %1345 = vmatprep.mubr.bf16.mxu0 0
    %1346 = vmatmul.mubr.bf16.gmra.mxu0 %v1230
    %v1347 = vpop.f32.mrf.mxu0
    %v1348 = vadd.f32 0.0, %v1347
    %v1349 = vpop.f32.mrf.mxu0
    %v1350 = vpop.f32.mrf.mxu0
    %v1351 = vadd.f32 0.0, %v1350
    %v1352 = vpop.f32.mrf.mxu0
    %1353 = vmatprep.mubr.bf16.mxu0 0
    %1354 = vmatmul.mubr.bf16.gmra.mxu0 %v1231
    %v1355 = vpop.f32.mrf.mxu0
    %v1356 = vadd.f32 0.0, %v1355
    %v1357 = vpop.f32.mrf.mxu0
    %v1358 = vpop.f32.mrf.mxu0
    %v1359 = vadd.f32 0.0, %v1358
    %v1360 = vpop.f32.mrf.mxu0
    %1361 = vdwg.mxu0
    %v1378 = vunpack.c.l.b16 %v1212
    %v1379 = vunpack.c.l.b16 %v1213
    %v1380 = vunpack.c.l.b16 %v1214
    %v1381 = vunpack.c.l.b16 %v1215
    %v1382 = vunpack.c.l.b16 %v1216
    %v1383 = vunpack.c.l.b16 %v1217
    %v1384 = vunpack.c.l.b16 %v1218
    %v1385 = vunpack.c.l.b16 %v1219
    %v1386 = vunpack.c.l.b16 %v1220
    %v1387 = vunpack.c.l.b16 %v1221
    %v1388 = vunpack.c.l.b16 %v1222
    %v1389 = vunpack.c.l.b16 %v1223
    %v1390 = vunpack.c.l.b16 %v1224
    %v1391 = vunpack.c.l.b16 %v1225
    %v1392 = vunpack.c.l.b16 %v1226
    %v1393 = vunpack.c.l.b16 %v1227
    %v1394 = vpack.c.b16 %v1379, %v1378
    %v1395 = vpack.c.b16 %v1381, %v1380
    %v1396 = vpack.c.b16 %v1383, %v1382
    %v1397 = vpack.c.b16 %v1385, %v1384
    %v1398 = vpack.c.b16 %v1387, %v1386
    %v1399 = vpack.c.b16 %v1389, %v1388
    %v1400 = vpack.c.b16 %v1391, %v1390
    %v1401 = vpack.c.b16 %v1393, %v1392
    %1410 = vmatprep.subr.bf16.mxu0 0
    %1411 = vmatpush1.bf16.msra.mxu0 %v1401
    %1412 = vmatprep.subr.bf16.mxu0 0
    %1413 = vmatpush1.bf16.msra.mxu0 %v1400
    %1414 = vmatprep.subr.bf16.mxu0 0
    %1415 = vmatpush1.bf16.msra.mxu0 %v1399
    %1416 = vmatprep.subr.bf16.mxu0 0
    %1417 = vmatpush1.bf16.msra.mxu0 %v1398
    %1418 = vmatprep.subr.bf16.mxu0 0
    %1419 = vmatpush1.bf16.msra.mxu0 %v1397
    %1420 = vmatprep.subr.bf16.mxu0 0
    %1421 = vmatpush1.bf16.msra.mxu0 %v1396
    %1422 = vmatprep.subr.bf16.mxu0 0
    %1423 = vmatpush1.bf16.msra.mxu0 %v1395
    %1424 = vmatprep.subr.bf16.mxu0 0
    %1425 = vmatpush1.bf16.msra.mxu0 %v1394
    %1426 = vmatprep.subr.bf16.mxu0 0
    %1427 = vmatpush2.bf16.msra.mxu0 0
    %1428 = vmatprep.subr.bf16.mxu0 0
    %1429 = vmatpush2.bf16.msra.mxu0 0
    %1430 = vmatprep.subr.bf16.mxu0 0
    %1431 = vmatpush2.bf16.msra.mxu0 0
    %1432 = vmatprep.subr.bf16.mxu0 0
    %1433 = vmatpush2.bf16.msra.mxu0 0
    %1434 = vmatprep.subr.bf16.mxu0 0
    %1435 = vmatpush2.bf16.msra.mxu0 0
    %1436 = vmatprep.subr.bf16.mxu0 0
    %1437 = vmatpush2.bf16.msra.mxu0 0
    %1438 = vmatprep.subr.bf16.mxu0 0
    %1439 = vmatpush2.bf16.msra.mxu0 0
    %1440 = vmatprep.subr.bf16.mxu0 0
    %1441 = vmatpush2.bf16.msra.mxu0 0
    %1442 = vmatprep.mubr.bf16.mxu0 0
    %1443 = vmatmul.mubr.bf16.gmra.mxu0 %v1207
    %v1444 = vpop.f32.mrf.mxu0
    %v1445 = vadd.f32 %v1332, %v1444
    %v1446 = vpop.f32.mrf.mxu0
    %v1447 = vpop.f32.mrf.mxu0
    %v1448 = vadd.f32 %v1335, %v1447
    %v1449 = vpop.f32.mrf.mxu0
    %1450 = vmatprep.mubr.bf16.mxu0 0
    %1451 = vmatmul.mubr.bf16.gmra.mxu0 %v1208
    %v1452 = vpop.f32.mrf.mxu0
    %v1453 = vadd.f32 %v1340, %v1452
    %v1454 = vpop.f32.mrf.mxu0
    %v1455 = vpop.f32.mrf.mxu0
    %v1456 = vadd.f32 %v1343, %v1455
    %v1457 = vpop.f32.mrf.mxu0
    %1458 = vmatprep.mubr.bf16.mxu0 0
    %1459 = vmatmul.mubr.bf16.gmra.mxu0 %v1209
    %v1460 = vpop.f32.mrf.mxu0
    %v1461 = vadd.f32 %v1348, %v1460
    %v1462 = vpop.f32.mrf.mxu0
    %v1463 = vpop.f32.mrf.mxu0
    %v1464 = vadd.f32 %v1351, %v1463
    %v1465 = vpop.f32.mrf.mxu0
    %1466 = vmatprep.mubr.bf16.mxu0 0
    %1467 = vmatmul.mubr.bf16.gmra.mxu0 %v1210
    %v1468 = vpop.f32.mrf.mxu0
    %v1469 = vadd.f32 %v1356, %v1468
    %v1470 = vpop.f32.mrf.mxu0
    %v1471 = vpop.f32.mrf.mxu0
    %v1472 = vadd.f32 %v1359, %v1471
    %v1473 = vpop.f32.mrf.mxu0
    %1474 = vdwg.mxu0
    %v1475 = vpack.c.bf16 %v1200, %v1199
    %v1476 = vpack.c.bf16 %v1202, %v1201
    %v1477 = vpack.c.bf16 %v1204, %v1203
    %v1478 = vpack.c.bf16 %v1206, %v1205
    %s1479 = scalar_lea.vmem [#allocation7], 320
    %v1480 = vld [vmem:[%s1479] sm:$0xf]
    %v1481 = vld [vmem:[%s1479 + $0x4] sm:$0xf]
    %v1482 = vld [vmem:[%s1479 + $0x8] sm:$0xf]
    %v1483 = vld [vmem:[%s1479 + $0xc] sm:$0xf]
    %v1484 = vld [vmem:[%s1479 + $0x10] sm:$0xf]
    %v1485 = vld [vmem:[%s1479 + $0x14] sm:$0xf]
    %v1486 = vld [vmem:[%s1479 + $0x18] sm:$0xf]
    %v1487 = vld [vmem:[%s1479 + $0x1c] sm:$0xf]
    %v1488 = vld [vmem:[%s1479 + $0x20] sm:$0xf]
    %v1489 = vld [vmem:[%s1479 + $0x24] sm:$0xf]
    %v1490 = vld [vmem:[%s1479 + $0x28] sm:$0xf]
    %v1491 = vld [vmem:[%s1479 + $0x2c] sm:$0xf]
    %v1492 = vld [vmem:[%s1479 + $0x30] sm:$0xf]
    %v1493 = vld [vmem:[%s1479 + $0x34] sm:$0xf]
    %v1494 = vld [vmem:[%s1479 + $0x38] sm:$0xf]
    %v1495 = vld [vmem:[%s1479 + $0x3c] sm:$0xf]
    %v1512 = vunpack.c.l.b16 %v1480
    %v1513 = vunpack.c.l.b16 %v1481
    %v1514 = vunpack.c.l.b16 %v1482
    %v1515 = vunpack.c.l.b16 %v1483
    %v1516 = vunpack.c.l.b16 %v1484
    %v1517 = vunpack.c.l.b16 %v1485
    %v1518 = vunpack.c.l.b16 %v1486
    %v1519 = vunpack.c.l.b16 %v1487
    %v1520 = vunpack.c.l.b16 %v1488
    %v1521 = vunpack.c.l.b16 %v1489
    %v1522 = vunpack.c.l.b16 %v1490
    %v1523 = vunpack.c.l.b16 %v1491
    %v1524 = vunpack.c.l.b16 %v1492
    %v1525 = vunpack.c.l.b16 %v1493
    %v1526 = vunpack.c.l.b16 %v1494
    %v1527 = vunpack.c.l.b16 %v1495
    %v1528 = vpack.c.b16 %v1513, %v1512
    %v1529 = vpack.c.b16 %v1515, %v1514
    %v1530 = vpack.c.b16 %v1517, %v1516
    %v1531 = vpack.c.b16 %v1519, %v1518
    %v1532 = vpack.c.b16 %v1521, %v1520
    %v1533 = vpack.c.b16 %v1523, %v1522
    %v1534 = vpack.c.b16 %v1525, %v1524
    %v1535 = vpack.c.b16 %v1527, %v1526
    %1544 = vmatprep.subr.bf16.mxu0 0
    %1545 = vmatpush1.bf16.msra.mxu0 %v1535
    %1546 = vmatprep.subr.bf16.mxu0 0
    %1547 = vmatpush1.bf16.msra.mxu0 %v1534
    %1548 = vmatprep.subr.bf16.mxu0 0
    %1549 = vmatpush1.bf16.msra.mxu0 %v1533
    %1550 = vmatprep.subr.bf16.mxu0 0
    %1551 = vmatpush1.bf16.msra.mxu0 %v1532
    %1552 = vmatprep.subr.bf16.mxu0 0
    %1553 = vmatpush1.bf16.msra.mxu0 %v1531
    %1554 = vmatprep.subr.bf16.mxu0 0
    %1555 = vmatpush1.bf16.msra.mxu0 %v1530
    %1556 = vmatprep.subr.bf16.mxu0 0
    %1557 = vmatpush1.bf16.msra.mxu0 %v1529
    %1558 = vmatprep.subr.bf16.mxu0 0
    %1559 = vmatpush1.bf16.msra.mxu0 %v1528
    %1560 = vmatprep.subr.bf16.mxu0 0
    %1561 = vmatpush2.bf16.msra.mxu0 0
    %1562 = vmatprep.subr.bf16.mxu0 0
    %1563 = vmatpush2.bf16.msra.mxu0 0
    %1564 = vmatprep.subr.bf16.mxu0 0
    %1565 = vmatpush2.bf16.msra.mxu0 0
    %1566 = vmatprep.subr.bf16.mxu0 0
    %1567 = vmatpush2.bf16.msra.mxu0 0
    %1568 = vmatprep.subr.bf16.mxu0 0
    %1569 = vmatpush2.bf16.msra.mxu0 0
    %1570 = vmatprep.subr.bf16.mxu0 0
    %1571 = vmatpush2.bf16.msra.mxu0 0
    %1572 = vmatprep.subr.bf16.mxu0 0
    %1573 = vmatpush2.bf16.msra.mxu0 0
    %1574 = vmatprep.subr.bf16.mxu0 0
    %1575 = vmatpush2.bf16.msra.mxu0 0
    %1576 = vmatprep.mubr.bf16.mxu0 0
    %1577 = vmatmul.mubr.bf16.gmra.mxu0 %v1475
    %v1578 = vpop.f32.mrf.mxu0
    %v1579 = vadd.f32 0.0, %v1578
    %v1580 = vpop.f32.mrf.mxu0
    %v1581 = vpop.f32.mrf.mxu0
    %v1582 = vadd.f32 0.0, %v1581
    %v1583 = vpop.f32.mrf.mxu0
    %1584 = vmatprep.mubr.bf16.mxu0 0
    %1585 = vmatmul.mubr.bf16.gmra.mxu0 %v1476
    %v1586 = vpop.f32.mrf.mxu0
    %v1587 = vadd.f32 0.0, %v1586
    %v1588 = vpop.f32.mrf.mxu0
    %v1589 = vpop.f32.mrf.mxu0
    %v1590 = vadd.f32 0.0, %v1589
    %v1591 = vpop.f32.mrf.mxu0
    %1592 = vmatprep.mubr.bf16.mxu0 0
    %1593 = vmatmul.mubr.bf16.gmra.mxu0 %v1477
    %v1594 = vpop.f32.mrf.mxu0
    %v1595 = vadd.f32 0.0, %v1594
    %v1596 = vpop.f32.mrf.mxu0
    %v1597 = vpop.f32.mrf.mxu0
    %v1598 = vadd.f32 0.0, %v1597
    %v1599 = vpop.f32.mrf.mxu0
    %1600 = vmatprep.mubr.bf16.mxu0 0
    %1601 = vmatmul.mubr.bf16.gmra.mxu0 %v1478
    %v1602 = vpop.f32.mrf.mxu0
    %v1603 = vadd.f32 0.0, %v1602
    %v1604 = vpop.f32.mrf.mxu0
    %v1605 = vpop.f32.mrf.mxu0
    %v1606 = vadd.f32 0.0, %v1605
    %v1607 = vpop.f32.mrf.mxu0
    %1608 = vdwg.mxu0
    %v1609 = vadd.f32 %v1445, %v1579
    %v1610 = vadd.f32 %v1448, %v1582
    %v1611 = vadd.f32 %v1453, %v1587
    %v1612 = vadd.f32 %v1456, %v1590
    %v1613 = vadd.f32 %v1461, %v1595
    %v1614 = vadd.f32 %v1464, %v1598
    %v1615 = vadd.f32 %v1469, %v1603
    %v1616 = vadd.f32 %v1472, %v1606
    %s1617 = scalar_lea.vmem [#allocation8], 1
    %v1618 = vld [vmem:[%s1617] sm:$0x1]
    %v1620 = vlaneseq
    %v1621 = vshrl.u32 %v1620, 7
    %v1622 = vsub.s32 0, %v1621
    %v1623 = vrot.slane %v1618, %v1622
    %v1625 = vadd.f32 %v1609, %v1623
    %v1626 = vadd.f32 %v1610, %v1623
    %v1627 = vadd.f32 %v1611, %v1623
    %v1628 = vadd.f32 %v1612, %v1623
    %v1629 = vadd.f32 %v1613, %v1623
    %v1630 = vadd.f32 %v1614, %v1623
    %v1631 = vadd.f32 %v1615, %v1623
    %v1632 = vadd.f32 %v1616, %v1623
    %v1633 = vmax.f32 %v1625, 0.0
    %v1634 = vmax.f32 %v1626, 0.0
    %v1635 = vmax.f32 %v1627, 0.0
    %v1636 = vmax.f32 %v1628, 0.0
    %v1637 = vmax.f32 %v1629, 0.0
    %v1638 = vmax.f32 %v1630, 0.0
    %v1639 = vmax.f32 %v1631, 0.0
    %v1640 = vmax.f32 %v1632, 0.0
    %v1641 = vpack.c.bf16 %v1634, %v1633
    %v1642 = vpack.c.bf16 %v1636, %v1635
    %v1643 = vpack.c.bf16 %v1638, %v1637
    %v1644 = vpack.c.bf16 %v1640, %v1639
    %s1645 = scalar_lea.vmem [#allocation10], 64
    %v1646 = vld [vmem:[%s1645] sm:$0xf]
    %v1647 = vld [vmem:[%s1645 + $0x4] sm:$0xf]
    %v1648 = vld [vmem:[%s1645 + $0x8] sm:$0xf]
    %v1649 = vld [vmem:[%s1645 + $0xc] sm:$0xf]
    %v1650 = vld [vmem:[%s1645 + $0x10] sm:$0xf]
    %v1651 = vld [vmem:[%s1645 + $0x14] sm:$0xf]
    %v1652 = vld [vmem:[%s1645 + $0x18] sm:$0xf]
    %v1653 = vld [vmem:[%s1645 + $0x1c] sm:$0xf]
    %v1654 = vld [vmem:[%s1645 + $0x20] sm:$0xf]
    %v1655 = vld [vmem:[%s1645 + $0x24] sm:$0xf]
    %v1656 = vld [vmem:[%s1645 + $0x28] sm:$0xf]
    %v1657 = vld [vmem:[%s1645 + $0x2c] sm:$0xf]
    %v1658 = vld [vmem:[%s1645 + $0x30] sm:$0xf]
    %v1659 = vld [vmem:[%s1645 + $0x34] sm:$0xf]
    %v1660 = vld [vmem:[%s1645 + $0x38] sm:$0xf]
    %v1661 = vld [vmem:[%s1645 + $0x3c] sm:$0xf]
    %s1662 = scalar_lea.vmem [#allocation11], 1
    %v1663 = vld [vmem:[%s1662] sm:$0x1]
    %v1665 = vlaneseq
    %v1666 = vshrl.u32 %v1665, 7
    %v1667 = vsub.s32 0, %v1666
    %v1668 = vrot.slane %v1663, %v1667
    %v1686 = vunpack.c.l.b16 %v1646
    %v1687 = vunpack.c.l.b16 %v1647
    %v1688 = vunpack.c.l.b16 %v1648
    %v1689 = vunpack.c.l.b16 %v1649
    %v1690 = vunpack.c.l.b16 %v1650
    %v1691 = vunpack.c.l.b16 %v1651
    %v1692 = vunpack.c.l.b16 %v1652
    %v1693 = vunpack.c.l.b16 %v1653
    %v1694 = vunpack.c.l.b16 %v1654
    %v1695 = vunpack.c.l.b16 %v1655
    %v1696 = vunpack.c.l.b16 %v1656
    %v1697 = vunpack.c.l.b16 %v1657
    %v1698 = vunpack.c.l.b16 %v1658
    %v1699 = vunpack.c.l.b16 %v1659
    %v1700 = vunpack.c.l.b16 %v1660
    %v1701 = vunpack.c.l.b16 %v1661
    %v1702 = vpack.c.b16 %v1687, %v1686
    %v1703 = vpack.c.b16 %v1689, %v1688
    %v1704 = vpack.c.b16 %v1691, %v1690
    %v1705 = vpack.c.b16 %v1693, %v1692
    %v1706 = vpack.c.b16 %v1695, %v1694
    %v1707 = vpack.c.b16 %v1697, %v1696
    %v1708 = vpack.c.b16 %v1699, %v1698
    %v1709 = vpack.c.b16 %v1701, %v1700
    %1718 = vmatprep.subr.bf16.mxu0 0
    %1719 = vmatpush1.bf16.msra.mxu0 %v1709
    %1720 = vmatprep.subr.bf16.mxu0 0
    %1721 = vmatpush1.bf16.msra.mxu0 %v1708
    %1722 = vmatprep.subr.bf16.mxu0 0
    %1723 = vmatpush1.bf16.msra.mxu0 %v1707
    %1724 = vmatprep.subr.bf16.mxu0 0
    %1725 = vmatpush1.bf16.msra.mxu0 %v1706
    %1726 = vmatprep.subr.bf16.mxu0 0
    %1727 = vmatpush1.bf16.msra.mxu0 %v1705
    %1728 = vmatprep.subr.bf16.mxu0 0
    %1729 = vmatpush1.bf16.msra.mxu0 %v1704
    %1730 = vmatprep.subr.bf16.mxu0 0
    %1731 = vmatpush1.bf16.msra.mxu0 %v1703
    %1732 = vmatprep.subr.bf16.mxu0 0
    %1733 = vmatpush1.bf16.msra.mxu0 %v1702
    %1734 = vmatprep.subr.bf16.mxu0 0
    %1735 = vmatpush2.bf16.msra.mxu0 0
    %1736 = vmatprep.subr.bf16.mxu0 0
    %1737 = vmatpush2.bf16.msra.mxu0 0
    %1738 = vmatprep.subr.bf16.mxu0 0
    %1739 = vmatpush2.bf16.msra.mxu0 0
    %1740 = vmatprep.subr.bf16.mxu0 0
    %1741 = vmatpush2.bf16.msra.mxu0 0
    %1742 = vmatprep.subr.bf16.mxu0 0
    %1743 = vmatpush2.bf16.msra.mxu0 0
    %1744 = vmatprep.subr.bf16.mxu0 0
    %1745 = vmatpush2.bf16.msra.mxu0 0
    %1746 = vmatprep.subr.bf16.mxu0 0
    %1747 = vmatpush2.bf16.msra.mxu0 0
    %1748 = vmatprep.subr.bf16.mxu0 0
    %1749 = vmatpush2.bf16.msra.mxu0 0
    %1750 = vmatprep.mubr.bf16.mxu0 0
    %1751 = vmatmul.mubr.bf16.gmra.mxu0 %v1641
    %v1752 = vpop.f32.mrf.mxu0
    %v1753 = vadd.f32 %v1668, %v1752
    %v1754 = vpop.f32.mrf.mxu0
    %v1755 = vpop.f32.mrf.mxu0
    %v1756 = vadd.f32 %v1668, %v1755
    %v1757 = vpop.f32.mrf.mxu0
    %1758 = vmatprep.mubr.bf16.mxu0 0
    %1759 = vmatmul.mubr.bf16.gmra.mxu0 %v1642
    %v1760 = vpop.f32.mrf.mxu0
    %v1761 = vadd.f32 %v1668, %v1760
    %v1762 = vpop.f32.mrf.mxu0
    %v1763 = vpop.f32.mrf.mxu0
    %v1764 = vadd.f32 %v1668, %v1763
    %v1765 = vpop.f32.mrf.mxu0
    %1766 = vmatprep.mubr.bf16.mxu0 0
    %1767 = vmatmul.mubr.bf16.gmra.mxu0 %v1643
    %v1768 = vpop.f32.mrf.mxu0
    %v1769 = vadd.f32 %v1668, %v1768
    %v1770 = vpop.f32.mrf.mxu0
    %v1771 = vpop.f32.mrf.mxu0
    %v1772 = vadd.f32 %v1668, %v1771
    %v1773 = vpop.f32.mrf.mxu0
    %1774 = vmatprep.mubr.bf16.mxu0 0
    %1775 = vmatmul.mubr.bf16.gmra.mxu0 %v1644
    %v1776 = vpop.f32.mrf.mxu0
    %v1777 = vadd.f32 %v1668, %v1776
    %v1778 = vpop.f32.mrf.mxu0
    %v1779 = vpop.f32.mrf.mxu0
    %v1780 = vadd.f32 %v1668, %v1779
    %v1781 = vpop.f32.mrf.mxu0
    %1782 = vdwg.mxu0
    %v1783 = vadd.f32 %v1053, %v1753
    %v1784 = vadd.f32 %v1054, %v1756
    %v1785 = vadd.f32 %v1055, %v1761
    %v1786 = vadd.f32 %v1056, %v1764
    %v1787 = vadd.f32 %v1057, %v1769
    %v1788 = vadd.f32 %v1058, %v1772
    %v1789 = vadd.f32 %v1059, %v1777
    %v1790 = vadd.f32 %v1060, %v1780
    %v1791 = vmul.f32 %v1783, %v1016
    %v1792 = vmul.f32 %v1784, %v1021
    %v1793 = vmul.f32 %v1785, %v1026
    %v1794 = vmul.f32 %v1786, %v1031
    %v1795 = vmul.f32 %v1787, %v1036
    %v1796 = vmul.f32 %v1788, %v1041
    %v1797 = vmul.f32 %v1789, %v1046
    %v1798 = vmul.f32 %v1790, %v1051
    %v1799 = vpack.c.bf16 %v1792, %v1791
    %v1800 = vpack.c.bf16 %v1794, %v1793
    %v1801 = vpack.c.bf16 %v1796, %v1795
    %v1802 = vpack.c.bf16 %v1798, %v1797
    %v1803 = vld [vmem:[#allocation13] sm:$0xff]
    %v1804 = vld [vmem:[#allocation13 + $0x8] sm:$0xff]
    %v1805 = vld [vmem:[#allocation13 + $0x10] sm:$0xff]
    %v1806 = vld [vmem:[#allocation13 + $0x18] sm:$0xff]
    %v1807 = vld [vmem:[#allocation13 + $0x20] sm:$0xff]
    %v1808 = vld [vmem:[#allocation13 + $0x28] sm:$0xff]
    %v1809 = vld [vmem:[#allocation13 + $0x30] sm:$0xff]
    %v1810 = vld [vmem:[#allocation13 + $0x38] sm:$0xff]
    %v1811 = vld [vmem:[#allocation13 + $0x40] sm:$0xff]
    %v1812 = vld [vmem:[#allocation13 + $0x48] sm:$0xff]
    %v1813 = vld [vmem:[#allocation13 + $0x50] sm:$0xff]
    %v1814 = vld [vmem:[#allocation13 + $0x58] sm:$0xff]
    %v1815 = vld [vmem:[#allocation13 + $0x60] sm:$0xff]
    %v1816 = vld [vmem:[#allocation13 + $0x68] sm:$0xff]
    %v1817 = vld [vmem:[#allocation13 + $0x70] sm:$0xff]
    %v1818 = vld [vmem:[#allocation13 + $0x78] sm:$0xff]
    %v1819 = vld [vmem:[#allocation13 + $0x80] sm:$0xff]
    %v1820 = vld [vmem:[#allocation13 + $0x88] sm:$0xff]
    %v1821 = vld [vmem:[#allocation13 + $0x90] sm:$0xff]
    %v1822 = vld [vmem:[#allocation13 + $0x98] sm:$0xff]
    %v1823 = vld [vmem:[#allocation13 + $0xa0] sm:$0xff]
    %v1824 = vld [vmem:[#allocation13 + $0xa8] sm:$0xff]
    %v1825 = vld [vmem:[#allocation13 + $0xb0] sm:$0xff]
    %v1826 = vld [vmem:[#allocation13 + $0xb8] sm:$0xff]
    %v1827 = vld [vmem:[#allocation13 + $0xc0] sm:$0xff]
    %v1828 = vld [vmem:[#allocation13 + $0xc8] sm:$0xff]
    %v1829 = vld [vmem:[#allocation13 + $0xd0] sm:$0xff]
    %v1830 = vld [vmem:[#allocation13 + $0xd8] sm:$0xff]
    %v1831 = vld [vmem:[#allocation13 + $0xe0] sm:$0xff]
    %v1832 = vld [vmem:[#allocation13 + $0xe8] sm:$0xff]
    %v1833 = vld [vmem:[#allocation13 + $0xf0] sm:$0xff]
    %v1834 = vld [vmem:[#allocation13 + $0xf8] sm:$0xff]
    %v1835 = vld [vmem:[#allocation13 + $0x100] sm:$0xff]
    %v1836 = vld [vmem:[#allocation13 + $0x108] sm:$0xff]
    %v1837 = vld [vmem:[#allocation13 + $0x110] sm:$0xff]
    %v1838 = vld [vmem:[#allocation13 + $0x118] sm:$0xff]
    %v1839 = vld [vmem:[#allocation13 + $0x120] sm:$0xff]
    %v1840 = vld [vmem:[#allocation13 + $0x128] sm:$0xff]
    %v1841 = vld [vmem:[#allocation13 + $0x130] sm:$0xff]
    %v1842 = vld [vmem:[#allocation13 + $0x138] sm:$0xff]
    %v1843 = vld [vmem:[#allocation13 + $0x140] sm:$0xff]
    %v1844 = vld [vmem:[#allocation13 + $0x148] sm:$0xff]
    %v1845 = vld [vmem:[#allocation13 + $0x150] sm:$0xff]
    %v1846 = vld [vmem:[#allocation13 + $0x158] sm:$0xff]
    %v1847 = vld [vmem:[#allocation13 + $0x160] sm:$0xff]
    %v1848 = vld [vmem:[#allocation13 + $0x168] sm:$0xff]
    %v1849 = vld [vmem:[#allocation13 + $0x170] sm:$0xff]
    %v1850 = vld [vmem:[#allocation13 + $0x178] sm:$0xff]
    %v1851 = vld [vmem:[#allocation13 + $0x180] sm:$0xff]
    %v1852 = vld [vmem:[#allocation13 + $0x188] sm:$0xff]
    %v1853 = vld [vmem:[#allocation13 + $0x190] sm:$0xff]
    %v1854 = vld [vmem:[#allocation13 + $0x198] sm:$0xff]
    %v1855 = vld [vmem:[#allocation13 + $0x1a0] sm:$0xff]
    %v1856 = vld [vmem:[#allocation13 + $0x1a8] sm:$0xff]
    %v1857 = vld [vmem:[#allocation13 + $0x1b0] sm:$0xff]
    %v1858 = vld [vmem:[#allocation13 + $0x1b8] sm:$0xff]
    %v1859 = vld [vmem:[#allocation13 + $0x1c0] sm:$0xff]
    %v1860 = vld [vmem:[#allocation13 + $0x1c8] sm:$0xff]
    %v1861 = vld [vmem:[#allocation13 + $0x1d0] sm:$0xff]
    %v1862 = vld [vmem:[#allocation13 + $0x1d8] sm:$0xff]
    %v1863 = vld [vmem:[#allocation13 + $0x1e0] sm:$0xff]
    %v1864 = vld [vmem:[#allocation13 + $0x1e8] sm:$0xff]
    %v1865 = vld [vmem:[#allocation13 + $0x1f0] sm:$0xff]
    %v1866 = vld [vmem:[#allocation13 + $0x1f8] sm:$0xff]
    %v1867 = vld [vmem:[#allocation13 + $0x200] sm:$0xff]
    %v1868 = vld [vmem:[#allocation13 + $0x208] sm:$0xff]
    %v1869 = vld [vmem:[#allocation13 + $0x210] sm:$0xff]
    %v1870 = vld [vmem:[#allocation13 + $0x218] sm:$0xff]
    %v1871 = vld [vmem:[#allocation13 + $0x220] sm:$0xff]
    %v1872 = vld [vmem:[#allocation13 + $0x228] sm:$0xff]
    %v1873 = vld [vmem:[#allocation13 + $0x230] sm:$0xff]
    %v1874 = vld [vmem:[#allocation13 + $0x238] sm:$0xff]
    %v1875 = vld [vmem:[#allocation13 + $0x240] sm:$0xff]
    %v1876 = vld [vmem:[#allocation13 + $0x248] sm:$0xff]
    %v1877 = vld [vmem:[#allocation13 + $0x250] sm:$0xff]
    %v1878 = vld [vmem:[#allocation13 + $0x258] sm:$0xff]
    %v1879 = vld [vmem:[#allocation13 + $0x260] sm:$0xff]
    %v1880 = vld [vmem:[#allocation13 + $0x268] sm:$0xff]
    %v1881 = vld [vmem:[#allocation13 + $0x270] sm:$0xff]
    %v1882 = vld [vmem:[#allocation13 + $0x278] sm:$0xff]
    %v1883 = vld [vmem:[#allocation13 + $0x280] sm:$0xff]
    %v1884 = vld [vmem:[#allocation13 + $0x288] sm:$0xff]
    %v1885 = vld [vmem:[#allocation13 + $0x290] sm:$0xff]
    %v1886 = vld [vmem:[#allocation13 + $0x298] sm:$0xff]
    %v1887 = vld [vmem:[#allocation13 + $0x2a0] sm:$0xff]
    %v1888 = vld [vmem:[#allocation13 + $0x2a8] sm:$0xff]
    %v1889 = vld [vmem:[#allocation13 + $0x2b0] sm:$0xff]
    %v1890 = vld [vmem:[#allocation13 + $0x2b8] sm:$0xff]
    %v1891 = vld [vmem:[#allocation13 + $0x2c0] sm:$0xff]
    %v1892 = vld [vmem:[#allocation13 + $0x2c8] sm:$0xff]
    %v1893 = vld [vmem:[#allocation13 + $0x2d0] sm:$0xff]
    %v1894 = vld [vmem:[#allocation13 + $0x2d8] sm:$0xff]
    %v1895 = vld [vmem:[#allocation13 + $0x2e0] sm:$0xff]
    %v1896 = vld [vmem:[#allocation13 + $0x2e8] sm:$0xff]
    %v1897 = vld [vmem:[#allocation13 + $0x2f0] sm:$0xff]
    %v1898 = vld [vmem:[#allocation13 + $0x2f8] sm:$0xff]
    %v1899 = vld [vmem:[#allocation13 + $0x300] sm:$0xff]
    %v1900 = vld [vmem:[#allocation13 + $0x308] sm:$0xff]
    %v1901 = vld [vmem:[#allocation13 + $0x310] sm:$0xff]
    %v1902 = vld [vmem:[#allocation13 + $0x318] sm:$0xff]
    %v1903 = vld [vmem:[#allocation13 + $0x320] sm:$0xff]
    %v1904 = vld [vmem:[#allocation13 + $0x328] sm:$0xff]
    %v1905 = vld [vmem:[#allocation13 + $0x330] sm:$0xff]
    %v1906 = vld [vmem:[#allocation13 + $0x338] sm:$0xff]
    %v1907 = vld [vmem:[#allocation13 + $0x340] sm:$0xff]
    %v1908 = vld [vmem:[#allocation13 + $0x348] sm:$0xff]
    %v1909 = vld [vmem:[#allocation13 + $0x350] sm:$0xff]
    %v1910 = vld [vmem:[#allocation13 + $0x358] sm:$0xff]
    %v1911 = vld [vmem:[#allocation13 + $0x360] sm:$0xff]
    %v1912 = vld [vmem:[#allocation13 + $0x368] sm:$0xff]
    %v1913 = vld [vmem:[#allocation13 + $0x370] sm:$0xff]
    %v1914 = vld [vmem:[#allocation13 + $0x378] sm:$0xff]
    %v1915 = vld [vmem:[#allocation13 + $0x380] sm:$0xff]
    %v1916 = vld [vmem:[#allocation13 + $0x388] sm:$0xff]
    %v1917 = vld [vmem:[#allocation13 + $0x390] sm:$0xff]
    %v1918 = vld [vmem:[#allocation13 + $0x398] sm:$0xff]
    %v1919 = vld [vmem:[#allocation13 + $0x3a0] sm:$0xff]
    %v1920 = vld [vmem:[#allocation13 + $0x3a8] sm:$0xff]
    %v1921 = vld [vmem:[#allocation13 + $0x3b0] sm:$0xff]
    %v1922 = vld [vmem:[#allocation13 + $0x3b8] sm:$0xff]
    %v1923 = vld [vmem:[#allocation13 + $0x3c0] sm:$0xff]
    %v1924 = vld [vmem:[#allocation13 + $0x3c8] sm:$0xff]
    %v1925 = vld [vmem:[#allocation13 + $0x3d0] sm:$0xff]
    %v1926 = vld [vmem:[#allocation13 + $0x3d8] sm:$0xff]
    %v1927 = vld [vmem:[#allocation13 + $0x3e0] sm:$0xff]
    %v1928 = vld [vmem:[#allocation13 + $0x3e8] sm:$0xff]
    %v1929 = vld [vmem:[#allocation13 + $0x3f0] sm:$0xff]
    %v1930 = vld [vmem:[#allocation13 + $0x3f8] sm:$0xff]
    %v2059 = vunpack.c.l.b16 %v1803
    %v2060 = vunpack.c.h.b16 %v1803
    %v2061 = vunpack.c.l.b16 %v1804
    %v2062 = vunpack.c.h.b16 %v1804
    %v2063 = vunpack.c.l.b16 %v1805
    %v2064 = vunpack.c.h.b16 %v1805
    %v2065 = vunpack.c.l.b16 %v1806
    %v2066 = vunpack.c.h.b16 %v1806
    %v2067 = vunpack.c.l.b16 %v1807
    %v2068 = vunpack.c.h.b16 %v1807
    %v2069 = vunpack.c.l.b16 %v1808
    %v2070 = vunpack.c.h.b16 %v1808
    %v2071 = vunpack.c.l.b16 %v1809
    %v2072 = vunpack.c.h.b16 %v1809
    %v2073 = vunpack.c.l.b16 %v1810
    %v2074 = vunpack.c.h.b16 %v1810
    %v2075 = vunpack.c.l.b16 %v1811
    %v2076 = vunpack.c.h.b16 %v1811
    %v2077 = vunpack.c.l.b16 %v1812
    %v2078 = vunpack.c.h.b16 %v1812
    %v2079 = vunpack.c.l.b16 %v1813
    %v2080 = vunpack.c.h.b16 %v1813
    %v2081 = vunpack.c.l.b16 %v1814
    %v2082 = vunpack.c.h.b16 %v1814
    %v2083 = vunpack.c.l.b16 %v1815
    %v2084 = vunpack.c.h.b16 %v1815
    %v2085 = vunpack.c.l.b16 %v1816
    %v2086 = vunpack.c.h.b16 %v1816
    %v2087 = vunpack.c.l.b16 %v1817
    %v2088 = vunpack.c.h.b16 %v1817
    %v2089 = vunpack.c.l.b16 %v1818
    %v2090 = vunpack.c.h.b16 %v1818
    %v2091 = vunpack.c.l.b16 %v1819
    %v2092 = vunpack.c.h.b16 %v1819
    %v2093 = vunpack.c.l.b16 %v1820
    %v2094 = vunpack.c.h.b16 %v1820
    %v2095 = vunpack.c.l.b16 %v1821
    %v2096 = vunpack.c.h.b16 %v1821
    %v2097 = vunpack.c.l.b16 %v1822
    %v2098 = vunpack.c.h.b16 %v1822
    %v2099 = vunpack.c.l.b16 %v1823
    %v2100 = vunpack.c.h.b16 %v1823
    %v2101 = vunpack.c.l.b16 %v1824
    %v2102 = vunpack.c.h.b16 %v1824
    %v2103 = vunpack.c.l.b16 %v1825
    %v2104 = vunpack.c.h.b16 %v1825
    %v2105 = vunpack.c.l.b16 %v1826
    %v2106 = vunpack.c.h.b16 %v1826
    %v2107 = vunpack.c.l.b16 %v1827
    %v2108 = vunpack.c.h.b16 %v1827
    %v2109 = vunpack.c.l.b16 %v1828
    %v2110 = vunpack.c.h.b16 %v1828
    %v2111 = vunpack.c.l.b16 %v1829
    %v2112 = vunpack.c.h.b16 %v1829
    %v2113 = vunpack.c.l.b16 %v1830
    %v2114 = vunpack.c.h.b16 %v1830
    %v2115 = vunpack.c.l.b16 %v1831
    %v2116 = vunpack.c.h.b16 %v1831
    %v2117 = vunpack.c.l.b16 %v1832
    %v2118 = vunpack.c.h.b16 %v1832
    %v2119 = vunpack.c.l.b16 %v1833
    %v2120 = vunpack.c.h.b16 %v1833
    %v2121 = vunpack.c.l.b16 %v1834
    %v2122 = vunpack.c.h.b16 %v1834
    %v2123 = vunpack.c.l.b16 %v1835
    %v2124 = vunpack.c.h.b16 %v1835
    %v2125 = vunpack.c.l.b16 %v1836
    %v2126 = vunpack.c.h.b16 %v1836
    %v2127 = vunpack.c.l.b16 %v1837
    %v2128 = vunpack.c.h.b16 %v1837
    %v2129 = vunpack.c.l.b16 %v1838
    %v2130 = vunpack.c.h.b16 %v1838
    %v2131 = vunpack.c.l.b16 %v1839
    %v2132 = vunpack.c.h.b16 %v1839
    %v2133 = vunpack.c.l.b16 %v1840
    %v2134 = vunpack.c.h.b16 %v1840
    %v2135 = vunpack.c.l.b16 %v1841
    %v2136 = vunpack.c.h.b16 %v1841
    %v2137 = vunpack.c.l.b16 %v1842
    %v2138 = vunpack.c.h.b16 %v1842
    %v2139 = vunpack.c.l.b16 %v1843
    %v2140 = vunpack.c.h.b16 %v1843
    %v2141 = vunpack.c.l.b16 %v1844
    %v2142 = vunpack.c.h.b16 %v1844
    %v2143 = vunpack.c.l.b16 %v1845
    %v2144 = vunpack.c.h.b16 %v1845
    %v2145 = vunpack.c.l.b16 %v1846
    %v2146 = vunpack.c.h.b16 %v1846
    %v2147 = vunpack.c.l.b16 %v1847
    %v2148 = vunpack.c.h.b16 %v1847
    %v2149 = vunpack.c.l.b16 %v1848
    %v2150 = vunpack.c.h.b16 %v1848
    %v2151 = vunpack.c.l.b16 %v1849
    %v2152 = vunpack.c.h.b16 %v1849
    %v2153 = vunpack.c.l.b16 %v1850
    %v2154 = vunpack.c.h.b16 %v1850
    %v2155 = vunpack.c.l.b16 %v1851
    %v2156 = vunpack.c.h.b16 %v1851
    %v2157 = vunpack.c.l.b16 %v1852
    %v2158 = vunpack.c.h.b16 %v1852
    %v2159 = vunpack.c.l.b16 %v1853
    %v2160 = vunpack.c.h.b16 %v1853
    %v2161 = vunpack.c.l.b16 %v1854
    %v2162 = vunpack.c.h.b16 %v1854
    %v2163 = vunpack.c.l.b16 %v1855
    %v2164 = vunpack.c.h.b16 %v1855
    %v2165 = vunpack.c.l.b16 %v1856
    %v2166 = vunpack.c.h.b16 %v1856
    %v2167 = vunpack.c.l.b16 %v1857
    %v2168 = vunpack.c.h.b16 %v1857
    %v2169 = vunpack.c.l.b16 %v1858
    %v2170 = vunpack.c.h.b16 %v1858
    %v2171 = vunpack.c.l.b16 %v1859
    %v2172 = vunpack.c.h.b16 %v1859
    %v2173 = vunpack.c.l.b16 %v1860
    %v2174 = vunpack.c.h.b16 %v1860
    %v2175 = vunpack.c.l.b16 %v1861
    %v2176 = vunpack.c.h.b16 %v1861
    %v2177 = vunpack.c.l.b16 %v1862
    %v2178 = vunpack.c.h.b16 %v1862
    %v2179 = vunpack.c.l.b16 %v1863
    %v2180 = vunpack.c.h.b16 %v1863
    %v2181 = vunpack.c.l.b16 %v1864
    %v2182 = vunpack.c.h.b16 %v1864
    %v2183 = vunpack.c.l.b16 %v1865
    %v2184 = vunpack.c.h.b16 %v1865
    %v2185 = vunpack.c.l.b16 %v1866
    %v2186 = vunpack.c.h.b16 %v1866
    %v2187 = vunpack.c.l.b16 %v1867
    %v2188 = vunpack.c.h.b16 %v1867
    %v2189 = vunpack.c.l.b16 %v1868
    %v2190 = vunpack.c.h.b16 %v1868
    %v2191 = vunpack.c.l.b16 %v1869
    %v2192 = vunpack.c.h.b16 %v1869
    %v2193 = vunpack.c.l.b16 %v1870
    %v2194 = vunpack.c.h.b16 %v1870
    %v2195 = vunpack.c.l.b16 %v1871
    %v2196 = vunpack.c.h.b16 %v1871
    %v2197 = vunpack.c.l.b16 %v1872
    %v2198 = vunpack.c.h.b16 %v1872
    %v2199 = vunpack.c.l.b16 %v1873
    %v2200 = vunpack.c.h.b16 %v1873
    %v2201 = vunpack.c.l.b16 %v1874
    %v2202 = vunpack.c.h.b16 %v1874
    %v2203 = vunpack.c.l.b16 %v1875
    %v2204 = vunpack.c.h.b16 %v1875
    %v2205 = vunpack.c.l.b16 %v1876
    %v2206 = vunpack.c.h.b16 %v1876
    %v2207 = vunpack.c.l.b16 %v1877
    %v2208 = vunpack.c.h.b16 %v1877
    %v2209 = vunpack.c.l.b16 %v1878
    %v2210 = vunpack.c.h.b16 %v1878
    %v2211 = vunpack.c.l.b16 %v1879
    %v2212 = vunpack.c.h.b16 %v1879
    %v2213 = vunpack.c.l.b16 %v1880
    %v2214 = vunpack.c.h.b16 %v1880
    %v2215 = vunpack.c.l.b16 %v1881
    %v2216 = vunpack.c.h.b16 %v1881
    %v2217 = vunpack.c.l.b16 %v1882
    %v2218 = vunpack.c.h.b16 %v1882
    %v2219 = vunpack.c.l.b16 %v1883
    %v2220 = vunpack.c.h.b16 %v1883
    %v2221 = vunpack.c.l.b16 %v1884
    %v2222 = vunpack.c.h.b16 %v1884
    %v2223 = vunpack.c.l.b16 %v1885
    %v2224 = vunpack.c.h.b16 %v1885
    %v2225 = vunpack.c.l.b16 %v1886
    %v2226 = vunpack.c.h.b16 %v1886
    %v2227 = vunpack.c.l.b16 %v1887
    %v2228 = vunpack.c.h.b16 %v1887
    %v2229 = vunpack.c.l.b16 %v1888
    %v2230 = vunpack.c.h.b16 %v1888
    %v2231 = vunpack.c.l.b16 %v1889
    %v2232 = vunpack.c.h.b16 %v1889
    %v2233 = vunpack.c.l.b16 %v1890
    %v2234 = vunpack.c.h.b16 %v1890
    %v2235 = vunpack.c.l.b16 %v1891
    %v2236 = vunpack.c.h.b16 %v1891
    %v2237 = vunpack.c.l.b16 %v1892
    %v2238 = vunpack.c.h.b16 %v1892
    %v2239 = vunpack.c.l.b16 %v1893
    %v2240 = vunpack.c.h.b16 %v1893
    %v2241 = vunpack.c.l.b16 %v1894
    %v2242 = vunpack.c.h.b16 %v1894
    %v2243 = vunpack.c.l.b16 %v1895
    %v2244 = vunpack.c.h.b16 %v1895
    %v2245 = vunpack.c.l.b16 %v1896
    %v2246 = vunpack.c.h.b16 %v1896
    %v2247 = vunpack.c.l.b16 %v1897
    %v2248 = vunpack.c.h.b16 %v1897
    %v2249 = vunpack.c.l.b16 %v1898
    %v2250 = vunpack.c.h.b16 %v1898
    %v2251 = vunpack.c.l.b16 %v1899
    %v2252 = vunpack.c.h.b16 %v1899
    %v2253 = vunpack.c.l.b16 %v1900
    %v2254 = vunpack.c.h.b16 %v1900
    %v2255 = vunpack.c.l.b16 %v1901
    %v2256 = vunpack.c.h.b16 %v1901
    %v2257 = vunpack.c.l.b16 %v1902
    %v2258 = vunpack.c.h.b16 %v1902
    %v2259 = vunpack.c.l.b16 %v1903
    %v2260 = vunpack.c.h.b16 %v1903
    %v2261 = vunpack.c.l.b16 %v1904
    %v2262 = vunpack.c.h.b16 %v1904
    %v2263 = vunpack.c.l.b16 %v1905
    %v2264 = vunpack.c.h.b16 %v1905
    %v2265 = vunpack.c.l.b16 %v1906
    %v2266 = vunpack.c.h.b16 %v1906
    %v2267 = vunpack.c.l.b16 %v1907
    %v2268 = vunpack.c.h.b16 %v1907
    %v2269 = vunpack.c.l.b16 %v1908
    %v2270 = vunpack.c.h.b16 %v1908
    %v2271 = vunpack.c.l.b16 %v1909
    %v2272 = vunpack.c.h.b16 %v1909
    %v2273 = vunpack.c.l.b16 %v1910
    %v2274 = vunpack.c.h.b16 %v1910
    %v2275 = vunpack.c.l.b16 %v1911
    %v2276 = vunpack.c.h.b16 %v1911
    %v2277 = vunpack.c.l.b16 %v1912
    %v2278 = vunpack.c.h.b16 %v1912
    %v2279 = vunpack.c.l.b16 %v1913
    %v2280 = vunpack.c.h.b16 %v1913
    %v2281 = vunpack.c.l.b16 %v1914
    %v2282 = vunpack.c.h.b16 %v1914
    %v2283 = vunpack.c.l.b16 %v1915
    %v2284 = vunpack.c.h.b16 %v1915
    %v2285 = vunpack.c.l.b16 %v1916
    %v2286 = vunpack.c.h.b16 %v1916
    %v2287 = vunpack.c.l.b16 %v1917
    %v2288 = vunpack.c.h.b16 %v1917
    %v2289 = vunpack.c.l.b16 %v1918
    %v2290 = vunpack.c.h.b16 %v1918
    %v2291 = vunpack.c.l.b16 %v1919
    %v2292 = vunpack.c.h.b16 %v1919
    %v2293 = vunpack.c.l.b16 %v1920
    %v2294 = vunpack.c.h.b16 %v1920
    %v2295 = vunpack.c.l.b16 %v1921
    %v2296 = vunpack.c.h.b16 %v1921
    %v2297 = vunpack.c.l.b16 %v1922
    %v2298 = vunpack.c.h.b16 %v1922
    %v2299 = vunpack.c.l.b16 %v1923
    %v2300 = vunpack.c.h.b16 %v1923
    %v2301 = vunpack.c.l.b16 %v1924
    %v2302 = vunpack.c.h.b16 %v1924
    %v2303 = vunpack.c.l.b16 %v1925
    %v2304 = vunpack.c.h.b16 %v1925
    %v2305 = vunpack.c.l.b16 %v1926
    %v2306 = vunpack.c.h.b16 %v1926
    %v2307 = vunpack.c.l.b16 %v1927
    %v2308 = vunpack.c.h.b16 %v1927
    %v2309 = vunpack.c.l.b16 %v1928
    %v2310 = vunpack.c.h.b16 %v1928
    %v2311 = vunpack.c.l.b16 %v1929
    %v2312 = vunpack.c.h.b16 %v1929
    %v2313 = vunpack.c.l.b16 %v1930
    %v2314 = vunpack.c.h.b16 %v1930
    %v2315 = vpack.c.b16 %v2075, %v2059
    %v2316 = vpack.c.b16 %v2076, %v2060
    %v2317 = vpack.c.b16 %v2077, %v2061
    %v2318 = vpack.c.b16 %v2078, %v2062
    %v2319 = vpack.c.b16 %v2079, %v2063
    %v2320 = vpack.c.b16 %v2080, %v2064
    %v2321 = vpack.c.b16 %v2081, %v2065
    %v2322 = vpack.c.b16 %v2082, %v2066
    %v2323 = vpack.c.b16 %v2083, %v2067
    %v2324 = vpack.c.b16 %v2084, %v2068
    %v2325 = vpack.c.b16 %v2085, %v2069
    %v2326 = vpack.c.b16 %v2086, %v2070
    %v2327 = vpack.c.b16 %v2087, %v2071
    %v2328 = vpack.c.b16 %v2088, %v2072
    %v2329 = vpack.c.b16 %v2089, %v2073
    %v2330 = vpack.c.b16 %v2090, %v2074
    %v2331 = vpack.c.b16 %v2107, %v2091
    %v2332 = vpack.c.b16 %v2108, %v2092
    %v2333 = vpack.c.b16 %v2109, %v2093
    %v2334 = vpack.c.b16 %v2110, %v2094
    %v2335 = vpack.c.b16 %v2111, %v2095
    %v2336 = vpack.c.b16 %v2112, %v2096
    %v2337 = vpack.c.b16 %v2113, %v2097
    %v2338 = vpack.c.b16 %v2114, %v2098
    %v2339 = vpack.c.b16 %v2115, %v2099
    %v2340 = vpack.c.b16 %v2116, %v2100
    %v2341 = vpack.c.b16 %v2117, %v2101
    %v2342 = vpack.c.b16 %v2118, %v2102
    %v2343 = vpack.c.b16 %v2119, %v2103
    %v2344 = vpack.c.b16 %v2120, %v2104
    %v2345 = vpack.c.b16 %v2121, %v2105
    %v2346 = vpack.c.b16 %v2122, %v2106
    %v2347 = vpack.c.b16 %v2139, %v2123
    %v2348 = vpack.c.b16 %v2140, %v2124
    %v2349 = vpack.c.b16 %v2141, %v2125
    %v2350 = vpack.c.b16 %v2142, %v2126
    %v2351 = vpack.c.b16 %v2143, %v2127
    %v2352 = vpack.c.b16 %v2144, %v2128
    %v2353 = vpack.c.b16 %v2145, %v2129
    %v2354 = vpack.c.b16 %v2146, %v2130
    %v2355 = vpack.c.b16 %v2147, %v2131
    %v2356 = vpack.c.b16 %v2148, %v2132
    %v2357 = vpack.c.b16 %v2149, %v2133
    %v2358 = vpack.c.b16 %v2150, %v2134
    %v2359 = vpack.c.b16 %v2151, %v2135
    %v2360 = vpack.c.b16 %v2152, %v2136
    %v2361 = vpack.c.b16 %v2153, %v2137
    %v2362 = vpack.c.b16 %v2154, %v2138
    %v2363 = vpack.c.b16 %v2171, %v2155
    %v2364 = vpack.c.b16 %v2172, %v2156
    %v2365 = vpack.c.b16 %v2173, %v2157
    %v2366 = vpack.c.b16 %v2174, %v2158
    %v2367 = vpack.c.b16 %v2175, %v2159
    %v2368 = vpack.c.b16 %v2176, %v2160
    %v2369 = vpack.c.b16 %v2177, %v2161
    %v2370 = vpack.c.b16 %v2178, %v2162
    %v2371 = vpack.c.b16 %v2179, %v2163
    %v2372 = vpack.c.b16 %v2180, %v2164
    %v2373 = vpack.c.b16 %v2181, %v2165
    %v2374 = vpack.c.b16 %v2182, %v2166
    %v2375 = vpack.c.b16 %v2183, %v2167
    %v2376 = vpack.c.b16 %v2184, %v2168
    %v2377 = vpack.c.b16 %v2185, %v2169
    %v2378 = vpack.c.b16 %v2186, %v2170
    %v2379 = vpack.c.b16 %v2203, %v2187
    %v2380 = vpack.c.b16 %v2204, %v2188
    %v2381 = vpack.c.b16 %v2205, %v2189
    %v2382 = vpack.c.b16 %v2206, %v2190
    %v2383 = vpack.c.b16 %v2207, %v2191
    %v2384 = vpack.c.b16 %v2208, %v2192
    %v2385 = vpack.c.b16 %v2209, %v2193
    %v2386 = vpack.c.b16 %v2210, %v2194
    %v2387 = vpack.c.b16 %v2211, %v2195
    %v2388 = vpack.c.b16 %v2212, %v2196
    %v2389 = vpack.c.b16 %v2213, %v2197
    %v2390 = vpack.c.b16 %v2214, %v2198
    %v2391 = vpack.c.b16 %v2215, %v2199
    %v2392 = vpack.c.b16 %v2216, %v2200
    %v2393 = vpack.c.b16 %v2217, %v2201
    %v2394 = vpack.c.b16 %v2218, %v2202
    %v2395 = vpack.c.b16 %v2235, %v2219
    %v2396 = vpack.c.b16 %v2236, %v2220
    %v2397 = vpack.c.b16 %v2237, %v2221
    %v2398 = vpack.c.b16 %v2238, %v2222
    %v2399 = vpack.c.b16 %v2239, %v2223
    %v2400 = vpack.c.b16 %v2240, %v2224
    %v2401 = vpack.c.b16 %v2241, %v2225
    %v2402 = vpack.c.b16 %v2242, %v2226
    %v2403 = vpack.c.b16 %v2243, %v2227
    %v2404 = vpack.c.b16 %v2244, %v2228
    %v2405 = vpack.c.b16 %v2245, %v2229
    %v2406 = vpack.c.b16 %v2246, %v2230
    %v2407 = vpack.c.b16 %v2247, %v2231
    %v2408 = vpack.c.b16 %v2248, %v2232
    %v2409 = vpack.c.b16 %v2249, %v2233
    %v2410 = vpack.c.b16 %v2250, %v2234
    %v2411 = vpack.c.b16 %v2267, %v2251
    %v2412 = vpack.c.b16 %v2268, %v2252
    %v2413 = vpack.c.b16 %v2269, %v2253
    %v2414 = vpack.c.b16 %v2270, %v2254
    %v2415 = vpack.c.b16 %v2271, %v2255
    %v2416 = vpack.c.b16 %v2272, %v2256
    %v2417 = vpack.c.b16 %v2273, %v2257
    %v2418 = vpack.c.b16 %v2274, %v2258
    %v2419 = vpack.c.b16 %v2275, %v2259
    %v2420 = vpack.c.b16 %v2276, %v2260
    %v2421 = vpack.c.b16 %v2277, %v2261
    %v2422 = vpack.c.b16 %v2278, %v2262
    %v2423 = vpack.c.b16 %v2279, %v2263
    %v2424 = vpack.c.b16 %v2280, %v2264
    %v2425 = vpack.c.b16 %v2281, %v2265
    %v2426 = vpack.c.b16 %v2282, %v2266
    %v2427 = vpack.c.b16 %v2299, %v2283
    %v2428 = vpack.c.b16 %v2300, %v2284
    %v2429 = vpack.c.b16 %v2301, %v2285
    %v2430 = vpack.c.b16 %v2302, %v2286
    %v2431 = vpack.c.b16 %v2303, %v2287
    %v2432 = vpack.c.b16 %v2304, %v2288
    %v2433 = vpack.c.b16 %v2305, %v2289
    %v2434 = vpack.c.b16 %v2306, %v2290
    %v2435 = vpack.c.b16 %v2307, %v2291
    %v2436 = vpack.c.b16 %v2308, %v2292
    %v2437 = vpack.c.b16 %v2309, %v2293
    %v2438 = vpack.c.b16 %v2310, %v2294
    %v2439 = vpack.c.b16 %v2311, %v2295
    %v2440 = vpack.c.b16 %v2312, %v2296
    %v2441 = vpack.c.b16 %v2313, %v2297
    %v2442 = vpack.c.b16 %v2314, %v2298
    %2571 = vmatprep.subr.bf16.mxu0 %v2428
    %2572 = vmatpush1.bf16.msra.mxu0 %v2427
    %2573 = vmatprep.subr.bf16.mxu0 %v2412
    %2574 = vmatpush1.bf16.msra.mxu0 %v2411
    %2575 = vmatprep.subr.bf16.mxu0 %v2396
    %2576 = vmatpush1.bf16.msra.mxu0 %v2395
    %2577 = vmatprep.subr.bf16.mxu0 %v2380
    %2578 = vmatpush1.bf16.msra.mxu0 %v2379
    %2579 = vmatprep.subr.bf16.mxu0 %v2364
    %2580 = vmatpush1.bf16.msra.mxu0 %v2363
    %2581 = vmatprep.subr.bf16.mxu0 %v2348
    %2582 = vmatpush1.bf16.msra.mxu0 %v2347
    %2583 = vmatprep.subr.bf16.mxu0 %v2332
    %2584 = vmatpush1.bf16.msra.mxu0 %v2331
    %2585 = vmatprep.subr.bf16.mxu0 %v2316
    %2586 = vmatpush1.bf16.msra.mxu0 %v2315
    %2587 = vmatprep.subr.bf16.mxu0 0
    %2588 = vmatpush2.bf16.msra.mxu0 0
    %2589 = vmatprep.subr.bf16.mxu0 0
    %2590 = vmatpush2.bf16.msra.mxu0 0
    %2591 = vmatprep.subr.bf16.mxu0 0
    %2592 = vmatpush2.bf16.msra.mxu0 0
    %2593 = vmatprep.subr.bf16.mxu0 0
    %2594 = vmatpush2.bf16.msra.mxu0 0
    %2595 = vmatprep.subr.bf16.mxu0 0
    %2596 = vmatpush2.bf16.msra.mxu0 0
    %2597 = vmatprep.subr.bf16.mxu0 0
    %2598 = vmatpush2.bf16.msra.mxu0 0
    %2599 = vmatprep.subr.bf16.mxu0 0
    %2600 = vmatpush2.bf16.msra.mxu0 0
    %2601 = vmatprep.subr.bf16.mxu0 0
    %2602 = vmatpush2.bf16.msra.mxu0 0
    %2603 = vmatprep.mubr.bf16.mxu0 0
    %2604 = vmatmul.mubr.bf16.gmra.mxu0 %v1799
    %v2605 = vpop.f32.mrf.mxu0
    %v2606 = vadd.f32 0.0, %v2605
    %v2607 = vpop.f32.mrf.mxu0
    %v2608 = vadd.f32 0.0, %v2607
    %v2609 = vpop.f32.mrf.mxu0
    %v2610 = vadd.f32 0.0, %v2609
    %v2611 = vpop.f32.mrf.mxu0
    %v2612 = vadd.f32 0.0, %v2611
    %2613 = vmatprep.mubr.bf16.mxu0 0
    %2614 = vmatmul.mubr.bf16.gmra.mxu0 %v1800
    %v2615 = vpop.f32.mrf.mxu0
    %v2616 = vadd.f32 0.0, %v2615
    %v2617 = vpop.f32.mrf.mxu0
    %v2618 = vadd.f32 0.0, %v2617
    %v2619 = vpop.f32.mrf.mxu0
    %v2620 = vadd.f32 0.0, %v2619
    %v2621 = vpop.f32.mrf.mxu0
    %v2622 = vadd.f32 0.0, %v2621
    %2623 = vmatprep.mubr.bf16.mxu0 0
    %2624 = vmatmul.mubr.bf16.gmra.mxu0 %v1801
    %v2625 = vpop.f32.mrf.mxu0
    %v2626 = vadd.f32 0.0, %v2625
    %v2627 = vpop.f32.mrf.mxu0
    %v2628 = vadd.f32 0.0, %v2627
    %v2629 = vpop.f32.mrf.mxu0
    %v2630 = vadd.f32 0.0, %v2629
    %v2631 = vpop.f32.mrf.mxu0
    %v2632 = vadd.f32 0.0, %v2631
    %2633 = vmatprep.mubr.bf16.mxu0 0
    %2634 = vmatmul.mubr.bf16.gmra.mxu0 %v1802
    %v2635 = vpop.f32.mrf.mxu0
    %v2636 = vadd.f32 0.0, %v2635
    %v2637 = vpop.f32.mrf.mxu0
    %v2638 = vadd.f32 0.0, %v2637
    %v2639 = vpop.f32.mrf.mxu0
    %v2640 = vadd.f32 0.0, %v2639
    %v2641 = vpop.f32.mrf.mxu0
    %v2642 = vadd.f32 0.0, %v2641
    %2643 = vdwg.mxu0
    %2644 = vmatprep.subr.bf16.mxu0 %v2430
    %2645 = vmatpush1.bf16.msra.mxu0 %v2429
    %2646 = vmatprep.subr.bf16.mxu0 %v2414
    %2647 = vmatpush1.bf16.msra.mxu0 %v2413
    %2648 = vmatprep.subr.bf16.mxu0 %v2398
    %2649 = vmatpush1.bf16.msra.mxu0 %v2397
    %2650 = vmatprep.subr.bf16.mxu0 %v2382
    %2651 = vmatpush1.bf16.msra.mxu0 %v2381
    %2652 = vmatprep.subr.bf16.mxu0 %v2366
    %2653 = vmatpush1.bf16.msra.mxu0 %v2365
    %2654 = vmatprep.subr.bf16.mxu0 %v2350
    %2655 = vmatpush1.bf16.msra.mxu0 %v2349
    %2656 = vmatprep.subr.bf16.mxu0 %v2334
    %2657 = vmatpush1.bf16.msra.mxu0 %v2333
    %2658 = vmatprep.subr.bf16.mxu0 %v2318
    %2659 = vmatpush1.bf16.msra.mxu0 %v2317
    %2660 = vmatprep.subr.bf16.mxu0 0
    %2661 = vmatpush2.bf16.msra.mxu0 0
    %2662 = vmatprep.subr.bf16.mxu0 0
    %2663 = vmatpush2.bf16.msra.mxu0 0
    %2664 = vmatprep.subr.bf16.mxu0 0
    %2665 = vmatpush2.bf16.msra.mxu0 0
    %2666 = vmatprep.subr.bf16.mxu0 0
    %2667 = vmatpush2.bf16.msra.mxu0 0
    %2668 = vmatprep.subr.bf16.mxu0 0
    %2669 = vmatpush2.bf16.msra.mxu0 0
    %2670 = vmatprep.subr.bf16.mxu0 0
    %2671 = vmatpush2.bf16.msra.mxu0 0
    %2672 = vmatprep.subr.bf16.mxu0 0
    %2673 = vmatpush2.bf16.msra.mxu0 0
    %2674 = vmatprep.subr.bf16.mxu0 0
    %2675 = vmatpush2.bf16.msra.mxu0 0
    %2676 = vmatprep.mubr.bf16.mxu0 0
    %2677 = vmatmul.mubr.bf16.gmra.mxu0 %v1799
    %v2678 = vpop.f32.mrf.mxu0
    %v2679 = vadd.f32 0.0, %v2678
    %v2680 = vpop.f32.mrf.mxu0
    %v2681 = vadd.f32 0.0, %v2680
    %v2682 = vpop.f32.mrf.mxu0
    %v2683 = vadd.f32 0.0, %v2682
    %v2684 = vpop.f32.mrf.mxu0
    %v2685 = vadd.f32 0.0, %v2684
    %2686 = vmatprep.mubr.bf16.mxu0 0
    %2687 = vmatmul.mubr.bf16.gmra.mxu0 %v1800
    %v2688 = vpop.f32.mrf.mxu0
    %v2689 = vadd.f32 0.0, %v2688
    %v2690 = vpop.f32.mrf.mxu0
    %v2691 = vadd.f32 0.0, %v2690
    %v2692 = vpop.f32.mrf.mxu0
    %v2693 = vadd.f32 0.0, %v2692
    %v2694 = vpop.f32.mrf.mxu0
    %v2695 = vadd.f32 0.0, %v2694
    %2696 = vmatprep.mubr.bf16.mxu0 0
    %2697 = vmatmul.mubr.bf16.gmra.mxu0 %v1801
    %v2698 = vpop.f32.mrf.mxu0
    %v2699 = vadd.f32 0.0, %v2698
    %v2700 = vpop.f32.mrf.mxu0
    %v2701 = vadd.f32 0.0, %v2700
    %v2702 = vpop.f32.mrf.mxu0
    %v2703 = vadd.f32 0.0, %v2702
    %v2704 = vpop.f32.mrf.mxu0
    %v2705 = vadd.f32 0.0, %v2704
    %2706 = vmatprep.mubr.bf16.mxu0 0
    %2707 = vmatmul.mubr.bf16.gmra.mxu0 %v1802
    %v2708 = vpop.f32.mrf.mxu0
    %v2709 = vadd.f32 0.0, %v2708
    %v2710 = vpop.f32.mrf.mxu0
    %v2711 = vadd.f32 0.0, %v2710
    %v2712 = vpop.f32.mrf.mxu0
    %v2713 = vadd.f32 0.0, %v2712
    %v2714 = vpop.f32.mrf.mxu0
    %v2715 = vadd.f32 0.0, %v2714
    %2716 = vdwg.mxu0
    %2717 = vmatprep.subr.bf16.mxu0 %v2432
    %2718 = vmatpush1.bf16.msra.mxu0 %v2431
    %2719 = vmatprep.subr.bf16.mxu0 %v2416
    %2720 = vmatpush1.bf16.msra.mxu0 %v2415
    %2721 = vmatprep.subr.bf16.mxu0 %v2400
    %2722 = vmatpush1.bf16.msra.mxu0 %v2399
    %2723 = vmatprep.subr.bf16.mxu0 %v2384
    %2724 = vmatpush1.bf16.msra.mxu0 %v2383
    %2725 = vmatprep.subr.bf16.mxu0 %v2368
    %2726 = vmatpush1.bf16.msra.mxu0 %v2367
    %2727 = vmatprep.subr.bf16.mxu0 %v2352
    %2728 = vmatpush1.bf16.msra.mxu0 %v2351
    %2729 = vmatprep.subr.bf16.mxu0 %v2336
    %2730 = vmatpush1.bf16.msra.mxu0 %v2335
    %2731 = vmatprep.subr.bf16.mxu0 %v2320
    %2732 = vmatpush1.bf16.msra.mxu0 %v2319
    %2733 = vmatprep.subr.bf16.mxu0 0
    %2734 = vmatpush2.bf16.msra.mxu0 0
    %2735 = vmatprep.subr.bf16.mxu0 0
    %2736 = vmatpush2.bf16.msra.mxu0 0
    %2737 = vmatprep.subr.bf16.mxu0 0
    %2738 = vmatpush2.bf16.msra.mxu0 0
    %2739 = vmatprep.subr.bf16.mxu0 0
    %2740 = vmatpush2.bf16.msra.mxu0 0
    %2741 = vmatprep.subr.bf16.mxu0 0
    %2742 = vmatpush2.bf16.msra.mxu0 0
    %2743 = vmatprep.subr.bf16.mxu0 0
    %2744 = vmatpush2.bf16.msra.mxu0 0
    %2745 = vmatprep.subr.bf16.mxu0 0
    %2746 = vmatpush2.bf16.msra.mxu0 0
    %2747 = vmatprep.subr.bf16.mxu0 0
    %2748 = vmatpush2.bf16.msra.mxu0 0
    %2749 = vmatprep.mubr.bf16.mxu0 0
    %2750 = vmatmul.mubr.bf16.gmra.mxu0 %v1799
    %v2751 = vpop.f32.mrf.mxu0
    %v2752 = vadd.f32 0.0, %v2751
    %v2753 = vpop.f32.mrf.mxu0
    %v2754 = vadd.f32 0.0, %v2753
    %v2755 = vpop.f32.mrf.mxu0
    %v2756 = vadd.f32 0.0, %v2755
    %v2757 = vpop.f32.mrf.mxu0
    %v2758 = vadd.f32 0.0, %v2757
    %2759 = vmatprep.mubr.bf16.mxu0 0
    %2760 = vmatmul.mubr.bf16.gmra.mxu0 %v1800
    %v2761 = vpop.f32.mrf.mxu0
    %v2762 = vadd.f32 0.0, %v2761
    %v2763 = vpop.f32.mrf.mxu0
    %v2764 = vadd.f32 0.0, %v2763
    %v2765 = vpop.f32.mrf.mxu0
    %v2766 = vadd.f32 0.0, %v2765
    %v2767 = vpop.f32.mrf.mxu0
    %v2768 = vadd.f32 0.0, %v2767
    %2769 = vmatprep.mubr.bf16.mxu0 0
    %2770 = vmatmul.mubr.bf16.gmra.mxu0 %v1801
    %v2771 = vpop.f32.mrf.mxu0
    %v2772 = vadd.f32 0.0, %v2771
    %v2773 = vpop.f32.mrf.mxu0
    %v2774 = vadd.f32 0.0, %v2773
    %v2775 = vpop.f32.mrf.mxu0
    %v2776 = vadd.f32 0.0, %v2775
    %v2777 = vpop.f32.mrf.mxu0
    %v2778 = vadd.f32 0.0, %v2777
    %2779 = vmatprep.mubr.bf16.mxu0 0
    %2780 = vmatmul.mubr.bf16.gmra.mxu0 %v1802
    %v2781 = vpop.f32.mrf.mxu0
    %v2782 = vadd.f32 0.0, %v2781
    %v2783 = vpop.f32.mrf.mxu0
    %v2784 = vadd.f32 0.0, %v2783
    %v2785 = vpop.f32.mrf.mxu0
    %v2786 = vadd.f32 0.0, %v2785
    %v2787 = vpop.f32.mrf.mxu0
    %v2788 = vadd.f32 0.0, %v2787
    %2789 = vdwg.mxu0
    %2790 = vmatprep.subr.bf16.mxu0 %v2434
    %2791 = vmatpush1.bf16.msra.mxu0 %v2433
    %2792 = vmatprep.subr.bf16.mxu0 %v2418
    %2793 = vmatpush1.bf16.msra.mxu0 %v2417
    %2794 = vmatprep.subr.bf16.mxu0 %v2402
    %2795 = vmatpush1.bf16.msra.mxu0 %v2401
    %2796 = vmatprep.subr.bf16.mxu0 %v2386
    %2797 = vmatpush1.bf16.msra.mxu0 %v2385
    %2798 = vmatprep.subr.bf16.mxu0 %v2370
    %2799 = vmatpush1.bf16.msra.mxu0 %v2369
    %2800 = vmatprep.subr.bf16.mxu0 %v2354
    %2801 = vmatpush1.bf16.msra.mxu0 %v2353
    %2802 = vmatprep.subr.bf16.mxu0 %v2338
    %2803 = vmatpush1.bf16.msra.mxu0 %v2337
    %2804 = vmatprep.subr.bf16.mxu0 %v2322
    %2805 = vmatpush1.bf16.msra.mxu0 %v2321
    %2806 = vmatprep.subr.bf16.mxu0 0
    %2807 = vmatpush2.bf16.msra.mxu0 0
    %2808 = vmatprep.subr.bf16.mxu0 0
    %2809 = vmatpush2.bf16.msra.mxu0 0
    %2810 = vmatprep.subr.bf16.mxu0 0
    %2811 = vmatpush2.bf16.msra.mxu0 0
    %2812 = vmatprep.subr.bf16.mxu0 0
    %2813 = vmatpush2.bf16.msra.mxu0 0
    %2814 = vmatprep.subr.bf16.mxu0 0
    %2815 = vmatpush2.bf16.msra.mxu0 0
    %2816 = vmatprep.subr.bf16.mxu0 0
    %2817 = vmatpush2.bf16.msra.mxu0 0
    %2818 = vmatprep.subr.bf16.mxu0 0
    %2819 = vmatpush2.bf16.msra.mxu0 0
    %2820 = vmatprep.subr.bf16.mxu0 0
    %2821 = vmatpush2.bf16.msra.mxu0 0
    %2822 = vmatprep.mubr.bf16.mxu0 0
    %2823 = vmatmul.mubr.bf16.gmra.mxu0 %v1799
    %v2824 = vpop.f32.mrf.mxu0
    %v2825 = vadd.f32 0.0, %v2824
    %v2826 = vpop.f32.mrf.mxu0
    %v2827 = vadd.f32 0.0, %v2826
    %v2828 = vpop.f32.mrf.mxu0
    %v2829 = vadd.f32 0.0, %v2828
    %v2830 = vpop.f32.mrf.mxu0
    %v2831 = vadd.f32 0.0, %v2830
    %2832 = vmatprep.mubr.bf16.mxu0 0
    %2833 = vmatmul.mubr.bf16.gmra.mxu0 %v1800
    %v2834 = vpop.f32.mrf.mxu0
    %v2835 = vadd.f32 0.0, %v2834
    %v2836 = vpop.f32.mrf.mxu0
    %v2837 = vadd.f32 0.0, %v2836
    %v2838 = vpop.f32.mrf.mxu0
    %v2839 = vadd.f32 0.0, %v2838
    %v2840 = vpop.f32.mrf.mxu0
    %v2841 = vadd.f32 0.0, %v2840
    %2842 = vmatprep.mubr.bf16.mxu0 0
    %2843 = vmatmul.mubr.bf16.gmra.mxu0 %v1801
    %v2844 = vpop.f32.mrf.mxu0
    %v2845 = vadd.f32 0.0, %v2844
    %v2846 = vpop.f32.mrf.mxu0
    %v2847 = vadd.f32 0.0, %v2846
    %v2848 = vpop.f32.mrf.mxu0
    %v2849 = vadd.f32 0.0, %v2848
    %v2850 = vpop.f32.mrf.mxu0
    %v2851 = vadd.f32 0.0, %v2850
    %2852 = vmatprep.mubr.bf16.mxu0 0
    %2853 = vmatmul.mubr.bf16.gmra.mxu0 %v1802
    %v2854 = vpop.f32.mrf.mxu0
    %v2855 = vadd.f32 0.0, %v2854
    %v2856 = vpop.f32.mrf.mxu0
    %v2857 = vadd.f32 0.0, %v2856
    %v2858 = vpop.f32.mrf.mxu0
    %v2859 = vadd.f32 0.0, %v2858
    %v2860 = vpop.f32.mrf.mxu0
    %v2861 = vadd.f32 0.0, %v2860
    %2862 = vdwg.mxu0
    %2863 = vmatprep.subr.bf16.mxu0 %v2436
    %2864 = vmatpush1.bf16.msra.mxu0 %v2435
    %2865 = vmatprep.subr.bf16.mxu0 %v2420
    %2866 = vmatpush1.bf16.msra.mxu0 %v2419
    %2867 = vmatprep.subr.bf16.mxu0 %v2404
    %2868 = vmatpush1.bf16.msra.mxu0 %v2403
    %2869 = vmatprep.subr.bf16.mxu0 %v2388
    %2870 = vmatpush1.bf16.msra.mxu0 %v2387
    %2871 = vmatprep.subr.bf16.mxu0 %v2372
    %2872 = vmatpush1.bf16.msra.mxu0 %v2371
    %2873 = vmatprep.subr.bf16.mxu0 %v2356
    %2874 = vmatpush1.bf16.msra.mxu0 %v2355
    %2875 = vmatprep.subr.bf16.mxu0 %v2340
    %2876 = vmatpush1.bf16.msra.mxu0 %v2339
    %2877 = vmatprep.subr.bf16.mxu0 %v2324
    %2878 = vmatpush1.bf16.msra.mxu0 %v2323
    %2879 = vmatprep.subr.bf16.mxu0 0
    %2880 = vmatpush2.bf16.msra.mxu0 0
    %2881 = vmatprep.subr.bf16.mxu0 0
    %2882 = vmatpush2.bf16.msra.mxu0 0
    %2883 = vmatprep.subr.bf16.mxu0 0
    %2884 = vmatpush2.bf16.msra.mxu0 0
    %2885 = vmatprep.subr.bf16.mxu0 0
    %2886 = vmatpush2.bf16.msra.mxu0 0
    %2887 = vmatprep.subr.bf16.mxu0 0
    %2888 = vmatpush2.bf16.msra.mxu0 0
    %2889 = vmatprep.subr.bf16.mxu0 0
    %2890 = vmatpush2.bf16.msra.mxu0 0
    %2891 = vmatprep.subr.bf16.mxu0 0
    %2892 = vmatpush2.bf16.msra.mxu0 0
    %2893 = vmatprep.subr.bf16.mxu0 0
    %2894 = vmatpush2.bf16.msra.mxu0 0
    %2895 = vmatprep.mubr.bf16.mxu0 0
    %2896 = vmatmul.mubr.bf16.gmra.mxu0 %v1799
    %v2897 = vpop.f32.mrf.mxu0
    %v2898 = vadd.f32 0.0, %v2897
    %v2899 = vpop.f32.mrf.mxu0
    %v2900 = vadd.f32 0.0, %v2899
    %v2901 = vpop.f32.mrf.mxu0
    %v2902 = vadd.f32 0.0, %v2901
    %v2903 = vpop.f32.mrf.mxu0
    %v2904 = vadd.f32 0.0, %v2903
    %2905 = vmatprep.mubr.bf16.mxu0 0
    %2906 = vmatmul.mubr.bf16.gmra.mxu0 %v1800
    %v2907 = vpop.f32.mrf.mxu0
    %v2908 = vadd.f32 0.0, %v2907
    %v2909 = vpop.f32.mrf.mxu0
    %v2910 = vadd.f32 0.0, %v2909
    %v2911 = vpop.f32.mrf.mxu0
    %v2912 = vadd.f32 0.0, %v2911
    %v2913 = vpop.f32.mrf.mxu0
    %v2914 = vadd.f32 0.0, %v2913
    %2915 = vmatprep.mubr.bf16.mxu0 0
    %2916 = vmatmul.mubr.bf16.gmra.mxu0 %v1801
    %v2917 = vpop.f32.mrf.mxu0
    %v2918 = vadd.f32 0.0, %v2917
    %v2919 = vpop.f32.mrf.mxu0
    %v2920 = vadd.f32 0.0, %v2919
    %v2921 = vpop.f32.mrf.mxu0
    %v2922 = vadd.f32 0.0, %v2921
    %v2923 = vpop.f32.mrf.mxu0
    %v2924 = vadd.f32 0.0, %v2923
    %2925 = vmatprep.mubr.bf16.mxu0 0
    %2926 = vmatmul.mubr.bf16.gmra.mxu0 %v1802
    %v2927 = vpop.f32.mrf.mxu0
    %v2928 = vadd.f32 0.0, %v2927
    %v2929 = vpop.f32.mrf.mxu0
    %v2930 = vadd.f32 0.0, %v2929
    %v2931 = vpop.f32.mrf.mxu0
    %v2932 = vadd.f32 0.0, %v2931
    %v2933 = vpop.f32.mrf.mxu0
    %v2934 = vadd.f32 0.0, %v2933
    %2935 = vdwg.mxu0
    %2936 = vmatprep.subr.bf16.mxu0 %v2438
    %2937 = vmatpush1.bf16.msra.mxu0 %v2437
    %2938 = vmatprep.subr.bf16.mxu0 %v2422
    %2939 = vmatpush1.bf16.msra.mxu0 %v2421
    %2940 = vmatprep.subr.bf16.mxu0 %v2406
    %2941 = vmatpush1.bf16.msra.mxu0 %v2405
    %2942 = vmatprep.subr.bf16.mxu0 %v2390
    %2943 = vmatpush1.bf16.msra.mxu0 %v2389
    %2944 = vmatprep.subr.bf16.mxu0 %v2374
    %2945 = vmatpush1.bf16.msra.mxu0 %v2373
    %2946 = vmatprep.subr.bf16.mxu0 %v2358
    %2947 = vmatpush1.bf16.msra.mxu0 %v2357
    %2948 = vmatprep.subr.bf16.mxu0 %v2342
    %2949 = vmatpush1.bf16.msra.mxu0 %v2341
    %2950 = vmatprep.subr.bf16.mxu0 %v2326
    %2951 = vmatpush1.bf16.msra.mxu0 %v2325
    %2952 = vmatprep.subr.bf16.mxu0 0
    %2953 = vmatpush2.bf16.msra.mxu0 0
    %2954 = vmatprep.subr.bf16.mxu0 0
    %2955 = vmatpush2.bf16.msra.mxu0 0
    %2956 = vmatprep.subr.bf16.mxu0 0
    %2957 = vmatpush2.bf16.msra.mxu0 0
    %2958 = vmatprep.subr.bf16.mxu0 0
    %2959 = vmatpush2.bf16.msra.mxu0 0
    %2960 = vmatprep.subr.bf16.mxu0 0
    %2961 = vmatpush2.bf16.msra.mxu0 0
    %2962 = vmatprep.subr.bf16.mxu0 0
    %2963 = vmatpush2.bf16.msra.mxu0 0
    %2964 = vmatprep.subr.bf16.mxu0 0
    %2965 = vmatpush2.bf16.msra.mxu0 0
    %2966 = vmatprep.subr.bf16.mxu0 0
    %2967 = vmatpush2.bf16.msra.mxu0 0
    %2968 = vmatprep.mubr.bf16.mxu0 0
    %2969 = vmatmul.mubr.bf16.gmra.mxu0 %v1799
    %v2970 = vpop.f32.mrf.mxu0
    %v2971 = vadd.f32 0.0, %v2970
    %v2972 = vpop.f32.mrf.mxu0
    %v2973 = vadd.f32 0.0, %v2972
    %v2974 = vpop.f32.mrf.mxu0
    %v2975 = vadd.f32 0.0, %v2974
    %v2976 = vpop.f32.mrf.mxu0
    %v2977 = vadd.f32 0.0, %v2976
    %2978 = vmatprep.mubr.bf16.mxu0 0
    %2979 = vmatmul.mubr.bf16.gmra.mxu0 %v1800
    %v2980 = vpop.f32.mrf.mxu0
    %v2981 = vadd.f32 0.0, %v2980
    %v2982 = vpop.f32.mrf.mxu0
    %v2983 = vadd.f32 0.0, %v2982
    %v2984 = vpop.f32.mrf.mxu0
    %v2985 = vadd.f32 0.0, %v2984
    %v2986 = vpop.f32.mrf.mxu0
    %v2987 = vadd.f32 0.0, %v2986
    %2988 = vmatprep.mubr.bf16.mxu0 0
    %2989 = vmatmul.mubr.bf16.gmra.mxu0 %v1801
    %v2990 = vpop.f32.mrf.mxu0
    %v2991 = vadd.f32 0.0, %v2990
    %v2992 = vpop.f32.mrf.mxu0
    %v2993 = vadd.f32 0.0, %v2992
    %v2994 = vpop.f32.mrf.mxu0
    %v2995 = vadd.f32 0.0, %v2994
    %v2996 = vpop.f32.mrf.mxu0
    %v2997 = vadd.f32 0.0, %v2996
    %2998 = vmatprep.mubr.bf16.mxu0 0
    %2999 = vmatmul.mubr.bf16.gmra.mxu0 %v1802
    %v3000 = vpop.f32.mrf.mxu0
    %v3001 = vadd.f32 0.0, %v3000
    %v3002 = vpop.f32.mrf.mxu0
    %v3003 = vadd.f32 0.0, %v3002
    %v3004 = vpop.f32.mrf.mxu0
    %v3005 = vadd.f32 0.0, %v3004
    %v3006 = vpop.f32.mrf.mxu0
    %v3007 = vadd.f32 0.0, %v3006
    %3008 = vdwg.mxu0
    %3009 = vmatprep.subr.bf16.mxu0 %v2440
    %3010 = vmatpush1.bf16.msra.mxu0 %v2439
    %3011 = vmatprep.subr.bf16.mxu0 %v2424
    %3012 = vmatpush1.bf16.msra.mxu0 %v2423
    %3013 = vmatprep.subr.bf16.mxu0 %v2408
    %3014 = vmatpush1.bf16.msra.mxu0 %v2407
    %3015 = vmatprep.subr.bf16.mxu0 %v2392
    %3016 = vmatpush1.bf16.msra.mxu0 %v2391
    %3017 = vmatprep.subr.bf16.mxu0 %v2376
    %3018 = vmatpush1.bf16.msra.mxu0 %v2375
    %3019 = vmatprep.subr.bf16.mxu0 %v2360
    %3020 = vmatpush1.bf16.msra.mxu0 %v2359
    %3021 = vmatprep.subr.bf16.mxu0 %v2344
    %3022 = vmatpush1.bf16.msra.mxu0 %v2343
    %3023 = vmatprep.subr.bf16.mxu0 %v2328
    %3024 = vmatpush1.bf16.msra.mxu0 %v2327
    %3025 = vmatprep.subr.bf16.mxu0 0
    %3026 = vmatpush2.bf16.msra.mxu0 0
    %3027 = vmatprep.subr.bf16.mxu0 0
    %3028 = vmatpush2.bf16.msra.mxu0 0
    %3029 = vmatprep.subr.bf16.mxu0 0
    %3030 = vmatpush2.bf16.msra.mxu0 0
    %3031 = vmatprep.subr.bf16.mxu0 0
    %3032 = vmatpush2.bf16.msra.mxu0 0
    %3033 = vmatprep.subr.bf16.mxu0 0
    %3034 = vmatpush2.bf16.msra.mxu0 0
    %3035 = vmatprep.subr.bf16.mxu0 0
    %3036 = vmatpush2.bf16.msra.mxu0 0
    %3037 = vmatprep.subr.bf16.mxu0 0
    %3038 = vmatpush2.bf16.msra.mxu0 0
    %3039 = vmatprep.subr.bf16.mxu0 0
    %3040 = vmatpush2.bf16.msra.mxu0 0
    %3041 = vmatprep.mubr.bf16.mxu0 0
    %3042 = vmatmul.mubr.bf16.gmra.mxu0 %v1799
    %v3043 = vpop.f32.mrf.mxu0
    %v3044 = vadd.f32 0.0, %v3043
    %v3045 = vpop.f32.mrf.mxu0
    %v3046 = vadd.f32 0.0, %v3045
    %v3047 = vpop.f32.mrf.mxu0
    %v3048 = vadd.f32 0.0, %v3047
    %v3049 = vpop.f32.mrf.mxu0
    %v3050 = vadd.f32 0.0, %v3049
    %3051 = vmatprep.mubr.bf16.mxu0 0
    %3052 = vmatmul.mubr.bf16.gmra.mxu0 %v1800
    %v3053 = vpop.f32.mrf.mxu0
    %v3054 = vadd.f32 0.0, %v3053
    %v3055 = vpop.f32.mrf.mxu0
    %v3056 = vadd.f32 0.0, %v3055
    %v3057 = vpop.f32.mrf.mxu0
    %v3058 = vadd.f32 0.0, %v3057
    %v3059 = vpop.f32.mrf.mxu0
    %v3060 = vadd.f32 0.0, %v3059
    %3061 = vmatprep.mubr.bf16.mxu0 0
    %3062 = vmatmul.mubr.bf16.gmra.mxu0 %v1801
    %v3063 = vpop.f32.mrf.mxu0
    %v3064 = vadd.f32 0.0, %v3063
    %v3065 = vpop.f32.mrf.mxu0
    %v3066 = vadd.f32 0.0, %v3065
    %v3067 = vpop.f32.mrf.mxu0
    %v3068 = vadd.f32 0.0, %v3067
    %v3069 = vpop.f32.mrf.mxu0
    %v3070 = vadd.f32 0.0, %v3069
    %3071 = vmatprep.mubr.bf16.mxu0 0
    %3072 = vmatmul.mubr.bf16.gmra.mxu0 %v1802
    %v3073 = vpop.f32.mrf.mxu0
    %v3074 = vadd.f32 0.0, %v3073
    %v3075 = vpop.f32.mrf.mxu0
    %v3076 = vadd.f32 0.0, %v3075
    %v3077 = vpop.f32.mrf.mxu0
    %v3078 = vadd.f32 0.0, %v3077
    %v3079 = vpop.f32.mrf.mxu0
    %v3080 = vadd.f32 0.0, %v3079
    %3081 = vdwg.mxu0
    %3082 = vmatprep.subr.bf16.mxu0 %v2442
    %3083 = vmatpush1.bf16.msra.mxu0 %v2441
    %3084 = vmatprep.subr.bf16.mxu0 %v2426
    %3085 = vmatpush1.bf16.msra.mxu0 %v2425
    %3086 = vmatprep.subr.bf16.mxu0 %v2410
    %3087 = vmatpush1.bf16.msra.mxu0 %v2409
    %3088 = vmatprep.subr.bf16.mxu0 %v2394
    %3089 = vmatpush1.bf16.msra.mxu0 %v2393
    %3090 = vmatprep.subr.bf16.mxu0 %v2378
    %3091 = vmatpush1.bf16.msra.mxu0 %v2377
    %3092 = vmatprep.subr.bf16.mxu0 %v2362
    %3093 = vmatpush1.bf16.msra.mxu0 %v2361
    %3094 = vmatprep.subr.bf16.mxu0 %v2346
    %3095 = vmatpush1.bf16.msra.mxu0 %v2345
    %3096 = vmatprep.subr.bf16.mxu0 %v2330
    %3097 = vmatpush1.bf16.msra.mxu0 %v2329
    %3098 = vmatprep.subr.bf16.mxu0 0
    %3099 = vmatpush2.bf16.msra.mxu0 0
    %3100 = vmatprep.subr.bf16.mxu0 0
    %3101 = vmatpush2.bf16.msra.mxu0 0
    %3102 = vmatprep.subr.bf16.mxu0 0
    %3103 = vmatpush2.bf16.msra.mxu0 0
    %3104 = vmatprep.subr.bf16.mxu0 0
    %3105 = vmatpush2.bf16.msra.mxu0 0
    %3106 = vmatprep.subr.bf16.mxu0 0
    %3107 = vmatpush2.bf16.msra.mxu0 0
    %3108 = vmatprep.subr.bf16.mxu0 0
    %3109 = vmatpush2.bf16.msra.mxu0 0
    %3110 = vmatprep.subr.bf16.mxu0 0
    %3111 = vmatpush2.bf16.msra.mxu0 0
    %3112 = vmatprep.subr.bf16.mxu0 0
    %3113 = vmatpush2.bf16.msra.mxu0 0
    %3114 = vmatprep.mubr.bf16.mxu0 0
    %3115 = vmatmul.mubr.bf16.gmra.mxu0 %v1799
    %v3116 = vpop.f32.mrf.mxu0
    %v3117 = vadd.f32 0.0, %v3116
    %v3118 = vpop.f32.mrf.mxu0
    %v3119 = vadd.f32 0.0, %v3118
    %v3120 = vpop.f32.mrf.mxu0
    %v3121 = vadd.f32 0.0, %v3120
    %v3122 = vpop.f32.mrf.mxu0
    %v3123 = vadd.f32 0.0, %v3122
    %3124 = vmatprep.mubr.bf16.mxu0 0
    %3125 = vmatmul.mubr.bf16.gmra.mxu0 %v1800
    %v3126 = vpop.f32.mrf.mxu0
    %v3127 = vadd.f32 0.0, %v3126
    %v3128 = vpop.f32.mrf.mxu0
    %v3129 = vadd.f32 0.0, %v3128
    %v3130 = vpop.f32.mrf.mxu0
    %v3131 = vadd.f32 0.0, %v3130
    %v3132 = vpop.f32.mrf.mxu0
    %v3133 = vadd.f32 0.0, %v3132
    %3134 = vmatprep.mubr.bf16.mxu0 0
    %3135 = vmatmul.mubr.bf16.gmra.mxu0 %v1801
    %v3136 = vpop.f32.mrf.mxu0
    %v3137 = vadd.f32 0.0, %v3136
    %v3138 = vpop.f32.mrf.mxu0
    %v3139 = vadd.f32 0.0, %v3138
    %v3140 = vpop.f32.mrf.mxu0
    %v3141 = vadd.f32 0.0, %v3140
    %v3142 = vpop.f32.mrf.mxu0
    %v3143 = vadd.f32 0.0, %v3142
    %3144 = vmatprep.mubr.bf16.mxu0 0
    %3145 = vmatmul.mubr.bf16.gmra.mxu0 %v1802
    %v3146 = vpop.f32.mrf.mxu0
    %v3147 = vadd.f32 0.0, %v3146
    %v3148 = vpop.f32.mrf.mxu0
    %v3149 = vadd.f32 0.0, %v3148
    %v3150 = vpop.f32.mrf.mxu0
    %v3151 = vadd.f32 0.0, %v3150
    %v3152 = vpop.f32.mrf.mxu0
    %v3153 = vadd.f32 0.0, %v3152
    %3154 = vdwg.mxu0
    %v3155 = vmul.f32 %v2606, %v2898
    %v3156 = vmul.f32 %v2608, %v2900
    %v3157 = vmul.f32 %v2679, %v2971
    %v3158 = vmul.f32 %v2681, %v2973
    %v3159 = vmul.f32 %v2752, %v3044
    %v3160 = vmul.f32 %v2754, %v3046
    %v3161 = vmul.f32 %v2825, %v3117
    %v3162 = vmul.f32 %v2827, %v3119
    %v3163 = vmul.f32 %v2610, %v2902
    %v3164 = vmul.f32 %v2612, %v2904
    %v3165 = vmul.f32 %v2683, %v2975
    %v3166 = vmul.f32 %v2685, %v2977
    %v3167 = vmul.f32 %v2756, %v3048
    %v3168 = vmul.f32 %v2758, %v3050
    %v3169 = vmul.f32 %v2829, %v3121
    %v3170 = vmul.f32 %v2831, %v3123
    %v3171 = vmul.f32 %v2616, %v2908
    %v3172 = vmul.f32 %v2618, %v2910
    %v3173 = vmul.f32 %v2689, %v2981
    %v3174 = vmul.f32 %v2691, %v2983
    %v3175 = vmul.f32 %v2762, %v3054
    %v3176 = vmul.f32 %v2764, %v3056
    %v3177 = vmul.f32 %v2835, %v3127
    %v3178 = vmul.f32 %v2837, %v3129
    %v3179 = vmul.f32 %v2620, %v2912
    %v3180 = vmul.f32 %v2622, %v2914
    %v3181 = vmul.f32 %v2693, %v2985
    %v3182 = vmul.f32 %v2695, %v2987
    %v3183 = vmul.f32 %v2766, %v3058
    %v3184 = vmul.f32 %v2768, %v3060
    %v3185 = vmul.f32 %v2839, %v3131
    %v3186 = vmul.f32 %v2841, %v3133
    %v3187 = vmul.f32 %v2626, %v2918
    %v3188 = vmul.f32 %v2628, %v2920
    %v3189 = vmul.f32 %v2699, %v2991
    %v3190 = vmul.f32 %v2701, %v2993
    %v3191 = vmul.f32 %v2772, %v3064
    %v3192 = vmul.f32 %v2774, %v3066
    %v3193 = vmul.f32 %v2845, %v3137
    %v3194 = vmul.f32 %v2847, %v3139
    %v3195 = vmul.f32 %v2630, %v2922
    %v3196 = vmul.f32 %v2632, %v2924
    %v3197 = vmul.f32 %v2703, %v2995
    %v3198 = vmul.f32 %v2705, %v2997
    %v3199 = vmul.f32 %v2776, %v3068
    %v3200 = vmul.f32 %v2778, %v3070
    %v3201 = vmul.f32 %v2849, %v3141
    %v3202 = vmul.f32 %v2851, %v3143
    %v3203 = vmul.f32 %v2636, %v2928
    %v3204 = vmul.f32 %v2638, %v2930
    %v3205 = vmul.f32 %v2709, %v3001
    %v3206 = vmul.f32 %v2711, %v3003
    %v3207 = vmul.f32 %v2782, %v3074
    %v3208 = vmul.f32 %v2784, %v3076
    %v3209 = vmul.f32 %v2855, %v3147
    %v3210 = vmul.f32 %v2857, %v3149
    %v3211 = vmul.f32 %v2640, %v2932
    %v3212 = vmul.f32 %v2642, %v2934
    %v3213 = vmul.f32 %v2713, %v3005
    %v3214 = vmul.f32 %v2715, %v3007
    %v3215 = vmul.f32 %v2786, %v3078
    %v3216 = vmul.f32 %v2788, %v3080
    %v3217 = vmul.f32 %v2859, %v3151
    %v3218 = vmul.f32 %v2861, %v3153
    %v3219 = vadd.f32 %v3155, %v3157
    %v3220 = vadd.f32 %v3156, %v3158
    %v3221 = vadd.f32 %v3163, %v3165
    %v3222 = vadd.f32 %v3164, %v3166
    %v3223 = vadd.f32 %v3171, %v3173
    %v3224 = vadd.f32 %v3172, %v3174
    %v3225 = vadd.f32 %v3179, %v3181
    %v3226 = vadd.f32 %v3180, %v3182
    %v3227 = vadd.f32 %v3187, %v3189
    %v3228 = vadd.f32 %v3188, %v3190
    %v3229 = vadd.f32 %v3195, %v3197
    %v3230 = vadd.f32 %v3196, %v3198
    %v3231 = vadd.f32 %v3203, %v3205
    %v3232 = vadd.f32 %v3204, %v3206
    %v3233 = vadd.f32 %v3211, %v3213
    %v3234 = vadd.f32 %v3212, %v3214
    %v3235 = vadd.f32 %v3219, %v3159
    %v3236 = vadd.f32 %v3220, %v3160
    %v3237 = vadd.f32 %v3221, %v3167
    %v3238 = vadd.f32 %v3222, %v3168
    %v3239 = vadd.f32 %v3223, %v3175
    %v3240 = vadd.f32 %v3224, %v3176
    %v3241 = vadd.f32 %v3225, %v3183
    %v3242 = vadd.f32 %v3226, %v3184
    %v3243 = vadd.f32 %v3227, %v3191
    %v3244 = vadd.f32 %v3228, %v3192
    %v3245 = vadd.f32 %v3229, %v3199
    %v3246 = vadd.f32 %v3230, %v3200
    %v3247 = vadd.f32 %v3231, %v3207
    %v3248 = vadd.f32 %v3232, %v3208
    %v3249 = vadd.f32 %v3233, %v3215
    %v3250 = vadd.f32 %v3234, %v3216
    %v3251 = vadd.f32 %v3235, %v3161
    %v3252 = vadd.f32 %v3236, %v3162
    %v3253 = vadd.f32 %v3237, %v3169
    %v3254 = vadd.f32 %v3238, %v3170
    %v3255 = vadd.f32 %v3239, %v3177
    %v3256 = vadd.f32 %v3240, %v3178
    %v3257 = vadd.f32 %v3241, %v3185
    %v3258 = vadd.f32 %v3242, %v3186
    %v3259 = vadd.f32 %v3243, %v3193
    %v3260 = vadd.f32 %v3244, %v3194
    %v3261 = vadd.f32 %v3245, %v3201
    %v3262 = vadd.f32 %v3246, %v3202
    %v3263 = vadd.f32 %v3247, %v3209
    %v3264 = vadd.f32 %v3248, %v3210
    %v3265 = vadd.f32 %v3249, %v3217
    %v3266 = vadd.f32 %v3250, %v3218
    %v3267 = vmul.f32 %v3251, 0.25
    %v3268 = vmul.f32 %v3252, 0.25
    %v3269 = vmul.f32 %v3253, 0.25
    %v3270 = vmul.f32 %v3254, 0.25
    %v3271 = vmul.f32 %v3255, 0.25
    %v3272 = vmul.f32 %v3256, 0.25
    %v3273 = vmul.f32 %v3257, 0.25
    %v3274 = vmul.f32 %v3258, 0.25
    %v3275 = vmul.f32 %v3259, 0.25
    %v3276 = vmul.f32 %v3260, 0.25
    %v3277 = vmul.f32 %v3261, 0.25
    %v3278 = vmul.f32 %v3262, 0.25
    %v3279 = vmul.f32 %v3263, 0.25
    %v3280 = vmul.f32 %v3264, 0.25
    %v3281 = vmul.f32 %v3265, 0.25
    %v3282 = vmul.f32 %v3266, 0.25
    %v3283 = vmul.f32 %v3267, %v1016
    %v3284 = vmul.f32 %v3268, %v1016
    %v3285 = vmul.f32 %v3269, %v1021
    %v3286 = vmul.f32 %v3270, %v1021
    %v3287 = vmul.f32 %v3271, %v1026
    %v3288 = vmul.f32 %v3272, %v1026
    %v3289 = vmul.f32 %v3273, %v1031
    %v3290 = vmul.f32 %v3274, %v1031
    %v3291 = vmul.f32 %v3275, %v1036
    %v3292 = vmul.f32 %v3276, %v1036
    %v3293 = vmul.f32 %v3277, %v1041
    %v3294 = vmul.f32 %v3278, %v1041
    %v3295 = vmul.f32 %v3279, %v1046
    %v3296 = vmul.f32 %v3280, %v1046
    %v3297 = vmul.f32 %v3281, %v1051
    %v3298 = vmul.f32 %v3282, %v1051
    %vm3299 = vcmp.ge.s32.totalorder %v169, 12
    %vm3300 = vcmp.ge.s32.totalorder %v170, 12
    %vm3301 = vcmp.ge.s32.totalorder %v171, 12
    %vm3302 = vcmp.ge.s32.totalorder %v172, 12
    %vm3303 = vcmp.ge.s32.totalorder %v173, 12
    %vm3304 = vcmp.ge.s32.totalorder %v174, 12
    %vm3305 = vcmp.ge.s32.totalorder %v175, 12
    %vm3306 = vcmp.ge.s32.totalorder %v176, 12
    %v3307 = vrot.slane %v3283, 4
    %v3308 = vrot.slane %v3284, 4
    %v3309 = vrot.slane %v3285, 4
    %v3310 = vrot.slane %v3286, 4
    %v3311 = vrot.slane %v3287, 4
    %v3312 = vrot.slane %v3288, 4
    %v3313 = vrot.slane %v3289, 4
    %v3314 = vrot.slane %v3290, 4
    %v3315 = vrot.slane %v3291, 4
    %v3316 = vrot.slane %v3292, 4
    %v3317 = vrot.slane %v3293, 4
    %v3318 = vrot.slane %v3294, 4
    %v3319 = vrot.slane %v3295, 4
    %v3320 = vrot.slane %v3296, 4
    %v3321 = vrot.slane %v3297, 4
    %v3322 = vrot.slane %v3298, 4
    %vm3323 = vcmp.lt.s32.totalorder %v302, 4
    %v3324 = vsel %vm3323, %v3319, %v3321
    %v3325 = vsel %vm3323, %v3320, %v3322
    %v3326 = vsel %vm3323, %v3317, %v3319
    %v3327 = vsel %vm3323, %v3318, %v3320
    %v3328 = vsel %vm3323, %v3315, %v3317
    %v3329 = vsel %vm3323, %v3316, %v3318
    %v3330 = vsel %vm3323, %v3313, %v3315
    %v3331 = vsel %vm3323, %v3314, %v3316
    %v3332 = vsel %vm3323, %v3311, %v3313
    %v3333 = vsel %vm3323, %v3312, %v3314
    %v3334 = vsel %vm3323, %v3309, %v3311
    %v3335 = vsel %vm3323, %v3310, %v3312
    %v3336 = vsel %vm3323, %v3307, %v3309
    %v3337 = vsel %vm3323, %v3308, %v3310
    %v3338 = vsel %vm3323, %v3321, %v3307
    %v3339 = vsel %vm3323, %v3322, %v3308
    %v3340 = vsel %vm3299, 1, 0
    %v3341 = vsel %vm3300, 1, 0
    %v3342 = vsel %vm3301, 1, 0
    %v3343 = vsel %vm3302, 1, 0
    %v3344 = vsel %vm3303, 1, 0
    %v3345 = vsel %vm3304, 1, 0
    %v3346 = vsel %vm3305, 1, 0
    %v3347 = vsel %vm3306, 1, 0
    %3348 = vset.pattern.permute.xlu0 0
    %3349 = vperm.xlu0 %3348, %v3340
    %v3350 = vpop.permute.xlu0 %3349
    %3351 = vset.pattern.permute.xlu0 0
    %3352 = vperm.xlu0 %3351, %v3341
    %v3353 = vpop.permute.xlu0 %3352
    %3354 = vset.pattern.permute.xlu0 0
    %3355 = vperm.xlu0 %3354, %v3342
    %v3356 = vpop.permute.xlu0 %3355
    %3357 = vset.pattern.permute.xlu0 0
    %3358 = vperm.xlu0 %3357, %v3343
    %v3359 = vpop.permute.xlu0 %3358
    %3360 = vset.pattern.permute.xlu0 0
    %3361 = vperm.xlu0 %3360, %v3344
    %v3362 = vpop.permute.xlu0 %3361
    %3363 = vset.pattern.permute.xlu0 0
    %3364 = vperm.xlu0 %3363, %v3345
    %v3365 = vpop.permute.xlu0 %3364
    %3366 = vset.pattern.permute.xlu0 0
    %3367 = vperm.xlu0 %3366, %v3346
    %v3368 = vpop.permute.xlu0 %3367
    %3369 = vset.pattern.permute.xlu0 0
    %3370 = vperm.xlu0 %3369, %v3347
    %v3371 = vpop.permute.xlu0 %3370
    %vm3372 = vcmp.eq.s32.totalorder %v3350, 1
    %vm3373 = vcmp.eq.s32.totalorder %v3353, 1
    %vm3374 = vcmp.eq.s32.totalorder %v3356, 1
    %vm3375 = vcmp.eq.s32.totalorder %v3359, 1
    %vm3376 = vcmp.eq.s32.totalorder %v3362, 1
    %vm3377 = vcmp.eq.s32.totalorder %v3365, 1
    %vm3378 = vcmp.eq.s32.totalorder %v3368, 1
    %vm3379 = vcmp.eq.s32.totalorder %v3371, 1
    %v3380 = vsel %vm3372, %v3324, 0.0
    %v3381 = vsel %vm3372, %v3325, 0.0
    %v3382 = vsel %vm3373, %v3338, 0.0
    %v3383 = vsel %vm3373, %v3339, 0.0
    %v3384 = vsel %vm3374, %v3336, 0.0
    %v3385 = vsel %vm3374, %v3337, 0.0
    %v3386 = vsel %vm3375, %v3334, 0.0
    %v3387 = vsel %vm3375, %v3335, 0.0
    %v3388 = vsel %vm3376, %v3332, 0.0
    %v3389 = vsel %vm3376, %v3333, 0.0
    %v3390 = vsel %vm3377, %v3330, 0.0
    %v3391 = vsel %vm3377, %v3331, 0.0
    %v3392 = vsel %vm3378, %v3328, 0.0
    %v3393 = vsel %vm3378, %v3329, 0.0
    %v3394 = vsel %vm3379, %v3326, 0.0
    %v3395 = vsel %vm3379, %v3327, 0.0
    %v3396 = vpack.c.bf16 %v3382, %v3380
    %v3397 = vpack.c.bf16 %v3383, %v3381
    %v3398 = vpack.c.bf16 %v3386, %v3384
    %v3399 = vpack.c.bf16 %v3387, %v3385
    %v3400 = vpack.c.bf16 %v3390, %v3388
    %v3401 = vpack.c.bf16 %v3391, %v3389
    %v3402 = vpack.c.bf16 %v3394, %v3392
    %v3403 = vpack.c.bf16 %v3395, %v3393
    %v3404 = vld [vmem:[#allocation14] sm:$0xf]
    %v3405 = vld [vmem:[#allocation14 + $0x4] sm:$0xf]
    %v3406 = vld [vmem:[#allocation14 + $0x8] sm:$0xf]
    %v3407 = vld [vmem:[#allocation14 + $0xc] sm:$0xf]
    %v3408 = vld [vmem:[#allocation14 + $0x10] sm:$0xf]
    %v3409 = vld [vmem:[#allocation14 + $0x14] sm:$0xf]
    %v3410 = vld [vmem:[#allocation14 + $0x18] sm:$0xf]
    %v3411 = vld [vmem:[#allocation14 + $0x1c] sm:$0xf]
    %v3412 = vld [vmem:[#allocation14 + $0x20] sm:$0xf]
    %v3413 = vld [vmem:[#allocation14 + $0x24] sm:$0xf]
    %v3414 = vld [vmem:[#allocation14 + $0x28] sm:$0xf]
    %v3415 = vld [vmem:[#allocation14 + $0x2c] sm:$0xf]
    %v3416 = vld [vmem:[#allocation14 + $0x30] sm:$0xf]
    %v3417 = vld [vmem:[#allocation14 + $0x34] sm:$0xf]
    %v3418 = vld [vmem:[#allocation14 + $0x38] sm:$0xf]
    %v3419 = vld [vmem:[#allocation14 + $0x3c] sm:$0xf]
    %v3420 = vld [vmem:[#allocation14 + $0x40] sm:$0xf]
    %v3421 = vld [vmem:[#allocation14 + $0x44] sm:$0xf]
    %v3422 = vld [vmem:[#allocation14 + $0x48] sm:$0xf]
    %v3423 = vld [vmem:[#allocation14 + $0x4c] sm:$0xf]
    %v3424 = vld [vmem:[#allocation14 + $0x50] sm:$0xf]
    %v3425 = vld [vmem:[#allocation14 + $0x54] sm:$0xf]
    %v3426 = vld [vmem:[#allocation14 + $0x58] sm:$0xf]
    %v3427 = vld [vmem:[#allocation14 + $0x5c] sm:$0xf]
    %v3428 = vld [vmem:[#allocation14 + $0x60] sm:$0xf]
    %v3429 = vld [vmem:[#allocation14 + $0x64] sm:$0xf]
    %v3430 = vld [vmem:[#allocation14 + $0x68] sm:$0xf]
    %v3431 = vld [vmem:[#allocation14 + $0x6c] sm:$0xf]
    %v3432 = vld [vmem:[#allocation14 + $0x70] sm:$0xf]
    %v3433 = vld [vmem:[#allocation14 + $0x74] sm:$0xf]
    %v3434 = vld [vmem:[#allocation14 + $0x78] sm:$0xf]
    %v3435 = vld [vmem:[#allocation14 + $0x7c] sm:$0xf]
    %vm3436 = vcmp.ge.s32.totalorder %v169, 11
    %vm3437 = vcmp.ge.s32.totalorder %v170, 11
    %vm3438 = vcmp.ge.s32.totalorder %v171, 11
    %vm3439 = vcmp.ge.s32.totalorder %v172, 11
    %vm3440 = vcmp.ge.s32.totalorder %v173, 11
    %vm3441 = vcmp.ge.s32.totalorder %v174, 11
    %vm3442 = vcmp.ge.s32.totalorder %v175, 11
    %vm3443 = vcmp.ge.s32.totalorder %v176, 11
    %v3444 = vrot.slane %v3283, 5
    %v3445 = vrot.slane %v3284, 5
    %v3446 = vrot.slane %v3285, 5
    %v3447 = vrot.slane %v3286, 5
    %v3448 = vrot.slane %v3287, 5
    %v3449 = vrot.slane %v3288, 5
    %v3450 = vrot.slane %v3289, 5
    %v3451 = vrot.slane %v3290, 5
    %v3452 = vrot.slane %v3291, 5
    %v3453 = vrot.slane %v3292, 5
    %v3454 = vrot.slane %v3293, 5
    %v3455 = vrot.slane %v3294, 5
    %v3456 = vrot.slane %v3295, 5
    %v3457 = vrot.slane %v3296, 5
    %v3458 = vrot.slane %v3297, 5
    %v3459 = vrot.slane %v3298, 5
    %vm3460 = vcmp.lt.s32.totalorder %v302, 3
    %v3461 = vsel %vm3460, %v3456, %v3458
    %v3462 = vsel %vm3460, %v3457, %v3459
    %v3463 = vsel %vm3460, %v3454, %v3456
    %v3464 = vsel %vm3460, %v3455, %v3457
    %v3465 = vsel %vm3460, %v3452, %v3454
    %v3466 = vsel %vm3460, %v3453, %v3455
    %v3467 = vsel %vm3460, %v3450, %v3452
    %v3468 = vsel %vm3460, %v3451, %v3453
    %v3469 = vsel %vm3460, %v3448, %v3450
    %v3470 = vsel %vm3460, %v3449, %v3451
    %v3471 = vsel %vm3460, %v3446, %v3448
    %v3472 = vsel %vm3460, %v3447, %v3449
    %v3473 = vsel %vm3460, %v3444, %v3446
    %v3474 = vsel %vm3460, %v3445, %v3447
    %v3475 = vsel %vm3460, %v3458, %v3444
    %v3476 = vsel %vm3460, %v3459, %v3445
    %v3477 = vsel %vm3436, 1, 0
    %v3478 = vsel %vm3437, 1, 0
    %v3479 = vsel %vm3438, 1, 0
    %v3480 = vsel %vm3439, 1, 0
    %v3481 = vsel %vm3440, 1, 0
    %v3482 = vsel %vm3441, 1, 0
    %v3483 = vsel %vm3442, 1, 0
    %v3484 = vsel %vm3443, 1, 0
    %3485 = vset.pattern.permute.xlu0 0
    %3486 = vperm.xlu0 %3485, %v3477
    %v3487 = vpop.permute.xlu0 %3486
    %3488 = vset.pattern.permute.xlu0 0
    %3489 = vperm.xlu0 %3488, %v3478
    %v3490 = vpop.permute.xlu0 %3489
    %3491 = vset.pattern.permute.xlu0 0
    %3492 = vperm.xlu0 %3491, %v3479
    %v3493 = vpop.permute.xlu0 %3492
    %3494 = vset.pattern.permute.xlu0 0
    %3495 = vperm.xlu0 %3494, %v3480
    %v3496 = vpop.permute.xlu0 %3495
    %3497 = vset.pattern.permute.xlu0 0
    %3498 = vperm.xlu0 %3497, %v3481
    %v3499 = vpop.permute.xlu0 %3498
    %3500 = vset.pattern.permute.xlu0 0
    %3501 = vperm.xlu0 %3500, %v3482
    %v3502 = vpop.permute.xlu0 %3501
    %3503 = vset.pattern.permute.xlu0 0
    %3504 = vperm.xlu0 %3503, %v3483
    %v3505 = vpop.permute.xlu0 %3504
    %3506 = vset.pattern.permute.xlu0 0
    %3507 = vperm.xlu0 %3506, %v3484
    %v3508 = vpop.permute.xlu0 %3507
    %vm3509 = vcmp.eq.s32.totalorder %v3487, 1
    %vm3510 = vcmp.eq.s32.totalorder %v3490, 1
    %vm3511 = vcmp.eq.s32.totalorder %v3493, 1
    %vm3512 = vcmp.eq.s32.totalorder %v3496, 1
    %vm3513 = vcmp.eq.s32.totalorder %v3499, 1
    %vm3514 = vcmp.eq.s32.totalorder %v3502, 1
    %vm3515 = vcmp.eq.s32.totalorder %v3505, 1
    %vm3516 = vcmp.eq.s32.totalorder %v3508, 1
    %v3517 = vsel %vm3509, %v3461, 0.0
    %v3518 = vsel %vm3509, %v3462, 0.0
    %v3519 = vsel %vm3510, %v3475, 0.0
    %v3520 = vsel %vm3510, %v3476, 0.0
    %v3521 = vsel %vm3511, %v3473, 0.0
    %v3522 = vsel %vm3511, %v3474, 0.0
    %v3523 = vsel %vm3512, %v3471, 0.0
    %v3524 = vsel %vm3512, %v3472, 0.0
    %v3525 = vsel %vm3513, %v3469, 0.0
    %v3526 = vsel %vm3513, %v3470, 0.0
    %v3527 = vsel %vm3514, %v3467, 0.0
    %v3528 = vsel %vm3514, %v3468, 0.0
    %v3529 = vsel %vm3515, %v3465, 0.0
    %v3530 = vsel %vm3515, %v3466, 0.0
    %v3531 = vsel %vm3516, %v3463, 0.0
    %v3532 = vsel %vm3516, %v3464, 0.0
    %v3533 = vpack.c.bf16 %v3519, %v3517
    %v3534 = vpack.c.bf16 %v3520, %v3518
    %v3535 = vpack.c.bf16 %v3523, %v3521
    %v3536 = vpack.c.bf16 %v3524, %v3522
    %v3537 = vpack.c.bf16 %v3527, %v3525
    %v3538 = vpack.c.bf16 %v3528, %v3526
    %v3539 = vpack.c.bf16 %v3531, %v3529
    %v3540 = vpack.c.bf16 %v3532, %v3530
    %s3541 = scalar_lea.vmem [#allocation14], 128
    %v3542 = vld [vmem:[%s3541] sm:$0xf]
    %v3543 = vld [vmem:[%s3541 + $0x4] sm:$0xf]
    %v3544 = vld [vmem:[%s3541 + $0x8] sm:$0xf]
    %v3545 = vld [vmem:[%s3541 + $0xc] sm:$0xf]
    %v3546 = vld [vmem:[%s3541 + $0x10] sm:$0xf]
    %v3547 = vld [vmem:[%s3541 + $0x14] sm:$0xf]
    %v3548 = vld [vmem:[%s3541 + $0x18] sm:$0xf]
    %v3549 = vld [vmem:[%s3541 + $0x1c] sm:$0xf]
    %v3550 = vld [vmem:[%s3541 + $0x20] sm:$0xf]
    %v3551 = vld [vmem:[%s3541 + $0x24] sm:$0xf]
    %v3552 = vld [vmem:[%s3541 + $0x28] sm:$0xf]
    %v3553 = vld [vmem:[%s3541 + $0x2c] sm:$0xf]
    %v3554 = vld [vmem:[%s3541 + $0x30] sm:$0xf]
    %v3555 = vld [vmem:[%s3541 + $0x34] sm:$0xf]
    %v3556 = vld [vmem:[%s3541 + $0x38] sm:$0xf]
    %v3557 = vld [vmem:[%s3541 + $0x3c] sm:$0xf]
    %v3558 = vld [vmem:[%s3541 + $0x40] sm:$0xf]
    %v3559 = vld [vmem:[%s3541 + $0x44] sm:$0xf]
    %v3560 = vld [vmem:[%s3541 + $0x48] sm:$0xf]
    %v3561 = vld [vmem:[%s3541 + $0x4c] sm:$0xf]
    %v3562 = vld [vmem:[%s3541 + $0x50] sm:$0xf]
    %v3563 = vld [vmem:[%s3541 + $0x54] sm:$0xf]
    %v3564 = vld [vmem:[%s3541 + $0x58] sm:$0xf]
    %v3565 = vld [vmem:[%s3541 + $0x5c] sm:$0xf]
    %v3566 = vld [vmem:[%s3541 + $0x60] sm:$0xf]
    %v3567 = vld [vmem:[%s3541 + $0x64] sm:$0xf]
    %v3568 = vld [vmem:[%s3541 + $0x68] sm:$0xf]
    %v3569 = vld [vmem:[%s3541 + $0x6c] sm:$0xf]
    %v3570 = vld [vmem:[%s3541 + $0x70] sm:$0xf]
    %v3571 = vld [vmem:[%s3541 + $0x74] sm:$0xf]
    %v3572 = vld [vmem:[%s3541 + $0x78] sm:$0xf]
    %v3573 = vld [vmem:[%s3541 + $0x7c] sm:$0xf]
    %v3606 = vunpack.c.l.b16 %v3542
    %v3607 = vunpack.c.l.b16 %v3543
    %v3608 = vunpack.c.l.b16 %v3544
    %v3609 = vunpack.c.l.b16 %v3545
    %v3610 = vunpack.c.l.b16 %v3546
    %v3611 = vunpack.c.l.b16 %v3547
    %v3612 = vunpack.c.l.b16 %v3548
    %v3613 = vunpack.c.l.b16 %v3549
    %v3614 = vunpack.c.l.b16 %v3550
    %v3615 = vunpack.c.l.b16 %v3551
    %v3616 = vunpack.c.l.b16 %v3552
    %v3617 = vunpack.c.l.b16 %v3553
    %v3618 = vunpack.c.l.b16 %v3554
    %v3619 = vunpack.c.l.b16 %v3555
    %v3620 = vunpack.c.l.b16 %v3556
    %v3621 = vunpack.c.l.b16 %v3557
    %v3622 = vunpack.c.l.b16 %v3558
    %v3623 = vunpack.c.l.b16 %v3559
    %v3624 = vunpack.c.l.b16 %v3560
    %v3625 = vunpack.c.l.b16 %v3561
    %v3626 = vunpack.c.l.b16 %v3562
    %v3627 = vunpack.c.l.b16 %v3563
    %v3628 = vunpack.c.l.b16 %v3564
    %v3629 = vunpack.c.l.b16 %v3565
    %v3630 = vunpack.c.l.b16 %v3566
    %v3631 = vunpack.c.l.b16 %v3567
    %v3632 = vunpack.c.l.b16 %v3568
    %v3633 = vunpack.c.l.b16 %v3569
    %v3634 = vunpack.c.l.b16 %v3570
    %v3635 = vunpack.c.l.b16 %v3571
    %v3636 = vunpack.c.l.b16 %v3572
    %v3637 = vunpack.c.l.b16 %v3573
    %v3638 = vpack.c.b16 %v3607, %v3606
    %v3639 = vpack.c.b16 %v3609, %v3608
    %v3640 = vpack.c.b16 %v3611, %v3610
    %v3641 = vpack.c.b16 %v3613, %v3612
    %v3642 = vpack.c.b16 %v3615, %v3614
    %v3643 = vpack.c.b16 %v3617, %v3616
    %v3644 = vpack.c.b16 %v3619, %v3618
    %v3645 = vpack.c.b16 %v3621, %v3620
    %v3646 = vpack.c.b16 %v3623, %v3622
    %v3647 = vpack.c.b16 %v3625, %v3624
    %v3648 = vpack.c.b16 %v3627, %v3626
    %v3649 = vpack.c.b16 %v3629, %v3628
    %v3650 = vpack.c.b16 %v3631, %v3630
    %v3651 = vpack.c.b16 %v3633, %v3632
    %v3652 = vpack.c.b16 %v3635, %v3634
    %v3653 = vpack.c.b16 %v3637, %v3636
    %3670 = vmatprep.subr.bf16.mxu0 0
    %3671 = vmatpush1.bf16.msra.mxu0 %v3645
    %3672 = vmatprep.subr.bf16.mxu0 0
    %3673 = vmatpush1.bf16.msra.mxu0 %v3644
    %3674 = vmatprep.subr.bf16.mxu0 0
    %3675 = vmatpush1.bf16.msra.mxu0 %v3643
    %3676 = vmatprep.subr.bf16.mxu0 0
    %3677 = vmatpush1.bf16.msra.mxu0 %v3642
    %3678 = vmatprep.subr.bf16.mxu0 0
    %3679 = vmatpush1.bf16.msra.mxu0 %v3641
    %3680 = vmatprep.subr.bf16.mxu0 0
    %3681 = vmatpush1.bf16.msra.mxu0 %v3640
    %3682 = vmatprep.subr.bf16.mxu0 0
    %3683 = vmatpush1.bf16.msra.mxu0 %v3639
    %3684 = vmatprep.subr.bf16.mxu0 0
    %3685 = vmatpush1.bf16.msra.mxu0 %v3638
    %3686 = vmatprep.subr.bf16.mxu0 0
    %3687 = vmatpush2.bf16.msra.mxu0 %v3653
    %3688 = vmatprep.subr.bf16.mxu0 0
    %3689 = vmatpush2.bf16.msra.mxu0 %v3652
    %3690 = vmatprep.subr.bf16.mxu0 0
    %3691 = vmatpush2.bf16.msra.mxu0 %v3651
    %3692 = vmatprep.subr.bf16.mxu0 0
    %3693 = vmatpush2.bf16.msra.mxu0 %v3650
    %3694 = vmatprep.subr.bf16.mxu0 0
    %3695 = vmatpush2.bf16.msra.mxu0 %v3649
    %3696 = vmatprep.subr.bf16.mxu0 0
    %3697 = vmatpush2.bf16.msra.mxu0 %v3648
    %3698 = vmatprep.subr.bf16.mxu0 0
    %3699 = vmatpush2.bf16.msra.mxu0 %v3647
    %3700 = vmatprep.subr.bf16.mxu0 0
    %3701 = vmatpush2.bf16.msra.mxu0 %v3646
    %3702 = vmatprep.mubr.bf16.mxu0 %v3534
    %3703 = vmatmul.mubr.bf16.gmra.mxu0 %v3533
    %v3704 = vpop.f32.mrf.mxu0
    %v3705 = vadd.f32 0.0, %v3704
    %v3706 = vpop.f32.mrf.mxu0
    %v3707 = vpop.f32.mrf.mxu0
    %v3708 = vadd.f32 0.0, %v3707
    %v3709 = vpop.f32.mrf.mxu0
    %3710 = vmatprep.mubr.bf16.mxu0 %v3536
    %3711 = vmatmul.mubr.bf16.gmra.mxu0 %v3535
    %v3712 = vpop.f32.mrf.mxu0
    %v3713 = vadd.f32 0.0, %v3712
    %v3714 = vpop.f32.mrf.mxu0
    %v3715 = vpop.f32.mrf.mxu0
    %v3716 = vadd.f32 0.0, %v3715
    %v3717 = vpop.f32.mrf.mxu0
    %3718 = vmatprep.mubr.bf16.mxu0 %v3538
    %3719 = vmatmul.mubr.bf16.gmra.mxu0 %v3537
    %v3720 = vpop.f32.mrf.mxu0
    %v3721 = vadd.f32 0.0, %v3720
    %v3722 = vpop.f32.mrf.mxu0
    %v3723 = vpop.f32.mrf.mxu0
    %v3724 = vadd.f32 0.0, %v3723
    %v3725 = vpop.f32.mrf.mxu0
    %3726 = vmatprep.mubr.bf16.mxu0 %v3540
    %3727 = vmatmul.mubr.bf16.gmra.mxu0 %v3539
    %v3728 = vpop.f32.mrf.mxu0
    %v3729 = vadd.f32 0.0, %v3728
    %v3730 = vpop.f32.mrf.mxu0
    %v3731 = vpop.f32.mrf.mxu0
    %v3732 = vadd.f32 0.0, %v3731
    %v3733 = vpop.f32.mrf.mxu0
    %3734 = vdwg.mxu0
    %v3767 = vunpack.c.l.b16 %v3404
    %v3768 = vunpack.c.l.b16 %v3405
    %v3769 = vunpack.c.l.b16 %v3406
    %v3770 = vunpack.c.l.b16 %v3407
    %v3771 = vunpack.c.l.b16 %v3408
    %v3772 = vunpack.c.l.b16 %v3409
    %v3773 = vunpack.c.l.b16 %v3410
    %v3774 = vunpack.c.l.b16 %v3411
    %v3775 = vunpack.c.l.b16 %v3412
    %v3776 = vunpack.c.l.b16 %v3413
    %v3777 = vunpack.c.l.b16 %v3414
    %v3778 = vunpack.c.l.b16 %v3415
    %v3779 = vunpack.c.l.b16 %v3416
    %v3780 = vunpack.c.l.b16 %v3417
    %v3781 = vunpack.c.l.b16 %v3418
    %v3782 = vunpack.c.l.b16 %v3419
    %v3783 = vunpack.c.l.b16 %v3420
    %v3784 = vunpack.c.l.b16 %v3421
    %v3785 = vunpack.c.l.b16 %v3422
    %v3786 = vunpack.c.l.b16 %v3423
    %v3787 = vunpack.c.l.b16 %v3424
    %v3788 = vunpack.c.l.b16 %v3425
    %v3789 = vunpack.c.l.b16 %v3426
    %v3790 = vunpack.c.l.b16 %v3427
    %v3791 = vunpack.c.l.b16 %v3428
    %v3792 = vunpack.c.l.b16 %v3429
    %v3793 = vunpack.c.l.b16 %v3430
    %v3794 = vunpack.c.l.b16 %v3431
    %v3795 = vunpack.c.l.b16 %v3432
    %v3796 = vunpack.c.l.b16 %v3433
    %v3797 = vunpack.c.l.b16 %v3434
    %v3798 = vunpack.c.l.b16 %v3435
    %v3799 = vpack.c.b16 %v3768, %v3767
    %v3800 = vpack.c.b16 %v3770, %v3769
    %v3801 = vpack.c.b16 %v3772, %v3771
    %v3802 = vpack.c.b16 %v3774, %v3773
    %v3803 = vpack.c.b16 %v3776, %v3775
    %v3804 = vpack.c.b16 %v3778, %v3777
    %v3805 = vpack.c.b16 %v3780, %v3779
    %v3806 = vpack.c.b16 %v3782, %v3781
    %v3807 = vpack.c.b16 %v3784, %v3783
    %v3808 = vpack.c.b16 %v3786, %v3785
    %v3809 = vpack.c.b16 %v3788, %v3787
    %v3810 = vpack.c.b16 %v3790, %v3789
    %v3811 = vpack.c.b16 %v3792, %v3791
    %v3812 = vpack.c.b16 %v3794, %v3793
    %v3813 = vpack.c.b16 %v3796, %v3795
    %v3814 = vpack.c.b16 %v3798, %v3797
    %3831 = vmatprep.subr.bf16.mxu0 0
    %3832 = vmatpush1.bf16.msra.mxu0 %v3806
    %3833 = vmatprep.subr.bf16.mxu0 0
    %3834 = vmatpush1.bf16.msra.mxu0 %v3805
    %3835 = vmatprep.subr.bf16.mxu0 0
    %3836 = vmatpush1.bf16.msra.mxu0 %v3804
    %3837 = vmatprep.subr.bf16.mxu0 0
    %3838 = vmatpush1.bf16.msra.mxu0 %v3803
    %3839 = vmatprep.subr.bf16.mxu0 0
    %3840 = vmatpush1.bf16.msra.mxu0 %v3802
    %3841 = vmatprep.subr.bf16.mxu0 0
    %3842 = vmatpush1.bf16.msra.mxu0 %v3801
    %3843 = vmatprep.subr.bf16.mxu0 0
    %3844 = vmatpush1.bf16.msra.mxu0 %v3800
    %3845 = vmatprep.subr.bf16.mxu0 0
    %3846 = vmatpush1.bf16.msra.mxu0 %v3799
    %3847 = vmatprep.subr.bf16.mxu0 0
    %3848 = vmatpush2.bf16.msra.mxu0 %v3814
    %3849 = vmatprep.subr.bf16.mxu0 0
    %3850 = vmatpush2.bf16.msra.mxu0 %v3813
    %3851 = vmatprep.subr.bf16.mxu0 0
    %3852 = vmatpush2.bf16.msra.mxu0 %v3812
    %3853 = vmatprep.subr.bf16.mxu0 0
    %3854 = vmatpush2.bf16.msra.mxu0 %v3811
    %3855 = vmatprep.subr.bf16.mxu0 0
    %3856 = vmatpush2.bf16.msra.mxu0 %v3810
    %3857 = vmatprep.subr.bf16.mxu0 0
    %3858 = vmatpush2.bf16.msra.mxu0 %v3809
    %3859 = vmatprep.subr.bf16.mxu0 0
    %3860 = vmatpush2.bf16.msra.mxu0 %v3808
    %3861 = vmatprep.subr.bf16.mxu0 0
    %3862 = vmatpush2.bf16.msra.mxu0 %v3807
    %3863 = vmatprep.mubr.bf16.mxu0 %v3397
    %3864 = vmatmul.mubr.bf16.gmra.mxu0 %v3396
    %v3865 = vpop.f32.mrf.mxu0
    %v3866 = vadd.f32 %v3705, %v3865
    %v3867 = vpop.f32.mrf.mxu0
    %v3868 = vpop.f32.mrf.mxu0
    %v3869 = vadd.f32 %v3708, %v3868
    %v3870 = vpop.f32.mrf.mxu0
    %3871 = vmatprep.mubr.bf16.mxu0 %v3399
    %3872 = vmatmul.mubr.bf16.gmra.mxu0 %v3398
    %v3873 = vpop.f32.mrf.mxu0
    %v3874 = vadd.f32 %v3713, %v3873
    %v3875 = vpop.f32.mrf.mxu0
    %v3876 = vpop.f32.mrf.mxu0
    %v3877 = vadd.f32 %v3716, %v3876
    %v3878 = vpop.f32.mrf.mxu0
    %3879 = vmatprep.mubr.bf16.mxu0 %v3401
    %3880 = vmatmul.mubr.bf16.gmra.mxu0 %v3400
    %v3881 = vpop.f32.mrf.mxu0
    %v3882 = vadd.f32 %v3721, %v3881
    %v3883 = vpop.f32.mrf.mxu0
    %v3884 = vpop.f32.mrf.mxu0
    %v3885 = vadd.f32 %v3724, %v3884
    %v3886 = vpop.f32.mrf.mxu0
    %3887 = vmatprep.mubr.bf16.mxu0 %v3403
    %3888 = vmatmul.mubr.bf16.gmra.mxu0 %v3402
    %v3889 = vpop.f32.mrf.mxu0
    %v3890 = vadd.f32 %v3729, %v3889
    %v3891 = vpop.f32.mrf.mxu0
    %v3892 = vpop.f32.mrf.mxu0
    %v3893 = vadd.f32 %v3732, %v3892
    %v3894 = vpop.f32.mrf.mxu0
    %3895 = vdwg.mxu0
    %vm3896 = vcmp.ge.s32.totalorder %v169, 10
    %vm3897 = vcmp.ge.s32.totalorder %v170, 10
    %vm3898 = vcmp.ge.s32.totalorder %v171, 10
    %vm3899 = vcmp.ge.s32.totalorder %v172, 10
    %vm3900 = vcmp.ge.s32.totalorder %v173, 10
    %vm3901 = vcmp.ge.s32.totalorder %v174, 10
    %vm3902 = vcmp.ge.s32.totalorder %v175, 10
    %vm3903 = vcmp.ge.s32.totalorder %v176, 10
    %v3904 = vrot.slane %v3283, 6
    %v3905 = vrot.slane %v3284, 6
    %v3906 = vrot.slane %v3285, 6
    %v3907 = vrot.slane %v3286, 6
    %v3908 = vrot.slane %v3287, 6
    %v3909 = vrot.slane %v3288, 6
    %v3910 = vrot.slane %v3289, 6
    %v3911 = vrot.slane %v3290, 6
    %v3912 = vrot.slane %v3291, 6
    %v3913 = vrot.slane %v3292, 6
    %v3914 = vrot.slane %v3293, 6
    %v3915 = vrot.slane %v3294, 6
    %v3916 = vrot.slane %v3295, 6
    %v3917 = vrot.slane %v3296, 6
    %v3918 = vrot.slane %v3297, 6
    %v3919 = vrot.slane %v3298, 6
    %v3920 = vsel %vm1077, %v3916, %v3918
    %v3921 = vsel %vm1077, %v3917, %v3919
    %v3922 = vsel %vm1077, %v3914, %v3916
    %v3923 = vsel %vm1077, %v3915, %v3917
    %v3924 = vsel %vm1077, %v3912, %v3914
    %v3925 = vsel %vm1077, %v3913, %v3915
    %v3926 = vsel %vm1077, %v3910, %v3912
    %v3927 = vsel %vm1077, %v3911, %v3913
    %v3928 = vsel %vm1077, %v3908, %v3910
    %v3929 = vsel %vm1077, %v3909, %v3911
    %v3930 = vsel %vm1077, %v3906, %v3908
    %v3931 = vsel %vm1077, %v3907, %v3909
    %v3932 = vsel %vm1077, %v3904, %v3906
    %v3933 = vsel %vm1077, %v3905, %v3907
    %v3934 = vsel %vm1077, %v3918, %v3904
    %v3935 = vsel %vm1077, %v3919, %v3905
    %v3936 = vsel %vm3896, 1, 0
    %v3937 = vsel %vm3897, 1, 0
    %v3938 = vsel %vm3898, 1, 0
    %v3939 = vsel %vm3899, 1, 0
    %v3940 = vsel %vm3900, 1, 0
    %v3941 = vsel %vm3901, 1, 0
    %v3942 = vsel %vm3902, 1, 0
    %v3943 = vsel %vm3903, 1, 0
    %3944 = vset.pattern.permute.xlu0 0
    %3945 = vperm.xlu0 %3944, %v3936
    %v3946 = vpop.permute.xlu0 %3945
    %3947 = vset.pattern.permute.xlu0 0
    %3948 = vperm.xlu0 %3947, %v3937
    %v3949 = vpop.permute.xlu0 %3948
    %3950 = vset.pattern.permute.xlu0 0
    %3951 = vperm.xlu0 %3950, %v3938
    %v3952 = vpop.permute.xlu0 %3951
    %3953 = vset.pattern.permute.xlu0 0
    %3954 = vperm.xlu0 %3953, %v3939
    %v3955 = vpop.permute.xlu0 %3954
    %3956 = vset.pattern.permute.xlu0 0
    %3957 = vperm.xlu0 %3956, %v3940
    %v3958 = vpop.permute.xlu0 %3957
    %3959 = vset.pattern.permute.xlu0 0
    %3960 = vperm.xlu0 %3959, %v3941
    %v3961 = vpop.permute.xlu0 %3960
    %3962 = vset.pattern.permute.xlu0 0
    %3963 = vperm.xlu0 %3962, %v3942
    %v3964 = vpop.permute.xlu0 %3963
    %3965 = vset.pattern.permute.xlu0 0
    %3966 = vperm.xlu0 %3965, %v3943
    %v3967 = vpop.permute.xlu0 %3966
    %vm3968 = vcmp.eq.s32.totalorder %v3946, 1
    %vm3969 = vcmp.eq.s32.totalorder %v3949, 1
    %vm3970 = vcmp.eq.s32.totalorder %v3952, 1
    %vm3971 = vcmp.eq.s32.totalorder %v3955, 1
    %vm3972 = vcmp.eq.s32.totalorder %v3958, 1
    %vm3973 = vcmp.eq.s32.totalorder %v3961, 1
    %vm3974 = vcmp.eq.s32.totalorder %v3964, 1
    %vm3975 = vcmp.eq.s32.totalorder %v3967, 1
    %v3976 = vsel %vm3968, %v3920, 0.0
    %v3977 = vsel %vm3968, %v3921, 0.0
    %v3978 = vsel %vm3969, %v3934, 0.0
    %v3979 = vsel %vm3969, %v3935, 0.0
    %v3980 = vsel %vm3970, %v3932, 0.0
    %v3981 = vsel %vm3970, %v3933, 0.0
    %v3982 = vsel %vm3971, %v3930, 0.0
    %v3983 = vsel %vm3971, %v3931, 0.0
    %v3984 = vsel %vm3972, %v3928, 0.0
    %v3985 = vsel %vm3972, %v3929, 0.0
    %v3986 = vsel %vm3973, %v3926, 0.0
    %v3987 = vsel %vm3973, %v3927, 0.0
    %v3988 = vsel %vm3974, %v3924, 0.0
    %v3989 = vsel %vm3974, %v3925, 0.0
    %v3990 = vsel %vm3975, %v3922, 0.0
    %v3991 = vsel %vm3975, %v3923, 0.0
    %v3992 = vpack.c.bf16 %v3978, %v3976
    %v3993 = vpack.c.bf16 %v3979, %v3977
    %v3994 = vpack.c.bf16 %v3982, %v3980
    %v3995 = vpack.c.bf16 %v3983, %v3981
    %v3996 = vpack.c.bf16 %v3986, %v3984
    %v3997 = vpack.c.bf16 %v3987, %v3985
    %v3998 = vpack.c.bf16 %v3990, %v3988
    %v3999 = vpack.c.bf16 %v3991, %v3989
    %s4000 = scalar_lea.vmem [#allocation14], 256
    %v4001 = vld [vmem:[%s4000] sm:$0xf]
    %v4002 = vld [vmem:[%s4000 + $0x4] sm:$0xf]
    %v4003 = vld [vmem:[%s4000 + $0x8] sm:$0xf]
    %v4004 = vld [vmem:[%s4000 + $0xc] sm:$0xf]
    %v4005 = vld [vmem:[%s4000 + $0x10] sm:$0xf]
    %v4006 = vld [vmem:[%s4000 + $0x14] sm:$0xf]
    %v4007 = vld [vmem:[%s4000 + $0x18] sm:$0xf]
    %v4008 = vld [vmem:[%s4000 + $0x1c] sm:$0xf]
    %v4009 = vld [vmem:[%s4000 + $0x20] sm:$0xf]
    %v4010 = vld [vmem:[%s4000 + $0x24] sm:$0xf]
    %v4011 = vld [vmem:[%s4000 + $0x28] sm:$0xf]
    %v4012 = vld [vmem:[%s4000 + $0x2c] sm:$0xf]
    %v4013 = vld [vmem:[%s4000 + $0x30] sm:$0xf]
    %v4014 = vld [vmem:[%s4000 + $0x34] sm:$0xf]
    %v4015 = vld [vmem:[%s4000 + $0x38] sm:$0xf]
    %v4016 = vld [vmem:[%s4000 + $0x3c] sm:$0xf]
    %v4017 = vld [vmem:[%s4000 + $0x40] sm:$0xf]
    %v4018 = vld [vmem:[%s4000 + $0x44] sm:$0xf]
    %v4019 = vld [vmem:[%s4000 + $0x48] sm:$0xf]
    %v4020 = vld [vmem:[%s4000 + $0x4c] sm:$0xf]
    %v4021 = vld [vmem:[%s4000 + $0x50] sm:$0xf]
    %v4022 = vld [vmem:[%s4000 + $0x54] sm:$0xf]
    %v4023 = vld [vmem:[%s4000 + $0x58] sm:$0xf]
    %v4024 = vld [vmem:[%s4000 + $0x5c] sm:$0xf]
    %v4025 = vld [vmem:[%s4000 + $0x60] sm:$0xf]
    %v4026 = vld [vmem:[%s4000 + $0x64] sm:$0xf]
    %v4027 = vld [vmem:[%s4000 + $0x68] sm:$0xf]
    %v4028 = vld [vmem:[%s4000 + $0x6c] sm:$0xf]
    %v4029 = vld [vmem:[%s4000 + $0x70] sm:$0xf]
    %v4030 = vld [vmem:[%s4000 + $0x74] sm:$0xf]
    %v4031 = vld [vmem:[%s4000 + $0x78] sm:$0xf]
    %v4032 = vld [vmem:[%s4000 + $0x7c] sm:$0xf]
    %v4065 = vunpack.c.l.b16 %v4001
    %v4066 = vunpack.c.l.b16 %v4002
    %v4067 = vunpack.c.l.b16 %v4003
    %v4068 = vunpack.c.l.b16 %v4004
    %v4069 = vunpack.c.l.b16 %v4005
    %v4070 = vunpack.c.l.b16 %v4006
    %v4071 = vunpack.c.l.b16 %v4007
    %v4072 = vunpack.c.l.b16 %v4008
    %v4073 = vunpack.c.l.b16 %v4009
    %v4074 = vunpack.c.l.b16 %v4010
    %v4075 = vunpack.c.l.b16 %v4011
    %v4076 = vunpack.c.l.b16 %v4012
    %v4077 = vunpack.c.l.b16 %v4013
    %v4078 = vunpack.c.l.b16 %v4014
    %v4079 = vunpack.c.l.b16 %v4015
    %v4080 = vunpack.c.l.b16 %v4016
    %v4081 = vunpack.c.l.b16 %v4017
    %v4082 = vunpack.c.l.b16 %v4018
    %v4083 = vunpack.c.l.b16 %v4019
    %v4084 = vunpack.c.l.b16 %v4020
    %v4085 = vunpack.c.l.b16 %v4021
    %v4086 = vunpack.c.l.b16 %v4022
    %v4087 = vunpack.c.l.b16 %v4023
    %v4088 = vunpack.c.l.b16 %v4024
    %v4089 = vunpack.c.l.b16 %v4025
    %v4090 = vunpack.c.l.b16 %v4026
    %v4091 = vunpack.c.l.b16 %v4027
    %v4092 = vunpack.c.l.b16 %v4028
    %v4093 = vunpack.c.l.b16 %v4029
    %v4094 = vunpack.c.l.b16 %v4030
    %v4095 = vunpack.c.l.b16 %v4031
    %v4096 = vunpack.c.l.b16 %v4032
    %v4097 = vpack.c.b16 %v4066, %v4065
    %v4098 = vpack.c.b16 %v4068, %v4067
    %v4099 = vpack.c.b16 %v4070, %v4069
    %v4100 = vpack.c.b16 %v4072, %v4071
    %v4101 = vpack.c.b16 %v4074, %v4073
    %v4102 = vpack.c.b16 %v4076, %v4075
    %v4103 = vpack.c.b16 %v4078, %v4077
    %v4104 = vpack.c.b16 %v4080, %v4079
    %v4105 = vpack.c.b16 %v4082, %v4081
    %v4106 = vpack.c.b16 %v4084, %v4083
    %v4107 = vpack.c.b16 %v4086, %v4085
    %v4108 = vpack.c.b16 %v4088, %v4087
    %v4109 = vpack.c.b16 %v4090, %v4089
    %v4110 = vpack.c.b16 %v4092, %v4091
    %v4111 = vpack.c.b16 %v4094, %v4093
    %v4112 = vpack.c.b16 %v4096, %v4095
    %4129 = vmatprep.subr.bf16.mxu0 0
    %4130 = vmatpush1.bf16.msra.mxu0 %v4104
    %4131 = vmatprep.subr.bf16.mxu0 0
    %4132 = vmatpush1.bf16.msra.mxu0 %v4103
    %4133 = vmatprep.subr.bf16.mxu0 0
    %4134 = vmatpush1.bf16.msra.mxu0 %v4102
    %4135 = vmatprep.subr.bf16.mxu0 0
    %4136 = vmatpush1.bf16.msra.mxu0 %v4101
    %4137 = vmatprep.subr.bf16.mxu0 0
    %4138 = vmatpush1.bf16.msra.mxu0 %v4100
    %4139 = vmatprep.subr.bf16.mxu0 0
    %4140 = vmatpush1.bf16.msra.mxu0 %v4099
    %4141 = vmatprep.subr.bf16.mxu0 0
    %4142 = vmatpush1.bf16.msra.mxu0 %v4098
    %4143 = vmatprep.subr.bf16.mxu0 0
    %4144 = vmatpush1.bf16.msra.mxu0 %v4097
    %4145 = vmatprep.subr.bf16.mxu0 0
    %4146 = vmatpush2.bf16.msra.mxu0 %v4112
    %4147 = vmatprep.subr.bf16.mxu0 0
    %4148 = vmatpush2.bf16.msra.mxu0 %v4111
    %4149 = vmatprep.subr.bf16.mxu0 0
    %4150 = vmatpush2.bf16.msra.mxu0 %v4110
    %4151 = vmatprep.subr.bf16.mxu0 0
    %4152 = vmatpush2.bf16.msra.mxu0 %v4109
    %4153 = vmatprep.subr.bf16.mxu0 0
    %4154 = vmatpush2.bf16.msra.mxu0 %v4108
    %4155 = vmatprep.subr.bf16.mxu0 0
    %4156 = vmatpush2.bf16.msra.mxu0 %v4107
    %4157 = vmatprep.subr.bf16.mxu0 0
    %4158 = vmatpush2.bf16.msra.mxu0 %v4106
    %4159 = vmatprep.subr.bf16.mxu0 0
    %4160 = vmatpush2.bf16.msra.mxu0 %v4105
    %4161 = vmatprep.mubr.bf16.mxu0 %v3993
    %4162 = vmatmul.mubr.bf16.gmra.mxu0 %v3992
    %v4163 = vpop.f32.mrf.mxu0
    %v4164 = vadd.f32 0.0, %v4163
    %v4165 = vpop.f32.mrf.mxu0
    %v4166 = vpop.f32.mrf.mxu0
    %v4167 = vadd.f32 0.0, %v4166
    %v4168 = vpop.f32.mrf.mxu0
    %4169 = vmatprep.mubr.bf16.mxu0 %v3995
    %4170 = vmatmul.mubr.bf16.gmra.mxu0 %v3994
    %v4171 = vpop.f32.mrf.mxu0
    %v4172 = vadd.f32 0.0, %v4171
    %v4173 = vpop.f32.mrf.mxu0
    %v4174 = vpop.f32.mrf.mxu0
    %v4175 = vadd.f32 0.0, %v4174
    %v4176 = vpop.f32.mrf.mxu0
    %4177 = vmatprep.mubr.bf16.mxu0 %v3997
    %4178 = vmatmul.mubr.bf16.gmra.mxu0 %v3996
    %v4179 = vpop.f32.mrf.mxu0
    %v4180 = vadd.f32 0.0, %v4179
    %v4181 = vpop.f32.mrf.mxu0
    %v4182 = vpop.f32.mrf.mxu0
    %v4183 = vadd.f32 0.0, %v4182
    %v4184 = vpop.f32.mrf.mxu0
    %4185 = vmatprep.mubr.bf16.mxu0 %v3999
    %4186 = vmatmul.mubr.bf16.gmra.mxu0 %v3998
    %v4187 = vpop.f32.mrf.mxu0
    %v4188 = vadd.f32 0.0, %v4187
    %v4189 = vpop.f32.mrf.mxu0
    %v4190 = vpop.f32.mrf.mxu0
    %v4191 = vadd.f32 0.0, %v4190
    %v4192 = vpop.f32.mrf.mxu0
    %4193 = vdwg.mxu0
    %v4194 = vadd.f32 %v3866, %v4164
    %v4195 = vadd.f32 %v3869, %v4167
    %v4196 = vadd.f32 %v3874, %v4172
    %v4197 = vadd.f32 %v3877, %v4175
    %v4198 = vadd.f32 %v3882, %v4180
    %v4199 = vadd.f32 %v3885, %v4183
    %v4200 = vadd.f32 %v3890, %v4188
    %v4201 = vadd.f32 %v3893, %v4191
    %vm4202 = vcmp.ge.s32.totalorder %v169, 9
    %vm4203 = vcmp.ge.s32.totalorder %v170, 9
    %vm4204 = vcmp.ge.s32.totalorder %v171, 9
    %vm4205 = vcmp.ge.s32.totalorder %v172, 9
    %vm4206 = vcmp.ge.s32.totalorder %v173, 9
    %vm4207 = vcmp.ge.s32.totalorder %v174, 9
    %vm4208 = vcmp.ge.s32.totalorder %v175, 9
    %vm4209 = vcmp.ge.s32.totalorder %v176, 9
    %v4210 = vrot.slane %v3283, 7
    %v4211 = vrot.slane %v3284, 7
    %v4212 = vrot.slane %v3285, 7
    %v4213 = vrot.slane %v3286, 7
    %v4214 = vrot.slane %v3287, 7
    %v4215 = vrot.slane %v3288, 7
    %v4216 = vrot.slane %v3289, 7
    %v4217 = vrot.slane %v3290, 7
    %v4218 = vrot.slane %v3291, 7
    %v4219 = vrot.slane %v3292, 7
    %v4220 = vrot.slane %v3293, 7
    %v4221 = vrot.slane %v3294, 7
    %v4222 = vrot.slane %v3295, 7
    %v4223 = vrot.slane %v3296, 7
    %v4224 = vrot.slane %v3297, 7
    %v4225 = vrot.slane %v3298, 7
    %v4226 = vsel %vm303, %v4222, %v4224
    %v4227 = vsel %vm303, %v4223, %v4225
    %v4228 = vsel %vm303, %v4220, %v4222
    %v4229 = vsel %vm303, %v4221, %v4223
    %v4230 = vsel %vm303, %v4218, %v4220
    %v4231 = vsel %vm303, %v4219, %v4221
    %v4232 = vsel %vm303, %v4216, %v4218
    %v4233 = vsel %vm303, %v4217, %v4219
    %v4234 = vsel %vm303, %v4214, %v4216
    %v4235 = vsel %vm303, %v4215, %v4217
    %v4236 = vsel %vm303, %v4212, %v4214
    %v4237 = vsel %vm303, %v4213, %v4215
    %v4238 = vsel %vm303, %v4210, %v4212
    %v4239 = vsel %vm303, %v4211, %v4213
    %v4240 = vsel %vm303, %v4224, %v4210
    %v4241 = vsel %vm303, %v4225, %v4211
    %v4242 = vsel %vm4202, 1, 0
    %v4243 = vsel %vm4203, 1, 0
    %v4244 = vsel %vm4204, 1, 0
    %v4245 = vsel %vm4205, 1, 0
    %v4246 = vsel %vm4206, 1, 0
    %v4247 = vsel %vm4207, 1, 0
    %v4248 = vsel %vm4208, 1, 0
    %v4249 = vsel %vm4209, 1, 0
    %4250 = vset.pattern.permute.xlu0 0
    %4251 = vperm.xlu0 %4250, %v4242
    %v4252 = vpop.permute.xlu0 %4251
    %4253 = vset.pattern.permute.xlu0 0
    %4254 = vperm.xlu0 %4253, %v4243
    %v4255 = vpop.permute.xlu0 %4254
    %4256 = vset.pattern.permute.xlu0 0
    %4257 = vperm.xlu0 %4256, %v4244
    %v4258 = vpop.permute.xlu0 %4257
    %4259 = vset.pattern.permute.xlu0 0
    %4260 = vperm.xlu0 %4259, %v4245
    %v4261 = vpop.permute.xlu0 %4260
    %4262 = vset.pattern.permute.xlu0 0
    %4263 = vperm.xlu0 %4262, %v4246
    %v4264 = vpop.permute.xlu0 %4263
    %4265 = vset.pattern.permute.xlu0 0
    %4266 = vperm.xlu0 %4265, %v4247
    %v4267 = vpop.permute.xlu0 %4266
    %4268 = vset.pattern.permute.xlu0 0
    %4269 = vperm.xlu0 %4268, %v4248
    %v4270 = vpop.permute.xlu0 %4269
    %4271 = vset.pattern.permute.xlu0 0
    %4272 = vperm.xlu0 %4271, %v4249
    %v4273 = vpop.permute.xlu0 %4272
    %vm4274 = vcmp.eq.s32.totalorder %v4252, 1
    %vm4275 = vcmp.eq.s32.totalorder %v4255, 1
    %vm4276 = vcmp.eq.s32.totalorder %v4258, 1
    %vm4277 = vcmp.eq.s32.totalorder %v4261, 1
    %vm4278 = vcmp.eq.s32.totalorder %v4264, 1
    %vm4279 = vcmp.eq.s32.totalorder %v4267, 1
    %vm4280 = vcmp.eq.s32.totalorder %v4270, 1
    %vm4281 = vcmp.eq.s32.totalorder %v4273, 1
    %v4282 = vsel %vm4274, %v4226, 0.0
    %v4283 = vsel %vm4274, %v4227, 0.0
    %v4284 = vsel %vm4275, %v4240, 0.0
    %v4285 = vsel %vm4275, %v4241, 0.0
    %v4286 = vsel %vm4276, %v4238, 0.0
    %v4287 = vsel %vm4276, %v4239, 0.0
    %v4288 = vsel %vm4277, %v4236, 0.0
    %v4289 = vsel %vm4277, %v4237, 0.0
    %v4290 = vsel %vm4278, %v4234, 0.0
    %v4291 = vsel %vm4278, %v4235, 0.0
    %v4292 = vsel %vm4279, %v4232, 0.0
    %v4293 = vsel %vm4279, %v4233, 0.0
    %v4294 = vsel %vm4280, %v4230, 0.0
    %v4295 = vsel %vm4280, %v4231, 0.0
    %v4296 = vsel %vm4281, %v4228, 0.0
    %v4297 = vsel %vm4281, %v4229, 0.0
    %v4298 = vpack.c.bf16 %v4284, %v4282
    %v4299 = vpack.c.bf16 %v4285, %v4283
    %v4300 = vpack.c.bf16 %v4288, %v4286
    %v4301 = vpack.c.bf16 %v4289, %v4287
    %v4302 = vpack.c.bf16 %v4292, %v4290
    %v4303 = vpack.c.bf16 %v4293, %v4291
    %v4304 = vpack.c.bf16 %v4296, %v4294
    %v4305 = vpack.c.bf16 %v4297, %v4295
    %s4306 = scalar_lea.vmem [#allocation14], 384
    %v4307 = vld [vmem:[%s4306] sm:$0xf]
    %v4308 = vld [vmem:[%s4306 + $0x4] sm:$0xf]
    %v4309 = vld [vmem:[%s4306 + $0x8] sm:$0xf]
    %v4310 = vld [vmem:[%s4306 + $0xc] sm:$0xf]
    %v4311 = vld [vmem:[%s4306 + $0x10] sm:$0xf]
    %v4312 = vld [vmem:[%s4306 + $0x14] sm:$0xf]
    %v4313 = vld [vmem:[%s4306 + $0x18] sm:$0xf]
    %v4314 = vld [vmem:[%s4306 + $0x1c] sm:$0xf]
    %v4315 = vld [vmem:[%s4306 + $0x20] sm:$0xf]
    %v4316 = vld [vmem:[%s4306 + $0x24] sm:$0xf]
    %v4317 = vld [vmem:[%s4306 + $0x28] sm:$0xf]
    %v4318 = vld [vmem:[%s4306 + $0x2c] sm:$0xf]
    %v4319 = vld [vmem:[%s4306 + $0x30] sm:$0xf]
    %v4320 = vld [vmem:[%s4306 + $0x34] sm:$0xf]
    %v4321 = vld [vmem:[%s4306 + $0x38] sm:$0xf]
    %v4322 = vld [vmem:[%s4306 + $0x3c] sm:$0xf]
    %v4323 = vld [vmem:[%s4306 + $0x40] sm:$0xf]
    %v4324 = vld [vmem:[%s4306 + $0x44] sm:$0xf]
    %v4325 = vld [vmem:[%s4306 + $0x48] sm:$0xf]
    %v4326 = vld [vmem:[%s4306 + $0x4c] sm:$0xf]
    %v4327 = vld [vmem:[%s4306 + $0x50] sm:$0xf]
    %v4328 = vld [vmem:[%s4306 + $0x54] sm:$0xf]
    %v4329 = vld [vmem:[%s4306 + $0x58] sm:$0xf]
    %v4330 = vld [vmem:[%s4306 + $0x5c] sm:$0xf]
    %v4331 = vld [vmem:[%s4306 + $0x60] sm:$0xf]
    %v4332 = vld [vmem:[%s4306 + $0x64] sm:$0xf]
    %v4333 = vld [vmem:[%s4306 + $0x68] sm:$0xf]
    %v4334 = vld [vmem:[%s4306 + $0x6c] sm:$0xf]
    %v4335 = vld [vmem:[%s4306 + $0x70] sm:$0xf]
    %v4336 = vld [vmem:[%s4306 + $0x74] sm:$0xf]
    %v4337 = vld [vmem:[%s4306 + $0x78] sm:$0xf]
    %v4338 = vld [vmem:[%s4306 + $0x7c] sm:$0xf]
    %v4371 = vunpack.c.l.b16 %v4307
    %v4372 = vunpack.c.l.b16 %v4308
    %v4373 = vunpack.c.l.b16 %v4309
    %v4374 = vunpack.c.l.b16 %v4310
    %v4375 = vunpack.c.l.b16 %v4311
    %v4376 = vunpack.c.l.b16 %v4312
    %v4377 = vunpack.c.l.b16 %v4313
    %v4378 = vunpack.c.l.b16 %v4314
    %v4379 = vunpack.c.l.b16 %v4315
    %v4380 = vunpack.c.l.b16 %v4316
    %v4381 = vunpack.c.l.b16 %v4317
    %v4382 = vunpack.c.l.b16 %v4318
    %v4383 = vunpack.c.l.b16 %v4319
    %v4384 = vunpack.c.l.b16 %v4320
    %v4385 = vunpack.c.l.b16 %v4321
    %v4386 = vunpack.c.l.b16 %v4322
    %v4387 = vunpack.c.l.b16 %v4323
    %v4388 = vunpack.c.l.b16 %v4324
    %v4389 = vunpack.c.l.b16 %v4325
    %v4390 = vunpack.c.l.b16 %v4326
    %v4391 = vunpack.c.l.b16 %v4327
    %v4392 = vunpack.c.l.b16 %v4328
    %v4393 = vunpack.c.l.b16 %v4329
    %v4394 = vunpack.c.l.b16 %v4330
    %v4395 = vunpack.c.l.b16 %v4331
    %v4396 = vunpack.c.l.b16 %v4332
    %v4397 = vunpack.c.l.b16 %v4333
    %v4398 = vunpack.c.l.b16 %v4334
    %v4399 = vunpack.c.l.b16 %v4335
    %v4400 = vunpack.c.l.b16 %v4336
    %v4401 = vunpack.c.l.b16 %v4337
    %v4402 = vunpack.c.l.b16 %v4338
    %v4403 = vpack.c.b16 %v4372, %v4371
    %v4404 = vpack.c.b16 %v4374, %v4373
    %v4405 = vpack.c.b16 %v4376, %v4375
    %v4406 = vpack.c.b16 %v4378, %v4377
    %v4407 = vpack.c.b16 %v4380, %v4379
    %v4408 = vpack.c.b16 %v4382, %v4381
    %v4409 = vpack.c.b16 %v4384, %v4383
    %v4410 = vpack.c.b16 %v4386, %v4385
    %v4411 = vpack.c.b16 %v4388, %v4387
    %v4412 = vpack.c.b16 %v4390, %v4389
    %v4413 = vpack.c.b16 %v4392, %v4391
    %v4414 = vpack.c.b16 %v4394, %v4393
    %v4415 = vpack.c.b16 %v4396, %v4395
    %v4416 = vpack.c.b16 %v4398, %v4397
    %v4417 = vpack.c.b16 %v4400, %v4399
    %v4418 = vpack.c.b16 %v4402, %v4401
    %4435 = vmatprep.subr.bf16.mxu0 0
    %4436 = vmatpush1.bf16.msra.mxu0 %v4410
    %4437 = vmatprep.subr.bf16.mxu0 0
    %4438 = vmatpush1.bf16.msra.mxu0 %v4409
    %4439 = vmatprep.subr.bf16.mxu0 0
    %4440 = vmatpush1.bf16.msra.mxu0 %v4408
    %4441 = vmatprep.subr.bf16.mxu0 0
    %4442 = vmatpush1.bf16.msra.mxu0 %v4407
    %4443 = vmatprep.subr.bf16.mxu0 0
    %4444 = vmatpush1.bf16.msra.mxu0 %v4406
    %4445 = vmatprep.subr.bf16.mxu0 0
    %4446 = vmatpush1.bf16.msra.mxu0 %v4405
    %4447 = vmatprep.subr.bf16.mxu0 0
    %4448 = vmatpush1.bf16.msra.mxu0 %v4404
    %4449 = vmatprep.subr.bf16.mxu0 0
    %4450 = vmatpush1.bf16.msra.mxu0 %v4403
    %4451 = vmatprep.subr.bf16.mxu0 0
    %4452 = vmatpush2.bf16.msra.mxu0 %v4418
    %4453 = vmatprep.subr.bf16.mxu0 0
    %4454 = vmatpush2.bf16.msra.mxu0 %v4417
    %4455 = vmatprep.subr.bf16.mxu0 0
    %4456 = vmatpush2.bf16.msra.mxu0 %v4416
    %4457 = vmatprep.subr.bf16.mxu0 0
    %4458 = vmatpush2.bf16.msra.mxu0 %v4415
    %4459 = vmatprep.subr.bf16.mxu0 0
    %4460 = vmatpush2.bf16.msra.mxu0 %v4414
    %4461 = vmatprep.subr.bf16.mxu0 0
    %4462 = vmatpush2.bf16.msra.mxu0 %v4413
    %4463 = vmatprep.subr.bf16.mxu0 0
    %4464 = vmatpush2.bf16.msra.mxu0 %v4412
    %4465 = vmatprep.subr.bf16.mxu0 0
    %4466 = vmatpush2.bf16.msra.mxu0 %v4411
    %4467 = vmatprep.mubr.bf16.mxu0 %v4299
    %4468 = vmatmul.mubr.bf16.gmra.mxu0 %v4298
    %v4469 = vpop.f32.mrf.mxu0
    %v4470 = vadd.f32 0.0, %v4469
    %v4471 = vpop.f32.mrf.mxu0
    %v4472 = vpop.f32.mrf.mxu0
    %v4473 = vadd.f32 0.0, %v4472
    %v4474 = vpop.f32.mrf.mxu0
    %4475 = vmatprep.mubr.bf16.mxu0 %v4301
    %4476 = vmatmul.mubr.bf16.gmra.mxu0 %v4300
    %v4477 = vpop.f32.mrf.mxu0
    %v4478 = vadd.f32 0.0, %v4477
    %v4479 = vpop.f32.mrf.mxu0
    %v4480 = vpop.f32.mrf.mxu0
    %v4481 = vadd.f32 0.0, %v4480
    %v4482 = vpop.f32.mrf.mxu0
    %4483 = vmatprep.mubr.bf16.mxu0 %v4303
    %4484 = vmatmul.mubr.bf16.gmra.mxu0 %v4302
    %v4485 = vpop.f32.mrf.mxu0
    %v4486 = vadd.f32 0.0, %v4485
    %v4487 = vpop.f32.mrf.mxu0
    %v4488 = vpop.f32.mrf.mxu0
    %v4489 = vadd.f32 0.0, %v4488
    %v4490 = vpop.f32.mrf.mxu0
    %4491 = vmatprep.mubr.bf16.mxu0 %v4305
    %4492 = vmatmul.mubr.bf16.gmra.mxu0 %v4304
    %v4493 = vpop.f32.mrf.mxu0
    %v4494 = vadd.f32 0.0, %v4493
    %v4495 = vpop.f32.mrf.mxu0
    %v4496 = vpop.f32.mrf.mxu0
    %v4497 = vadd.f32 0.0, %v4496
    %v4498 = vpop.f32.mrf.mxu0
    %4499 = vdwg.mxu0
    %v4500 = vadd.f32 %v4194, %v4470
    %v4501 = vadd.f32 %v4195, %v4473
    %v4502 = vadd.f32 %v4196, %v4478
    %v4503 = vadd.f32 %v4197, %v4481
    %v4504 = vadd.f32 %v4198, %v4486
    %v4505 = vadd.f32 %v4199, %v4489
    %v4506 = vadd.f32 %v4200, %v4494
    %v4507 = vadd.f32 %v4201, %v4497
    %vm4508 = vcmp.ge.s32.totalorder %v169, 8
    %vm4509 = vcmp.ge.s32.totalorder %v170, 8
    %vm4510 = vcmp.ge.s32.totalorder %v171, 8
    %vm4511 = vcmp.ge.s32.totalorder %v172, 8
    %vm4512 = vcmp.ge.s32.totalorder %v173, 8
    %vm4513 = vcmp.ge.s32.totalorder %v174, 8
    %vm4514 = vcmp.ge.s32.totalorder %v175, 8
    %vm4515 = vcmp.ge.s32.totalorder %v176, 8
    %v4516 = vsel %vm4508, 1, 0
    %v4517 = vsel %vm4509, 1, 0
    %v4518 = vsel %vm4510, 1, 0
    %v4519 = vsel %vm4511, 1, 0
    %v4520 = vsel %vm4512, 1, 0
    %v4521 = vsel %vm4513, 1, 0
    %v4522 = vsel %vm4514, 1, 0
    %v4523 = vsel %vm4515, 1, 0
    %4524 = vset.pattern.permute.xlu0 0
    %4525 = vperm.xlu0 %4524, %v4516
    %v4526 = vpop.permute.xlu0 %4525
    %4527 = vset.pattern.permute.xlu0 0
    %4528 = vperm.xlu0 %4527, %v4517
    %v4529 = vpop.permute.xlu0 %4528
    %4530 = vset.pattern.permute.xlu0 0
    %4531 = vperm.xlu0 %4530, %v4518
    %v4532 = vpop.permute.xlu0 %4531
    %4533 = vset.pattern.permute.xlu0 0
    %4534 = vperm.xlu0 %4533, %v4519
    %v4535 = vpop.permute.xlu0 %4534
    %4536 = vset.pattern.permute.xlu0 0
    %4537 = vperm.xlu0 %4536, %v4520
    %v4538 = vpop.permute.xlu0 %4537
    %4539 = vset.pattern.permute.xlu0 0
    %4540 = vperm.xlu0 %4539, %v4521
    %v4541 = vpop.permute.xlu0 %4540
    %4542 = vset.pattern.permute.xlu0 0
    %4543 = vperm.xlu0 %4542, %v4522
    %v4544 = vpop.permute.xlu0 %4543
    %4545 = vset.pattern.permute.xlu0 0
    %4546 = vperm.xlu0 %4545, %v4523
    %v4547 = vpop.permute.xlu0 %4546
    %vm4548 = vcmp.eq.s32.totalorder %v4526, 1
    %vm4549 = vcmp.eq.s32.totalorder %v4529, 1
    %vm4550 = vcmp.eq.s32.totalorder %v4532, 1
    %vm4551 = vcmp.eq.s32.totalorder %v4535, 1
    %vm4552 = vcmp.eq.s32.totalorder %v4538, 1
    %vm4553 = vcmp.eq.s32.totalorder %v4541, 1
    %vm4554 = vcmp.eq.s32.totalorder %v4544, 1
    %vm4555 = vcmp.eq.s32.totalorder %v4547, 1
    %v4556 = vsel %vm4548, %v3297, 0.0
    %v4557 = vsel %vm4548, %v3298, 0.0
    %v4558 = vsel %vm4549, %v3283, 0.0
    %v4559 = vsel %vm4549, %v3284, 0.0
    %v4560 = vsel %vm4550, %v3285, 0.0
    %v4561 = vsel %vm4550, %v3286, 0.0
    %v4562 = vsel %vm4551, %v3287, 0.0
    %v4563 = vsel %vm4551, %v3288, 0.0
    %v4564 = vsel %vm4552, %v3289, 0.0
    %v4565 = vsel %vm4552, %v3290, 0.0
    %v4566 = vsel %vm4553, %v3291, 0.0
    %v4567 = vsel %vm4553, %v3292, 0.0
    %v4568 = vsel %vm4554, %v3293, 0.0
    %v4569 = vsel %vm4554, %v3294, 0.0
    %v4570 = vsel %vm4555, %v3295, 0.0
    %v4571 = vsel %vm4555, %v3296, 0.0
    %v4572 = vpack.c.bf16 %v4558, %v4556
    %v4573 = vpack.c.bf16 %v4559, %v4557
    %v4574 = vpack.c.bf16 %v4562, %v4560
    %v4575 = vpack.c.bf16 %v4563, %v4561
    %v4576 = vpack.c.bf16 %v4566, %v4564
    %v4577 = vpack.c.bf16 %v4567, %v4565
    %v4578 = vpack.c.bf16 %v4570, %v4568
    %v4579 = vpack.c.bf16 %v4571, %v4569
    %s4580 = scalar_lea.vmem [#allocation14], 512
    %v4581 = vld [vmem:[%s4580] sm:$0xf]
    %v4582 = vld [vmem:[%s4580 + $0x4] sm:$0xf]
    %v4583 = vld [vmem:[%s4580 + $0x8] sm:$0xf]
    %v4584 = vld [vmem:[%s4580 + $0xc] sm:$0xf]
    %v4585 = vld [vmem:[%s4580 + $0x10] sm:$0xf]
    %v4586 = vld [vmem:[%s4580 + $0x14] sm:$0xf]
    %v4587 = vld [vmem:[%s4580 + $0x18] sm:$0xf]
    %v4588 = vld [vmem:[%s4580 + $0x1c] sm:$0xf]
    %v4589 = vld [vmem:[%s4580 + $0x20] sm:$0xf]
    %v4590 = vld [vmem:[%s4580 + $0x24] sm:$0xf]
    %v4591 = vld [vmem:[%s4580 + $0x28] sm:$0xf]
    %v4592 = vld [vmem:[%s4580 + $0x2c] sm:$0xf]
    %v4593 = vld [vmem:[%s4580 + $0x30] sm:$0xf]
    %v4594 = vld [vmem:[%s4580 + $0x34] sm:$0xf]
    %v4595 = vld [vmem:[%s4580 + $0x38] sm:$0xf]
    %v4596 = vld [vmem:[%s4580 + $0x3c] sm:$0xf]
    %v4597 = vld [vmem:[%s4580 + $0x40] sm:$0xf]
    %v4598 = vld [vmem:[%s4580 + $0x44] sm:$0xf]
    %v4599 = vld [vmem:[%s4580 + $0x48] sm:$0xf]
    %v4600 = vld [vmem:[%s4580 + $0x4c] sm:$0xf]
    %v4601 = vld [vmem:[%s4580 + $0x50] sm:$0xf]
    %v4602 = vld [vmem:[%s4580 + $0x54] sm:$0xf]
    %v4603 = vld [vmem:[%s4580 + $0x58] sm:$0xf]
    %v4604 = vld [vmem:[%s4580 + $0x5c] sm:$0xf]
    %v4605 = vld [vmem:[%s4580 + $0x60] sm:$0xf]
    %v4606 = vld [vmem:[%s4580 + $0x64] sm:$0xf]
    %v4607 = vld [vmem:[%s4580 + $0x68] sm:$0xf]
    %v4608 = vld [vmem:[%s4580 + $0x6c] sm:$0xf]
    %v4609 = vld [vmem:[%s4580 + $0x70] sm:$0xf]
    %v4610 = vld [vmem:[%s4580 + $0x74] sm:$0xf]
    %v4611 = vld [vmem:[%s4580 + $0x78] sm:$0xf]
    %v4612 = vld [vmem:[%s4580 + $0x7c] sm:$0xf]
    %v4645 = vunpack.c.l.b16 %v4581
    %v4646 = vunpack.c.l.b16 %v4582
    %v4647 = vunpack.c.l.b16 %v4583
    %v4648 = vunpack.c.l.b16 %v4584
    %v4649 = vunpack.c.l.b16 %v4585
    %v4650 = vunpack.c.l.b16 %v4586
    %v4651 = vunpack.c.l.b16 %v4587
    %v4652 = vunpack.c.l.b16 %v4588
    %v4653 = vunpack.c.l.b16 %v4589
    %v4654 = vunpack.c.l.b16 %v4590
    %v4655 = vunpack.c.l.b16 %v4591
    %v4656 = vunpack.c.l.b16 %v4592
    %v4657 = vunpack.c.l.b16 %v4593
    %v4658 = vunpack.c.l.b16 %v4594
    %v4659 = vunpack.c.l.b16 %v4595
    %v4660 = vunpack.c.l.b16 %v4596
    %v4661 = vunpack.c.l.b16 %v4597
    %v4662 = vunpack.c.l.b16 %v4598
    %v4663 = vunpack.c.l.b16 %v4599
    %v4664 = vunpack.c.l.b16 %v4600
    %v4665 = vunpack.c.l.b16 %v4601
    %v4666 = vunpack.c.l.b16 %v4602
    %v4667 = vunpack.c.l.b16 %v4603
    %v4668 = vunpack.c.l.b16 %v4604
    %v4669 = vunpack.c.l.b16 %v4605
    %v4670 = vunpack.c.l.b16 %v4606
    %v4671 = vunpack.c.l.b16 %v4607
    %v4672 = vunpack.c.l.b16 %v4608
    %v4673 = vunpack.c.l.b16 %v4609
    %v4674 = vunpack.c.l.b16 %v4610
    %v4675 = vunpack.c.l.b16 %v4611
    %v4676 = vunpack.c.l.b16 %v4612
    %v4677 = vpack.c.b16 %v4646, %v4645
    %v4678 = vpack.c.b16 %v4648, %v4647
    %v4679 = vpack.c.b16 %v4650, %v4649
    %v4680 = vpack.c.b16 %v4652, %v4651
    %v4681 = vpack.c.b16 %v4654, %v4653
    %v4682 = vpack.c.b16 %v4656, %v4655
    %v4683 = vpack.c.b16 %v4658, %v4657
    %v4684 = vpack.c.b16 %v4660, %v4659
    %v4685 = vpack.c.b16 %v4662, %v4661
    %v4686 = vpack.c.b16 %v4664, %v4663
    %v4687 = vpack.c.b16 %v4666, %v4665
    %v4688 = vpack.c.b16 %v4668, %v4667
    %v4689 = vpack.c.b16 %v4670, %v4669
    %v4690 = vpack.c.b16 %v4672, %v4671
    %v4691 = vpack.c.b16 %v4674, %v4673
    %v4692 = vpack.c.b16 %v4676, %v4675
    %4709 = vmatprep.subr.bf16.mxu0 0
    %4710 = vmatpush1.bf16.msra.mxu0 %v4684
    %4711 = vmatprep.subr.bf16.mxu0 0
    %4712 = vmatpush1.bf16.msra.mxu0 %v4683
    %4713 = vmatprep.subr.bf16.mxu0 0
    %4714 = vmatpush1.bf16.msra.mxu0 %v4682
    %4715 = vmatprep.subr.bf16.mxu0 0
    %4716 = vmatpush1.bf16.msra.mxu0 %v4681
    %4717 = vmatprep.subr.bf16.mxu0 0
    %4718 = vmatpush1.bf16.msra.mxu0 %v4680
    %4719 = vmatprep.subr.bf16.mxu0 0
    %4720 = vmatpush1.bf16.msra.mxu0 %v4679
    %4721 = vmatprep.subr.bf16.mxu0 0
    %4722 = vmatpush1.bf16.msra.mxu0 %v4678
    %4723 = vmatprep.subr.bf16.mxu0 0
    %4724 = vmatpush1.bf16.msra.mxu0 %v4677
    %4725 = vmatprep.subr.bf16.mxu0 0
    %4726 = vmatpush2.bf16.msra.mxu0 %v4692
    %4727 = vmatprep.subr.bf16.mxu0 0
    %4728 = vmatpush2.bf16.msra.mxu0 %v4691
    %4729 = vmatprep.subr.bf16.mxu0 0
    %4730 = vmatpush2.bf16.msra.mxu0 %v4690
    %4731 = vmatprep.subr.bf16.mxu0 0
    %4732 = vmatpush2.bf16.msra.mxu0 %v4689
    %4733 = vmatprep.subr.bf16.mxu0 0
    %4734 = vmatpush2.bf16.msra.mxu0 %v4688
    %4735 = vmatprep.subr.bf16.mxu0 0
    %4736 = vmatpush2.bf16.msra.mxu0 %v4687
    %4737 = vmatprep.subr.bf16.mxu0 0
    %4738 = vmatpush2.bf16.msra.mxu0 %v4686
    %4739 = vmatprep.subr.bf16.mxu0 0
    %4740 = vmatpush2.bf16.msra.mxu0 %v4685
    %4741 = vmatprep.mubr.bf16.mxu0 %v4573
    %4742 = vmatmul.mubr.bf16.gmra.mxu0 %v4572
    %v4743 = vpop.f32.mrf.mxu0
    %v4744 = vadd.f32 0.0, %v4743
    %v4745 = vpop.f32.mrf.mxu0
    %v4746 = vpop.f32.mrf.mxu0
    %v4747 = vadd.f32 0.0, %v4746
    %v4748 = vpop.f32.mrf.mxu0
    %4749 = vmatprep.mubr.bf16.mxu0 %v4575
    %4750 = vmatmul.mubr.bf16.gmra.mxu0 %v4574
    %v4751 = vpop.f32.mrf.mxu0
    %v4752 = vadd.f32 0.0, %v4751
    %v4753 = vpop.f32.mrf.mxu0
    %v4754 = vpop.f32.mrf.mxu0
    %v4755 = vadd.f32 0.0, %v4754
    %v4756 = vpop.f32.mrf.mxu0
    %4757 = vmatprep.mubr.bf16.mxu0 %v4577
    %4758 = vmatmul.mubr.bf16.gmra.mxu0 %v4576
    %v4759 = vpop.f32.mrf.mxu0
    %v4760 = vadd.f32 0.0, %v4759
    %v4761 = vpop.f32.mrf.mxu0
    %v4762 = vpop.f32.mrf.mxu0
    %v4763 = vadd.f32 0.0, %v4762
    %v4764 = vpop.f32.mrf.mxu0
    %4765 = vmatprep.mubr.bf16.mxu0 %v4579
    %4766 = vmatmul.mubr.bf16.gmra.mxu0 %v4578
    %v4767 = vpop.f32.mrf.mxu0
    %v4768 = vadd.f32 0.0, %v4767
    %v4769 = vpop.f32.mrf.mxu0
    %v4770 = vpop.f32.mrf.mxu0
    %v4771 = vadd.f32 0.0, %v4770
    %v4772 = vpop.f32.mrf.mxu0
    %4773 = vdwg.mxu0
    %v4774 = vadd.f32 %v4500, %v4744
    %v4775 = vadd.f32 %v4501, %v4747
    %v4776 = vadd.f32 %v4502, %v4752
    %v4777 = vadd.f32 %v4503, %v4755
    %v4778 = vadd.f32 %v4504, %v4760
    %v4779 = vadd.f32 %v4505, %v4763
    %v4780 = vadd.f32 %v4506, %v4768
    %v4781 = vadd.f32 %v4507, %v4771
    %vm4782 = vcmp.ge.s32.totalorder %v169, 7
    %vm4783 = vcmp.ge.s32.totalorder %v170, 7
    %vm4784 = vcmp.ge.s32.totalorder %v171, 7
    %vm4785 = vcmp.ge.s32.totalorder %v172, 7
    %vm4786 = vcmp.ge.s32.totalorder %v173, 7
    %vm4787 = vcmp.ge.s32.totalorder %v174, 7
    %vm4788 = vcmp.ge.s32.totalorder %v175, 7
    %vm4789 = vcmp.ge.s32.totalorder %v176, 7
    %v4790 = vrot.slane %v3283, 1
    %v4791 = vrot.slane %v3284, 1
    %v4792 = vrot.slane %v3285, 1
    %v4793 = vrot.slane %v3286, 1
    %v4794 = vrot.slane %v3287, 1
    %v4795 = vrot.slane %v3288, 1
    %v4796 = vrot.slane %v3289, 1
    %v4797 = vrot.slane %v3290, 1
    %v4798 = vrot.slane %v3291, 1
    %v4799 = vrot.slane %v3292, 1
    %v4800 = vrot.slane %v3293, 1
    %v4801 = vrot.slane %v3294, 1
    %v4802 = vrot.slane %v3295, 1
    %v4803 = vrot.slane %v3296, 1
    %v4804 = vrot.slane %v3297, 1
    %v4805 = vrot.slane %v3298, 1
    %v4806 = vsel %vm376, %v4802, %v4804
    %v4807 = vsel %vm376, %v4803, %v4805
    %v4808 = vsel %vm376, %v4800, %v4802
    %v4809 = vsel %vm376, %v4801, %v4803
    %v4810 = vsel %vm376, %v4798, %v4800
    %v4811 = vsel %vm376, %v4799, %v4801
    %v4812 = vsel %vm376, %v4796, %v4798
    %v4813 = vsel %vm376, %v4797, %v4799
    %v4814 = vsel %vm376, %v4794, %v4796
    %v4815 = vsel %vm376, %v4795, %v4797
    %v4816 = vsel %vm376, %v4792, %v4794
    %v4817 = vsel %vm376, %v4793, %v4795
    %v4818 = vsel %vm376, %v4790, %v4792
    %v4819 = vsel %vm376, %v4791, %v4793
    %v4820 = vsel %vm376, %v4804, %v4790
    %v4821 = vsel %vm376, %v4805, %v4791
    %v4822 = vsel %vm4782, 1, 0
    %v4823 = vsel %vm4783, 1, 0
    %v4824 = vsel %vm4784, 1, 0
    %v4825 = vsel %vm4785, 1, 0
    %v4826 = vsel %vm4786, 1, 0
    %v4827 = vsel %vm4787, 1, 0
    %v4828 = vsel %vm4788, 1, 0
    %v4829 = vsel %vm4789, 1, 0
    %4830 = vset.pattern.permute.xlu0 0
    %4831 = vperm.xlu0 %4830, %v4822
    %v4832 = vpop.permute.xlu0 %4831
    %4833 = vset.pattern.permute.xlu0 0
    %4834 = vperm.xlu0 %4833, %v4823
    %v4835 = vpop.permute.xlu0 %4834
    %4836 = vset.pattern.permute.xlu0 0
    %4837 = vperm.xlu0 %4836, %v4824
    %v4838 = vpop.permute.xlu0 %4837
    %4839 = vset.pattern.permute.xlu0 0
    %4840 = vperm.xlu0 %4839, %v4825
    %v4841 = vpop.permute.xlu0 %4840
    %4842 = vset.pattern.permute.xlu0 0
    %4843 = vperm.xlu0 %4842, %v4826
    %v4844 = vpop.permute.xlu0 %4843
    %4845 = vset.pattern.permute.xlu0 0
    %4846 = vperm.xlu0 %4845, %v4827
    %v4847 = vpop.permute.xlu0 %4846
    %4848 = vset.pattern.permute.xlu0 0
    %4849 = vperm.xlu0 %4848, %v4828
    %v4850 = vpop.permute.xlu0 %4849
    %4851 = vset.pattern.permute.xlu0 0
    %4852 = vperm.xlu0 %4851, %v4829
    %v4853 = vpop.permute.xlu0 %4852
    %vm4854 = vcmp.eq.s32.totalorder %v4832, 1
    %vm4855 = vcmp.eq.s32.totalorder %v4835, 1
    %vm4856 = vcmp.eq.s32.totalorder %v4838, 1
    %vm4857 = vcmp.eq.s32.totalorder %v4841, 1
    %vm4858 = vcmp.eq.s32.totalorder %v4844, 1
    %vm4859 = vcmp.eq.s32.totalorder %v4847, 1
    %vm4860 = vcmp.eq.s32.totalorder %v4850, 1
    %vm4861 = vcmp.eq.s32.totalorder %v4853, 1
    %v4862 = vsel %vm4854, %v4820, 0.0
    %v4863 = vsel %vm4854, %v4821, 0.0
    %v4864 = vsel %vm4855, %v4818, 0.0
    %v4865 = vsel %vm4855, %v4819, 0.0
    %v4866 = vsel %vm4856, %v4816, 0.0
    %v4867 = vsel %vm4856, %v4817, 0.0
    %v4868 = vsel %vm4857, %v4814, 0.0
    %v4869 = vsel %vm4857, %v4815, 0.0
    %v4870 = vsel %vm4858, %v4812, 0.0
    %v4871 = vsel %vm4858, %v4813, 0.0
    %v4872 = vsel %vm4859, %v4810, 0.0
    %v4873 = vsel %vm4859, %v4811, 0.0
    %v4874 = vsel %vm4860, %v4808, 0.0
    %v4875 = vsel %vm4860, %v4809, 0.0
    %v4876 = vsel %vm4861, %v4806, 0.0
    %v4877 = vsel %vm4861, %v4807, 0.0
    %v4878 = vpack.c.bf16 %v4864, %v4862
    %v4879 = vpack.c.bf16 %v4865, %v4863
    %v4880 = vpack.c.bf16 %v4868, %v4866
    %v4881 = vpack.c.bf16 %v4869, %v4867
    %v4882 = vpack.c.bf16 %v4872, %v4870
    %v4883 = vpack.c.bf16 %v4873, %v4871
    %v4884 = vpack.c.bf16 %v4876, %v4874
    %v4885 = vpack.c.bf16 %v4877, %v4875
    %s4886 = scalar_lea.vmem [#allocation14], 640
    %v4887 = vld [vmem:[%s4886] sm:$0xf]
    %v4888 = vld [vmem:[%s4886 + $0x4] sm:$0xf]
    %v4889 = vld [vmem:[%s4886 + $0x8] sm:$0xf]
    %v4890 = vld [vmem:[%s4886 + $0xc] sm:$0xf]
    %v4891 = vld [vmem:[%s4886 + $0x10] sm:$0xf]
    %v4892 = vld [vmem:[%s4886 + $0x14] sm:$0xf]
    %v4893 = vld [vmem:[%s4886 + $0x18] sm:$0xf]
    %v4894 = vld [vmem:[%s4886 + $0x1c] sm:$0xf]
    %v4895 = vld [vmem:[%s4886 + $0x20] sm:$0xf]
    %v4896 = vld [vmem:[%s4886 + $0x24] sm:$0xf]
    %v4897 = vld [vmem:[%s4886 + $0x28] sm:$0xf]
    %v4898 = vld [vmem:[%s4886 + $0x2c] sm:$0xf]
    %v4899 = vld [vmem:[%s4886 + $0x30] sm:$0xf]
    %v4900 = vld [vmem:[%s4886 + $0x34] sm:$0xf]
    %v4901 = vld [vmem:[%s4886 + $0x38] sm:$0xf]
    %v4902 = vld [vmem:[%s4886 + $0x3c] sm:$0xf]
    %v4903 = vld [vmem:[%s4886 + $0x40] sm:$0xf]
    %v4904 = vld [vmem:[%s4886 + $0x44] sm:$0xf]
    %v4905 = vld [vmem:[%s4886 + $0x48] sm:$0xf]
    %v4906 = vld [vmem:[%s4886 + $0x4c] sm:$0xf]
    %v4907 = vld [vmem:[%s4886 + $0x50] sm:$0xf]
    %v4908 = vld [vmem:[%s4886 + $0x54] sm:$0xf]
    %v4909 = vld [vmem:[%s4886 + $0x58] sm:$0xf]
    %v4910 = vld [vmem:[%s4886 + $0x5c] sm:$0xf]
    %v4911 = vld [vmem:[%s4886 + $0x60] sm:$0xf]
    %v4912 = vld [vmem:[%s4886 + $0x64] sm:$0xf]
    %v4913 = vld [vmem:[%s4886 + $0x68] sm:$0xf]
    %v4914 = vld [vmem:[%s4886 + $0x6c] sm:$0xf]
    %v4915 = vld [vmem:[%s4886 + $0x70] sm:$0xf]
    %v4916 = vld [vmem:[%s4886 + $0x74] sm:$0xf]
    %v4917 = vld [vmem:[%s4886 + $0x78] sm:$0xf]
    %v4918 = vld [vmem:[%s4886 + $0x7c] sm:$0xf]
    %v4951 = vunpack.c.l.b16 %v4887
    %v4952 = vunpack.c.l.b16 %v4888
    %v4953 = vunpack.c.l.b16 %v4889
    %v4954 = vunpack.c.l.b16 %v4890
    %v4955 = vunpack.c.l.b16 %v4891
    %v4956 = vunpack.c.l.b16 %v4892
    %v4957 = vunpack.c.l.b16 %v4893
    %v4958 = vunpack.c.l.b16 %v4894
    %v4959 = vunpack.c.l.b16 %v4895
    %v4960 = vunpack.c.l.b16 %v4896
    %v4961 = vunpack.c.l.b16 %v4897
    %v4962 = vunpack.c.l.b16 %v4898
    %v4963 = vunpack.c.l.b16 %v4899
    %v4964 = vunpack.c.l.b16 %v4900
    %v4965 = vunpack.c.l.b16 %v4901
    %v4966 = vunpack.c.l.b16 %v4902
    %v4967 = vunpack.c.l.b16 %v4903
    %v4968 = vunpack.c.l.b16 %v4904
    %v4969 = vunpack.c.l.b16 %v4905
    %v4970 = vunpack.c.l.b16 %v4906
    %v4971 = vunpack.c.l.b16 %v4907
    %v4972 = vunpack.c.l.b16 %v4908
    %v4973 = vunpack.c.l.b16 %v4909
    %v4974 = vunpack.c.l.b16 %v4910
    %v4975 = vunpack.c.l.b16 %v4911
    %v4976 = vunpack.c.l.b16 %v4912
    %v4977 = vunpack.c.l.b16 %v4913
    %v4978 = vunpack.c.l.b16 %v4914
    %v4979 = vunpack.c.l.b16 %v4915
    %v4980 = vunpack.c.l.b16 %v4916
    %v4981 = vunpack.c.l.b16 %v4917
    %v4982 = vunpack.c.l.b16 %v4918
    %v4983 = vpack.c.b16 %v4952, %v4951
    %v4984 = vpack.c.b16 %v4954, %v4953
    %v4985 = vpack.c.b16 %v4956, %v4955
    %v4986 = vpack.c.b16 %v4958, %v4957
    %v4987 = vpack.c.b16 %v4960, %v4959
    %v4988 = vpack.c.b16 %v4962, %v4961
    %v4989 = vpack.c.b16 %v4964, %v4963
    %v4990 = vpack.c.b16 %v4966, %v4965
    %v4991 = vpack.c.b16 %v4968, %v4967
    %v4992 = vpack.c.b16 %v4970, %v4969
    %v4993 = vpack.c.b16 %v4972, %v4971
    %v4994 = vpack.c.b16 %v4974, %v4973
    %v4995 = vpack.c.b16 %v4976, %v4975
    %v4996 = vpack.c.b16 %v4978, %v4977
    %v4997 = vpack.c.b16 %v4980, %v4979
    %v4998 = vpack.c.b16 %v4982, %v4981
    %5015 = vmatprep.subr.bf16.mxu0 0
    %5016 = vmatpush1.bf16.msra.mxu0 %v4990
    %5017 = vmatprep.subr.bf16.mxu0 0
    %5018 = vmatpush1.bf16.msra.mxu0 %v4989
    %5019 = vmatprep.subr.bf16.mxu0 0
    %5020 = vmatpush1.bf16.msra.mxu0 %v4988
    %5021 = vmatprep.subr.bf16.mxu0 0
    %5022 = vmatpush1.bf16.msra.mxu0 %v4987
    %5023 = vmatprep.subr.bf16.mxu0 0
    %5024 = vmatpush1.bf16.msra.mxu0 %v4986
    %5025 = vmatprep.subr.bf16.mxu0 0
    %5026 = vmatpush1.bf16.msra.mxu0 %v4985
    %5027 = vmatprep.subr.bf16.mxu0 0
    %5028 = vmatpush1.bf16.msra.mxu0 %v4984
    %5029 = vmatprep.subr.bf16.mxu0 0
    %5030 = vmatpush1.bf16.msra.mxu0 %v4983
    %5031 = vmatprep.subr.bf16.mxu0 0
    %5032 = vmatpush2.bf16.msra.mxu0 %v4998
    %5033 = vmatprep.subr.bf16.mxu0 0
    %5034 = vmatpush2.bf16.msra.mxu0 %v4997
    %5035 = vmatprep.subr.bf16.mxu0 0
    %5036 = vmatpush2.bf16.msra.mxu0 %v4996
    %5037 = vmatprep.subr.bf16.mxu0 0
    %5038 = vmatpush2.bf16.msra.mxu0 %v4995
    %5039 = vmatprep.subr.bf16.mxu0 0
    %5040 = vmatpush2.bf16.msra.mxu0 %v4994
    %5041 = vmatprep.subr.bf16.mxu0 0
    %5042 = vmatpush2.bf16.msra.mxu0 %v4993
    %5043 = vmatprep.subr.bf16.mxu0 0
    %5044 = vmatpush2.bf16.msra.mxu0 %v4992
    %5045 = vmatprep.subr.bf16.mxu0 0
    %5046 = vmatpush2.bf16.msra.mxu0 %v4991
    %5047 = vmatprep.mubr.bf16.mxu0 %v4879
    %5048 = vmatmul.mubr.bf16.gmra.mxu0 %v4878
    %v5049 = vpop.f32.mrf.mxu0
    %v5050 = vadd.f32 0.0, %v5049
    %v5051 = vpop.f32.mrf.mxu0
    %v5052 = vpop.f32.mrf.mxu0
    %v5053 = vadd.f32 0.0, %v5052
    %v5054 = vpop.f32.mrf.mxu0
    %5055 = vmatprep.mubr.bf16.mxu0 %v4881
    %5056 = vmatmul.mubr.bf16.gmra.mxu0 %v4880
    %v5057 = vpop.f32.mrf.mxu0
    %v5058 = vadd.f32 0.0, %v5057
    %v5059 = vpop.f32.mrf.mxu0
    %v5060 = vpop.f32.mrf.mxu0
    %v5061 = vadd.f32 0.0, %v5060
    %v5062 = vpop.f32.mrf.mxu0
    %5063 = vmatprep.mubr.bf16.mxu0 %v4883
    %5064 = vmatmul.mubr.bf16.gmra.mxu0 %v4882
    %v5065 = vpop.f32.mrf.mxu0
    %v5066 = vadd.f32 0.0, %v5065
    %v5067 = vpop.f32.mrf.mxu0
    %v5068 = vpop.f32.mrf.mxu0
    %v5069 = vadd.f32 0.0, %v5068
    %v5070 = vpop.f32.mrf.mxu0
    %5071 = vmatprep.mubr.bf16.mxu0 %v4885
    %5072 = vmatmul.mubr.bf16.gmra.mxu0 %v4884
    %v5073 = vpop.f32.mrf.mxu0
    %v5074 = vadd.f32 0.0, %v5073
    %v5075 = vpop.f32.mrf.mxu0
    %v5076 = vpop.f32.mrf.mxu0
    %v5077 = vadd.f32 0.0, %v5076
    %v5078 = vpop.f32.mrf.mxu0
    %5079 = vdwg.mxu0
    %v5080 = vadd.f32 %v4774, %v5050
    %v5081 = vadd.f32 %v4775, %v5053
    %v5082 = vadd.f32 %v4776, %v5058
    %v5083 = vadd.f32 %v4777, %v5061
    %v5084 = vadd.f32 %v4778, %v5066
    %v5085 = vadd.f32 %v4779, %v5069
    %v5086 = vadd.f32 %v4780, %v5074
    %v5087 = vadd.f32 %v4781, %v5077
    %vm5088 = vcmp.ge.s32.totalorder %v169, 6
    %vm5089 = vcmp.ge.s32.totalorder %v170, 6
    %vm5090 = vcmp.ge.s32.totalorder %v171, 6
    %vm5091 = vcmp.ge.s32.totalorder %v172, 6
    %vm5092 = vcmp.ge.s32.totalorder %v173, 6
    %vm5093 = vcmp.ge.s32.totalorder %v174, 6
    %vm5094 = vcmp.ge.s32.totalorder %v175, 6
    %vm5095 = vcmp.ge.s32.totalorder %v176, 6
    %v5096 = vrot.slane %v3283, 2
    %v5097 = vrot.slane %v3284, 2
    %v5098 = vrot.slane %v3285, 2
    %v5099 = vrot.slane %v3286, 2
    %v5100 = vrot.slane %v3287, 2
    %v5101 = vrot.slane %v3288, 2
    %v5102 = vrot.slane %v3289, 2
    %v5103 = vrot.slane %v3290, 2
    %v5104 = vrot.slane %v3291, 2
    %v5105 = vrot.slane %v3292, 2
    %v5106 = vrot.slane %v3293, 2
    %v5107 = vrot.slane %v3294, 2
    %v5108 = vrot.slane %v3295, 2
    %v5109 = vrot.slane %v3296, 2
    %v5110 = vrot.slane %v3297, 2
    %v5111 = vrot.slane %v3298, 2
    %v5112 = vsel %vm1150, %v5108, %v5110
    %v5113 = vsel %vm1150, %v5109, %v5111
    %v5114 = vsel %vm1150, %v5106, %v5108
    %v5115 = vsel %vm1150, %v5107, %v5109
    %v5116 = vsel %vm1150, %v5104, %v5106
    %v5117 = vsel %vm1150, %v5105, %v5107
    %v5118 = vsel %vm1150, %v5102, %v5104
    %v5119 = vsel %vm1150, %v5103, %v5105
    %v5120 = vsel %vm1150, %v5100, %v5102
    %v5121 = vsel %vm1150, %v5101, %v5103
    %v5122 = vsel %vm1150, %v5098, %v5100
    %v5123 = vsel %vm1150, %v5099, %v5101
    %v5124 = vsel %vm1150, %v5096, %v5098
    %v5125 = vsel %vm1150, %v5097, %v5099
    %v5126 = vsel %vm1150, %v5110, %v5096
    %v5127 = vsel %vm1150, %v5111, %v5097
    %v5128 = vsel %vm5088, 1, 0
    %v5129 = vsel %vm5089, 1, 0
    %v5130 = vsel %vm5090, 1, 0
    %v5131 = vsel %vm5091, 1, 0
    %v5132 = vsel %vm5092, 1, 0
    %v5133 = vsel %vm5093, 1, 0
    %v5134 = vsel %vm5094, 1, 0
    %v5135 = vsel %vm5095, 1, 0
    %5136 = vset.pattern.permute.xlu0 0
    %5137 = vperm.xlu0 %5136, %v5128
    %v5138 = vpop.permute.xlu0 %5137
    %5139 = vset.pattern.permute.xlu0 0
    %5140 = vperm.xlu0 %5139, %v5129
    %v5141 = vpop.permute.xlu0 %5140
    %5142 = vset.pattern.permute.xlu0 0
    %5143 = vperm.xlu0 %5142, %v5130
    %v5144 = vpop.permute.xlu0 %5143
    %5145 = vset.pattern.permute.xlu0 0
    %5146 = vperm.xlu0 %5145, %v5131
    %v5147 = vpop.permute.xlu0 %5146
    %5148 = vset.pattern.permute.xlu0 0
    %5149 = vperm.xlu0 %5148, %v5132
    %v5150 = vpop.permute.xlu0 %5149
    %5151 = vset.pattern.permute.xlu0 0
    %5152 = vperm.xlu0 %5151, %v5133
    %v5153 = vpop.permute.xlu0 %5152
    %5154 = vset.pattern.permute.xlu0 0
    %5155 = vperm.xlu0 %5154, %v5134
    %v5156 = vpop.permute.xlu0 %5155
    %5157 = vset.pattern.permute.xlu0 0
    %5158 = vperm.xlu0 %5157, %v5135
    %v5159 = vpop.permute.xlu0 %5158
    %vm5160 = vcmp.eq.s32.totalorder %v5138, 1
    %vm5161 = vcmp.eq.s32.totalorder %v5141, 1
    %vm5162 = vcmp.eq.s32.totalorder %v5144, 1
    %vm5163 = vcmp.eq.s32.totalorder %v5147, 1
    %vm5164 = vcmp.eq.s32.totalorder %v5150, 1
    %vm5165 = vcmp.eq.s32.totalorder %v5153, 1
    %vm5166 = vcmp.eq.s32.totalorder %v5156, 1
    %vm5167 = vcmp.eq.s32.totalorder %v5159, 1
    %v5168 = vsel %vm5160, %v5126, 0.0
    %v5169 = vsel %vm5160, %v5127, 0.0
    %v5170 = vsel %vm5161, %v5124, 0.0
    %v5171 = vsel %vm5161, %v5125, 0.0
    %v5172 = vsel %vm5162, %v5122, 0.0
    %v5173 = vsel %vm5162, %v5123, 0.0
    %v5174 = vsel %vm5163, %v5120, 0.0
    %v5175 = vsel %vm5163, %v5121, 0.0
    %v5176 = vsel %vm5164, %v5118, 0.0
    %v5177 = vsel %vm5164, %v5119, 0.0
    %v5178 = vsel %vm5165, %v5116, 0.0
    %v5179 = vsel %vm5165, %v5117, 0.0
    %v5180 = vsel %vm5166, %v5114, 0.0
    %v5181 = vsel %vm5166, %v5115, 0.0
    %v5182 = vsel %vm5167, %v5112, 0.0
    %v5183 = vsel %vm5167, %v5113, 0.0
    %v5184 = vpack.c.bf16 %v5170, %v5168
    %v5185 = vpack.c.bf16 %v5171, %v5169
    %v5186 = vpack.c.bf16 %v5174, %v5172
    %v5187 = vpack.c.bf16 %v5175, %v5173
    %v5188 = vpack.c.bf16 %v5178, %v5176
    %v5189 = vpack.c.bf16 %v5179, %v5177
    %v5190 = vpack.c.bf16 %v5182, %v5180
    %v5191 = vpack.c.bf16 %v5183, %v5181
    %s5192 = scalar_lea.vmem [#allocation14], 768
    %v5193 = vld [vmem:[%s5192] sm:$0xf]
    %v5194 = vld [vmem:[%s5192 + $0x4] sm:$0xf]
    %v5195 = vld [vmem:[%s5192 + $0x8] sm:$0xf]
    %v5196 = vld [vmem:[%s5192 + $0xc] sm:$0xf]
    %v5197 = vld [vmem:[%s5192 + $0x10] sm:$0xf]
    %v5198 = vld [vmem:[%s5192 + $0x14] sm:$0xf]
    %v5199 = vld [vmem:[%s5192 + $0x18] sm:$0xf]
    %v5200 = vld [vmem:[%s5192 + $0x1c] sm:$0xf]
    %v5201 = vld [vmem:[%s5192 + $0x20] sm:$0xf]
    %v5202 = vld [vmem:[%s5192 + $0x24] sm:$0xf]
    %v5203 = vld [vmem:[%s5192 + $0x28] sm:$0xf]
    %v5204 = vld [vmem:[%s5192 + $0x2c] sm:$0xf]
    %v5205 = vld [vmem:[%s5192 + $0x30] sm:$0xf]
    %v5206 = vld [vmem:[%s5192 + $0x34] sm:$0xf]
    %v5207 = vld [vmem:[%s5192 + $0x38] sm:$0xf]
    %v5208 = vld [vmem:[%s5192 + $0x3c] sm:$0xf]
    %v5209 = vld [vmem:[%s5192 + $0x40] sm:$0xf]
    %v5210 = vld [vmem:[%s5192 + $0x44] sm:$0xf]
    %v5211 = vld [vmem:[%s5192 + $0x48] sm:$0xf]
    %v5212 = vld [vmem:[%s5192 + $0x4c] sm:$0xf]
    %v5213 = vld [vmem:[%s5192 + $0x50] sm:$0xf]
    %v5214 = vld [vmem:[%s5192 + $0x54] sm:$0xf]
    %v5215 = vld [vmem:[%s5192 + $0x58] sm:$0xf]
    %v5216 = vld [vmem:[%s5192 + $0x5c] sm:$0xf]
    %v5217 = vld [vmem:[%s5192 + $0x60] sm:$0xf]
    %v5218 = vld [vmem:[%s5192 + $0x64] sm:$0xf]
    %v5219 = vld [vmem:[%s5192 + $0x68] sm:$0xf]
    %v5220 = vld [vmem:[%s5192 + $0x6c] sm:$0xf]
    %v5221 = vld [vmem:[%s5192 + $0x70] sm:$0xf]
    %v5222 = vld [vmem:[%s5192 + $0x74] sm:$0xf]
    %v5223 = vld [vmem:[%s5192 + $0x78] sm:$0xf]
    %v5224 = vld [vmem:[%s5192 + $0x7c] sm:$0xf]
    %v5257 = vunpack.c.l.b16 %v5193
    %v5258 = vunpack.c.l.b16 %v5194
    %v5259 = vunpack.c.l.b16 %v5195
    %v5260 = vunpack.c.l.b16 %v5196
    %v5261 = vunpack.c.l.b16 %v5197
    %v5262 = vunpack.c.l.b16 %v5198
    %v5263 = vunpack.c.l.b16 %v5199
    %v5264 = vunpack.c.l.b16 %v5200
    %v5265 = vunpack.c.l.b16 %v5201
    %v5266 = vunpack.c.l.b16 %v5202
    %v5267 = vunpack.c.l.b16 %v5203
    %v5268 = vunpack.c.l.b16 %v5204
    %v5269 = vunpack.c.l.b16 %v5205
    %v5270 = vunpack.c.l.b16 %v5206
    %v5271 = vunpack.c.l.b16 %v5207
    %v5272 = vunpack.c.l.b16 %v5208
    %v5273 = vunpack.c.l.b16 %v5209
    %v5274 = vunpack.c.l.b16 %v5210
    %v5275 = vunpack.c.l.b16 %v5211
    %v5276 = vunpack.c.l.b16 %v5212
    %v5277 = vunpack.c.l.b16 %v5213
    %v5278 = vunpack.c.l.b16 %v5214
    %v5279 = vunpack.c.l.b16 %v5215
    %v5280 = vunpack.c.l.b16 %v5216
    %v5281 = vunpack.c.l.b16 %v5217
    %v5282 = vunpack.c.l.b16 %v5218
    %v5283 = vunpack.c.l.b16 %v5219
    %v5284 = vunpack.c.l.b16 %v5220
    %v5285 = vunpack.c.l.b16 %v5221
    %v5286 = vunpack.c.l.b16 %v5222
    %v5287 = vunpack.c.l.b16 %v5223
    %v5288 = vunpack.c.l.b16 %v5224
    %v5289 = vpack.c.b16 %v5258, %v5257
    %v5290 = vpack.c.b16 %v5260, %v5259
    %v5291 = vpack.c.b16 %v5262, %v5261
    %v5292 = vpack.c.b16 %v5264, %v5263
    %v5293 = vpack.c.b16 %v5266, %v5265
    %v5294 = vpack.c.b16 %v5268, %v5267
    %v5295 = vpack.c.b16 %v5270, %v5269
    %v5296 = vpack.c.b16 %v5272, %v5271
    %v5297 = vpack.c.b16 %v5274, %v5273
    %v5298 = vpack.c.b16 %v5276, %v5275
    %v5299 = vpack.c.b16 %v5278, %v5277
    %v5300 = vpack.c.b16 %v5280, %v5279
    %v5301 = vpack.c.b16 %v5282, %v5281
    %v5302 = vpack.c.b16 %v5284, %v5283
    %v5303 = vpack.c.b16 %v5286, %v5285
    %v5304 = vpack.c.b16 %v5288, %v5287
    %5321 = vmatprep.subr.bf16.mxu0 0
    %5322 = vmatpush1.bf16.msra.mxu0 %v5296
    %5323 = vmatprep.subr.bf16.mxu0 0
    %5324 = vmatpush1.bf16.msra.mxu0 %v5295
    %5325 = vmatprep.subr.bf16.mxu0 0
    %5326 = vmatpush1.bf16.msra.mxu0 %v5294
    %5327 = vmatprep.subr.bf16.mxu0 0
    %5328 = vmatpush1.bf16.msra.mxu0 %v5293
    %5329 = vmatprep.subr.bf16.mxu0 0
    %5330 = vmatpush1.bf16.msra.mxu0 %v5292
    %5331 = vmatprep.subr.bf16.mxu0 0
    %5332 = vmatpush1.bf16.msra.mxu0 %v5291
    %5333 = vmatprep.subr.bf16.mxu0 0
    %5334 = vmatpush1.bf16.msra.mxu0 %v5290
    %5335 = vmatprep.subr.bf16.mxu0 0
    %5336 = vmatpush1.bf16.msra.mxu0 %v5289
    %5337 = vmatprep.subr.bf16.mxu0 0
    %5338 = vmatpush2.bf16.msra.mxu0 %v5304
    %5339 = vmatprep.subr.bf16.mxu0 0
    %5340 = vmatpush2.bf16.msra.mxu0 %v5303
    %5341 = vmatprep.subr.bf16.mxu0 0
    %5342 = vmatpush2.bf16.msra.mxu0 %v5302
    %5343 = vmatprep.subr.bf16.mxu0 0
    %5344 = vmatpush2.bf16.msra.mxu0 %v5301
    %5345 = vmatprep.subr.bf16.mxu0 0
    %5346 = vmatpush2.bf16.msra.mxu0 %v5300
    %5347 = vmatprep.subr.bf16.mxu0 0
    %5348 = vmatpush2.bf16.msra.mxu0 %v5299
    %5349 = vmatprep.subr.bf16.mxu0 0
    %5350 = vmatpush2.bf16.msra.mxu0 %v5298
    %5351 = vmatprep.subr.bf16.mxu0 0
    %5352 = vmatpush2.bf16.msra.mxu0 %v5297
    %5353 = vmatprep.mubr.bf16.mxu0 %v5185
    %5354 = vmatmul.mubr.bf16.gmra.mxu0 %v5184
    %v5355 = vpop.f32.mrf.mxu0
    %v5356 = vadd.f32 0.0, %v5355
    %v5357 = vpop.f32.mrf.mxu0
    %v5358 = vpop.f32.mrf.mxu0
    %v5359 = vadd.f32 0.0, %v5358
    %v5360 = vpop.f32.mrf.mxu0
    %5361 = vmatprep.mubr.bf16.mxu0 %v5187
    %5362 = vmatmul.mubr.bf16.gmra.mxu0 %v5186
    %v5363 = vpop.f32.mrf.mxu0
    %v5364 = vadd.f32 0.0, %v5363
    %v5365 = vpop.f32.mrf.mxu0
    %v5366 = vpop.f32.mrf.mxu0
    %v5367 = vadd.f32 0.0, %v5366
    %v5368 = vpop.f32.mrf.mxu0
    %5369 = vmatprep.mubr.bf16.mxu0 %v5189
    %5370 = vmatmul.mubr.bf16.gmra.mxu0 %v5188
    %v5371 = vpop.f32.mrf.mxu0
    %v5372 = vadd.f32 0.0, %v5371
    %v5373 = vpop.f32.mrf.mxu0
    %v5374 = vpop.f32.mrf.mxu0
    %v5375 = vadd.f32 0.0, %v5374
    %v5376 = vpop.f32.mrf.mxu0
    %5377 = vmatprep.mubr.bf16.mxu0 %v5191
    %5378 = vmatmul.mubr.bf16.gmra.mxu0 %v5190
    %v5379 = vpop.f32.mrf.mxu0
    %v5380 = vadd.f32 0.0, %v5379
    %v5381 = vpop.f32.mrf.mxu0
    %v5382 = vpop.f32.mrf.mxu0
    %v5383 = vadd.f32 0.0, %v5382
    %v5384 = vpop.f32.mrf.mxu0
    %5385 = vdwg.mxu0
    %v5386 = vadd.f32 %v5080, %v5356
    %v5387 = vadd.f32 %v5081, %v5359
    %v5388 = vadd.f32 %v5082, %v5364
    %v5389 = vadd.f32 %v5083, %v5367
    %v5390 = vadd.f32 %v5084, %v5372
    %v5391 = vadd.f32 %v5085, %v5375
    %v5392 = vadd.f32 %v5086, %v5380
    %v5393 = vadd.f32 %v5087, %v5383
    %vm5394 = vcmp.ge.s32.totalorder %v169, 5
    %vm5395 = vcmp.ge.s32.totalorder %v170, 5
    %vm5396 = vcmp.ge.s32.totalorder %v171, 5
    %vm5397 = vcmp.ge.s32.totalorder %v172, 5
    %vm5398 = vcmp.ge.s32.totalorder %v173, 5
    %vm5399 = vcmp.ge.s32.totalorder %v174, 5
    %vm5400 = vcmp.ge.s32.totalorder %v175, 5
    %vm5401 = vcmp.ge.s32.totalorder %v176, 5
    %v5402 = vrot.slane %v3283, 3
    %v5403 = vrot.slane %v3284, 3
    %v5404 = vrot.slane %v3285, 3
    %v5405 = vrot.slane %v3286, 3
    %v5406 = vrot.slane %v3287, 3
    %v5407 = vrot.slane %v3288, 3
    %v5408 = vrot.slane %v3289, 3
    %v5409 = vrot.slane %v3290, 3
    %v5410 = vrot.slane %v3291, 3
    %v5411 = vrot.slane %v3292, 3
    %v5412 = vrot.slane %v3293, 3
    %v5413 = vrot.slane %v3294, 3
    %v5414 = vrot.slane %v3295, 3
    %v5415 = vrot.slane %v3296, 3
    %v5416 = vrot.slane %v3297, 3
    %v5417 = vrot.slane %v3298, 3
    %vm5418 = vcmp.lt.s32.totalorder %v302, 5
    %v5419 = vsel %vm5418, %v5414, %v5416
    %v5420 = vsel %vm5418, %v5415, %v5417
    %v5421 = vsel %vm5418, %v5412, %v5414
    %v5422 = vsel %vm5418, %v5413, %v5415
    %v5423 = vsel %vm5418, %v5410, %v5412
    %v5424 = vsel %vm5418, %v5411, %v5413
    %v5425 = vsel %vm5418, %v5408, %v5410
    %v5426 = vsel %vm5418, %v5409, %v5411
    %v5427 = vsel %vm5418, %v5406, %v5408
    %v5428 = vsel %vm5418, %v5407, %v5409
    %v5429 = vsel %vm5418, %v5404, %v5406
    %v5430 = vsel %vm5418, %v5405, %v5407
    %v5431 = vsel %vm5418, %v5402, %v5404
    %v5432 = vsel %vm5418, %v5403, %v5405
    %v5433 = vsel %vm5418, %v5416, %v5402
    %v5434 = vsel %vm5418, %v5417, %v5403
    %v5435 = vsel %vm5394, 1, 0
    %v5436 = vsel %vm5395, 1, 0
    %v5437 = vsel %vm5396, 1, 0
    %v5438 = vsel %vm5397, 1, 0
    %v5439 = vsel %vm5398, 1, 0
    %v5440 = vsel %vm5399, 1, 0
    %v5441 = vsel %vm5400, 1, 0
    %v5442 = vsel %vm5401, 1, 0
    %5443 = vset.pattern.permute.xlu0 0
    %5444 = vperm.xlu0 %5443, %v5435
    %v5445 = vpop.permute.xlu0 %5444
    %5446 = vset.pattern.permute.xlu0 0
    %5447 = vperm.xlu0 %5446, %v5436
    %v5448 = vpop.permute.xlu0 %5447
    %5449 = vset.pattern.permute.xlu0 0
    %5450 = vperm.xlu0 %5449, %v5437
    %v5451 = vpop.permute.xlu0 %5450
    %5452 = vset.pattern.permute.xlu0 0
    %5453 = vperm.xlu0 %5452, %v5438
    %v5454 = vpop.permute.xlu0 %5453
    %5455 = vset.pattern.permute.xlu0 0
    %5456 = vperm.xlu0 %5455, %v5439
    %v5457 = vpop.permute.xlu0 %5456
    %5458 = vset.pattern.permute.xlu0 0
    %5459 = vperm.xlu0 %5458, %v5440
    %v5460 = vpop.permute.xlu0 %5459
    %5461 = vset.pattern.permute.xlu0 0
    %5462 = vperm.xlu0 %5461, %v5441
    %v5463 = vpop.permute.xlu0 %5462
    %5464 = vset.pattern.permute.xlu0 0
    %5465 = vperm.xlu0 %5464, %v5442
    %v5466 = vpop.permute.xlu0 %5465
    %vm5467 = vcmp.eq.s32.totalorder %v5445, 1
    %vm5468 = vcmp.eq.s32.totalorder %v5448, 1
    %vm5469 = vcmp.eq.s32.totalorder %v5451, 1
    %vm5470 = vcmp.eq.s32.totalorder %v5454, 1
    %vm5471 = vcmp.eq.s32.totalorder %v5457, 1
    %vm5472 = vcmp.eq.s32.totalorder %v5460, 1
    %vm5473 = vcmp.eq.s32.totalorder %v5463, 1
    %vm5474 = vcmp.eq.s32.totalorder %v5466, 1
    %v5475 = vsel %vm5467, %v5433, 0.0
    %v5476 = vsel %vm5467, %v5434, 0.0
    %v5477 = vsel %vm5468, %v5431, 0.0
    %v5478 = vsel %vm5468, %v5432, 0.0
    %v5479 = vsel %vm5469, %v5429, 0.0
    %v5480 = vsel %vm5469, %v5430, 0.0
    %v5481 = vsel %vm5470, %v5427, 0.0
    %v5482 = vsel %vm5470, %v5428, 0.0
    %v5483 = vsel %vm5471, %v5425, 0.0
    %v5484 = vsel %vm5471, %v5426, 0.0
    %v5485 = vsel %vm5472, %v5423, 0.0
    %v5486 = vsel %vm5472, %v5424, 0.0
    %v5487 = vsel %vm5473, %v5421, 0.0
    %v5488 = vsel %vm5473, %v5422, 0.0
    %v5489 = vsel %vm5474, %v5419, 0.0
    %v5490 = vsel %vm5474, %v5420, 0.0
    %v5491 = vpack.c.bf16 %v5477, %v5475
    %v5492 = vpack.c.bf16 %v5478, %v5476
    %v5493 = vpack.c.bf16 %v5481, %v5479
    %v5494 = vpack.c.bf16 %v5482, %v5480
    %v5495 = vpack.c.bf16 %v5485, %v5483
    %v5496 = vpack.c.bf16 %v5486, %v5484
    %v5497 = vpack.c.bf16 %v5489, %v5487
    %v5498 = vpack.c.bf16 %v5490, %v5488
    %s5499 = scalar_lea.vmem [#allocation14], 896
    %v5500 = vld [vmem:[%s5499] sm:$0xf]
    %v5501 = vld [vmem:[%s5499 + $0x4] sm:$0xf]
    %v5502 = vld [vmem:[%s5499 + $0x8] sm:$0xf]
    %v5503 = vld [vmem:[%s5499 + $0xc] sm:$0xf]
    %v5504 = vld [vmem:[%s5499 + $0x10] sm:$0xf]
    %v5505 = vld [vmem:[%s5499 + $0x14] sm:$0xf]
    %v5506 = vld [vmem:[%s5499 + $0x18] sm:$0xf]
    %v5507 = vld [vmem:[%s5499 + $0x1c] sm:$0xf]
    %v5508 = vld [vmem:[%s5499 + $0x20] sm:$0xf]
    %v5509 = vld [vmem:[%s5499 + $0x24] sm:$0xf]
    %v5510 = vld [vmem:[%s5499 + $0x28] sm:$0xf]
    %v5511 = vld [vmem:[%s5499 + $0x2c] sm:$0xf]
    %v5512 = vld [vmem:[%s5499 + $0x30] sm:$0xf]
    %v5513 = vld [vmem:[%s5499 + $0x34] sm:$0xf]
    %v5514 = vld [vmem:[%s5499 + $0x38] sm:$0xf]
    %v5515 = vld [vmem:[%s5499 + $0x3c] sm:$0xf]
    %v5516 = vld [vmem:[%s5499 + $0x40] sm:$0xf]
    %v5517 = vld [vmem:[%s5499 + $0x44] sm:$0xf]
    %v5518 = vld [vmem:[%s5499 + $0x48] sm:$0xf]
    %v5519 = vld [vmem:[%s5499 + $0x4c] sm:$0xf]
    %v5520 = vld [vmem:[%s5499 + $0x50] sm:$0xf]
    %v5521 = vld [vmem:[%s5499 + $0x54] sm:$0xf]
    %v5522 = vld [vmem:[%s5499 + $0x58] sm:$0xf]
    %v5523 = vld [vmem:[%s5499 + $0x5c] sm:$0xf]
    %v5524 = vld [vmem:[%s5499 + $0x60] sm:$0xf]
    %v5525 = vld [vmem:[%s5499 + $0x64] sm:$0xf]
    %v5526 = vld [vmem:[%s5499 + $0x68] sm:$0xf]
    %v5527 = vld [vmem:[%s5499 + $0x6c] sm:$0xf]
    %v5528 = vld [vmem:[%s5499 + $0x70] sm:$0xf]
    %v5529 = vld [vmem:[%s5499 + $0x74] sm:$0xf]
    %v5530 = vld [vmem:[%s5499 + $0x78] sm:$0xf]
    %v5531 = vld [vmem:[%s5499 + $0x7c] sm:$0xf]
    %v5564 = vunpack.c.l.b16 %v5500
    %v5565 = vunpack.c.l.b16 %v5501
    %v5566 = vunpack.c.l.b16 %v5502
    %v5567 = vunpack.c.l.b16 %v5503
    %v5568 = vunpack.c.l.b16 %v5504
    %v5569 = vunpack.c.l.b16 %v5505
    %v5570 = vunpack.c.l.b16 %v5506
    %v5571 = vunpack.c.l.b16 %v5507
    %v5572 = vunpack.c.l.b16 %v5508
    %v5573 = vunpack.c.l.b16 %v5509
    %v5574 = vunpack.c.l.b16 %v5510
    %v5575 = vunpack.c.l.b16 %v5511
    %v5576 = vunpack.c.l.b16 %v5512
    %v5577 = vunpack.c.l.b16 %v5513
    %v5578 = vunpack.c.l.b16 %v5514
    %v5579 = vunpack.c.l.b16 %v5515
    %v5580 = vunpack.c.l.b16 %v5516
    %v5581 = vunpack.c.l.b16 %v5517
    %v5582 = vunpack.c.l.b16 %v5518
    %v5583 = vunpack.c.l.b16 %v5519
    %v5584 = vunpack.c.l.b16 %v5520
    %v5585 = vunpack.c.l.b16 %v5521
    %v5586 = vunpack.c.l.b16 %v5522
    %v5587 = vunpack.c.l.b16 %v5523
    %v5588 = vunpack.c.l.b16 %v5524
    %v5589 = vunpack.c.l.b16 %v5525
    %v5590 = vunpack.c.l.b16 %v5526
    %v5591 = vunpack.c.l.b16 %v5527
    %v5592 = vunpack.c.l.b16 %v5528
    %v5593 = vunpack.c.l.b16 %v5529
    %v5594 = vunpack.c.l.b16 %v5530
    %v5595 = vunpack.c.l.b16 %v5531
    %v5596 = vpack.c.b16 %v5565, %v5564
    %v5597 = vpack.c.b16 %v5567, %v5566
    %v5598 = vpack.c.b16 %v5569, %v5568
    %v5599 = vpack.c.b16 %v5571, %v5570
    %v5600 = vpack.c.b16 %v5573, %v5572
    %v5601 = vpack.c.b16 %v5575, %v5574
    %v5602 = vpack.c.b16 %v5577, %v5576
    %v5603 = vpack.c.b16 %v5579, %v5578
    %v5604 = vpack.c.b16 %v5581, %v5580
    %v5605 = vpack.c.b16 %v5583, %v5582
    %v5606 = vpack.c.b16 %v5585, %v5584
    %v5607 = vpack.c.b16 %v5587, %v5586
    %v5608 = vpack.c.b16 %v5589, %v5588
    %v5609 = vpack.c.b16 %v5591, %v5590
    %v5610 = vpack.c.b16 %v5593, %v5592
    %v5611 = vpack.c.b16 %v5595, %v5594
    %5628 = vmatprep.subr.bf16.mxu0 0
    %5629 = vmatpush1.bf16.msra.mxu0 %v5603
    %5630 = vmatprep.subr.bf16.mxu0 0
    %5631 = vmatpush1.bf16.msra.mxu0 %v5602
    %5632 = vmatprep.subr.bf16.mxu0 0
    %5633 = vmatpush1.bf16.msra.mxu0 %v5601
    %5634 = vmatprep.subr.bf16.mxu0 0
    %5635 = vmatpush1.bf16.msra.mxu0 %v5600
    %5636 = vmatprep.subr.bf16.mxu0 0
    %5637 = vmatpush1.bf16.msra.mxu0 %v5599
    %5638 = vmatprep.subr.bf16.mxu0 0
    %5639 = vmatpush1.bf16.msra.mxu0 %v5598
    %5640 = vmatprep.subr.bf16.mxu0 0
    %5641 = vmatpush1.bf16.msra.mxu0 %v5597
    %5642 = vmatprep.subr.bf16.mxu0 0
    %5643 = vmatpush1.bf16.msra.mxu0 %v5596
    %5644 = vmatprep.subr.bf16.mxu0 0
    %5645 = vmatpush2.bf16.msra.mxu0 %v5611
    %5646 = vmatprep.subr.bf16.mxu0 0
    %5647 = vmatpush2.bf16.msra.mxu0 %v5610
    %5648 = vmatprep.subr.bf16.mxu0 0
    %5649 = vmatpush2.bf16.msra.mxu0 %v5609
    %5650 = vmatprep.subr.bf16.mxu0 0
    %5651 = vmatpush2.bf16.msra.mxu0 %v5608
    %5652 = vmatprep.subr.bf16.mxu0 0
    %5653 = vmatpush2.bf16.msra.mxu0 %v5607
    %5654 = vmatprep.subr.bf16.mxu0 0
    %5655 = vmatpush2.bf16.msra.mxu0 %v5606
    %5656 = vmatprep.subr.bf16.mxu0 0
    %5657 = vmatpush2.bf16.msra.mxu0 %v5605
    %5658 = vmatprep.subr.bf16.mxu0 0
    %5659 = vmatpush2.bf16.msra.mxu0 %v5604
    %5660 = vmatprep.mubr.bf16.mxu0 %v5492
    %5661 = vmatmul.mubr.bf16.gmra.mxu0 %v5491
    %v5662 = vpop.f32.mrf.mxu0
    %v5663 = vadd.f32 0.0, %v5662
    %v5664 = vpop.f32.mrf.mxu0
    %v5665 = vpop.f32.mrf.mxu0
    %v5666 = vadd.f32 0.0, %v5665
    %v5667 = vpop.f32.mrf.mxu0
    %5668 = vmatprep.mubr.bf16.mxu0 %v5494
    %5669 = vmatmul.mubr.bf16.gmra.mxu0 %v5493
    %v5670 = vpop.f32.mrf.mxu0
    %v5671 = vadd.f32 0.0, %v5670
    %v5672 = vpop.f32.mrf.mxu0
    %v5673 = vpop.f32.mrf.mxu0
    %v5674 = vadd.f32 0.0, %v5673
    %v5675 = vpop.f32.mrf.mxu0
    %5676 = vmatprep.mubr.bf16.mxu0 %v5496
    %5677 = vmatmul.mubr.bf16.gmra.mxu0 %v5495
    %v5678 = vpop.f32.mrf.mxu0
    %v5679 = vadd.f32 0.0, %v5678
    %v5680 = vpop.f32.mrf.mxu0
    %v5681 = vpop.f32.mrf.mxu0
    %v5682 = vadd.f32 0.0, %v5681
    %v5683 = vpop.f32.mrf.mxu0
    %5684 = vmatprep.mubr.bf16.mxu0 %v5498
    %5685 = vmatmul.mubr.bf16.gmra.mxu0 %v5497
    %v5686 = vpop.f32.mrf.mxu0
    %v5687 = vadd.f32 0.0, %v5686
    %v5688 = vpop.f32.mrf.mxu0
    %v5689 = vpop.f32.mrf.mxu0
    %v5690 = vadd.f32 0.0, %v5689
    %v5691 = vpop.f32.mrf.mxu0
    %5692 = vdwg.mxu0
    %v5693 = vadd.f32 %v5386, %v5663
    %v5694 = vadd.f32 %v5387, %v5666
    %v5695 = vadd.f32 %v5388, %v5671
    %v5696 = vadd.f32 %v5389, %v5674
    %v5697 = vadd.f32 %v5390, %v5679
    %v5698 = vadd.f32 %v5391, %v5682
    %v5699 = vadd.f32 %v5392, %v5687
    %v5700 = vadd.f32 %v5393, %v5690
    %vm5701 = vcmp.ge.s32.totalorder %v169, 4
    %vm5702 = vcmp.ge.s32.totalorder %v170, 4
    %vm5703 = vcmp.ge.s32.totalorder %v171, 4
    %vm5704 = vcmp.ge.s32.totalorder %v172, 4
    %vm5705 = vcmp.ge.s32.totalorder %v173, 4
    %vm5706 = vcmp.ge.s32.totalorder %v174, 4
    %vm5707 = vcmp.ge.s32.totalorder %v175, 4
    %vm5708 = vcmp.ge.s32.totalorder %v176, 4
    %v5709 = vsel %vm5701, 1, 0
    %v5710 = vsel %vm5702, 1, 0
    %v5711 = vsel %vm5703, 1, 0
    %v5712 = vsel %vm5704, 1, 0
    %v5713 = vsel %vm5705, 1, 0
    %v5714 = vsel %vm5706, 1, 0
    %v5715 = vsel %vm5707, 1, 0
    %v5716 = vsel %vm5708, 1, 0
    %5717 = vset.pattern.permute.xlu0 0
    %5718 = vperm.xlu0 %5717, %v5709
    %v5719 = vpop.permute.xlu0 %5718
    %5720 = vset.pattern.permute.xlu0 0
    %5721 = vperm.xlu0 %5720, %v5710
    %v5722 = vpop.permute.xlu0 %5721
    %5723 = vset.pattern.permute.xlu0 0
    %5724 = vperm.xlu0 %5723, %v5711
    %v5725 = vpop.permute.xlu0 %5724
    %5726 = vset.pattern.permute.xlu0 0
    %5727 = vperm.xlu0 %5726, %v5712
    %v5728 = vpop.permute.xlu0 %5727
    %5729 = vset.pattern.permute.xlu0 0
    %5730 = vperm.xlu0 %5729, %v5713
    %v5731 = vpop.permute.xlu0 %5730
    %5732 = vset.pattern.permute.xlu0 0
    %5733 = vperm.xlu0 %5732, %v5714
    %v5734 = vpop.permute.xlu0 %5733
    %5735 = vset.pattern.permute.xlu0 0
    %5736 = vperm.xlu0 %5735, %v5715
    %v5737 = vpop.permute.xlu0 %5736
    %5738 = vset.pattern.permute.xlu0 0
    %5739 = vperm.xlu0 %5738, %v5716
    %v5740 = vpop.permute.xlu0 %5739
    %vm5741 = vcmp.eq.s32.totalorder %v5719, 1
    %vm5742 = vcmp.eq.s32.totalorder %v5722, 1
    %vm5743 = vcmp.eq.s32.totalorder %v5725, 1
    %vm5744 = vcmp.eq.s32.totalorder %v5728, 1
    %vm5745 = vcmp.eq.s32.totalorder %v5731, 1
    %vm5746 = vcmp.eq.s32.totalorder %v5734, 1
    %vm5747 = vcmp.eq.s32.totalorder %v5737, 1
    %vm5748 = vcmp.eq.s32.totalorder %v5740, 1
    %v5749 = vsel %vm5741, %v3338, 0.0
    %v5750 = vsel %vm5741, %v3339, 0.0
    %v5751 = vsel %vm5742, %v3336, 0.0
    %v5752 = vsel %vm5742, %v3337, 0.0
    %v5753 = vsel %vm5743, %v3334, 0.0
    %v5754 = vsel %vm5743, %v3335, 0.0
    %v5755 = vsel %vm5744, %v3332, 0.0
    %v5756 = vsel %vm5744, %v3333, 0.0
    %v5757 = vsel %vm5745, %v3330, 0.0
    %v5758 = vsel %vm5745, %v3331, 0.0
    %v5759 = vsel %vm5746, %v3328, 0.0
    %v5760 = vsel %vm5746, %v3329, 0.0
    %v5761 = vsel %vm5747, %v3326, 0.0
    %v5762 = vsel %vm5747, %v3327, 0.0
    %v5763 = vsel %vm5748, %v3324, 0.0
    %v5764 = vsel %vm5748, %v3325, 0.0
    %v5765 = vpack.c.bf16 %v5751, %v5749
    %v5766 = vpack.c.bf16 %v5752, %v5750
    %v5767 = vpack.c.bf16 %v5755, %v5753
    %v5768 = vpack.c.bf16 %v5756, %v5754
    %v5769 = vpack.c.bf16 %v5759, %v5757
    %v5770 = vpack.c.bf16 %v5760, %v5758
    %v5771 = vpack.c.bf16 %v5763, %v5761
    %v5772 = vpack.c.bf16 %v5764, %v5762
    %s5773 = scalar_lea.vmem [#allocation14], 1024
    %v5774 = vld [vmem:[%s5773] sm:$0xf]
    %v5775 = vld [vmem:[%s5773 + $0x4] sm:$0xf]
    %v5776 = vld [vmem:[%s5773 + $0x8] sm:$0xf]
    %v5777 = vld [vmem:[%s5773 + $0xc] sm:$0xf]
    %v5778 = vld [vmem:[%s5773 + $0x10] sm:$0xf]
    %v5779 = vld [vmem:[%s5773 + $0x14] sm:$0xf]
    %v5780 = vld [vmem:[%s5773 + $0x18] sm:$0xf]
    %v5781 = vld [vmem:[%s5773 + $0x1c] sm:$0xf]
    %v5782 = vld [vmem:[%s5773 + $0x20] sm:$0xf]
    %v5783 = vld [vmem:[%s5773 + $0x24] sm:$0xf]
    %v5784 = vld [vmem:[%s5773 + $0x28] sm:$0xf]
    %v5785 = vld [vmem:[%s5773 + $0x2c] sm:$0xf]
    %v5786 = vld [vmem:[%s5773 + $0x30] sm:$0xf]
    %v5787 = vld [vmem:[%s5773 + $0x34] sm:$0xf]
    %v5788 = vld [vmem:[%s5773 + $0x38] sm:$0xf]
    %v5789 = vld [vmem:[%s5773 + $0x3c] sm:$0xf]
    %v5790 = vld [vmem:[%s5773 + $0x40] sm:$0xf]
    %v5791 = vld [vmem:[%s5773 + $0x44] sm:$0xf]
    %v5792 = vld [vmem:[%s5773 + $0x48] sm:$0xf]
    %v5793 = vld [vmem:[%s5773 + $0x4c] sm:$0xf]
    %v5794 = vld [vmem:[%s5773 + $0x50] sm:$0xf]
    %v5795 = vld [vmem:[%s5773 + $0x54] sm:$0xf]
    %v5796 = vld [vmem:[%s5773 + $0x58] sm:$0xf]
    %v5797 = vld [vmem:[%s5773 + $0x5c] sm:$0xf]
    %v5798 = vld [vmem:[%s5773 + $0x60] sm:$0xf]
    %v5799 = vld [vmem:[%s5773 + $0x64] sm:$0xf]
    %v5800 = vld [vmem:[%s5773 + $0x68] sm:$0xf]
    %v5801 = vld [vmem:[%s5773 + $0x6c] sm:$0xf]
    %v5802 = vld [vmem:[%s5773 + $0x70] sm:$0xf]
    %v5803 = vld [vmem:[%s5773 + $0x74] sm:$0xf]
    %v5804 = vld [vmem:[%s5773 + $0x78] sm:$0xf]
    %v5805 = vld [vmem:[%s5773 + $0x7c] sm:$0xf]
    %v5838 = vunpack.c.l.b16 %v5774
    %v5839 = vunpack.c.l.b16 %v5775
    %v5840 = vunpack.c.l.b16 %v5776
    %v5841 = vunpack.c.l.b16 %v5777
    %v5842 = vunpack.c.l.b16 %v5778
    %v5843 = vunpack.c.l.b16 %v5779
    %v5844 = vunpack.c.l.b16 %v5780
    %v5845 = vunpack.c.l.b16 %v5781
    %v5846 = vunpack.c.l.b16 %v5782
    %v5847 = vunpack.c.l.b16 %v5783
    %v5848 = vunpack.c.l.b16 %v5784
    %v5849 = vunpack.c.l.b16 %v5785
    %v5850 = vunpack.c.l.b16 %v5786
    %v5851 = vunpack.c.l.b16 %v5787
    %v5852 = vunpack.c.l.b16 %v5788
    %v5853 = vunpack.c.l.b16 %v5789
    %v5854 = vunpack.c.l.b16 %v5790
    %v5855 = vunpack.c.l.b16 %v5791
    %v5856 = vunpack.c.l.b16 %v5792
    %v5857 = vunpack.c.l.b16 %v5793
    %v5858 = vunpack.c.l.b16 %v5794
    %v5859 = vunpack.c.l.b16 %v5795
    %v5860 = vunpack.c.l.b16 %v5796
    %v5861 = vunpack.c.l.b16 %v5797
    %v5862 = vunpack.c.l.b16 %v5798
    %v5863 = vunpack.c.l.b16 %v5799
    %v5864 = vunpack.c.l.b16 %v5800
    %v5865 = vunpack.c.l.b16 %v5801
    %v5866 = vunpack.c.l.b16 %v5802
    %v5867 = vunpack.c.l.b16 %v5803
    %v5868 = vunpack.c.l.b16 %v5804
    %v5869 = vunpack.c.l.b16 %v5805
    %v5870 = vpack.c.b16 %v5839, %v5838
    %v5871 = vpack.c.b16 %v5841, %v5840
    %v5872 = vpack.c.b16 %v5843, %v5842
    %v5873 = vpack.c.b16 %v5845, %v5844
    %v5874 = vpack.c.b16 %v5847, %v5846
    %v5875 = vpack.c.b16 %v5849, %v5848
    %v5876 = vpack.c.b16 %v5851, %v5850
    %v5877 = vpack.c.b16 %v5853, %v5852
    %v5878 = vpack.c.b16 %v5855, %v5854
    %v5879 = vpack.c.b16 %v5857, %v5856
    %v5880 = vpack.c.b16 %v5859, %v5858
    %v5881 = vpack.c.b16 %v5861, %v5860
    %v5882 = vpack.c.b16 %v5863, %v5862
    %v5883 = vpack.c.b16 %v5865, %v5864
    %v5884 = vpack.c.b16 %v5867, %v5866
    %v5885 = vpack.c.b16 %v5869, %v5868
    %5902 = vmatprep.subr.bf16.mxu0 0
    %5903 = vmatpush1.bf16.msra.mxu0 %v5877
    %5904 = vmatprep.subr.bf16.mxu0 0
    %5905 = vmatpush1.bf16.msra.mxu0 %v5876
    %5906 = vmatprep.subr.bf16.mxu0 0
    %5907 = vmatpush1.bf16.msra.mxu0 %v5875
    %5908 = vmatprep.subr.bf16.mxu0 0
    %5909 = vmatpush1.bf16.msra.mxu0 %v5874
    %5910 = vmatprep.subr.bf16.mxu0 0
    %5911 = vmatpush1.bf16.msra.mxu0 %v5873
    %5912 = vmatprep.subr.bf16.mxu0 0
    %5913 = vmatpush1.bf16.msra.mxu0 %v5872
    %5914 = vmatprep.subr.bf16.mxu0 0
    %5915 = vmatpush1.bf16.msra.mxu0 %v5871
    %5916 = vmatprep.subr.bf16.mxu0 0
    %5917 = vmatpush1.bf16.msra.mxu0 %v5870
    %5918 = vmatprep.subr.bf16.mxu0 0
    %5919 = vmatpush2.bf16.msra.mxu0 %v5885
    %5920 = vmatprep.subr.bf16.mxu0 0
    %5921 = vmatpush2.bf16.msra.mxu0 %v5884
    %5922 = vmatprep.subr.bf16.mxu0 0
    %5923 = vmatpush2.bf16.msra.mxu0 %v5883
    %5924 = vmatprep.subr.bf16.mxu0 0
    %5925 = vmatpush2.bf16.msra.mxu0 %v5882
    %5926 = vmatprep.subr.bf16.mxu0 0
    %5927 = vmatpush2.bf16.msra.mxu0 %v5881
    %5928 = vmatprep.subr.bf16.mxu0 0
    %5929 = vmatpush2.bf16.msra.mxu0 %v5880
    %5930 = vmatprep.subr.bf16.mxu0 0
    %5931 = vmatpush2.bf16.msra.mxu0 %v5879
    %5932 = vmatprep.subr.bf16.mxu0 0
    %5933 = vmatpush2.bf16.msra.mxu0 %v5878
    %5934 = vmatprep.mubr.bf16.mxu0 %v5766
    %5935 = vmatmul.mubr.bf16.gmra.mxu0 %v5765
    %v5936 = vpop.f32.mrf.mxu0
    %v5937 = vadd.f32 0.0, %v5936
    %v5938 = vpop.f32.mrf.mxu0
    %v5939 = vpop.f32.mrf.mxu0
    %v5940 = vadd.f32 0.0, %v5939
    %v5941 = vpop.f32.mrf.mxu0
    %5942 = vmatprep.mubr.bf16.mxu0 %v5768
    %5943 = vmatmul.mubr.bf16.gmra.mxu0 %v5767
    %v5944 = vpop.f32.mrf.mxu0
    %v5945 = vadd.f32 0.0, %v5944
    %v5946 = vpop.f32.mrf.mxu0
    %v5947 = vpop.f32.mrf.mxu0
    %v5948 = vadd.f32 0.0, %v5947
    %v5949 = vpop.f32.mrf.mxu0
    %5950 = vmatprep.mubr.bf16.mxu0 %v5770
    %5951 = vmatmul.mubr.bf16.gmra.mxu0 %v5769
    %v5952 = vpop.f32.mrf.mxu0
    %v5953 = vadd.f32 0.0, %v5952
    %v5954 = vpop.f32.mrf.mxu0
    %v5955 = vpop.f32.mrf.mxu0
    %v5956 = vadd.f32 0.0, %v5955
    %v5957 = vpop.f32.mrf.mxu0
    %5958 = vmatprep.mubr.bf16.mxu0 %v5772
    %5959 = vmatmul.mubr.bf16.gmra.mxu0 %v5771
    %v5960 = vpop.f32.mrf.mxu0
    %v5961 = vadd.f32 0.0, %v5960
    %v5962 = vpop.f32.mrf.mxu0
    %v5963 = vpop.f32.mrf.mxu0
    %v5964 = vadd.f32 0.0, %v5963
    %v5965 = vpop.f32.mrf.mxu0
    %5966 = vdwg.mxu0
    %v5967 = vadd.f32 %v5693, %v5937
    %v5968 = vadd.f32 %v5694, %v5940
    %v5969 = vadd.f32 %v5695, %v5945
    %v5970 = vadd.f32 %v5696, %v5948
    %v5971 = vadd.f32 %v5697, %v5953
    %v5972 = vadd.f32 %v5698, %v5956
    %v5973 = vadd.f32 %v5699, %v5961
    %v5974 = vadd.f32 %v5700, %v5964
    %vm5975 = vcmp.ge.s32.totalorder %v169, 3
    %vm5976 = vcmp.ge.s32.totalorder %v170, 3
    %vm5977 = vcmp.ge.s32.totalorder %v171, 3
    %vm5978 = vcmp.ge.s32.totalorder %v172, 3
    %vm5979 = vcmp.ge.s32.totalorder %v173, 3
    %vm5980 = vcmp.ge.s32.totalorder %v174, 3
    %vm5981 = vcmp.ge.s32.totalorder %v175, 3
    %vm5982 = vcmp.ge.s32.totalorder %v176, 3
    %v5983 = vsel %vm5975, 1, 0
    %v5984 = vsel %vm5976, 1, 0
    %v5985 = vsel %vm5977, 1, 0
    %v5986 = vsel %vm5978, 1, 0
    %v5987 = vsel %vm5979, 1, 0
    %v5988 = vsel %vm5980, 1, 0
    %v5989 = vsel %vm5981, 1, 0
    %v5990 = vsel %vm5982, 1, 0
    %5991 = vset.pattern.permute.xlu0 0
    %5992 = vperm.xlu0 %5991, %v5983
    %v5993 = vpop.permute.xlu0 %5992
    %5994 = vset.pattern.permute.xlu0 0
    %5995 = vperm.xlu0 %5994, %v5984
    %v5996 = vpop.permute.xlu0 %5995
    %5997 = vset.pattern.permute.xlu0 0
    %5998 = vperm.xlu0 %5997, %v5985
    %v5999 = vpop.permute.xlu0 %5998
    %6000 = vset.pattern.permute.xlu0 0
    %6001 = vperm.xlu0 %6000, %v5986
    %v6002 = vpop.permute.xlu0 %6001
    %6003 = vset.pattern.permute.xlu0 0
    %6004 = vperm.xlu0 %6003, %v5987
    %v6005 = vpop.permute.xlu0 %6004
    %6006 = vset.pattern.permute.xlu0 0
    %6007 = vperm.xlu0 %6006, %v5988
    %v6008 = vpop.permute.xlu0 %6007
    %6009 = vset.pattern.permute.xlu0 0
    %6010 = vperm.xlu0 %6009, %v5989
    %v6011 = vpop.permute.xlu0 %6010
    %6012 = vset.pattern.permute.xlu0 0
    %6013 = vperm.xlu0 %6012, %v5990
    %v6014 = vpop.permute.xlu0 %6013
    %vm6015 = vcmp.eq.s32.totalorder %v5993, 1
    %vm6016 = vcmp.eq.s32.totalorder %v5996, 1
    %vm6017 = vcmp.eq.s32.totalorder %v5999, 1
    %vm6018 = vcmp.eq.s32.totalorder %v6002, 1
    %vm6019 = vcmp.eq.s32.totalorder %v6005, 1
    %vm6020 = vcmp.eq.s32.totalorder %v6008, 1
    %vm6021 = vcmp.eq.s32.totalorder %v6011, 1
    %vm6022 = vcmp.eq.s32.totalorder %v6014, 1
    %v6023 = vsel %vm6015, %v3475, 0.0
    %v6024 = vsel %vm6015, %v3476, 0.0
    %v6025 = vsel %vm6016, %v3473, 0.0
    %v6026 = vsel %vm6016, %v3474, 0.0
    %v6027 = vsel %vm6017, %v3471, 0.0
    %v6028 = vsel %vm6017, %v3472, 0.0
    %v6029 = vsel %vm6018, %v3469, 0.0
    %v6030 = vsel %vm6018, %v3470, 0.0
    %v6031 = vsel %vm6019, %v3467, 0.0
    %v6032 = vsel %vm6019, %v3468, 0.0
    %v6033 = vsel %vm6020, %v3465, 0.0
    %v6034 = vsel %vm6020, %v3466, 0.0
    %v6035 = vsel %vm6021, %v3463, 0.0
    %v6036 = vsel %vm6021, %v3464, 0.0
    %v6037 = vsel %vm6022, %v3461, 0.0
    %v6038 = vsel %vm6022, %v3462, 0.0
    %v6039 = vpack.c.bf16 %v6025, %v6023
    %v6040 = vpack.c.bf16 %v6026, %v6024
    %v6041 = vpack.c.bf16 %v6029, %v6027
    %v6042 = vpack.c.bf16 %v6030, %v6028
    %v6043 = vpack.c.bf16 %v6033, %v6031
    %v6044 = vpack.c.bf16 %v6034, %v6032
    %v6045 = vpack.c.bf16 %v6037, %v6035
    %v6046 = vpack.c.bf16 %v6038, %v6036
    %s6047 = scalar_lea.vmem [#allocation14], 1152
    %v6048 = vld [vmem:[%s6047] sm:$0xf]
    %v6049 = vld [vmem:[%s6047 + $0x4] sm:$0xf]
    %v6050 = vld [vmem:[%s6047 + $0x8] sm:$0xf]
    %v6051 = vld [vmem:[%s6047 + $0xc] sm:$0xf]
    %v6052 = vld [vmem:[%s6047 + $0x10] sm:$0xf]
    %v6053 = vld [vmem:[%s6047 + $0x14] sm:$0xf]
    %v6054 = vld [vmem:[%s6047 + $0x18] sm:$0xf]
    %v6055 = vld [vmem:[%s6047 + $0x1c] sm:$0xf]
    %v6056 = vld [vmem:[%s6047 + $0x20] sm:$0xf]
    %v6057 = vld [vmem:[%s6047 + $0x24] sm:$0xf]
    %v6058 = vld [vmem:[%s6047 + $0x28] sm:$0xf]
    %v6059 = vld [vmem:[%s6047 + $0x2c] sm:$0xf]
    %v6060 = vld [vmem:[%s6047 + $0x30] sm:$0xf]
    %v6061 = vld [vmem:[%s6047 + $0x34] sm:$0xf]
    %v6062 = vld [vmem:[%s6047 + $0x38] sm:$0xf]
    %v6063 = vld [vmem:[%s6047 + $0x3c] sm:$0xf]
    %v6064 = vld [vmem:[%s6047 + $0x40] sm:$0xf]
    %v6065 = vld [vmem:[%s6047 + $0x44] sm:$0xf]
    %v6066 = vld [vmem:[%s6047 + $0x48] sm:$0xf]
    %v6067 = vld [vmem:[%s6047 + $0x4c] sm:$0xf]
    %v6068 = vld [vmem:[%s6047 + $0x50] sm:$0xf]
    %v6069 = vld [vmem:[%s6047 + $0x54] sm:$0xf]
    %v6070 = vld [vmem:[%s6047 + $0x58] sm:$0xf]
    %v6071 = vld [vmem:[%s6047 + $0x5c] sm:$0xf]
    %v6072 = vld [vmem:[%s6047 + $0x60] sm:$0xf]
    %v6073 = vld [vmem:[%s6047 + $0x64] sm:$0xf]
    %v6074 = vld [vmem:[%s6047 + $0x68] sm:$0xf]
    %v6075 = vld [vmem:[%s6047 + $0x6c] sm:$0xf]
    %v6076 = vld [vmem:[%s6047 + $0x70] sm:$0xf]
    %v6077 = vld [vmem:[%s6047 + $0x74] sm:$0xf]
    %v6078 = vld [vmem:[%s6047 + $0x78] sm:$0xf]
    %v6079 = vld [vmem:[%s6047 + $0x7c] sm:$0xf]
    %v6112 = vunpack.c.l.b16 %v6048
    %v6113 = vunpack.c.l.b16 %v6049
    %v6114 = vunpack.c.l.b16 %v6050
    %v6115 = vunpack.c.l.b16 %v6051
    %v6116 = vunpack.c.l.b16 %v6052
    %v6117 = vunpack.c.l.b16 %v6053
    %v6118 = vunpack.c.l.b16 %v6054
    %v6119 = vunpack.c.l.b16 %v6055
    %v6120 = vunpack.c.l.b16 %v6056
    %v6121 = vunpack.c.l.b16 %v6057
    %v6122 = vunpack.c.l.b16 %v6058
    %v6123 = vunpack.c.l.b16 %v6059
    %v6124 = vunpack.c.l.b16 %v6060
    %v6125 = vunpack.c.l.b16 %v6061
    %v6126 = vunpack.c.l.b16 %v6062
    %v6127 = vunpack.c.l.b16 %v6063
    %v6128 = vunpack.c.l.b16 %v6064
    %v6129 = vunpack.c.l.b16 %v6065
    %v6130 = vunpack.c.l.b16 %v6066
    %v6131 = vunpack.c.l.b16 %v6067
    %v6132 = vunpack.c.l.b16 %v6068
    %v6133 = vunpack.c.l.b16 %v6069
    %v6134 = vunpack.c.l.b16 %v6070
    %v6135 = vunpack.c.l.b16 %v6071
    %v6136 = vunpack.c.l.b16 %v6072
    %v6137 = vunpack.c.l.b16 %v6073
    %v6138 = vunpack.c.l.b16 %v6074
    %v6139 = vunpack.c.l.b16 %v6075
    %v6140 = vunpack.c.l.b16 %v6076
    %v6141 = vunpack.c.l.b16 %v6077
    %v6142 = vunpack.c.l.b16 %v6078
    %v6143 = vunpack.c.l.b16 %v6079
    %v6144 = vpack.c.b16 %v6113, %v6112
    %v6145 = vpack.c.b16 %v6115, %v6114
    %v6146 = vpack.c.b16 %v6117, %v6116
    %v6147 = vpack.c.b16 %v6119, %v6118
    %v6148 = vpack.c.b16 %v6121, %v6120
    %v6149 = vpack.c.b16 %v6123, %v6122
    %v6150 = vpack.c.b16 %v6125, %v6124
    %v6151 = vpack.c.b16 %v6127, %v6126
    %v6152 = vpack.c.b16 %v6129, %v6128
    %v6153 = vpack.c.b16 %v6131, %v6130
    %v6154 = vpack.c.b16 %v6133, %v6132
    %v6155 = vpack.c.b16 %v6135, %v6134
    %v6156 = vpack.c.b16 %v6137, %v6136
    %v6157 = vpack.c.b16 %v6139, %v6138
    %v6158 = vpack.c.b16 %v6141, %v6140
    %v6159 = vpack.c.b16 %v6143, %v6142
    %6176 = vmatprep.subr.bf16.mxu0 0
    %6177 = vmatpush1.bf16.msra.mxu0 %v6151
    %6178 = vmatprep.subr.bf16.mxu0 0
    %6179 = vmatpush1.bf16.msra.mxu0 %v6150
    %6180 = vmatprep.subr.bf16.mxu0 0
    %6181 = vmatpush1.bf16.msra.mxu0 %v6149
    %6182 = vmatprep.subr.bf16.mxu0 0
    %6183 = vmatpush1.bf16.msra.mxu0 %v6148
    %6184 = vmatprep.subr.bf16.mxu0 0
    %6185 = vmatpush1.bf16.msra.mxu0 %v6147
    %6186 = vmatprep.subr.bf16.mxu0 0
    %6187 = vmatpush1.bf16.msra.mxu0 %v6146
    %6188 = vmatprep.subr.bf16.mxu0 0
    %6189 = vmatpush1.bf16.msra.mxu0 %v6145
    %6190 = vmatprep.subr.bf16.mxu0 0
    %6191 = vmatpush1.bf16.msra.mxu0 %v6144
    %6192 = vmatprep.subr.bf16.mxu0 0
    %6193 = vmatpush2.bf16.msra.mxu0 %v6159
    %6194 = vmatprep.subr.bf16.mxu0 0
    %6195 = vmatpush2.bf16.msra.mxu0 %v6158
    %6196 = vmatprep.subr.bf16.mxu0 0
    %6197 = vmatpush2.bf16.msra.mxu0 %v6157
    %6198 = vmatprep.subr.bf16.mxu0 0
    %6199 = vmatpush2.bf16.msra.mxu0 %v6156
    %6200 = vmatprep.subr.bf16.mxu0 0
    %6201 = vmatpush2.bf16.msra.mxu0 %v6155
    %6202 = vmatprep.subr.bf16.mxu0 0
    %6203 = vmatpush2.bf16.msra.mxu0 %v6154
    %6204 = vmatprep.subr.bf16.mxu0 0
    %6205 = vmatpush2.bf16.msra.mxu0 %v6153
    %6206 = vmatprep.subr.bf16.mxu0 0
    %6207 = vmatpush2.bf16.msra.mxu0 %v6152
    %6208 = vmatprep.mubr.bf16.mxu0 %v6040
    %6209 = vmatmul.mubr.bf16.gmra.mxu0 %v6039
    %v6210 = vpop.f32.mrf.mxu0
    %v6211 = vadd.f32 0.0, %v6210
    %v6212 = vpop.f32.mrf.mxu0
    %v6213 = vpop.f32.mrf.mxu0
    %v6214 = vadd.f32 0.0, %v6213
    %v6215 = vpop.f32.mrf.mxu0
    %6216 = vmatprep.mubr.bf16.mxu0 %v6042
    %6217 = vmatmul.mubr.bf16.gmra.mxu0 %v6041
    %v6218 = vpop.f32.mrf.mxu0
    %v6219 = vadd.f32 0.0, %v6218
    %v6220 = vpop.f32.mrf.mxu0
    %v6221 = vpop.f32.mrf.mxu0
    %v6222 = vadd.f32 0.0, %v6221
    %v6223 = vpop.f32.mrf.mxu0
    %6224 = vmatprep.mubr.bf16.mxu0 %v6044
    %6225 = vmatmul.mubr.bf16.gmra.mxu0 %v6043
    %v6226 = vpop.f32.mrf.mxu0
    %v6227 = vadd.f32 0.0, %v6226
    %v6228 = vpop.f32.mrf.mxu0
    %v6229 = vpop.f32.mrf.mxu0
    %v6230 = vadd.f32 0.0, %v6229
    %v6231 = vpop.f32.mrf.mxu0
    %6232 = vmatprep.mubr.bf16.mxu0 %v6046
    %6233 = vmatmul.mubr.bf16.gmra.mxu0 %v6045
    %v6234 = vpop.f32.mrf.mxu0
    %v6235 = vadd.f32 0.0, %v6234
    %v6236 = vpop.f32.mrf.mxu0
    %v6237 = vpop.f32.mrf.mxu0
    %v6238 = vadd.f32 0.0, %v6237
    %v6239 = vpop.f32.mrf.mxu0
    %6240 = vdwg.mxu0
    %v6241 = vadd.f32 %v5967, %v6211
    %v6242 = vadd.f32 %v5968, %v6214
    %v6243 = vadd.f32 %v5969, %v6219
    %v6244 = vadd.f32 %v5970, %v6222
    %v6245 = vadd.f32 %v5971, %v6227
    %v6246 = vadd.f32 %v5972, %v6230
    %v6247 = vadd.f32 %v5973, %v6235
    %v6248 = vadd.f32 %v5974, %v6238
    %v6249 = vsel %vm1118, %v3934, 0.0
    %v6250 = vsel %vm1118, %v3935, 0.0
    %v6251 = vsel %vm1119, %v3932, 0.0
    %v6252 = vsel %vm1119, %v3933, 0.0
    %v6253 = vsel %vm1120, %v3930, 0.0
    %v6254 = vsel %vm1120, %v3931, 0.0
    %v6255 = vsel %vm1121, %v3928, 0.0
    %v6256 = vsel %vm1121, %v3929, 0.0
    %v6257 = vsel %vm1122, %v3926, 0.0
    %v6258 = vsel %vm1122, %v3927, 0.0
    %v6259 = vsel %vm1123, %v3924, 0.0
    %v6260 = vsel %vm1123, %v3925, 0.0
    %v6261 = vsel %vm1124, %v3922, 0.0
    %v6262 = vsel %vm1124, %v3923, 0.0
    %v6263 = vsel %vm1125, %v3920, 0.0
    %v6264 = vsel %vm1125, %v3921, 0.0
    %v6265 = vpack.c.bf16 %v6251, %v6249
    %v6266 = vpack.c.bf16 %v6252, %v6250
    %v6267 = vpack.c.bf16 %v6255, %v6253
    %v6268 = vpack.c.bf16 %v6256, %v6254
    %v6269 = vpack.c.bf16 %v6259, %v6257
    %v6270 = vpack.c.bf16 %v6260, %v6258
    %v6271 = vpack.c.bf16 %v6263, %v6261
    %v6272 = vpack.c.bf16 %v6264, %v6262
    %s6273 = scalar_lea.vmem [#allocation14], 1280
    %v6274 = vld [vmem:[%s6273] sm:$0xf]
    %v6275 = vld [vmem:[%s6273 + $0x4] sm:$0xf]
    %v6276 = vld [vmem:[%s6273 + $0x8] sm:$0xf]
    %v6277 = vld [vmem:[%s6273 + $0xc] sm:$0xf]
    %v6278 = vld [vmem:[%s6273 + $0x10] sm:$0xf]
    %v6279 = vld [vmem:[%s6273 + $0x14] sm:$0xf]
    %v6280 = vld [vmem:[%s6273 + $0x18] sm:$0xf]
    %v6281 = vld [vmem:[%s6273 + $0x1c] sm:$0xf]
    %v6282 = vld [vmem:[%s6273 + $0x20] sm:$0xf]
    %v6283 = vld [vmem:[%s6273 + $0x24] sm:$0xf]
    %v6284 = vld [vmem:[%s6273 + $0x28] sm:$0xf]
    %v6285 = vld [vmem:[%s6273 + $0x2c] sm:$0xf]
    %v6286 = vld [vmem:[%s6273 + $0x30] sm:$0xf]
    %v6287 = vld [vmem:[%s6273 + $0x34] sm:$0xf]
    %v6288 = vld [vmem:[%s6273 + $0x38] sm:$0xf]
    %v6289 = vld [vmem:[%s6273 + $0x3c] sm:$0xf]
    %v6290 = vld [vmem:[%s6273 + $0x40] sm:$0xf]
    %v6291 = vld [vmem:[%s6273 + $0x44] sm:$0xf]
    %v6292 = vld [vmem:[%s6273 + $0x48] sm:$0xf]
    %v6293 = vld [vmem:[%s6273 + $0x4c] sm:$0xf]
    %v6294 = vld [vmem:[%s6273 + $0x50] sm:$0xf]
    %v6295 = vld [vmem:[%s6273 + $0x54] sm:$0xf]
    %v6296 = vld [vmem:[%s6273 + $0x58] sm:$0xf]
    %v6297 = vld [vmem:[%s6273 + $0x5c] sm:$0xf]
    %v6298 = vld [vmem:[%s6273 + $0x60] sm:$0xf]
    %v6299 = vld [vmem:[%s6273 + $0x64] sm:$0xf]
    %v6300 = vld [vmem:[%s6273 + $0x68] sm:$0xf]
    %v6301 = vld [vmem:[%s6273 + $0x6c] sm:$0xf]
    %v6302 = vld [vmem:[%s6273 + $0x70] sm:$0xf]
    %v6303 = vld [vmem:[%s6273 + $0x74] sm:$0xf]
    %v6304 = vld [vmem:[%s6273 + $0x78] sm:$0xf]
    %v6305 = vld [vmem:[%s6273 + $0x7c] sm:$0xf]
    %v6338 = vunpack.c.l.b16 %v6274
    %v6339 = vunpack.c.l.b16 %v6275
    %v6340 = vunpack.c.l.b16 %v6276
    %v6341 = vunpack.c.l.b16 %v6277
    %v6342 = vunpack.c.l.b16 %v6278
    %v6343 = vunpack.c.l.b16 %v6279
    %v6344 = vunpack.c.l.b16 %v6280
    %v6345 = vunpack.c.l.b16 %v6281
    %v6346 = vunpack.c.l.b16 %v6282
    %v6347 = vunpack.c.l.b16 %v6283
    %v6348 = vunpack.c.l.b16 %v6284
    %v6349 = vunpack.c.l.b16 %v6285
    %v6350 = vunpack.c.l.b16 %v6286
    %v6351 = vunpack.c.l.b16 %v6287
    %v6352 = vunpack.c.l.b16 %v6288
    %v6353 = vunpack.c.l.b16 %v6289
    %v6354 = vunpack.c.l.b16 %v6290
    %v6355 = vunpack.c.l.b16 %v6291
    %v6356 = vunpack.c.l.b16 %v6292
    %v6357 = vunpack.c.l.b16 %v6293
    %v6358 = vunpack.c.l.b16 %v6294
    %v6359 = vunpack.c.l.b16 %v6295
    %v6360 = vunpack.c.l.b16 %v6296
    %v6361 = vunpack.c.l.b16 %v6297
    %v6362 = vunpack.c.l.b16 %v6298
    %v6363 = vunpack.c.l.b16 %v6299
    %v6364 = vunpack.c.l.b16 %v6300
    %v6365 = vunpack.c.l.b16 %v6301
    %v6366 = vunpack.c.l.b16 %v6302
    %v6367 = vunpack.c.l.b16 %v6303
    %v6368 = vunpack.c.l.b16 %v6304
    %v6369 = vunpack.c.l.b16 %v6305
    %v6370 = vpack.c.b16 %v6339, %v6338
    %v6371 = vpack.c.b16 %v6341, %v6340
    %v6372 = vpack.c.b16 %v6343, %v6342
    %v6373 = vpack.c.b16 %v6345, %v6344
    %v6374 = vpack.c.b16 %v6347, %v6346
    %v6375 = vpack.c.b16 %v6349, %v6348
    %v6376 = vpack.c.b16 %v6351, %v6350
    %v6377 = vpack.c.b16 %v6353, %v6352
    %v6378 = vpack.c.b16 %v6355, %v6354
    %v6379 = vpack.c.b16 %v6357, %v6356
    %v6380 = vpack.c.b16 %v6359, %v6358
    %v6381 = vpack.c.b16 %v6361, %v6360
    %v6382 = vpack.c.b16 %v6363, %v6362
    %v6383 = vpack.c.b16 %v6365, %v6364
    %v6384 = vpack.c.b16 %v6367, %v6366
    %v6385 = vpack.c.b16 %v6369, %v6368
    %6402 = vmatprep.subr.bf16.mxu0 0
    %6403 = vmatpush1.bf16.msra.mxu0 %v6377
    %6404 = vmatprep.subr.bf16.mxu0 0
    %6405 = vmatpush1.bf16.msra.mxu0 %v6376
    %6406 = vmatprep.subr.bf16.mxu0 0
    %6407 = vmatpush1.bf16.msra.mxu0 %v6375
    %6408 = vmatprep.subr.bf16.mxu0 0
    %6409 = vmatpush1.bf16.msra.mxu0 %v6374
    %6410 = vmatprep.subr.bf16.mxu0 0
    %6411 = vmatpush1.bf16.msra.mxu0 %v6373
    %6412 = vmatprep.subr.bf16.mxu0 0
    %6413 = vmatpush1.bf16.msra.mxu0 %v6372
    %6414 = vmatprep.subr.bf16.mxu0 0
    %6415 = vmatpush1.bf16.msra.mxu0 %v6371
    %6416 = vmatprep.subr.bf16.mxu0 0
    %6417 = vmatpush1.bf16.msra.mxu0 %v6370
    %6418 = vmatprep.subr.bf16.mxu0 0
    %6419 = vmatpush2.bf16.msra.mxu0 %v6385
    %6420 = vmatprep.subr.bf16.mxu0 0
    %6421 = vmatpush2.bf16.msra.mxu0 %v6384
    %6422 = vmatprep.subr.bf16.mxu0 0
    %6423 = vmatpush2.bf16.msra.mxu0 %v6383
    %6424 = vmatprep.subr.bf16.mxu0 0
    %6425 = vmatpush2.bf16.msra.mxu0 %v6382
    %6426 = vmatprep.subr.bf16.mxu0 0
    %6427 = vmatpush2.bf16.msra.mxu0 %v6381
    %6428 = vmatprep.subr.bf16.mxu0 0
    %6429 = vmatpush2.bf16.msra.mxu0 %v6380
    %6430 = vmatprep.subr.bf16.mxu0 0
    %6431 = vmatpush2.bf16.msra.mxu0 %v6379
    %6432 = vmatprep.subr.bf16.mxu0 0
    %6433 = vmatpush2.bf16.msra.mxu0 %v6378
    %6434 = vmatprep.mubr.bf16.mxu0 %v6266
    %6435 = vmatmul.mubr.bf16.gmra.mxu0 %v6265
    %v6436 = vpop.f32.mrf.mxu0
    %v6437 = vadd.f32 0.0, %v6436
    %v6438 = vpop.f32.mrf.mxu0
    %v6439 = vpop.f32.mrf.mxu0
    %v6440 = vadd.f32 0.0, %v6439
    %v6441 = vpop.f32.mrf.mxu0
    %6442 = vmatprep.mubr.bf16.mxu0 %v6268
    %6443 = vmatmul.mubr.bf16.gmra.mxu0 %v6267
    %v6444 = vpop.f32.mrf.mxu0
    %v6445 = vadd.f32 0.0, %v6444
    %v6446 = vpop.f32.mrf.mxu0
    %v6447 = vpop.f32.mrf.mxu0
    %v6448 = vadd.f32 0.0, %v6447
    %v6449 = vpop.f32.mrf.mxu0
    %6450 = vmatprep.mubr.bf16.mxu0 %v6270
    %6451 = vmatmul.mubr.bf16.gmra.mxu0 %v6269
    %v6452 = vpop.f32.mrf.mxu0
    %v6453 = vadd.f32 0.0, %v6452
    %v6454 = vpop.f32.mrf.mxu0
    %v6455 = vpop.f32.mrf.mxu0
    %v6456 = vadd.f32 0.0, %v6455
    %v6457 = vpop.f32.mrf.mxu0
    %6458 = vmatprep.mubr.bf16.mxu0 %v6272
    %6459 = vmatmul.mubr.bf16.gmra.mxu0 %v6271
    %v6460 = vpop.f32.mrf.mxu0
    %v6461 = vadd.f32 0.0, %v6460
    %v6462 = vpop.f32.mrf.mxu0
    %v6463 = vpop.f32.mrf.mxu0
    %v6464 = vadd.f32 0.0, %v6463
    %v6465 = vpop.f32.mrf.mxu0
    %6466 = vdwg.mxu0
    %v6467 = vadd.f32 %v6241, %v6437
    %v6468 = vadd.f32 %v6242, %v6440
    %v6469 = vadd.f32 %v6243, %v6445
    %v6470 = vadd.f32 %v6244, %v6448
    %v6471 = vadd.f32 %v6245, %v6453
    %v6472 = vadd.f32 %v6246, %v6456
    %v6473 = vadd.f32 %v6247, %v6461
    %v6474 = vadd.f32 %v6248, %v6464
    %v6475 = vsel %vm344, %v4240, 0.0
    %v6476 = vsel %vm344, %v4241, 0.0
    %v6477 = vsel %vm345, %v4238, 0.0
    %v6478 = vsel %vm345, %v4239, 0.0
    %v6479 = vsel %vm346, %v4236, 0.0
    %v6480 = vsel %vm346, %v4237, 0.0
    %v6481 = vsel %vm347, %v4234, 0.0
    %v6482 = vsel %vm347, %v4235, 0.0
    %v6483 = vsel %vm348, %v4232, 0.0
    %v6484 = vsel %vm348, %v4233, 0.0
    %v6485 = vsel %vm349, %v4230, 0.0
    %v6486 = vsel %vm349, %v4231, 0.0
    %v6487 = vsel %vm350, %v4228, 0.0
    %v6488 = vsel %vm350, %v4229, 0.0
    %v6489 = vsel %vm351, %v4226, 0.0
    %v6490 = vsel %vm351, %v4227, 0.0
    %v6491 = vpack.c.bf16 %v6477, %v6475
    %v6492 = vpack.c.bf16 %v6478, %v6476
    %v6493 = vpack.c.bf16 %v6481, %v6479
    %v6494 = vpack.c.bf16 %v6482, %v6480
    %v6495 = vpack.c.bf16 %v6485, %v6483
    %v6496 = vpack.c.bf16 %v6486, %v6484
    %v6497 = vpack.c.bf16 %v6489, %v6487
    %v6498 = vpack.c.bf16 %v6490, %v6488
    %s6499 = scalar_lea.vmem [#allocation14], 1408
    %v6500 = vld [vmem:[%s6499] sm:$0xf]
    %v6501 = vld [vmem:[%s6499 + $0x4] sm:$0xf]
    %v6502 = vld [vmem:[%s6499 + $0x8] sm:$0xf]
    %v6503 = vld [vmem:[%s6499 + $0xc] sm:$0xf]
    %v6504 = vld [vmem:[%s6499 + $0x10] sm:$0xf]
    %v6505 = vld [vmem:[%s6499 + $0x14] sm:$0xf]
    %v6506 = vld [vmem:[%s6499 + $0x18] sm:$0xf]
    %v6507 = vld [vmem:[%s6499 + $0x1c] sm:$0xf]
    %v6508 = vld [vmem:[%s6499 + $0x20] sm:$0xf]
    %v6509 = vld [vmem:[%s6499 + $0x24] sm:$0xf]
    %v6510 = vld [vmem:[%s6499 + $0x28] sm:$0xf]
    %v6511 = vld [vmem:[%s6499 + $0x2c] sm:$0xf]
    %v6512 = vld [vmem:[%s6499 + $0x30] sm:$0xf]
    %v6513 = vld [vmem:[%s6499 + $0x34] sm:$0xf]
    %v6514 = vld [vmem:[%s6499 + $0x38] sm:$0xf]
    %v6515 = vld [vmem:[%s6499 + $0x3c] sm:$0xf]
    %v6516 = vld [vmem:[%s6499 + $0x40] sm:$0xf]
    %v6517 = vld [vmem:[%s6499 + $0x44] sm:$0xf]
    %v6518 = vld [vmem:[%s6499 + $0x48] sm:$0xf]
    %v6519 = vld [vmem:[%s6499 + $0x4c] sm:$0xf]
    %v6520 = vld [vmem:[%s6499 + $0x50] sm:$0xf]
    %v6521 = vld [vmem:[%s6499 + $0x54] sm:$0xf]
    %v6522 = vld [vmem:[%s6499 + $0x58] sm:$0xf]
    %v6523 = vld [vmem:[%s6499 + $0x5c] sm:$0xf]
    %v6524 = vld [vmem:[%s6499 + $0x60] sm:$0xf]
    %v6525 = vld [vmem:[%s6499 + $0x64] sm:$0xf]
    %v6526 = vld [vmem:[%s6499 + $0x68] sm:$0xf]
    %v6527 = vld [vmem:[%s6499 + $0x6c] sm:$0xf]
    %v6528 = vld [vmem:[%s6499 + $0x70] sm:$0xf]
    %v6529 = vld [vmem:[%s6499 + $0x74] sm:$0xf]
    %v6530 = vld [vmem:[%s6499 + $0x78] sm:$0xf]
    %v6531 = vld [vmem:[%s6499 + $0x7c] sm:$0xf]
    %v6564 = vunpack.c.l.b16 %v6500
    %v6565 = vunpack.c.l.b16 %v6501
    %v6566 = vunpack.c.l.b16 %v6502
    %v6567 = vunpack.c.l.b16 %v6503
    %v6568 = vunpack.c.l.b16 %v6504
    %v6569 = vunpack.c.l.b16 %v6505
    %v6570 = vunpack.c.l.b16 %v6506
    %v6571 = vunpack.c.l.b16 %v6507
    %v6572 = vunpack.c.l.b16 %v6508
    %v6573 = vunpack.c.l.b16 %v6509
    %v6574 = vunpack.c.l.b16 %v6510
    %v6575 = vunpack.c.l.b16 %v6511
    %v6576 = vunpack.c.l.b16 %v6512
    %v6577 = vunpack.c.l.b16 %v6513
    %v6578 = vunpack.c.l.b16 %v6514
    %v6579 = vunpack.c.l.b16 %v6515
    %v6580 = vunpack.c.l.b16 %v6516
    %v6581 = vunpack.c.l.b16 %v6517
    %v6582 = vunpack.c.l.b16 %v6518
    %v6583 = vunpack.c.l.b16 %v6519
    %v6584 = vunpack.c.l.b16 %v6520
    %v6585 = vunpack.c.l.b16 %v6521
    %v6586 = vunpack.c.l.b16 %v6522
    %v6587 = vunpack.c.l.b16 %v6523
    %v6588 = vunpack.c.l.b16 %v6524
    %v6589 = vunpack.c.l.b16 %v6525
    %v6590 = vunpack.c.l.b16 %v6526
    %v6591 = vunpack.c.l.b16 %v6527
    %v6592 = vunpack.c.l.b16 %v6528
    %v6593 = vunpack.c.l.b16 %v6529
    %v6594 = vunpack.c.l.b16 %v6530
    %v6595 = vunpack.c.l.b16 %v6531
    %v6596 = vpack.c.b16 %v6565, %v6564
    %v6597 = vpack.c.b16 %v6567, %v6566
    %v6598 = vpack.c.b16 %v6569, %v6568
    %v6599 = vpack.c.b16 %v6571, %v6570
    %v6600 = vpack.c.b16 %v6573, %v6572
    %v6601 = vpack.c.b16 %v6575, %v6574
    %v6602 = vpack.c.b16 %v6577, %v6576
    %v6603 = vpack.c.b16 %v6579, %v6578
    %v6604 = vpack.c.b16 %v6581, %v6580
    %v6605 = vpack.c.b16 %v6583, %v6582
    %v6606 = vpack.c.b16 %v6585, %v6584
    %v6607 = vpack.c.b16 %v6587, %v6586
    %v6608 = vpack.c.b16 %v6589, %v6588
    %v6609 = vpack.c.b16 %v6591, %v6590
    %v6610 = vpack.c.b16 %v6593, %v6592
    %v6611 = vpack.c.b16 %v6595, %v6594
    %6628 = vmatprep.subr.bf16.mxu0 0
    %6629 = vmatpush1.bf16.msra.mxu0 %v6603
    %6630 = vmatprep.subr.bf16.mxu0 0
    %6631 = vmatpush1.bf16.msra.mxu0 %v6602
    %6632 = vmatprep.subr.bf16.mxu0 0
    %6633 = vmatpush1.bf16.msra.mxu0 %v6601
    %6634 = vmatprep.subr.bf16.mxu0 0
    %6635 = vmatpush1.bf16.msra.mxu0 %v6600
    %6636 = vmatprep.subr.bf16.mxu0 0
    %6637 = vmatpush1.bf16.msra.mxu0 %v6599
    %6638 = vmatprep.subr.bf16.mxu0 0
    %6639 = vmatpush1.bf16.msra.mxu0 %v6598
    %6640 = vmatprep.subr.bf16.mxu0 0
    %6641 = vmatpush1.bf16.msra.mxu0 %v6597
    %6642 = vmatprep.subr.bf16.mxu0 0
    %6643 = vmatpush1.bf16.msra.mxu0 %v6596
    %6644 = vmatprep.subr.bf16.mxu0 0
    %6645 = vmatpush2.bf16.msra.mxu0 %v6611
    %6646 = vmatprep.subr.bf16.mxu0 0
    %6647 = vmatpush2.bf16.msra.mxu0 %v6610
    %6648 = vmatprep.subr.bf16.mxu0 0
    %6649 = vmatpush2.bf16.msra.mxu0 %v6609
    %6650 = vmatprep.subr.bf16.mxu0 0
    %6651 = vmatpush2.bf16.msra.mxu0 %v6608
    %6652 = vmatprep.subr.bf16.mxu0 0
    %6653 = vmatpush2.bf16.msra.mxu0 %v6607
    %6654 = vmatprep.subr.bf16.mxu0 0
    %6655 = vmatpush2.bf16.msra.mxu0 %v6606
    %6656 = vmatprep.subr.bf16.mxu0 0
    %6657 = vmatpush2.bf16.msra.mxu0 %v6605
    %6658 = vmatprep.subr.bf16.mxu0 0
    %6659 = vmatpush2.bf16.msra.mxu0 %v6604
    %6660 = vmatprep.mubr.bf16.mxu0 %v6492
    %6661 = vmatmul.mubr.bf16.gmra.mxu0 %v6491
    %v6662 = vpop.f32.mrf.mxu0
    %v6663 = vadd.f32 0.0, %v6662
    %v6664 = vpop.f32.mrf.mxu0
    %v6665 = vpop.f32.mrf.mxu0
    %v6666 = vadd.f32 0.0, %v6665
    %v6667 = vpop.f32.mrf.mxu0
    %6668 = vmatprep.mubr.bf16.mxu0 %v6494
    %6669 = vmatmul.mubr.bf16.gmra.mxu0 %v6493
    %v6670 = vpop.f32.mrf.mxu0
    %v6671 = vadd.f32 0.0, %v6670
    %v6672 = vpop.f32.mrf.mxu0
    %v6673 = vpop.f32.mrf.mxu0
    %v6674 = vadd.f32 0.0, %v6673
    %v6675 = vpop.f32.mrf.mxu0
    %6676 = vmatprep.mubr.bf16.mxu0 %v6496
    %6677 = vmatmul.mubr.bf16.gmra.mxu0 %v6495
    %v6678 = vpop.f32.mrf.mxu0
    %v6679 = vadd.f32 0.0, %v6678
    %v6680 = vpop.f32.mrf.mxu0
    %v6681 = vpop.f32.mrf.mxu0
    %v6682 = vadd.f32 0.0, %v6681
    %v6683 = vpop.f32.mrf.mxu0
    %6684 = vmatprep.mubr.bf16.mxu0 %v6498
    %6685 = vmatmul.mubr.bf16.gmra.mxu0 %v6497
    %v6686 = vpop.f32.mrf.mxu0
    %v6687 = vadd.f32 0.0, %v6686
    %v6688 = vpop.f32.mrf.mxu0
    %v6689 = vpop.f32.mrf.mxu0
    %v6690 = vadd.f32 0.0, %v6689
    %v6691 = vpop.f32.mrf.mxu0
    %6692 = vdwg.mxu0
    %v6693 = vadd.f32 %v6467, %v6663
    %v6694 = vadd.f32 %v6468, %v6666
    %v6695 = vadd.f32 %v6469, %v6671
    %v6696 = vadd.f32 %v6470, %v6674
    %v6697 = vadd.f32 %v6471, %v6679
    %v6698 = vadd.f32 %v6472, %v6682
    %v6699 = vadd.f32 %v6473, %v6687
    %v6700 = vadd.f32 %v6474, %v6690
    %v6701 = vpack.c.bf16 %v3285, %v3283
    %v6702 = vpack.c.bf16 %v3286, %v3284
    %v6703 = vpack.c.bf16 %v3289, %v3287
    %v6704 = vpack.c.bf16 %v3290, %v3288
    %v6705 = vpack.c.bf16 %v3293, %v3291
    %v6706 = vpack.c.bf16 %v3294, %v3292
    %v6707 = vpack.c.bf16 %v3297, %v3295
    %v6708 = vpack.c.bf16 %v3298, %v3296
    %s6709 = scalar_lea.vmem [#allocation14], 1536
    %v6710 = vld [vmem:[%s6709] sm:$0xf]
    %v6711 = vld [vmem:[%s6709 + $0x4] sm:$0xf]
    %v6712 = vld [vmem:[%s6709 + $0x8] sm:$0xf]
    %v6713 = vld [vmem:[%s6709 + $0xc] sm:$0xf]
    %v6714 = vld [vmem:[%s6709 + $0x10] sm:$0xf]
    %v6715 = vld [vmem:[%s6709 + $0x14] sm:$0xf]
    %v6716 = vld [vmem:[%s6709 + $0x18] sm:$0xf]
    %v6717 = vld [vmem:[%s6709 + $0x1c] sm:$0xf]
    %v6718 = vld [vmem:[%s6709 + $0x20] sm:$0xf]
    %v6719 = vld [vmem:[%s6709 + $0x24] sm:$0xf]
    %v6720 = vld [vmem:[%s6709 + $0x28] sm:$0xf]
    %v6721 = vld [vmem:[%s6709 + $0x2c] sm:$0xf]
    %v6722 = vld [vmem:[%s6709 + $0x30] sm:$0xf]
    %v6723 = vld [vmem:[%s6709 + $0x34] sm:$0xf]
    %v6724 = vld [vmem:[%s6709 + $0x38] sm:$0xf]
    %v6725 = vld [vmem:[%s6709 + $0x3c] sm:$0xf]
    %v6726 = vld [vmem:[%s6709 + $0x40] sm:$0xf]
    %v6727 = vld [vmem:[%s6709 + $0x44] sm:$0xf]
    %v6728 = vld [vmem:[%s6709 + $0x48] sm:$0xf]
    %v6729 = vld [vmem:[%s6709 + $0x4c] sm:$0xf]
    %v6730 = vld [vmem:[%s6709 + $0x50] sm:$0xf]
    %v6731 = vld [vmem:[%s6709 + $0x54] sm:$0xf]
    %v6732 = vld [vmem:[%s6709 + $0x58] sm:$0xf]
    %v6733 = vld [vmem:[%s6709 + $0x5c] sm:$0xf]
    %v6734 = vld [vmem:[%s6709 + $0x60] sm:$0xf]
    %v6735 = vld [vmem:[%s6709 + $0x64] sm:$0xf]
    %v6736 = vld [vmem:[%s6709 + $0x68] sm:$0xf]
    %v6737 = vld [vmem:[%s6709 + $0x6c] sm:$0xf]
    %v6738 = vld [vmem:[%s6709 + $0x70] sm:$0xf]
    %v6739 = vld [vmem:[%s6709 + $0x74] sm:$0xf]
    %v6740 = vld [vmem:[%s6709 + $0x78] sm:$0xf]
    %v6741 = vld [vmem:[%s6709 + $0x7c] sm:$0xf]
    %v6774 = vunpack.c.l.b16 %v6710
    %v6775 = vunpack.c.l.b16 %v6711
    %v6776 = vunpack.c.l.b16 %v6712
    %v6777 = vunpack.c.l.b16 %v6713
    %v6778 = vunpack.c.l.b16 %v6714
    %v6779 = vunpack.c.l.b16 %v6715
    %v6780 = vunpack.c.l.b16 %v6716
    %v6781 = vunpack.c.l.b16 %v6717
    %v6782 = vunpack.c.l.b16 %v6718
    %v6783 = vunpack.c.l.b16 %v6719
    %v6784 = vunpack.c.l.b16 %v6720
    %v6785 = vunpack.c.l.b16 %v6721
    %v6786 = vunpack.c.l.b16 %v6722
    %v6787 = vunpack.c.l.b16 %v6723
    %v6788 = vunpack.c.l.b16 %v6724
    %v6789 = vunpack.c.l.b16 %v6725
    %v6790 = vunpack.c.l.b16 %v6726
    %v6791 = vunpack.c.l.b16 %v6727
    %v6792 = vunpack.c.l.b16 %v6728
    %v6793 = vunpack.c.l.b16 %v6729
    %v6794 = vunpack.c.l.b16 %v6730
    %v6795 = vunpack.c.l.b16 %v6731
    %v6796 = vunpack.c.l.b16 %v6732
    %v6797 = vunpack.c.l.b16 %v6733
    %v6798 = vunpack.c.l.b16 %v6734
    %v6799 = vunpack.c.l.b16 %v6735
    %v6800 = vunpack.c.l.b16 %v6736
    %v6801 = vunpack.c.l.b16 %v6737
    %v6802 = vunpack.c.l.b16 %v6738
    %v6803 = vunpack.c.l.b16 %v6739
    %v6804 = vunpack.c.l.b16 %v6740
    %v6805 = vunpack.c.l.b16 %v6741
    %v6806 = vpack.c.b16 %v6775, %v6774
    %v6807 = vpack.c.b16 %v6777, %v6776
    %v6808 = vpack.c.b16 %v6779, %v6778
    %v6809 = vpack.c.b16 %v6781, %v6780
    %v6810 = vpack.c.b16 %v6783, %v6782
    %v6811 = vpack.c.b16 %v6785, %v6784
    %v6812 = vpack.c.b16 %v6787, %v6786
    %v6813 = vpack.c.b16 %v6789, %v6788
    %v6814 = vpack.c.b16 %v6791, %v6790
    %v6815 = vpack.c.b16 %v6793, %v6792
    %v6816 = vpack.c.b16 %v6795, %v6794
    %v6817 = vpack.c.b16 %v6797, %v6796
    %v6818 = vpack.c.b16 %v6799, %v6798
    %v6819 = vpack.c.b16 %v6801, %v6800
    %v6820 = vpack.c.b16 %v6803, %v6802
    %v6821 = vpack.c.b16 %v6805, %v6804
    %6838 = vmatprep.subr.bf16.mxu0 0
    %6839 = vmatpush1.bf16.msra.mxu0 %v6813
    %6840 = vmatprep.subr.bf16.mxu0 0
    %6841 = vmatpush1.bf16.msra.mxu0 %v6812
    %6842 = vmatprep.subr.bf16.mxu0 0
    %6843 = vmatpush1.bf16.msra.mxu0 %v6811
    %6844 = vmatprep.subr.bf16.mxu0 0
    %6845 = vmatpush1.bf16.msra.mxu0 %v6810
    %6846 = vmatprep.subr.bf16.mxu0 0
    %6847 = vmatpush1.bf16.msra.mxu0 %v6809
    %6848 = vmatprep.subr.bf16.mxu0 0
    %6849 = vmatpush1.bf16.msra.mxu0 %v6808
    %6850 = vmatprep.subr.bf16.mxu0 0
    %6851 = vmatpush1.bf16.msra.mxu0 %v6807
    %6852 = vmatprep.subr.bf16.mxu0 0
    %6853 = vmatpush1.bf16.msra.mxu0 %v6806
    %6854 = vmatprep.subr.bf16.mxu0 0
    %6855 = vmatpush2.bf16.msra.mxu0 %v6821
    %6856 = vmatprep.subr.bf16.mxu0 0
    %6857 = vmatpush2.bf16.msra.mxu0 %v6820
    %6858 = vmatprep.subr.bf16.mxu0 0
    %6859 = vmatpush2.bf16.msra.mxu0 %v6819
    %6860 = vmatprep.subr.bf16.mxu0 0
    %6861 = vmatpush2.bf16.msra.mxu0 %v6818
    %6862 = vmatprep.subr.bf16.mxu0 0
    %6863 = vmatpush2.bf16.msra.mxu0 %v6817
    %6864 = vmatprep.subr.bf16.mxu0 0
    %6865 = vmatpush2.bf16.msra.mxu0 %v6816
    %6866 = vmatprep.subr.bf16.mxu0 0
    %6867 = vmatpush2.bf16.msra.mxu0 %v6815
    %6868 = vmatprep.subr.bf16.mxu0 0
    %6869 = vmatpush2.bf16.msra.mxu0 %v6814
    %6870 = vmatprep.mubr.bf16.mxu0 %v6702
    %6871 = vmatmul.mubr.bf16.gmra.mxu0 %v6701
    %v6872 = vpop.f32.mrf.mxu0
    %v6873 = vadd.f32 0.0, %v6872
    %v6874 = vpop.f32.mrf.mxu0
    %v6875 = vpop.f32.mrf.mxu0
    %v6876 = vadd.f32 0.0, %v6875
    %v6877 = vpop.f32.mrf.mxu0
    %6878 = vmatprep.mubr.bf16.mxu0 %v6704
    %6879 = vmatmul.mubr.bf16.gmra.mxu0 %v6703
    %v6880 = vpop.f32.mrf.mxu0
    %v6881 = vadd.f32 0.0, %v6880
    %v6882 = vpop.f32.mrf.mxu0
    %v6883 = vpop.f32.mrf.mxu0
    %v6884 = vadd.f32 0.0, %v6883
    %v6885 = vpop.f32.mrf.mxu0
    %6886 = vmatprep.mubr.bf16.mxu0 %v6706
    %6887 = vmatmul.mubr.bf16.gmra.mxu0 %v6705
    %v6888 = vpop.f32.mrf.mxu0
    %v6889 = vadd.f32 0.0, %v6888
    %v6890 = vpop.f32.mrf.mxu0
    %v6891 = vpop.f32.mrf.mxu0
    %v6892 = vadd.f32 0.0, %v6891
    %v6893 = vpop.f32.mrf.mxu0
    %6894 = vmatprep.mubr.bf16.mxu0 %v6708
    %6895 = vmatmul.mubr.bf16.gmra.mxu0 %v6707
    %v6896 = vpop.f32.mrf.mxu0
    %v6897 = vadd.f32 0.0, %v6896
    %v6898 = vpop.f32.mrf.mxu0
    %v6899 = vpop.f32.mrf.mxu0
    %v6900 = vadd.f32 0.0, %v6899
    %v6901 = vpop.f32.mrf.mxu0
    %6902 = vdwg.mxu0
    %v6903 = vadd.f32 %v6693, %v6873
    %v6904 = vadd.f32 %v6694, %v6876
    %v6905 = vadd.f32 %v6695, %v6881
    %v6906 = vadd.f32 %v6696, %v6884
    %v6907 = vadd.f32 %v6697, %v6889
    %v6908 = vadd.f32 %v6698, %v6892
    %v6909 = vadd.f32 %v6699, %v6897
    %v6910 = vadd.f32 %v6700, %v6900
    %v6911 = vsel %vm417, %v4818, 0.0
    %v6912 = vsel %vm417, %v4819, 0.0
    %v6913 = vsel %vm418, %v4816, 0.0
    %v6914 = vsel %vm418, %v4817, 0.0
    %v6915 = vsel %vm419, %v4814, 0.0
    %v6916 = vsel %vm419, %v4815, 0.0
    %v6917 = vsel %vm420, %v4812, 0.0
    %v6918 = vsel %vm420, %v4813, 0.0
    %v6919 = vsel %vm421, %v4810, 0.0
    %v6920 = vsel %vm421, %v4811, 0.0
    %v6921 = vsel %vm422, %v4808, 0.0
    %v6922 = vsel %vm422, %v4809, 0.0
    %v6923 = vsel %vm423, %v4806, 0.0
    %v6924 = vsel %vm423, %v4807, 0.0
    %v6925 = vsel %vm424, %v4820, 0.0
    %v6926 = vsel %vm424, %v4821, 0.0
    %v6927 = vpack.c.bf16 %v6913, %v6911
    %v6928 = vpack.c.bf16 %v6914, %v6912
    %v6929 = vpack.c.bf16 %v6917, %v6915
    %v6930 = vpack.c.bf16 %v6918, %v6916
    %v6931 = vpack.c.bf16 %v6921, %v6919
    %v6932 = vpack.c.bf16 %v6922, %v6920
    %v6933 = vpack.c.bf16 %v6925, %v6923
    %v6934 = vpack.c.bf16 %v6926, %v6924
    %s6935 = scalar_lea.vmem [#allocation14], 1664
    %v6936 = vld [vmem:[%s6935] sm:$0xf]
    %v6937 = vld [vmem:[%s6935 + $0x4] sm:$0xf]
    %v6938 = vld [vmem:[%s6935 + $0x8] sm:$0xf]
    %v6939 = vld [vmem:[%s6935 + $0xc] sm:$0xf]
    %v6940 = vld [vmem:[%s6935 + $0x10] sm:$0xf]
    %v6941 = vld [vmem:[%s6935 + $0x14] sm:$0xf]
    %v6942 = vld [vmem:[%s6935 + $0x18] sm:$0xf]
    %v6943 = vld [vmem:[%s6935 + $0x1c] sm:$0xf]
    %v6944 = vld [vmem:[%s6935 + $0x20] sm:$0xf]
    %v6945 = vld [vmem:[%s6935 + $0x24] sm:$0xf]
    %v6946 = vld [vmem:[%s6935 + $0x28] sm:$0xf]
    %v6947 = vld [vmem:[%s6935 + $0x2c] sm:$0xf]
    %v6948 = vld [vmem:[%s6935 + $0x30] sm:$0xf]
    %v6949 = vld [vmem:[%s6935 + $0x34] sm:$0xf]
    %v6950 = vld [vmem:[%s6935 + $0x38] sm:$0xf]
    %v6951 = vld [vmem:[%s6935 + $0x3c] sm:$0xf]
    %v6952 = vld [vmem:[%s6935 + $0x40] sm:$0xf]
    %v6953 = vld [vmem:[%s6935 + $0x44] sm:$0xf]
    %v6954 = vld [vmem:[%s6935 + $0x48] sm:$0xf]
    %v6955 = vld [vmem:[%s6935 + $0x4c] sm:$0xf]
    %v6956 = vld [vmem:[%s6935 + $0x50] sm:$0xf]
    %v6957 = vld [vmem:[%s6935 + $0x54] sm:$0xf]
    %v6958 = vld [vmem:[%s6935 + $0x58] sm:$0xf]
    %v6959 = vld [vmem:[%s6935 + $0x5c] sm:$0xf]
    %v6960 = vld [vmem:[%s6935 + $0x60] sm:$0xf]
    %v6961 = vld [vmem:[%s6935 + $0x64] sm:$0xf]
    %v6962 = vld [vmem:[%s6935 + $0x68] sm:$0xf]
    %v6963 = vld [vmem:[%s6935 + $0x6c] sm:$0xf]
    %v6964 = vld [vmem:[%s6935 + $0x70] sm:$0xf]
    %v6965 = vld [vmem:[%s6935 + $0x74] sm:$0xf]
    %v6966 = vld [vmem:[%s6935 + $0x78] sm:$0xf]
    %v6967 = vld [vmem:[%s6935 + $0x7c] sm:$0xf]
    %v7000 = vunpack.c.l.b16 %v6936
    %v7001 = vunpack.c.l.b16 %v6937
    %v7002 = vunpack.c.l.b16 %v6938
    %v7003 = vunpack.c.l.b16 %v6939
    %v7004 = vunpack.c.l.b16 %v6940
    %v7005 = vunpack.c.l.b16 %v6941
    %v7006 = vunpack.c.l.b16 %v6942
    %v7007 = vunpack.c.l.b16 %v6943
    %v7008 = vunpack.c.l.b16 %v6944
    %v7009 = vunpack.c.l.b16 %v6945
    %v7010 = vunpack.c.l.b16 %v6946
    %v7011 = vunpack.c.l.b16 %v6947
    %v7012 = vunpack.c.l.b16 %v6948
    %v7013 = vunpack.c.l.b16 %v6949
    %v7014 = vunpack.c.l.b16 %v6950
    %v7015 = vunpack.c.l.b16 %v6951
    %v7016 = vunpack.c.l.b16 %v6952
    %v7017 = vunpack.c.l.b16 %v6953
    %v7018 = vunpack.c.l.b16 %v6954
    %v7019 = vunpack.c.l.b16 %v6955
    %v7020 = vunpack.c.l.b16 %v6956
    %v7021 = vunpack.c.l.b16 %v6957
    %v7022 = vunpack.c.l.b16 %v6958
    %v7023 = vunpack.c.l.b16 %v6959
    %v7024 = vunpack.c.l.b16 %v6960
    %v7025 = vunpack.c.l.b16 %v6961
    %v7026 = vunpack.c.l.b16 %v6962
    %v7027 = vunpack.c.l.b16 %v6963
    %v7028 = vunpack.c.l.b16 %v6964
    %v7029 = vunpack.c.l.b16 %v6965
    %v7030 = vunpack.c.l.b16 %v6966
    %v7031 = vunpack.c.l.b16 %v6967
    %v7032 = vpack.c.b16 %v7001, %v7000
    %v7033 = vpack.c.b16 %v7003, %v7002
    %v7034 = vpack.c.b16 %v7005, %v7004
    %v7035 = vpack.c.b16 %v7007, %v7006
    %v7036 = vpack.c.b16 %v7009, %v7008
    %v7037 = vpack.c.b16 %v7011, %v7010
    %v7038 = vpack.c.b16 %v7013, %v7012
    %v7039 = vpack.c.b16 %v7015, %v7014
    %v7040 = vpack.c.b16 %v7017, %v7016
    %v7041 = vpack.c.b16 %v7019, %v7018
    %v7042 = vpack.c.b16 %v7021, %v7020
    %v7043 = vpack.c.b16 %v7023, %v7022
    %v7044 = vpack.c.b16 %v7025, %v7024
    %v7045 = vpack.c.b16 %v7027, %v7026
    %v7046 = vpack.c.b16 %v7029, %v7028
    %v7047 = vpack.c.b16 %v7031, %v7030
    %7064 = vmatprep.subr.bf16.mxu0 0
    %7065 = vmatpush1.bf16.msra.mxu0 %v7039
    %7066 = vmatprep.subr.bf16.mxu0 0
    %7067 = vmatpush1.bf16.msra.mxu0 %v7038
    %7068 = vmatprep.subr.bf16.mxu0 0
    %7069 = vmatpush1.bf16.msra.mxu0 %v7037
    %7070 = vmatprep.subr.bf16.mxu0 0
    %7071 = vmatpush1.bf16.msra.mxu0 %v7036
    %7072 = vmatprep.subr.bf16.mxu0 0
    %7073 = vmatpush1.bf16.msra.mxu0 %v7035
    %7074 = vmatprep.subr.bf16.mxu0 0
    %7075 = vmatpush1.bf16.msra.mxu0 %v7034
    %7076 = vmatprep.subr.bf16.mxu0 0
    %7077 = vmatpush1.bf16.msra.mxu0 %v7033
    %7078 = vmatprep.subr.bf16.mxu0 0
    %7079 = vmatpush1.bf16.msra.mxu0 %v7032
    %7080 = vmatprep.subr.bf16.mxu0 0
    %7081 = vmatpush2.bf16.msra.mxu0 %v7047
    %7082 = vmatprep.subr.bf16.mxu0 0
    %7083 = vmatpush2.bf16.msra.mxu0 %v7046
    %7084 = vmatprep.subr.bf16.mxu0 0
    %7085 = vmatpush2.bf16.msra.mxu0 %v7045
    %7086 = vmatprep.subr.bf16.mxu0 0
    %7087 = vmatpush2.bf16.msra.mxu0 %v7044
    %7088 = vmatprep.subr.bf16.mxu0 0
    %7089 = vmatpush2.bf16.msra.mxu0 %v7043
    %7090 = vmatprep.subr.bf16.mxu0 0
    %7091 = vmatpush2.bf16.msra.mxu0 %v7042
    %7092 = vmatprep.subr.bf16.mxu0 0
    %7093 = vmatpush2.bf16.msra.mxu0 %v7041
    %7094 = vmatprep.subr.bf16.mxu0 0
    %7095 = vmatpush2.bf16.msra.mxu0 %v7040
    %7096 = vmatprep.mubr.bf16.mxu0 %v6928
    %7097 = vmatmul.mubr.bf16.gmra.mxu0 %v6927
    %v7098 = vpop.f32.mrf.mxu0
    %v7099 = vadd.f32 0.0, %v7098
    %v7100 = vpop.f32.mrf.mxu0
    %v7101 = vpop.f32.mrf.mxu0
    %v7102 = vadd.f32 0.0, %v7101
    %v7103 = vpop.f32.mrf.mxu0
    %7104 = vmatprep.mubr.bf16.mxu0 %v6930
    %7105 = vmatmul.mubr.bf16.gmra.mxu0 %v6929
    %v7106 = vpop.f32.mrf.mxu0
    %v7107 = vadd.f32 0.0, %v7106
    %v7108 = vpop.f32.mrf.mxu0
    %v7109 = vpop.f32.mrf.mxu0
    %v7110 = vadd.f32 0.0, %v7109
    %v7111 = vpop.f32.mrf.mxu0
    %7112 = vmatprep.mubr.bf16.mxu0 %v6932
    %7113 = vmatmul.mubr.bf16.gmra.mxu0 %v6931
    %v7114 = vpop.f32.mrf.mxu0
    %v7115 = vadd.f32 0.0, %v7114
    %v7116 = vpop.f32.mrf.mxu0
    %v7117 = vpop.f32.mrf.mxu0
    %v7118 = vadd.f32 0.0, %v7117
    %v7119 = vpop.f32.mrf.mxu0
    %7120 = vmatprep.mubr.bf16.mxu0 %v6934
    %7121 = vmatmul.mubr.bf16.gmra.mxu0 %v6933
    %v7122 = vpop.f32.mrf.mxu0
    %v7123 = vadd.f32 0.0, %v7122
    %v7124 = vpop.f32.mrf.mxu0
    %v7125 = vpop.f32.mrf.mxu0
    %v7126 = vadd.f32 0.0, %v7125
    %v7127 = vpop.f32.mrf.mxu0
    %7128 = vdwg.mxu0
    %v7129 = vadd.f32 %v6903, %v7099
    %v7130 = vadd.f32 %v6904, %v7102
    %v7131 = vadd.f32 %v6905, %v7107
    %v7132 = vadd.f32 %v6906, %v7110
    %v7133 = vadd.f32 %v6907, %v7115
    %v7134 = vadd.f32 %v6908, %v7118
    %v7135 = vadd.f32 %v6909, %v7123
    %v7136 = vadd.f32 %v6910, %v7126
    %v7137 = vsel %vm1191, %v5124, 0.0
    %v7138 = vsel %vm1191, %v5125, 0.0
    %v7139 = vsel %vm1192, %v5122, 0.0
    %v7140 = vsel %vm1192, %v5123, 0.0
    %v7141 = vsel %vm1193, %v5120, 0.0
    %v7142 = vsel %vm1193, %v5121, 0.0
    %v7143 = vsel %vm1194, %v5118, 0.0
    %v7144 = vsel %vm1194, %v5119, 0.0
    %v7145 = vsel %vm1195, %v5116, 0.0
    %v7146 = vsel %vm1195, %v5117, 0.0
    %v7147 = vsel %vm1196, %v5114, 0.0
    %v7148 = vsel %vm1196, %v5115, 0.0
    %v7149 = vsel %vm1197, %v5112, 0.0
    %v7150 = vsel %vm1197, %v5113, 0.0
    %v7151 = vsel %vm1198, %v5126, 0.0
    %v7152 = vsel %vm1198, %v5127, 0.0
    %v7153 = vpack.c.bf16 %v7139, %v7137
    %v7154 = vpack.c.bf16 %v7140, %v7138
    %v7155 = vpack.c.bf16 %v7143, %v7141
    %v7156 = vpack.c.bf16 %v7144, %v7142
    %v7157 = vpack.c.bf16 %v7147, %v7145
    %v7158 = vpack.c.bf16 %v7148, %v7146
    %v7159 = vpack.c.bf16 %v7151, %v7149
    %v7160 = vpack.c.bf16 %v7152, %v7150
    %s7161 = scalar_lea.vmem [#allocation14], 1792
    %v7162 = vld [vmem:[%s7161] sm:$0xf]
    %v7163 = vld [vmem:[%s7161 + $0x4] sm:$0xf]
    %v7164 = vld [vmem:[%s7161 + $0x8] sm:$0xf]
    %v7165 = vld [vmem:[%s7161 + $0xc] sm:$0xf]
    %v7166 = vld [vmem:[%s7161 + $0x10] sm:$0xf]
    %v7167 = vld [vmem:[%s7161 + $0x14] sm:$0xf]
    %v7168 = vld [vmem:[%s7161 + $0x18] sm:$0xf]
    %v7169 = vld [vmem:[%s7161 + $0x1c] sm:$0xf]
    %v7170 = vld [vmem:[%s7161 + $0x20] sm:$0xf]
    %v7171 = vld [vmem:[%s7161 + $0x24] sm:$0xf]
    %v7172 = vld [vmem:[%s7161 + $0x28] sm:$0xf]
    %v7173 = vld [vmem:[%s7161 + $0x2c] sm:$0xf]
    %v7174 = vld [vmem:[%s7161 + $0x30] sm:$0xf]
    %v7175 = vld [vmem:[%s7161 + $0x34] sm:$0xf]
    %v7176 = vld [vmem:[%s7161 + $0x38] sm:$0xf]
    %v7177 = vld [vmem:[%s7161 + $0x3c] sm:$0xf]
    %v7178 = vld [vmem:[%s7161 + $0x40] sm:$0xf]
    %v7179 = vld [vmem:[%s7161 + $0x44] sm:$0xf]
    %v7180 = vld [vmem:[%s7161 + $0x48] sm:$0xf]
    %v7181 = vld [vmem:[%s7161 + $0x4c] sm:$0xf]
    %v7182 = vld [vmem:[%s7161 + $0x50] sm:$0xf]
    %v7183 = vld [vmem:[%s7161 + $0x54] sm:$0xf]
    %v7184 = vld [vmem:[%s7161 + $0x58] sm:$0xf]
    %v7185 = vld [vmem:[%s7161 + $0x5c] sm:$0xf]
    %v7186 = vld [vmem:[%s7161 + $0x60] sm:$0xf]
    %v7187 = vld [vmem:[%s7161 + $0x64] sm:$0xf]
    %v7188 = vld [vmem:[%s7161 + $0x68] sm:$0xf]
    %v7189 = vld [vmem:[%s7161 + $0x6c] sm:$0xf]
    %v7190 = vld [vmem:[%s7161 + $0x70] sm:$0xf]
    %v7191 = vld [vmem:[%s7161 + $0x74] sm:$0xf]
    %v7192 = vld [vmem:[%s7161 + $0x78] sm:$0xf]
    %v7193 = vld [vmem:[%s7161 + $0x7c] sm:$0xf]
    %v7226 = vunpack.c.l.b16 %v7162
    %v7227 = vunpack.c.l.b16 %v7163
    %v7228 = vunpack.c.l.b16 %v7164
    %v7229 = vunpack.c.l.b16 %v7165
    %v7230 = vunpack.c.l.b16 %v7166
    %v7231 = vunpack.c.l.b16 %v7167
    %v7232 = vunpack.c.l.b16 %v7168
    %v7233 = vunpack.c.l.b16 %v7169
    %v7234 = vunpack.c.l.b16 %v7170
    %v7235 = vunpack.c.l.b16 %v7171
    %v7236 = vunpack.c.l.b16 %v7172
    %v7237 = vunpack.c.l.b16 %v7173
    %v7238 = vunpack.c.l.b16 %v7174
    %v7239 = vunpack.c.l.b16 %v7175
    %v7240 = vunpack.c.l.b16 %v7176
    %v7241 = vunpack.c.l.b16 %v7177
    %v7242 = vunpack.c.l.b16 %v7178
    %v7243 = vunpack.c.l.b16 %v7179
    %v7244 = vunpack.c.l.b16 %v7180
    %v7245 = vunpack.c.l.b16 %v7181
    %v7246 = vunpack.c.l.b16 %v7182
    %v7247 = vunpack.c.l.b16 %v7183
    %v7248 = vunpack.c.l.b16 %v7184
    %v7249 = vunpack.c.l.b16 %v7185
    %v7250 = vunpack.c.l.b16 %v7186
    %v7251 = vunpack.c.l.b16 %v7187
    %v7252 = vunpack.c.l.b16 %v7188
    %v7253 = vunpack.c.l.b16 %v7189
    %v7254 = vunpack.c.l.b16 %v7190
    %v7255 = vunpack.c.l.b16 %v7191
    %v7256 = vunpack.c.l.b16 %v7192
    %v7257 = vunpack.c.l.b16 %v7193
    %v7258 = vpack.c.b16 %v7227, %v7226
    %v7259 = vpack.c.b16 %v7229, %v7228
    %v7260 = vpack.c.b16 %v7231, %v7230
    %v7261 = vpack.c.b16 %v7233, %v7232
    %v7262 = vpack.c.b16 %v7235, %v7234
    %v7263 = vpack.c.b16 %v7237, %v7236
    %v7264 = vpack.c.b16 %v7239, %v7238
    %v7265 = vpack.c.b16 %v7241, %v7240
    %v7266 = vpack.c.b16 %v7243, %v7242
    %v7267 = vpack.c.b16 %v7245, %v7244
    %v7268 = vpack.c.b16 %v7247, %v7246
    %v7269 = vpack.c.b16 %v7249, %v7248
    %v7270 = vpack.c.b16 %v7251, %v7250
    %v7271 = vpack.c.b16 %v7253, %v7252
    %v7272 = vpack.c.b16 %v7255, %v7254
    %v7273 = vpack.c.b16 %v7257, %v7256
    %7290 = vmatprep.subr.bf16.mxu0 0
    %7291 = vmatpush1.bf16.msra.mxu0 %v7265
    %7292 = vmatprep.subr.bf16.mxu0 0
    %7293 = vmatpush1.bf16.msra.mxu0 %v7264
    %7294 = vmatprep.subr.bf16.mxu0 0
    %7295 = vmatpush1.bf16.msra.mxu0 %v7263
    %7296 = vmatprep.subr.bf16.mxu0 0
    %7297 = vmatpush1.bf16.msra.mxu0 %v7262
    %7298 = vmatprep.subr.bf16.mxu0 0
    %7299 = vmatpush1.bf16.msra.mxu0 %v7261
    %7300 = vmatprep.subr.bf16.mxu0 0
    %7301 = vmatpush1.bf16.msra.mxu0 %v7260
    %7302 = vmatprep.subr.bf16.mxu0 0
    %7303 = vmatpush1.bf16.msra.mxu0 %v7259
    %7304 = vmatprep.subr.bf16.mxu0 0
    %7305 = vmatpush1.bf16.msra.mxu0 %v7258
    %7306 = vmatprep.subr.bf16.mxu0 0
    %7307 = vmatpush2.bf16.msra.mxu0 %v7273
    %7308 = vmatprep.subr.bf16.mxu0 0
    %7309 = vmatpush2.bf16.msra.mxu0 %v7272
    %7310 = vmatprep.subr.bf16.mxu0 0
    %7311 = vmatpush2.bf16.msra.mxu0 %v7271
    %7312 = vmatprep.subr.bf16.mxu0 0
    %7313 = vmatpush2.bf16.msra.mxu0 %v7270
    %7314 = vmatprep.subr.bf16.mxu0 0
    %7315 = vmatpush2.bf16.msra.mxu0 %v7269
    %7316 = vmatprep.subr.bf16.mxu0 0
    %7317 = vmatpush2.bf16.msra.mxu0 %v7268
    %7318 = vmatprep.subr.bf16.mxu0 0
    %7319 = vmatpush2.bf16.msra.mxu0 %v7267
    %7320 = vmatprep.subr.bf16.mxu0 0
    %7321 = vmatpush2.bf16.msra.mxu0 %v7266
    %7322 = vmatprep.mubr.bf16.mxu0 %v7154
    %7323 = vmatmul.mubr.bf16.gmra.mxu0 %v7153
    %v7324 = vpop.f32.mrf.mxu0
    %v7325 = vadd.f32 0.0, %v7324
    %v7326 = vpop.f32.mrf.mxu0
    %v7327 = vpop.f32.mrf.mxu0
    %v7328 = vadd.f32 0.0, %v7327
    %v7329 = vpop.f32.mrf.mxu0
    %7330 = vmatprep.mubr.bf16.mxu0 %v7156
    %7331 = vmatmul.mubr.bf16.gmra.mxu0 %v7155
    %v7332 = vpop.f32.mrf.mxu0
    %v7333 = vadd.f32 0.0, %v7332
    %v7334 = vpop.f32.mrf.mxu0
    %v7335 = vpop.f32.mrf.mxu0
    %v7336 = vadd.f32 0.0, %v7335
    %v7337 = vpop.f32.mrf.mxu0
    %7338 = vmatprep.mubr.bf16.mxu0 %v7158
    %7339 = vmatmul.mubr.bf16.gmra.mxu0 %v7157
    %v7340 = vpop.f32.mrf.mxu0
    %v7341 = vadd.f32 0.0, %v7340
    %v7342 = vpop.f32.mrf.mxu0
    %v7343 = vpop.f32.mrf.mxu0
    %v7344 = vadd.f32 0.0, %v7343
    %v7345 = vpop.f32.mrf.mxu0
    %7346 = vmatprep.mubr.bf16.mxu0 %v7160
    %7347 = vmatmul.mubr.bf16.gmra.mxu0 %v7159
    %v7348 = vpop.f32.mrf.mxu0
    %v7349 = vadd.f32 0.0, %v7348
    %v7350 = vpop.f32.mrf.mxu0
    %v7351 = vpop.f32.mrf.mxu0
    %v7352 = vadd.f32 0.0, %v7351
    %v7353 = vpop.f32.mrf.mxu0
    %7354 = vdwg.mxu0
    %v7355 = vadd.f32 %v7129, %v7325
    %v7356 = vadd.f32 %v7130, %v7328
    %v7357 = vadd.f32 %v7131, %v7333
    %v7358 = vadd.f32 %v7132, %v7336
    %v7359 = vadd.f32 %v7133, %v7341
    %v7360 = vadd.f32 %v7134, %v7344
    %v7361 = vadd.f32 %v7135, %v7349
    %v7362 = vadd.f32 %v7136, %v7352
    %vm7363 = vcmp.lt.s32.totalorder %v169, 29
    %vm7364 = vcmp.lt.s32.totalorder %v170, 29
    %vm7365 = vcmp.lt.s32.totalorder %v171, 29
    %vm7366 = vcmp.lt.s32.totalorder %v172, 29
    %vm7367 = vcmp.lt.s32.totalorder %v173, 29
    %vm7368 = vcmp.lt.s32.totalorder %v174, 29
    %vm7369 = vcmp.lt.s32.totalorder %v175, 29
    %vm7370 = vcmp.lt.s32.totalorder %v176, 29
    %v7371 = vsel %vm7363, 1, 0
    %v7372 = vsel %vm7364, 1, 0
    %v7373 = vsel %vm7365, 1, 0
    %v7374 = vsel %vm7366, 1, 0
    %v7375 = vsel %vm7367, 1, 0
    %v7376 = vsel %vm7368, 1, 0
    %v7377 = vsel %vm7369, 1, 0
    %v7378 = vsel %vm7370, 1, 0
    %7379 = vset.pattern.permute.xlu0 0
    %7380 = vperm.xlu0 %7379, %v7371
    %v7381 = vpop.permute.xlu0 %7380
    %7382 = vset.pattern.permute.xlu0 0
    %7383 = vperm.xlu0 %7382, %v7372
    %v7384 = vpop.permute.xlu0 %7383
    %7385 = vset.pattern.permute.xlu0 0
    %7386 = vperm.xlu0 %7385, %v7373
    %v7387 = vpop.permute.xlu0 %7386
    %7388 = vset.pattern.permute.xlu0 0
    %7389 = vperm.xlu0 %7388, %v7374
    %v7390 = vpop.permute.xlu0 %7389
    %7391 = vset.pattern.permute.xlu0 0
    %7392 = vperm.xlu0 %7391, %v7375
    %v7393 = vpop.permute.xlu0 %7392
    %7394 = vset.pattern.permute.xlu0 0
    %7395 = vperm.xlu0 %7394, %v7376
    %v7396 = vpop.permute.xlu0 %7395
    %7397 = vset.pattern.permute.xlu0 0
    %7398 = vperm.xlu0 %7397, %v7377
    %v7399 = vpop.permute.xlu0 %7398
    %7400 = vset.pattern.permute.xlu0 0
    %7401 = vperm.xlu0 %7400, %v7378
    %v7402 = vpop.permute.xlu0 %7401
    %vm7403 = vcmp.eq.s32.totalorder %v7381, 1
    %vm7404 = vcmp.eq.s32.totalorder %v7384, 1
    %vm7405 = vcmp.eq.s32.totalorder %v7387, 1
    %vm7406 = vcmp.eq.s32.totalorder %v7390, 1
    %vm7407 = vcmp.eq.s32.totalorder %v7393, 1
    %vm7408 = vcmp.eq.s32.totalorder %v7396, 1
    %vm7409 = vcmp.eq.s32.totalorder %v7399, 1
    %vm7410 = vcmp.eq.s32.totalorder %v7402, 1
    %v7411 = vsel %vm7403, %v5431, 0.0
    %v7412 = vsel %vm7403, %v5432, 0.0
    %v7413 = vsel %vm7404, %v5429, 0.0
    %v7414 = vsel %vm7404, %v5430, 0.0
    %v7415 = vsel %vm7405, %v5427, 0.0
    %v7416 = vsel %vm7405, %v5428, 0.0
    %v7417 = vsel %vm7406, %v5425, 0.0
    %v7418 = vsel %vm7406, %v5426, 0.0
    %v7419 = vsel %vm7407, %v5423, 0.0
    %v7420 = vsel %vm7407, %v5424, 0.0
    %v7421 = vsel %vm7408, %v5421, 0.0
    %v7422 = vsel %vm7408, %v5422, 0.0
    %v7423 = vsel %vm7409, %v5419, 0.0
    %v7424 = vsel %vm7409, %v5420, 0.0
    %v7425 = vsel %vm7410, %v5433, 0.0
    %v7426 = vsel %vm7410, %v5434, 0.0
    %v7427 = vpack.c.bf16 %v7413, %v7411
    %v7428 = vpack.c.bf16 %v7414, %v7412
    %v7429 = vpack.c.bf16 %v7417, %v7415
    %v7430 = vpack.c.bf16 %v7418, %v7416
    %v7431 = vpack.c.bf16 %v7421, %v7419
    %v7432 = vpack.c.bf16 %v7422, %v7420
    %v7433 = vpack.c.bf16 %v7425, %v7423
    %v7434 = vpack.c.bf16 %v7426, %v7424
    %s7435 = scalar_lea.vmem [#allocation14], 1920
    %v7436 = vld [vmem:[%s7435] sm:$0xf]
    %v7437 = vld [vmem:[%s7435 + $0x4] sm:$0xf]
    %v7438 = vld [vmem:[%s7435 + $0x8] sm:$0xf]
    %v7439 = vld [vmem:[%s7435 + $0xc] sm:$0xf]
    %v7440 = vld [vmem:[%s7435 + $0x10] sm:$0xf]
    %v7441 = vld [vmem:[%s7435 + $0x14] sm:$0xf]
    %v7442 = vld [vmem:[%s7435 + $0x18] sm:$0xf]
    %v7443 = vld [vmem:[%s7435 + $0x1c] sm:$0xf]
    %v7444 = vld [vmem:[%s7435 + $0x20] sm:$0xf]
    %v7445 = vld [vmem:[%s7435 + $0x24] sm:$0xf]
    %v7446 = vld [vmem:[%s7435 + $0x28] sm:$0xf]
    %v7447 = vld [vmem:[%s7435 + $0x2c] sm:$0xf]
    %v7448 = vld [vmem:[%s7435 + $0x30] sm:$0xf]
    %v7449 = vld [vmem:[%s7435 + $0x34] sm:$0xf]
    %v7450 = vld [vmem:[%s7435 + $0x38] sm:$0xf]
    %v7451 = vld [vmem:[%s7435 + $0x3c] sm:$0xf]
    %v7452 = vld [vmem:[%s7435 + $0x40] sm:$0xf]
    %v7453 = vld [vmem:[%s7435 + $0x44] sm:$0xf]
    %v7454 = vld [vmem:[%s7435 + $0x48] sm:$0xf]
    %v7455 = vld [vmem:[%s7435 + $0x4c] sm:$0xf]
    %v7456 = vld [vmem:[%s7435 + $0x50] sm:$0xf]
    %v7457 = vld [vmem:[%s7435 + $0x54] sm:$0xf]
    %v7458 = vld [vmem:[%s7435 + $0x58] sm:$0xf]
    %v7459 = vld [vmem:[%s7435 + $0x5c] sm:$0xf]
    %v7460 = vld [vmem:[%s7435 + $0x60] sm:$0xf]
    %v7461 = vld [vmem:[%s7435 + $0x64] sm:$0xf]
    %v7462 = vld [vmem:[%s7435 + $0x68] sm:$0xf]
    %v7463 = vld [vmem:[%s7435 + $0x6c] sm:$0xf]
    %v7464 = vld [vmem:[%s7435 + $0x70] sm:$0xf]
    %v7465 = vld [vmem:[%s7435 + $0x74] sm:$0xf]
    %v7466 = vld [vmem:[%s7435 + $0x78] sm:$0xf]
    %v7467 = vld [vmem:[%s7435 + $0x7c] sm:$0xf]
    %v7500 = vunpack.c.l.b16 %v7436
    %v7501 = vunpack.c.l.b16 %v7437
    %v7502 = vunpack.c.l.b16 %v7438
    %v7503 = vunpack.c.l.b16 %v7439
    %v7504 = vunpack.c.l.b16 %v7440
    %v7505 = vunpack.c.l.b16 %v7441
    %v7506 = vunpack.c.l.b16 %v7442
    %v7507 = vunpack.c.l.b16 %v7443
    %v7508 = vunpack.c.l.b16 %v7444
    %v7509 = vunpack.c.l.b16 %v7445
    %v7510 = vunpack.c.l.b16 %v7446
    %v7511 = vunpack.c.l.b16 %v7447
    %v7512 = vunpack.c.l.b16 %v7448
    %v7513 = vunpack.c.l.b16 %v7449
    %v7514 = vunpack.c.l.b16 %v7450
    %v7515 = vunpack.c.l.b16 %v7451
    %v7516 = vunpack.c.l.b16 %v7452
    %v7517 = vunpack.c.l.b16 %v7453
    %v7518 = vunpack.c.l.b16 %v7454
    %v7519 = vunpack.c.l.b16 %v7455
    %v7520 = vunpack.c.l.b16 %v7456
    %v7521 = vunpack.c.l.b16 %v7457
    %v7522 = vunpack.c.l.b16 %v7458
    %v7523 = vunpack.c.l.b16 %v7459
    %v7524 = vunpack.c.l.b16 %v7460
    %v7525 = vunpack.c.l.b16 %v7461
    %v7526 = vunpack.c.l.b16 %v7462
    %v7527 = vunpack.c.l.b16 %v7463
    %v7528 = vunpack.c.l.b16 %v7464
    %v7529 = vunpack.c.l.b16 %v7465
    %v7530 = vunpack.c.l.b16 %v7466
    %v7531 = vunpack.c.l.b16 %v7467
    %v7532 = vpack.c.b16 %v7501, %v7500
    %v7533 = vpack.c.b16 %v7503, %v7502
    %v7534 = vpack.c.b16 %v7505, %v7504
    %v7535 = vpack.c.b16 %v7507, %v7506
    %v7536 = vpack.c.b16 %v7509, %v7508
    %v7537 = vpack.c.b16 %v7511, %v7510
    %v7538 = vpack.c.b16 %v7513, %v7512
    %v7539 = vpack.c.b16 %v7515, %v7514
    %v7540 = vpack.c.b16 %v7517, %v7516
    %v7541 = vpack.c.b16 %v7519, %v7518
    %v7542 = vpack.c.b16 %v7521, %v7520
    %v7543 = vpack.c.b16 %v7523, %v7522
    %v7544 = vpack.c.b16 %v7525, %v7524
    %v7545 = vpack.c.b16 %v7527, %v7526
    %v7546 = vpack.c.b16 %v7529, %v7528
    %v7547 = vpack.c.b16 %v7531, %v7530
    %7564 = vmatprep.subr.bf16.mxu0 0
    %7565 = vmatpush1.bf16.msra.mxu0 %v7539
    %7566 = vmatprep.subr.bf16.mxu0 0
    %7567 = vmatpush1.bf16.msra.mxu0 %v7538
    %7568 = vmatprep.subr.bf16.mxu0 0
    %7569 = vmatpush1.bf16.msra.mxu0 %v7537
    %7570 = vmatprep.subr.bf16.mxu0 0
    %7571 = vmatpush1.bf16.msra.mxu0 %v7536
    %7572 = vmatprep.subr.bf16.mxu0 0
    %7573 = vmatpush1.bf16.msra.mxu0 %v7535
    %7574 = vmatprep.subr.bf16.mxu0 0
    %7575 = vmatpush1.bf16.msra.mxu0 %v7534
    %7576 = vmatprep.subr.bf16.mxu0 0
    %7577 = vmatpush1.bf16.msra.mxu0 %v7533
    %7578 = vmatprep.subr.bf16.mxu0 0
    %7579 = vmatpush1.bf16.msra.mxu0 %v7532
    %7580 = vmatprep.subr.bf16.mxu0 0
    %7581 = vmatpush2.bf16.msra.mxu0 %v7547
    %7582 = vmatprep.subr.bf16.mxu0 0
    %7583 = vmatpush2.bf16.msra.mxu0 %v7546
    %7584 = vmatprep.subr.bf16.mxu0 0
    %7585 = vmatpush2.bf16.msra.mxu0 %v7545
    %7586 = vmatprep.subr.bf16.mxu0 0
    %7587 = vmatpush2.bf16.msra.mxu0 %v7544
    %7588 = vmatprep.subr.bf16.mxu0 0
    %7589 = vmatpush2.bf16.msra.mxu0 %v7543
    %7590 = vmatprep.subr.bf16.mxu0 0
    %7591 = vmatpush2.bf16.msra.mxu0 %v7542
    %7592 = vmatprep.subr.bf16.mxu0 0
    %7593 = vmatpush2.bf16.msra.mxu0 %v7541
    %7594 = vmatprep.subr.bf16.mxu0 0
    %7595 = vmatpush2.bf16.msra.mxu0 %v7540
    %7596 = vmatprep.mubr.bf16.mxu0 %v7428
    %7597 = vmatmul.mubr.bf16.gmra.mxu0 %v7427
    %v7598 = vpop.f32.mrf.mxu0
    %v7599 = vadd.f32 0.0, %v7598
    %v7600 = vpop.f32.mrf.mxu0
    %v7601 = vpop.f32.mrf.mxu0
    %v7602 = vadd.f32 0.0, %v7601
    %v7603 = vpop.f32.mrf.mxu0
    %7604 = vmatprep.mubr.bf16.mxu0 %v7430
    %7605 = vmatmul.mubr.bf16.gmra.mxu0 %v7429
    %v7606 = vpop.f32.mrf.mxu0
    %v7607 = vadd.f32 0.0, %v7606
    %v7608 = vpop.f32.mrf.mxu0
    %v7609 = vpop.f32.mrf.mxu0
    %v7610 = vadd.f32 0.0, %v7609
    %v7611 = vpop.f32.mrf.mxu0
    %7612 = vmatprep.mubr.bf16.mxu0 %v7432
    %7613 = vmatmul.mubr.bf16.gmra.mxu0 %v7431
    %v7614 = vpop.f32.mrf.mxu0
    %v7615 = vadd.f32 0.0, %v7614
    %v7616 = vpop.f32.mrf.mxu0
    %v7617 = vpop.f32.mrf.mxu0
    %v7618 = vadd.f32 0.0, %v7617
    %v7619 = vpop.f32.mrf.mxu0
    %7620 = vmatprep.mubr.bf16.mxu0 %v7434
    %7621 = vmatmul.mubr.bf16.gmra.mxu0 %v7433
    %v7622 = vpop.f32.mrf.mxu0
    %v7623 = vadd.f32 0.0, %v7622
    %v7624 = vpop.f32.mrf.mxu0
    %v7625 = vpop.f32.mrf.mxu0
    %v7626 = vadd.f32 0.0, %v7625
    %v7627 = vpop.f32.mrf.mxu0
    %7628 = vdwg.mxu0
    %v7629 = vadd.f32 %v7355, %v7599
    %v7630 = vadd.f32 %v7356, %v7602
    %v7631 = vadd.f32 %v7357, %v7607
    %v7632 = vadd.f32 %v7358, %v7610
    %v7633 = vadd.f32 %v7359, %v7615
    %v7634 = vadd.f32 %v7360, %v7618
    %v7635 = vadd.f32 %v7361, %v7623
    %v7636 = vadd.f32 %v7362, %v7626
    %vm7637 = vcmp.lt.s32.totalorder %v169, 28
    %vm7638 = vcmp.lt.s32.totalorder %v170, 28
    %vm7639 = vcmp.lt.s32.totalorder %v171, 28
    %vm7640 = vcmp.lt.s32.totalorder %v172, 28
    %vm7641 = vcmp.lt.s32.totalorder %v173, 28
    %vm7642 = vcmp.lt.s32.totalorder %v174, 28
    %vm7643 = vcmp.lt.s32.totalorder %v175, 28
    %vm7644 = vcmp.lt.s32.totalorder %v176, 28
    %v7645 = vsel %vm7637, 1, 0
    %v7646 = vsel %vm7638, 1, 0
    %v7647 = vsel %vm7639, 1, 0
    %v7648 = vsel %vm7640, 1, 0
    %v7649 = vsel %vm7641, 1, 0
    %v7650 = vsel %vm7642, 1, 0
    %v7651 = vsel %vm7643, 1, 0
    %v7652 = vsel %vm7644, 1, 0
    %7653 = vset.pattern.permute.xlu0 0
    %7654 = vperm.xlu0 %7653, %v7645
    %v7655 = vpop.permute.xlu0 %7654
    %7656 = vset.pattern.permute.xlu0 0
    %7657 = vperm.xlu0 %7656, %v7646
    %v7658 = vpop.permute.xlu0 %7657
    %7659 = vset.pattern.permute.xlu0 0
    %7660 = vperm.xlu0 %7659, %v7647
    %v7661 = vpop.permute.xlu0 %7660
    %7662 = vset.pattern.permute.xlu0 0
    %7663 = vperm.xlu0 %7662, %v7648
    %v7664 = vpop.permute.xlu0 %7663
    %7665 = vset.pattern.permute.xlu0 0
    %7666 = vperm.xlu0 %7665, %v7649
    %v7667 = vpop.permute.xlu0 %7666
    %7668 = vset.pattern.permute.xlu0 0
    %7669 = vperm.xlu0 %7668, %v7650
    %v7670 = vpop.permute.xlu0 %7669
    %7671 = vset.pattern.permute.xlu0 0
    %7672 = vperm.xlu0 %7671, %v7651
    %v7673 = vpop.permute.xlu0 %7672
    %7674 = vset.pattern.permute.xlu0 0
    %7675 = vperm.xlu0 %7674, %v7652
    %v7676 = vpop.permute.xlu0 %7675
    %vm7677 = vcmp.eq.s32.totalorder %v7655, 1
    %vm7678 = vcmp.eq.s32.totalorder %v7658, 1
    %vm7679 = vcmp.eq.s32.totalorder %v7661, 1
    %vm7680 = vcmp.eq.s32.totalorder %v7664, 1
    %vm7681 = vcmp.eq.s32.totalorder %v7667, 1
    %vm7682 = vcmp.eq.s32.totalorder %v7670, 1
    %vm7683 = vcmp.eq.s32.totalorder %v7673, 1
    %vm7684 = vcmp.eq.s32.totalorder %v7676, 1
    %v7685 = vsel %vm7677, %v3336, 0.0
    %v7686 = vsel %vm7677, %v3337, 0.0
    %v7687 = vsel %vm7678, %v3334, 0.0
    %v7688 = vsel %vm7678, %v3335, 0.0
    %v7689 = vsel %vm7679, %v3332, 0.0
    %v7690 = vsel %vm7679, %v3333, 0.0
    %v7691 = vsel %vm7680, %v3330, 0.0
    %v7692 = vsel %vm7680, %v3331, 0.0
    %v7693 = vsel %vm7681, %v3328, 0.0
    %v7694 = vsel %vm7681, %v3329, 0.0
    %v7695 = vsel %vm7682, %v3326, 0.0
    %v7696 = vsel %vm7682, %v3327, 0.0
    %v7697 = vsel %vm7683, %v3324, 0.0
    %v7698 = vsel %vm7683, %v3325, 0.0
    %v7699 = vsel %vm7684, %v3338, 0.0
    %v7700 = vsel %vm7684, %v3339, 0.0
    %v7701 = vpack.c.bf16 %v7687, %v7685
    %v7702 = vpack.c.bf16 %v7688, %v7686
    %v7703 = vpack.c.bf16 %v7691, %v7689
    %v7704 = vpack.c.bf16 %v7692, %v7690
    %v7705 = vpack.c.bf16 %v7695, %v7693
    %v7706 = vpack.c.bf16 %v7696, %v7694
    %v7707 = vpack.c.bf16 %v7699, %v7697
    %v7708 = vpack.c.bf16 %v7700, %v7698
    %s7709 = scalar_lea.vmem [#allocation14], 2048
    %v7710 = vld [vmem:[%s7709] sm:$0xf]
    %v7711 = vld [vmem:[%s7709 + $0x4] sm:$0xf]
    %v7712 = vld [vmem:[%s7709 + $0x8] sm:$0xf]
    %v7713 = vld [vmem:[%s7709 + $0xc] sm:$0xf]
    %v7714 = vld [vmem:[%s7709 + $0x10] sm:$0xf]
    %v7715 = vld [vmem:[%s7709 + $0x14] sm:$0xf]
    %v7716 = vld [vmem:[%s7709 + $0x18] sm:$0xf]
    %v7717 = vld [vmem:[%s7709 + $0x1c] sm:$0xf]
    %v7718 = vld [vmem:[%s7709 + $0x20] sm:$0xf]
    %v7719 = vld [vmem:[%s7709 + $0x24] sm:$0xf]
    %v7720 = vld [vmem:[%s7709 + $0x28] sm:$0xf]
    %v7721 = vld [vmem:[%s7709 + $0x2c] sm:$0xf]
    %v7722 = vld [vmem:[%s7709 + $0x30] sm:$0xf]
    %v7723 = vld [vmem:[%s7709 + $0x34] sm:$0xf]
    %v7724 = vld [vmem:[%s7709 + $0x38] sm:$0xf]
    %v7725 = vld [vmem:[%s7709 + $0x3c] sm:$0xf]
    %v7726 = vld [vmem:[%s7709 + $0x40] sm:$0xf]
    %v7727 = vld [vmem:[%s7709 + $0x44] sm:$0xf]
    %v7728 = vld [vmem:[%s7709 + $0x48] sm:$0xf]
    %v7729 = vld [vmem:[%s7709 + $0x4c] sm:$0xf]
    %v7730 = vld [vmem:[%s7709 + $0x50] sm:$0xf]
    %v7731 = vld [vmem:[%s7709 + $0x54] sm:$0xf]
    %v7732 = vld [vmem:[%s7709 + $0x58] sm:$0xf]
    %v7733 = vld [vmem:[%s7709 + $0x5c] sm:$0xf]
    %v7734 = vld [vmem:[%s7709 + $0x60] sm:$0xf]
    %v7735 = vld [vmem:[%s7709 + $0x64] sm:$0xf]
    %v7736 = vld [vmem:[%s7709 + $0x68] sm:$0xf]
    %v7737 = vld [vmem:[%s7709 + $0x6c] sm:$0xf]
    %v7738 = vld [vmem:[%s7709 + $0x70] sm:$0xf]
    %v7739 = vld [vmem:[%s7709 + $0x74] sm:$0xf]
    %v7740 = vld [vmem:[%s7709 + $0x78] sm:$0xf]
    %v7741 = vld [vmem:[%s7709 + $0x7c] sm:$0xf]
    %v7774 = vunpack.c.l.b16 %v7710
    %v7775 = vunpack.c.l.b16 %v7711
    %v7776 = vunpack.c.l.b16 %v7712
    %v7777 = vunpack.c.l.b16 %v7713
    %v7778 = vunpack.c.l.b16 %v7714
    %v7779 = vunpack.c.l.b16 %v7715
    %v7780 = vunpack.c.l.b16 %v7716
    %v7781 = vunpack.c.l.b16 %v7717
    %v7782 = vunpack.c.l.b16 %v7718
    %v7783 = vunpack.c.l.b16 %v7719
    %v7784 = vunpack.c.l.b16 %v7720
    %v7785 = vunpack.c.l.b16 %v7721
    %v7786 = vunpack.c.l.b16 %v7722
    %v7787 = vunpack.c.l.b16 %v7723
    %v7788 = vunpack.c.l.b16 %v7724
    %v7789 = vunpack.c.l.b16 %v7725
    %v7790 = vunpack.c.l.b16 %v7726
    %v7791 = vunpack.c.l.b16 %v7727
    %v7792 = vunpack.c.l.b16 %v7728
    %v7793 = vunpack.c.l.b16 %v7729
    %v7794 = vunpack.c.l.b16 %v7730
    %v7795 = vunpack.c.l.b16 %v7731
    %v7796 = vunpack.c.l.b16 %v7732
    %v7797 = vunpack.c.l.b16 %v7733
    %v7798 = vunpack.c.l.b16 %v7734
    %v7799 = vunpack.c.l.b16 %v7735
    %v7800 = vunpack.c.l.b16 %v7736
    %v7801 = vunpack.c.l.b16 %v7737
    %v7802 = vunpack.c.l.b16 %v7738
    %v7803 = vunpack.c.l.b16 %v7739
    %v7804 = vunpack.c.l.b16 %v7740
    %v7805 = vunpack.c.l.b16 %v7741
    %v7806 = vpack.c.b16 %v7775, %v7774
    %v7807 = vpack.c.b16 %v7777, %v7776
    %v7808 = vpack.c.b16 %v7779, %v7778
    %v7809 = vpack.c.b16 %v7781, %v7780
    %v7810 = vpack.c.b16 %v7783, %v7782
    %v7811 = vpack.c.b16 %v7785, %v7784
    %v7812 = vpack.c.b16 %v7787, %v7786
    %v7813 = vpack.c.b16 %v7789, %v7788
    %v7814 = vpack.c.b16 %v7791, %v7790
    %v7815 = vpack.c.b16 %v7793, %v7792
    %v7816 = vpack.c.b16 %v7795, %v7794
    %v7817 = vpack.c.b16 %v7797, %v7796
    %v7818 = vpack.c.b16 %v7799, %v7798
    %v7819 = vpack.c.b16 %v7801, %v7800
    %v7820 = vpack.c.b16 %v7803, %v7802
    %v7821 = vpack.c.b16 %v7805, %v7804
    %7838 = vmatprep.subr.bf16.mxu0 0
    %7839 = vmatpush1.bf16.msra.mxu0 %v7813
    %7840 = vmatprep.subr.bf16.mxu0 0
    %7841 = vmatpush1.bf16.msra.mxu0 %v7812
    %7842 = vmatprep.subr.bf16.mxu0 0
    %7843 = vmatpush1.bf16.msra.mxu0 %v7811
    %7844 = vmatprep.subr.bf16.mxu0 0
    %7845 = vmatpush1.bf16.msra.mxu0 %v7810
    %7846 = vmatprep.subr.bf16.mxu0 0
    %7847 = vmatpush1.bf16.msra.mxu0 %v7809
    %7848 = vmatprep.subr.bf16.mxu0 0
    %7849 = vmatpush1.bf16.msra.mxu0 %v7808
    %7850 = vmatprep.subr.bf16.mxu0 0
    %7851 = vmatpush1.bf16.msra.mxu0 %v7807
    %7852 = vmatprep.subr.bf16.mxu0 0
    %7853 = vmatpush1.bf16.msra.mxu0 %v7806
    %7854 = vmatprep.subr.bf16.mxu0 0
    %7855 = vmatpush2.bf16.msra.mxu0 %v7821
    %7856 = vmatprep.subr.bf16.mxu0 0
    %7857 = vmatpush2.bf16.msra.mxu0 %v7820
    %7858 = vmatprep.subr.bf16.mxu0 0
    %7859 = vmatpush2.bf16.msra.mxu0 %v7819
    %7860 = vmatprep.subr.bf16.mxu0 0
    %7861 = vmatpush2.bf16.msra.mxu0 %v7818
    %7862 = vmatprep.subr.bf16.mxu0 0
    %7863 = vmatpush2.bf16.msra.mxu0 %v7817
    %7864 = vmatprep.subr.bf16.mxu0 0
    %7865 = vmatpush2.bf16.msra.mxu0 %v7816
    %7866 = vmatprep.subr.bf16.mxu0 0
    %7867 = vmatpush2.bf16.msra.mxu0 %v7815
    %7868 = vmatprep.subr.bf16.mxu0 0
    %7869 = vmatpush2.bf16.msra.mxu0 %v7814
    %7870 = vmatprep.mubr.bf16.mxu0 %v7702
    %7871 = vmatmul.mubr.bf16.gmra.mxu0 %v7701
    %v7872 = vpop.f32.mrf.mxu0
    %v7873 = vadd.f32 0.0, %v7872
    %v7874 = vpop.f32.mrf.mxu0
    %v7875 = vpop.f32.mrf.mxu0
    %v7876 = vadd.f32 0.0, %v7875
    %v7877 = vpop.f32.mrf.mxu0
    %7878 = vmatprep.mubr.bf16.mxu0 %v7704
    %7879 = vmatmul.mubr.bf16.gmra.mxu0 %v7703
    %v7880 = vpop.f32.mrf.mxu0
    %v7881 = vadd.f32 0.0, %v7880
    %v7882 = vpop.f32.mrf.mxu0
    %v7883 = vpop.f32.mrf.mxu0
    %v7884 = vadd.f32 0.0, %v7883
    %v7885 = vpop.f32.mrf.mxu0
    %7886 = vmatprep.mubr.bf16.mxu0 %v7706
    %7887 = vmatmul.mubr.bf16.gmra.mxu0 %v7705
    %v7888 = vpop.f32.mrf.mxu0
    %v7889 = vadd.f32 0.0, %v7888
    %v7890 = vpop.f32.mrf.mxu0
    %v7891 = vpop.f32.mrf.mxu0
    %v7892 = vadd.f32 0.0, %v7891
    %v7893 = vpop.f32.mrf.mxu0
    %7894 = vmatprep.mubr.bf16.mxu0 %v7708
    %7895 = vmatmul.mubr.bf16.gmra.mxu0 %v7707
    %v7896 = vpop.f32.mrf.mxu0
    %v7897 = vadd.f32 0.0, %v7896
    %v7898 = vpop.f32.mrf.mxu0
    %v7899 = vpop.f32.mrf.mxu0
    %v7900 = vadd.f32 0.0, %v7899
    %v7901 = vpop.f32.mrf.mxu0
    %7902 = vdwg.mxu0
    %v7903 = vadd.f32 %v7629, %v7873
    %v7904 = vadd.f32 %v7630, %v7876
    %v7905 = vadd.f32 %v7631, %v7881
    %v7906 = vadd.f32 %v7632, %v7884
    %v7907 = vadd.f32 %v7633, %v7889
    %v7908 = vadd.f32 %v7634, %v7892
    %v7909 = vadd.f32 %v7635, %v7897
    %v7910 = vadd.f32 %v7636, %v7900
    %vm7911 = vcmp.lt.s32.totalorder %v169, 27
    %vm7912 = vcmp.lt.s32.totalorder %v170, 27
    %vm7913 = vcmp.lt.s32.totalorder %v171, 27
    %vm7914 = vcmp.lt.s32.totalorder %v172, 27
    %vm7915 = vcmp.lt.s32.totalorder %v173, 27
    %vm7916 = vcmp.lt.s32.totalorder %v174, 27
    %vm7917 = vcmp.lt.s32.totalorder %v175, 27
    %vm7918 = vcmp.lt.s32.totalorder %v176, 27
    %v7919 = vsel %vm7911, 1, 0
    %v7920 = vsel %vm7912, 1, 0
    %v7921 = vsel %vm7913, 1, 0
    %v7922 = vsel %vm7914, 1, 0
    %v7923 = vsel %vm7915, 1, 0
    %v7924 = vsel %vm7916, 1, 0
    %v7925 = vsel %vm7917, 1, 0
    %v7926 = vsel %vm7918, 1, 0
    %7927 = vset.pattern.permute.xlu0 0
    %7928 = vperm.xlu0 %7927, %v7919
    %v7929 = vpop.permute.xlu0 %7928
    %7930 = vset.pattern.permute.xlu0 0
    %7931 = vperm.xlu0 %7930, %v7920
    %v7932 = vpop.permute.xlu0 %7931
    %7933 = vset.pattern.permute.xlu0 0
    %7934 = vperm.xlu0 %7933, %v7921
    %v7935 = vpop.permute.xlu0 %7934
    %7936 = vset.pattern.permute.xlu0 0
    %7937 = vperm.xlu0 %7936, %v7922
    %v7938 = vpop.permute.xlu0 %7937
    %7939 = vset.pattern.permute.xlu0 0
    %7940 = vperm.xlu0 %7939, %v7923
    %v7941 = vpop.permute.xlu0 %7940
    %7942 = vset.pattern.permute.xlu0 0
    %7943 = vperm.xlu0 %7942, %v7924
    %v7944 = vpop.permute.xlu0 %7943
    %7945 = vset.pattern.permute.xlu0 0
    %7946 = vperm.xlu0 %7945, %v7925
    %v7947 = vpop.permute.xlu0 %7946
    %7948 = vset.pattern.permute.xlu0 0
    %7949 = vperm.xlu0 %7948, %v7926
    %v7950 = vpop.permute.xlu0 %7949
    %vm7951 = vcmp.eq.s32.totalorder %v7929, 1
    %vm7952 = vcmp.eq.s32.totalorder %v7932, 1
    %vm7953 = vcmp.eq.s32.totalorder %v7935, 1
    %vm7954 = vcmp.eq.s32.totalorder %v7938, 1
    %vm7955 = vcmp.eq.s32.totalorder %v7941, 1
    %vm7956 = vcmp.eq.s32.totalorder %v7944, 1
    %vm7957 = vcmp.eq.s32.totalorder %v7947, 1
    %vm7958 = vcmp.eq.s32.totalorder %v7950, 1
    %v7959 = vsel %vm7951, %v3473, 0.0
    %v7960 = vsel %vm7951, %v3474, 0.0
    %v7961 = vsel %vm7952, %v3471, 0.0
    %v7962 = vsel %vm7952, %v3472, 0.0
    %v7963 = vsel %vm7953, %v3469, 0.0
    %v7964 = vsel %vm7953, %v3470, 0.0
    %v7965 = vsel %vm7954, %v3467, 0.0
    %v7966 = vsel %vm7954, %v3468, 0.0
    %v7967 = vsel %vm7955, %v3465, 0.0
    %v7968 = vsel %vm7955, %v3466, 0.0
    %v7969 = vsel %vm7956, %v3463, 0.0
    %v7970 = vsel %vm7956, %v3464, 0.0
    %v7971 = vsel %vm7957, %v3461, 0.0
    %v7972 = vsel %vm7957, %v3462, 0.0
    %v7973 = vsel %vm7958, %v3475, 0.0
    %v7974 = vsel %vm7958, %v3476, 0.0
    %v7975 = vpack.c.bf16 %v7961, %v7959
    %v7976 = vpack.c.bf16 %v7962, %v7960
    %v7977 = vpack.c.bf16 %v7965, %v7963
    %v7978 = vpack.c.bf16 %v7966, %v7964
    %v7979 = vpack.c.bf16 %v7969, %v7967
    %v7980 = vpack.c.bf16 %v7970, %v7968
    %v7981 = vpack.c.bf16 %v7973, %v7971
    %v7982 = vpack.c.bf16 %v7974, %v7972
    %s7983 = scalar_lea.vmem [#allocation14], 2176
    %v7984 = vld [vmem:[%s7983] sm:$0xf]
    %v7985 = vld [vmem:[%s7983 + $0x4] sm:$0xf]
    %v7986 = vld [vmem:[%s7983 + $0x8] sm:$0xf]
    %v7987 = vld [vmem:[%s7983 + $0xc] sm:$0xf]
    %v7988 = vld [vmem:[%s7983 + $0x10] sm:$0xf]
    %v7989 = vld [vmem:[%s7983 + $0x14] sm:$0xf]
    %v7990 = vld [vmem:[%s7983 + $0x18] sm:$0xf]
    %v7991 = vld [vmem:[%s7983 + $0x1c] sm:$0xf]
    %v7992 = vld [vmem:[%s7983 + $0x20] sm:$0xf]
    %v7993 = vld [vmem:[%s7983 + $0x24] sm:$0xf]
    %v7994 = vld [vmem:[%s7983 + $0x28] sm:$0xf]
    %v7995 = vld [vmem:[%s7983 + $0x2c] sm:$0xf]
    %v7996 = vld [vmem:[%s7983 + $0x30] sm:$0xf]
    %v7997 = vld [vmem:[%s7983 + $0x34] sm:$0xf]
    %v7998 = vld [vmem:[%s7983 + $0x38] sm:$0xf]
    %v7999 = vld [vmem:[%s7983 + $0x3c] sm:$0xf]
    %v8000 = vld [vmem:[%s7983 + $0x40] sm:$0xf]
    %v8001 = vld [vmem:[%s7983 + $0x44] sm:$0xf]
    %v8002 = vld [vmem:[%s7983 + $0x48] sm:$0xf]
    %v8003 = vld [vmem:[%s7983 + $0x4c] sm:$0xf]
    %v8004 = vld [vmem:[%s7983 + $0x50] sm:$0xf]
    %v8005 = vld [vmem:[%s7983 + $0x54] sm:$0xf]
    %v8006 = vld [vmem:[%s7983 + $0x58] sm:$0xf]
    %v8007 = vld [vmem:[%s7983 + $0x5c] sm:$0xf]
    %v8008 = vld [vmem:[%s7983 + $0x60] sm:$0xf]
    %v8009 = vld [vmem:[%s7983 + $0x64] sm:$0xf]
    %v8010 = vld [vmem:[%s7983 + $0x68] sm:$0xf]
    %v8011 = vld [vmem:[%s7983 + $0x6c] sm:$0xf]
    %v8012 = vld [vmem:[%s7983 + $0x70] sm:$0xf]
    %v8013 = vld [vmem:[%s7983 + $0x74] sm:$0xf]
    %v8014 = vld [vmem:[%s7983 + $0x78] sm:$0xf]
    %v8015 = vld [vmem:[%s7983 + $0x7c] sm:$0xf]
    %v8048 = vunpack.c.l.b16 %v7984
    %v8049 = vunpack.c.l.b16 %v7985
    %v8050 = vunpack.c.l.b16 %v7986
    %v8051 = vunpack.c.l.b16 %v7987
    %v8052 = vunpack.c.l.b16 %v7988
    %v8053 = vunpack.c.l.b16 %v7989
    %v8054 = vunpack.c.l.b16 %v7990
    %v8055 = vunpack.c.l.b16 %v7991
    %v8056 = vunpack.c.l.b16 %v7992
    %v8057 = vunpack.c.l.b16 %v7993
    %v8058 = vunpack.c.l.b16 %v7994
    %v8059 = vunpack.c.l.b16 %v7995
    %v8060 = vunpack.c.l.b16 %v7996
    %v8061 = vunpack.c.l.b16 %v7997
    %v8062 = vunpack.c.l.b16 %v7998
    %v8063 = vunpack.c.l.b16 %v7999
    %v8064 = vunpack.c.l.b16 %v8000
    %v8065 = vunpack.c.l.b16 %v8001
    %v8066 = vunpack.c.l.b16 %v8002
    %v8067 = vunpack.c.l.b16 %v8003
    %v8068 = vunpack.c.l.b16 %v8004
    %v8069 = vunpack.c.l.b16 %v8005
    %v8070 = vunpack.c.l.b16 %v8006
    %v8071 = vunpack.c.l.b16 %v8007
    %v8072 = vunpack.c.l.b16 %v8008
    %v8073 = vunpack.c.l.b16 %v8009
    %v8074 = vunpack.c.l.b16 %v8010
    %v8075 = vunpack.c.l.b16 %v8011
    %v8076 = vunpack.c.l.b16 %v8012
    %v8077 = vunpack.c.l.b16 %v8013
    %v8078 = vunpack.c.l.b16 %v8014
    %v8079 = vunpack.c.l.b16 %v8015
    %v8080 = vpack.c.b16 %v8049, %v8048
    %v8081 = vpack.c.b16 %v8051, %v8050
    %v8082 = vpack.c.b16 %v8053, %v8052
    %v8083 = vpack.c.b16 %v8055, %v8054
    %v8084 = vpack.c.b16 %v8057, %v8056
    %v8085 = vpack.c.b16 %v8059, %v8058
    %v8086 = vpack.c.b16 %v8061, %v8060
    %v8087 = vpack.c.b16 %v8063, %v8062
    %v8088 = vpack.c.b16 %v8065, %v8064
    %v8089 = vpack.c.b16 %v8067, %v8066
    %v8090 = vpack.c.b16 %v8069, %v8068
    %v8091 = vpack.c.b16 %v8071, %v8070
    %v8092 = vpack.c.b16 %v8073, %v8072
    %v8093 = vpack.c.b16 %v8075, %v8074
    %v8094 = vpack.c.b16 %v8077, %v8076
    %v8095 = vpack.c.b16 %v8079, %v8078
    %8112 = vmatprep.subr.bf16.mxu0 0
    %8113 = vmatpush1.bf16.msra.mxu0 %v8087
    %8114 = vmatprep.subr.bf16.mxu0 0
    %8115 = vmatpush1.bf16.msra.mxu0 %v8086
    %8116 = vmatprep.subr.bf16.mxu0 0
    %8117 = vmatpush1.bf16.msra.mxu0 %v8085
    %8118 = vmatprep.subr.bf16.mxu0 0
    %8119 = vmatpush1.bf16.msra.mxu0 %v8084
    %8120 = vmatprep.subr.bf16.mxu0 0
    %8121 = vmatpush1.bf16.msra.mxu0 %v8083
    %8122 = vmatprep.subr.bf16.mxu0 0
    %8123 = vmatpush1.bf16.msra.mxu0 %v8082
    %8124 = vmatprep.subr.bf16.mxu0 0
    %8125 = vmatpush1.bf16.msra.mxu0 %v8081
    %8126 = vmatprep.subr.bf16.mxu0 0
    %8127 = vmatpush1.bf16.msra.mxu0 %v8080
    %8128 = vmatprep.subr.bf16.mxu0 0
    %8129 = vmatpush2.bf16.msra.mxu0 %v8095
    %8130 = vmatprep.subr.bf16.mxu0 0
    %8131 = vmatpush2.bf16.msra.mxu0 %v8094
    %8132 = vmatprep.subr.bf16.mxu0 0
    %8133 = vmatpush2.bf16.msra.mxu0 %v8093
    %8134 = vmatprep.subr.bf16.mxu0 0
    %8135 = vmatpush2.bf16.msra.mxu0 %v8092
    %8136 = vmatprep.subr.bf16.mxu0 0
    %8137 = vmatpush2.bf16.msra.mxu0 %v8091
    %8138 = vmatprep.subr.bf16.mxu0 0
    %8139 = vmatpush2.bf16.msra.mxu0 %v8090
    %8140 = vmatprep.subr.bf16.mxu0 0
    %8141 = vmatpush2.bf16.msra.mxu0 %v8089
    %8142 = vmatprep.subr.bf16.mxu0 0
    %8143 = vmatpush2.bf16.msra.mxu0 %v8088
    %8144 = vmatprep.mubr.bf16.mxu0 %v7976
    %8145 = vmatmul.mubr.bf16.gmra.mxu0 %v7975
    %v8146 = vpop.f32.mrf.mxu0
    %v8147 = vadd.f32 0.0, %v8146
    %v8148 = vpop.f32.mrf.mxu0
    %v8149 = vpop.f32.mrf.mxu0
    %v8150 = vadd.f32 0.0, %v8149
    %v8151 = vpop.f32.mrf.mxu0
    %8152 = vmatprep.mubr.bf16.mxu0 %v7978
    %8153 = vmatmul.mubr.bf16.gmra.mxu0 %v7977
    %v8154 = vpop.f32.mrf.mxu0
    %v8155 = vadd.f32 0.0, %v8154
    %v8156 = vpop.f32.mrf.mxu0
    %v8157 = vpop.f32.mrf.mxu0
    %v8158 = vadd.f32 0.0, %v8157
    %v8159 = vpop.f32.mrf.mxu0
    %8160 = vmatprep.mubr.bf16.mxu0 %v7980
    %8161 = vmatmul.mubr.bf16.gmra.mxu0 %v7979
    %v8162 = vpop.f32.mrf.mxu0
    %v8163 = vadd.f32 0.0, %v8162
    %v8164 = vpop.f32.mrf.mxu0
    %v8165 = vpop.f32.mrf.mxu0
    %v8166 = vadd.f32 0.0, %v8165
    %v8167 = vpop.f32.mrf.mxu0
    %8168 = vmatprep.mubr.bf16.mxu0 %v7982
    %8169 = vmatmul.mubr.bf16.gmra.mxu0 %v7981
    %v8170 = vpop.f32.mrf.mxu0
    %v8171 = vadd.f32 0.0, %v8170
    %v8172 = vpop.f32.mrf.mxu0
    %v8173 = vpop.f32.mrf.mxu0
    %v8174 = vadd.f32 0.0, %v8173
    %v8175 = vpop.f32.mrf.mxu0
    %8176 = vdwg.mxu0
    %v8177 = vadd.f32 %v7903, %v8147
    %v8178 = vadd.f32 %v7904, %v8150
    %v8179 = vadd.f32 %v7905, %v8155
    %v8180 = vadd.f32 %v7906, %v8158
    %v8181 = vadd.f32 %v7907, %v8163
    %v8182 = vadd.f32 %v7908, %v8166
    %v8183 = vadd.f32 %v7909, %v8171
    %v8184 = vadd.f32 %v7910, %v8174
    %vm8185 = vcmp.lt.s32.totalorder %v169, 26
    %vm8186 = vcmp.lt.s32.totalorder %v170, 26
    %vm8187 = vcmp.lt.s32.totalorder %v171, 26
    %vm8188 = vcmp.lt.s32.totalorder %v172, 26
    %vm8189 = vcmp.lt.s32.totalorder %v173, 26
    %vm8190 = vcmp.lt.s32.totalorder %v174, 26
    %vm8191 = vcmp.lt.s32.totalorder %v175, 26
    %vm8192 = vcmp.lt.s32.totalorder %v176, 26
    %v8193 = vsel %vm8185, 1, 0
    %v8194 = vsel %vm8186, 1, 0
    %v8195 = vsel %vm8187, 1, 0
    %v8196 = vsel %vm8188, 1, 0
    %v8197 = vsel %vm8189, 1, 0
    %v8198 = vsel %vm8190, 1, 0
    %v8199 = vsel %vm8191, 1, 0
    %v8200 = vsel %vm8192, 1, 0
    %8201 = vset.pattern.permute.xlu0 0
    %8202 = vperm.xlu0 %8201, %v8193
    %v8203 = vpop.permute.xlu0 %8202
    %8204 = vset.pattern.permute.xlu0 0
    %8205 = vperm.xlu0 %8204, %v8194
    %v8206 = vpop.permute.xlu0 %8205
    %8207 = vset.pattern.permute.xlu0 0
    %8208 = vperm.xlu0 %8207, %v8195
    %v8209 = vpop.permute.xlu0 %8208
    %8210 = vset.pattern.permute.xlu0 0
    %8211 = vperm.xlu0 %8210, %v8196
    %v8212 = vpop.permute.xlu0 %8211
    %8213 = vset.pattern.permute.xlu0 0
    %8214 = vperm.xlu0 %8213, %v8197
    %v8215 = vpop.permute.xlu0 %8214
    %8216 = vset.pattern.permute.xlu0 0
    %8217 = vperm.xlu0 %8216, %v8198
    %v8218 = vpop.permute.xlu0 %8217
    %8219 = vset.pattern.permute.xlu0 0
    %8220 = vperm.xlu0 %8219, %v8199
    %v8221 = vpop.permute.xlu0 %8220
    %8222 = vset.pattern.permute.xlu0 0
    %8223 = vperm.xlu0 %8222, %v8200
    %v8224 = vpop.permute.xlu0 %8223
    %vm8225 = vcmp.eq.s32.totalorder %v8203, 1
    %vm8226 = vcmp.eq.s32.totalorder %v8206, 1
    %vm8227 = vcmp.eq.s32.totalorder %v8209, 1
    %vm8228 = vcmp.eq.s32.totalorder %v8212, 1
    %vm8229 = vcmp.eq.s32.totalorder %v8215, 1
    %vm8230 = vcmp.eq.s32.totalorder %v8218, 1
    %vm8231 = vcmp.eq.s32.totalorder %v8221, 1
    %vm8232 = vcmp.eq.s32.totalorder %v8224, 1
    %v8233 = vsel %vm8225, %v3932, 0.0
    %v8234 = vsel %vm8225, %v3933, 0.0
    %v8235 = vsel %vm8226, %v3930, 0.0
    %v8236 = vsel %vm8226, %v3931, 0.0
    %v8237 = vsel %vm8227, %v3928, 0.0
    %v8238 = vsel %vm8227, %v3929, 0.0
    %v8239 = vsel %vm8228, %v3926, 0.0
    %v8240 = vsel %vm8228, %v3927, 0.0
    %v8241 = vsel %vm8229, %v3924, 0.0
    %v8242 = vsel %vm8229, %v3925, 0.0
    %v8243 = vsel %vm8230, %v3922, 0.0
    %v8244 = vsel %vm8230, %v3923, 0.0
    %v8245 = vsel %vm8231, %v3920, 0.0
    %v8246 = vsel %vm8231, %v3921, 0.0
    %v8247 = vsel %vm8232, %v3934, 0.0
    %v8248 = vsel %vm8232, %v3935, 0.0
    %v8249 = vpack.c.bf16 %v8235, %v8233
    %v8250 = vpack.c.bf16 %v8236, %v8234
    %v8251 = vpack.c.bf16 %v8239, %v8237
    %v8252 = vpack.c.bf16 %v8240, %v8238
    %v8253 = vpack.c.bf16 %v8243, %v8241
    %v8254 = vpack.c.bf16 %v8244, %v8242
    %v8255 = vpack.c.bf16 %v8247, %v8245
    %v8256 = vpack.c.bf16 %v8248, %v8246
    %s8257 = scalar_lea.vmem [#allocation14], 2304
    %v8258 = vld [vmem:[%s8257] sm:$0xf]
    %v8259 = vld [vmem:[%s8257 + $0x4] sm:$0xf]
    %v8260 = vld [vmem:[%s8257 + $0x8] sm:$0xf]
    %v8261 = vld [vmem:[%s8257 + $0xc] sm:$0xf]
    %v8262 = vld [vmem:[%s8257 + $0x10] sm:$0xf]
    %v8263 = vld [vmem:[%s8257 + $0x14] sm:$0xf]
    %v8264 = vld [vmem:[%s8257 + $0x18] sm:$0xf]
    %v8265 = vld [vmem:[%s8257 + $0x1c] sm:$0xf]
    %v8266 = vld [vmem:[%s8257 + $0x20] sm:$0xf]
    %v8267 = vld [vmem:[%s8257 + $0x24] sm:$0xf]
    %v8268 = vld [vmem:[%s8257 + $0x28] sm:$0xf]
    %v8269 = vld [vmem:[%s8257 + $0x2c] sm:$0xf]
    %v8270 = vld [vmem:[%s8257 + $0x30] sm:$0xf]
    %v8271 = vld [vmem:[%s8257 + $0x34] sm:$0xf]
    %v8272 = vld [vmem:[%s8257 + $0x38] sm:$0xf]
    %v8273 = vld [vmem:[%s8257 + $0x3c] sm:$0xf]
    %v8274 = vld [vmem:[%s8257 + $0x40] sm:$0xf]
    %v8275 = vld [vmem:[%s8257 + $0x44] sm:$0xf]
    %v8276 = vld [vmem:[%s8257 + $0x48] sm:$0xf]
    %v8277 = vld [vmem:[%s8257 + $0x4c] sm:$0xf]
    %v8278 = vld [vmem:[%s8257 + $0x50] sm:$0xf]
    %v8279 = vld [vmem:[%s8257 + $0x54] sm:$0xf]
    %v8280 = vld [vmem:[%s8257 + $0x58] sm:$0xf]
    %v8281 = vld [vmem:[%s8257 + $0x5c] sm:$0xf]
    %v8282 = vld [vmem:[%s8257 + $0x60] sm:$0xf]
    %v8283 = vld [vmem:[%s8257 + $0x64] sm:$0xf]
    %v8284 = vld [vmem:[%s8257 + $0x68] sm:$0xf]
    %v8285 = vld [vmem:[%s8257 + $0x6c] sm:$0xf]
    %v8286 = vld [vmem:[%s8257 + $0x70] sm:$0xf]
    %v8287 = vld [vmem:[%s8257 + $0x74] sm:$0xf]
    %v8288 = vld [vmem:[%s8257 + $0x78] sm:$0xf]
    %v8289 = vld [vmem:[%s8257 + $0x7c] sm:$0xf]
    %v8322 = vunpack.c.l.b16 %v8258
    %v8323 = vunpack.c.l.b16 %v8259
    %v8324 = vunpack.c.l.b16 %v8260
    %v8325 = vunpack.c.l.b16 %v8261
    %v8326 = vunpack.c.l.b16 %v8262
    %v8327 = vunpack.c.l.b16 %v8263
    %v8328 = vunpack.c.l.b16 %v8264
    %v8329 = vunpack.c.l.b16 %v8265
    %v8330 = vunpack.c.l.b16 %v8266
    %v8331 = vunpack.c.l.b16 %v8267
    %v8332 = vunpack.c.l.b16 %v8268
    %v8333 = vunpack.c.l.b16 %v8269
    %v8334 = vunpack.c.l.b16 %v8270
    %v8335 = vunpack.c.l.b16 %v8271
    %v8336 = vunpack.c.l.b16 %v8272
    %v8337 = vunpack.c.l.b16 %v8273
    %v8338 = vunpack.c.l.b16 %v8274
    %v8339 = vunpack.c.l.b16 %v8275
    %v8340 = vunpack.c.l.b16 %v8276
    %v8341 = vunpack.c.l.b16 %v8277
    %v8342 = vunpack.c.l.b16 %v8278
    %v8343 = vunpack.c.l.b16 %v8279
    %v8344 = vunpack.c.l.b16 %v8280
    %v8345 = vunpack.c.l.b16 %v8281
    %v8346 = vunpack.c.l.b16 %v8282
    %v8347 = vunpack.c.l.b16 %v8283
    %v8348 = vunpack.c.l.b16 %v8284
    %v8349 = vunpack.c.l.b16 %v8285
    %v8350 = vunpack.c.l.b16 %v8286
    %v8351 = vunpack.c.l.b16 %v8287
    %v8352 = vunpack.c.l.b16 %v8288
    %v8353 = vunpack.c.l.b16 %v8289
    %v8354 = vpack.c.b16 %v8323, %v8322
    %v8355 = vpack.c.b16 %v8325, %v8324
    %v8356 = vpack.c.b16 %v8327, %v8326
    %v8357 = vpack.c.b16 %v8329, %v8328
    %v8358 = vpack.c.b16 %v8331, %v8330
    %v8359 = vpack.c.b16 %v8333, %v8332
    %v8360 = vpack.c.b16 %v8335, %v8334
    %v8361 = vpack.c.b16 %v8337, %v8336
    %v8362 = vpack.c.b16 %v8339, %v8338
    %v8363 = vpack.c.b16 %v8341, %v8340
    %v8364 = vpack.c.b16 %v8343, %v8342
    %v8365 = vpack.c.b16 %v8345, %v8344
    %v8366 = vpack.c.b16 %v8347, %v8346
    %v8367 = vpack.c.b16 %v8349, %v8348
    %v8368 = vpack.c.b16 %v8351, %v8350
    %v8369 = vpack.c.b16 %v8353, %v8352
    %8386 = vmatprep.subr.bf16.mxu0 0
    %8387 = vmatpush1.bf16.msra.mxu0 %v8361
    %8388 = vmatprep.subr.bf16.mxu0 0
    %8389 = vmatpush1.bf16.msra.mxu0 %v8360
    %8390 = vmatprep.subr.bf16.mxu0 0
    %8391 = vmatpush1.bf16.msra.mxu0 %v8359
    %8392 = vmatprep.subr.bf16.mxu0 0
    %8393 = vmatpush1.bf16.msra.mxu0 %v8358
    %8394 = vmatprep.subr.bf16.mxu0 0
    %8395 = vmatpush1.bf16.msra.mxu0 %v8357
    %8396 = vmatprep.subr.bf16.mxu0 0
    %8397 = vmatpush1.bf16.msra.mxu0 %v8356
    %8398 = vmatprep.subr.bf16.mxu0 0
    %8399 = vmatpush1.bf16.msra.mxu0 %v8355
    %8400 = vmatprep.subr.bf16.mxu0 0
    %8401 = vmatpush1.bf16.msra.mxu0 %v8354
    %8402 = vmatprep.subr.bf16.mxu0 0
    %8403 = vmatpush2.bf16.msra.mxu0 %v8369
    %8404 = vmatprep.subr.bf16.mxu0 0
    %8405 = vmatpush2.bf16.msra.mxu0 %v8368
    %8406 = vmatprep.subr.bf16.mxu0 0
    %8407 = vmatpush2.bf16.msra.mxu0 %v8367
    %8408 = vmatprep.subr.bf16.mxu0 0
    %8409 = vmatpush2.bf16.msra.mxu0 %v8366
    %8410 = vmatprep.subr.bf16.mxu0 0
    %8411 = vmatpush2.bf16.msra.mxu0 %v8365
    %8412 = vmatprep.subr.bf16.mxu0 0
    %8413 = vmatpush2.bf16.msra.mxu0 %v8364
    %8414 = vmatprep.subr.bf16.mxu0 0
    %8415 = vmatpush2.bf16.msra.mxu0 %v8363
    %8416 = vmatprep.subr.bf16.mxu0 0
    %8417 = vmatpush2.bf16.msra.mxu0 %v8362
    %8418 = vmatprep.mubr.bf16.mxu0 %v8250
    %8419 = vmatmul.mubr.bf16.gmra.mxu0 %v8249
    %v8420 = vpop.f32.mrf.mxu0
    %v8421 = vadd.f32 0.0, %v8420
    %v8422 = vpop.f32.mrf.mxu0
    %v8423 = vpop.f32.mrf.mxu0
    %v8424 = vadd.f32 0.0, %v8423
    %v8425 = vpop.f32.mrf.mxu0
    %8426 = vmatprep.mubr.bf16.mxu0 %v8252
    %8427 = vmatmul.mubr.bf16.gmra.mxu0 %v8251
    %v8428 = vpop.f32.mrf.mxu0
    %v8429 = vadd.f32 0.0, %v8428
    %v8430 = vpop.f32.mrf.mxu0
    %v8431 = vpop.f32.mrf.mxu0
    %v8432 = vadd.f32 0.0, %v8431
    %v8433 = vpop.f32.mrf.mxu0
    %8434 = vmatprep.mubr.bf16.mxu0 %v8254
    %8435 = vmatmul.mubr.bf16.gmra.mxu0 %v8253
    %v8436 = vpop.f32.mrf.mxu0
    %v8437 = vadd.f32 0.0, %v8436
    %v8438 = vpop.f32.mrf.mxu0
    %v8439 = vpop.f32.mrf.mxu0
    %v8440 = vadd.f32 0.0, %v8439
    %v8441 = vpop.f32.mrf.mxu0
    %8442 = vmatprep.mubr.bf16.mxu0 %v8256
    %8443 = vmatmul.mubr.bf16.gmra.mxu0 %v8255
    %v8444 = vpop.f32.mrf.mxu0
    %v8445 = vadd.f32 0.0, %v8444
    %v8446 = vpop.f32.mrf.mxu0
    %v8447 = vpop.f32.mrf.mxu0
    %v8448 = vadd.f32 0.0, %v8447
    %v8449 = vpop.f32.mrf.mxu0
    %8450 = vdwg.mxu0
    %v8451 = vadd.f32 %v8177, %v8421
    %v8452 = vadd.f32 %v8178, %v8424
    %v8453 = vadd.f32 %v8179, %v8429
    %v8454 = vadd.f32 %v8180, %v8432
    %v8455 = vadd.f32 %v8181, %v8437
    %v8456 = vadd.f32 %v8182, %v8440
    %v8457 = vadd.f32 %v8183, %v8445
    %v8458 = vadd.f32 %v8184, %v8448
    %vm8459 = vcmp.lt.s32.totalorder %v169, 25
    %vm8460 = vcmp.lt.s32.totalorder %v170, 25
    %vm8461 = vcmp.lt.s32.totalorder %v171, 25
    %vm8462 = vcmp.lt.s32.totalorder %v172, 25
    %vm8463 = vcmp.lt.s32.totalorder %v173, 25
    %vm8464 = vcmp.lt.s32.totalorder %v174, 25
    %vm8465 = vcmp.lt.s32.totalorder %v175, 25
    %vm8466 = vcmp.lt.s32.totalorder %v176, 25
    %v8467 = vsel %vm8459, 1, 0
    %v8468 = vsel %vm8460, 1, 0
    %v8469 = vsel %vm8461, 1, 0
    %v8470 = vsel %vm8462, 1, 0
    %v8471 = vsel %vm8463, 1, 0
    %v8472 = vsel %vm8464, 1, 0
    %v8473 = vsel %vm8465, 1, 0
    %v8474 = vsel %vm8466, 1, 0
    %8475 = vset.pattern.permute.xlu0 0
    %8476 = vperm.xlu0 %8475, %v8467
    %v8477 = vpop.permute.xlu0 %8476
    %8478 = vset.pattern.permute.xlu0 0
    %8479 = vperm.xlu0 %8478, %v8468
    %v8480 = vpop.permute.xlu0 %8479
    %8481 = vset.pattern.permute.xlu0 0
    %8482 = vperm.xlu0 %8481, %v8469
    %v8483 = vpop.permute.xlu0 %8482
    %8484 = vset.pattern.permute.xlu0 0
    %8485 = vperm.xlu0 %8484, %v8470
    %v8486 = vpop.permute.xlu0 %8485
    %8487 = vset.pattern.permute.xlu0 0
    %8488 = vperm.xlu0 %8487, %v8471
    %v8489 = vpop.permute.xlu0 %8488
    %8490 = vset.pattern.permute.xlu0 0
    %8491 = vperm.xlu0 %8490, %v8472
    %v8492 = vpop.permute.xlu0 %8491
    %8493 = vset.pattern.permute.xlu0 0
    %8494 = vperm.xlu0 %8493, %v8473
    %v8495 = vpop.permute.xlu0 %8494
    %8496 = vset.pattern.permute.xlu0 0
    %8497 = vperm.xlu0 %8496, %v8474
    %v8498 = vpop.permute.xlu0 %8497
    %vm8499 = vcmp.eq.s32.totalorder %v8477, 1
    %vm8500 = vcmp.eq.s32.totalorder %v8480, 1
    %vm8501 = vcmp.eq.s32.totalorder %v8483, 1
    %vm8502 = vcmp.eq.s32.totalorder %v8486, 1
    %vm8503 = vcmp.eq.s32.totalorder %v8489, 1
    %vm8504 = vcmp.eq.s32.totalorder %v8492, 1
    %vm8505 = vcmp.eq.s32.totalorder %v8495, 1
    %vm8506 = vcmp.eq.s32.totalorder %v8498, 1
    %v8507 = vsel %vm8499, %v4238, 0.0
    %v8508 = vsel %vm8499, %v4239, 0.0
    %v8509 = vsel %vm8500, %v4236, 0.0
    %v8510 = vsel %vm8500, %v4237, 0.0
    %v8511 = vsel %vm8501, %v4234, 0.0
    %v8512 = vsel %vm8501, %v4235, 0.0
    %v8513 = vsel %vm8502, %v4232, 0.0
    %v8514 = vsel %vm8502, %v4233, 0.0
    %v8515 = vsel %vm8503, %v4230, 0.0
    %v8516 = vsel %vm8503, %v4231, 0.0
    %v8517 = vsel %vm8504, %v4228, 0.0
    %v8518 = vsel %vm8504, %v4229, 0.0
    %v8519 = vsel %vm8505, %v4226, 0.0
    %v8520 = vsel %vm8505, %v4227, 0.0
    %v8521 = vsel %vm8506, %v4240, 0.0
    %v8522 = vsel %vm8506, %v4241, 0.0
    %v8523 = vpack.c.bf16 %v8509, %v8507
    %v8524 = vpack.c.bf16 %v8510, %v8508
    %v8525 = vpack.c.bf16 %v8513, %v8511
    %v8526 = vpack.c.bf16 %v8514, %v8512
    %v8527 = vpack.c.bf16 %v8517, %v8515
    %v8528 = vpack.c.bf16 %v8518, %v8516
    %v8529 = vpack.c.bf16 %v8521, %v8519
    %v8530 = vpack.c.bf16 %v8522, %v8520
    %s8531 = scalar_lea.vmem [#allocation14], 2432
    %v8532 = vld [vmem:[%s8531] sm:$0xf]
    %v8533 = vld [vmem:[%s8531 + $0x4] sm:$0xf]
    %v8534 = vld [vmem:[%s8531 + $0x8] sm:$0xf]
    %v8535 = vld [vmem:[%s8531 + $0xc] sm:$0xf]
    %v8536 = vld [vmem:[%s8531 + $0x10] sm:$0xf]
    %v8537 = vld [vmem:[%s8531 + $0x14] sm:$0xf]
    %v8538 = vld [vmem:[%s8531 + $0x18] sm:$0xf]
    %v8539 = vld [vmem:[%s8531 + $0x1c] sm:$0xf]
    %v8540 = vld [vmem:[%s8531 + $0x20] sm:$0xf]
    %v8541 = vld [vmem:[%s8531 + $0x24] sm:$0xf]
    %v8542 = vld [vmem:[%s8531 + $0x28] sm:$0xf]
    %v8543 = vld [vmem:[%s8531 + $0x2c] sm:$0xf]
    %v8544 = vld [vmem:[%s8531 + $0x30] sm:$0xf]
    %v8545 = vld [vmem:[%s8531 + $0x34] sm:$0xf]
    %v8546 = vld [vmem:[%s8531 + $0x38] sm:$0xf]
    %v8547 = vld [vmem:[%s8531 + $0x3c] sm:$0xf]
    %v8548 = vld [vmem:[%s8531 + $0x40] sm:$0xf]
    %v8549 = vld [vmem:[%s8531 + $0x44] sm:$0xf]
    %v8550 = vld [vmem:[%s8531 + $0x48] sm:$0xf]
    %v8551 = vld [vmem:[%s8531 + $0x4c] sm:$0xf]
    %v8552 = vld [vmem:[%s8531 + $0x50] sm:$0xf]
    %v8553 = vld [vmem:[%s8531 + $0x54] sm:$0xf]
    %v8554 = vld [vmem:[%s8531 + $0x58] sm:$0xf]
    %v8555 = vld [vmem:[%s8531 + $0x5c] sm:$0xf]
    %v8556 = vld [vmem:[%s8531 + $0x60] sm:$0xf]
    %v8557 = vld [vmem:[%s8531 + $0x64] sm:$0xf]
    %v8558 = vld [vmem:[%s8531 + $0x68] sm:$0xf]
    %v8559 = vld [vmem:[%s8531 + $0x6c] sm:$0xf]
    %v8560 = vld [vmem:[%s8531 + $0x70] sm:$0xf]
    %v8561 = vld [vmem:[%s8531 + $0x74] sm:$0xf]
    %v8562 = vld [vmem:[%s8531 + $0x78] sm:$0xf]
    %v8563 = vld [vmem:[%s8531 + $0x7c] sm:$0xf]
    %v8596 = vunpack.c.l.b16 %v8532
    %v8597 = vunpack.c.l.b16 %v8533
    %v8598 = vunpack.c.l.b16 %v8534
    %v8599 = vunpack.c.l.b16 %v8535
    %v8600 = vunpack.c.l.b16 %v8536
    %v8601 = vunpack.c.l.b16 %v8537
    %v8602 = vunpack.c.l.b16 %v8538
    %v8603 = vunpack.c.l.b16 %v8539
    %v8604 = vunpack.c.l.b16 %v8540
    %v8605 = vunpack.c.l.b16 %v8541
    %v8606 = vunpack.c.l.b16 %v8542
    %v8607 = vunpack.c.l.b16 %v8543
    %v8608 = vunpack.c.l.b16 %v8544
    %v8609 = vunpack.c.l.b16 %v8545
    %v8610 = vunpack.c.l.b16 %v8546
    %v8611 = vunpack.c.l.b16 %v8547
    %v8612 = vunpack.c.l.b16 %v8548
    %v8613 = vunpack.c.l.b16 %v8549
    %v8614 = vunpack.c.l.b16 %v8550
    %v8615 = vunpack.c.l.b16 %v8551
    %v8616 = vunpack.c.l.b16 %v8552
    %v8617 = vunpack.c.l.b16 %v8553
    %v8618 = vunpack.c.l.b16 %v8554
    %v8619 = vunpack.c.l.b16 %v8555
    %v8620 = vunpack.c.l.b16 %v8556
    %v8621 = vunpack.c.l.b16 %v8557
    %v8622 = vunpack.c.l.b16 %v8558
    %v8623 = vunpack.c.l.b16 %v8559
    %v8624 = vunpack.c.l.b16 %v8560
    %v8625 = vunpack.c.l.b16 %v8561
    %v8626 = vunpack.c.l.b16 %v8562
    %v8627 = vunpack.c.l.b16 %v8563
    %v8628 = vpack.c.b16 %v8597, %v8596
    %v8629 = vpack.c.b16 %v8599, %v8598
    %v8630 = vpack.c.b16 %v8601, %v8600
    %v8631 = vpack.c.b16 %v8603, %v8602
    %v8632 = vpack.c.b16 %v8605, %v8604
    %v8633 = vpack.c.b16 %v8607, %v8606
    %v8634 = vpack.c.b16 %v8609, %v8608
    %v8635 = vpack.c.b16 %v8611, %v8610
    %v8636 = vpack.c.b16 %v8613, %v8612
    %v8637 = vpack.c.b16 %v8615, %v8614
    %v8638 = vpack.c.b16 %v8617, %v8616
    %v8639 = vpack.c.b16 %v8619, %v8618
    %v8640 = vpack.c.b16 %v8621, %v8620
    %v8641 = vpack.c.b16 %v8623, %v8622
    %v8642 = vpack.c.b16 %v8625, %v8624
    %v8643 = vpack.c.b16 %v8627, %v8626
    %8660 = vmatprep.subr.bf16.mxu0 0
    %8661 = vmatpush1.bf16.msra.mxu0 %v8635
    %8662 = vmatprep.subr.bf16.mxu0 0
    %8663 = vmatpush1.bf16.msra.mxu0 %v8634
    %8664 = vmatprep.subr.bf16.mxu0 0
    %8665 = vmatpush1.bf16.msra.mxu0 %v8633
    %8666 = vmatprep.subr.bf16.mxu0 0
    %8667 = vmatpush1.bf16.msra.mxu0 %v8632
    %8668 = vmatprep.subr.bf16.mxu0 0
    %8669 = vmatpush1.bf16.msra.mxu0 %v8631
    %8670 = vmatprep.subr.bf16.mxu0 0
    %8671 = vmatpush1.bf16.msra.mxu0 %v8630
    %8672 = vmatprep.subr.bf16.mxu0 0
    %8673 = vmatpush1.bf16.msra.mxu0 %v8629
    %8674 = vmatprep.subr.bf16.mxu0 0
    %8675 = vmatpush1.bf16.msra.mxu0 %v8628
    %8676 = vmatprep.subr.bf16.mxu0 0
    %8677 = vmatpush2.bf16.msra.mxu0 %v8643
    %8678 = vmatprep.subr.bf16.mxu0 0
    %8679 = vmatpush2.bf16.msra.mxu0 %v8642
    %8680 = vmatprep.subr.bf16.mxu0 0
    %8681 = vmatpush2.bf16.msra.mxu0 %v8641
    %8682 = vmatprep.subr.bf16.mxu0 0
    %8683 = vmatpush2.bf16.msra.mxu0 %v8640
    %8684 = vmatprep.subr.bf16.mxu0 0
    %8685 = vmatpush2.bf16.msra.mxu0 %v8639
    %8686 = vmatprep.subr.bf16.mxu0 0
    %8687 = vmatpush2.bf16.msra.mxu0 %v8638
    %8688 = vmatprep.subr.bf16.mxu0 0
    %8689 = vmatpush2.bf16.msra.mxu0 %v8637
    %8690 = vmatprep.subr.bf16.mxu0 0
    %8691 = vmatpush2.bf16.msra.mxu0 %v8636
    %8692 = vmatprep.mubr.bf16.mxu0 %v8524
    %8693 = vmatmul.mubr.bf16.gmra.mxu0 %v8523
    %v8694 = vpop.f32.mrf.mxu0
    %v8695 = vadd.f32 0.0, %v8694
    %v8696 = vpop.f32.mrf.mxu0
    %v8697 = vpop.f32.mrf.mxu0
    %v8698 = vadd.f32 0.0, %v8697
    %v8699 = vpop.f32.mrf.mxu0
    %8700 = vmatprep.mubr.bf16.mxu0 %v8526
    %8701 = vmatmul.mubr.bf16.gmra.mxu0 %v8525
    %v8702 = vpop.f32.mrf.mxu0
    %v8703 = vadd.f32 0.0, %v8702
    %v8704 = vpop.f32.mrf.mxu0
    %v8705 = vpop.f32.mrf.mxu0
    %v8706 = vadd.f32 0.0, %v8705
    %v8707 = vpop.f32.mrf.mxu0
    %8708 = vmatprep.mubr.bf16.mxu0 %v8528
    %8709 = vmatmul.mubr.bf16.gmra.mxu0 %v8527
    %v8710 = vpop.f32.mrf.mxu0
    %v8711 = vadd.f32 0.0, %v8710
    %v8712 = vpop.f32.mrf.mxu0
    %v8713 = vpop.f32.mrf.mxu0
    %v8714 = vadd.f32 0.0, %v8713
    %v8715 = vpop.f32.mrf.mxu0
    %8716 = vmatprep.mubr.bf16.mxu0 %v8530
    %8717 = vmatmul.mubr.bf16.gmra.mxu0 %v8529
    %v8718 = vpop.f32.mrf.mxu0
    %v8719 = vadd.f32 0.0, %v8718
    %v8720 = vpop.f32.mrf.mxu0
    %v8721 = vpop.f32.mrf.mxu0
    %v8722 = vadd.f32 0.0, %v8721
    %v8723 = vpop.f32.mrf.mxu0
    %8724 = vdwg.mxu0
    %v8725 = vadd.f32 %v8451, %v8695
    %v8726 = vadd.f32 %v8452, %v8698
    %v8727 = vadd.f32 %v8453, %v8703
    %v8728 = vadd.f32 %v8454, %v8706
    %v8729 = vadd.f32 %v8455, %v8711
    %v8730 = vadd.f32 %v8456, %v8714
    %v8731 = vadd.f32 %v8457, %v8719
    %v8732 = vadd.f32 %v8458, %v8722
    %vm8733 = vcmp.lt.s32.totalorder %v169, 24
    %vm8734 = vcmp.lt.s32.totalorder %v170, 24
    %vm8735 = vcmp.lt.s32.totalorder %v171, 24
    %vm8736 = vcmp.lt.s32.totalorder %v172, 24
    %vm8737 = vcmp.lt.s32.totalorder %v173, 24
    %vm8738 = vcmp.lt.s32.totalorder %v174, 24
    %vm8739 = vcmp.lt.s32.totalorder %v175, 24
    %vm8740 = vcmp.lt.s32.totalorder %v176, 24
    %v8741 = vsel %vm8733, 1, 0
    %v8742 = vsel %vm8734, 1, 0
    %v8743 = vsel %vm8735, 1, 0
    %v8744 = vsel %vm8736, 1, 0
    %v8745 = vsel %vm8737, 1, 0
    %v8746 = vsel %vm8738, 1, 0
    %v8747 = vsel %vm8739, 1, 0
    %v8748 = vsel %vm8740, 1, 0
    %8749 = vset.pattern.permute.xlu0 0
    %8750 = vperm.xlu0 %8749, %v8741
    %v8751 = vpop.permute.xlu0 %8750
    %8752 = vset.pattern.permute.xlu0 0
    %8753 = vperm.xlu0 %8752, %v8742
    %v8754 = vpop.permute.xlu0 %8753
    %8755 = vset.pattern.permute.xlu0 0
    %8756 = vperm.xlu0 %8755, %v8743
    %v8757 = vpop.permute.xlu0 %8756
    %8758 = vset.pattern.permute.xlu0 0
    %8759 = vperm.xlu0 %8758, %v8744
    %v8760 = vpop.permute.xlu0 %8759
    %8761 = vset.pattern.permute.xlu0 0
    %8762 = vperm.xlu0 %8761, %v8745
    %v8763 = vpop.permute.xlu0 %8762
    %8764 = vset.pattern.permute.xlu0 0
    %8765 = vperm.xlu0 %8764, %v8746
    %v8766 = vpop.permute.xlu0 %8765
    %8767 = vset.pattern.permute.xlu0 0
    %8768 = vperm.xlu0 %8767, %v8747
    %v8769 = vpop.permute.xlu0 %8768
    %8770 = vset.pattern.permute.xlu0 0
    %8771 = vperm.xlu0 %8770, %v8748
    %v8772 = vpop.permute.xlu0 %8771
    %vm8773 = vcmp.eq.s32.totalorder %v8751, 1
    %vm8774 = vcmp.eq.s32.totalorder %v8754, 1
    %vm8775 = vcmp.eq.s32.totalorder %v8757, 1
    %vm8776 = vcmp.eq.s32.totalorder %v8760, 1
    %vm8777 = vcmp.eq.s32.totalorder %v8763, 1
    %vm8778 = vcmp.eq.s32.totalorder %v8766, 1
    %vm8779 = vcmp.eq.s32.totalorder %v8769, 1
    %vm8780 = vcmp.eq.s32.totalorder %v8772, 1
    %v8781 = vsel %vm8773, %v3285, 0.0
    %v8782 = vsel %vm8773, %v3286, 0.0
    %v8783 = vsel %vm8774, %v3287, 0.0
    %v8784 = vsel %vm8774, %v3288, 0.0
    %v8785 = vsel %vm8775, %v3289, 0.0
    %v8786 = vsel %vm8775, %v3290, 0.0
    %v8787 = vsel %vm8776, %v3291, 0.0
    %v8788 = vsel %vm8776, %v3292, 0.0
    %v8789 = vsel %vm8777, %v3293, 0.0
    %v8790 = vsel %vm8777, %v3294, 0.0
    %v8791 = vsel %vm8778, %v3295, 0.0
    %v8792 = vsel %vm8778, %v3296, 0.0
    %v8793 = vsel %vm8779, %v3297, 0.0
    %v8794 = vsel %vm8779, %v3298, 0.0
    %v8795 = vsel %vm8780, %v3283, 0.0
    %v8796 = vsel %vm8780, %v3284, 0.0
    %v8797 = vpack.c.bf16 %v8783, %v8781
    %v8798 = vpack.c.bf16 %v8784, %v8782
    %v8799 = vpack.c.bf16 %v8787, %v8785
    %v8800 = vpack.c.bf16 %v8788, %v8786
    %v8801 = vpack.c.bf16 %v8791, %v8789
    %v8802 = vpack.c.bf16 %v8792, %v8790
    %v8803 = vpack.c.bf16 %v8795, %v8793
    %v8804 = vpack.c.bf16 %v8796, %v8794
    %s8805 = scalar_lea.vmem [#allocation14], 2560
    %v8806 = vld [vmem:[%s8805] sm:$0xf]
    %v8807 = vld [vmem:[%s8805 + $0x4] sm:$0xf]
    %v8808 = vld [vmem:[%s8805 + $0x8] sm:$0xf]
    %v8809 = vld [vmem:[%s8805 + $0xc] sm:$0xf]
    %v8810 = vld [vmem:[%s8805 + $0x10] sm:$0xf]
    %v8811 = vld [vmem:[%s8805 + $0x14] sm:$0xf]
    %v8812 = vld [vmem:[%s8805 + $0x18] sm:$0xf]
    %v8813 = vld [vmem:[%s8805 + $0x1c] sm:$0xf]
    %v8814 = vld [vmem:[%s8805 + $0x20] sm:$0xf]
    %v8815 = vld [vmem:[%s8805 + $0x24] sm:$0xf]
    %v8816 = vld [vmem:[%s8805 + $0x28] sm:$0xf]
    %v8817 = vld [vmem:[%s8805 + $0x2c] sm:$0xf]
    %v8818 = vld [vmem:[%s8805 + $0x30] sm:$0xf]
    %v8819 = vld [vmem:[%s8805 + $0x34] sm:$0xf]
    %v8820 = vld [vmem:[%s8805 + $0x38] sm:$0xf]
    %v8821 = vld [vmem:[%s8805 + $0x3c] sm:$0xf]
    %v8822 = vld [vmem:[%s8805 + $0x40] sm:$0xf]
    %v8823 = vld [vmem:[%s8805 + $0x44] sm:$0xf]
    %v8824 = vld [vmem:[%s8805 + $0x48] sm:$0xf]
    %v8825 = vld [vmem:[%s8805 + $0x4c] sm:$0xf]
    %v8826 = vld [vmem:[%s8805 + $0x50] sm:$0xf]
    %v8827 = vld [vmem:[%s8805 + $0x54] sm:$0xf]
    %v8828 = vld [vmem:[%s8805 + $0x58] sm:$0xf]
    %v8829 = vld [vmem:[%s8805 + $0x5c] sm:$0xf]
    %v8830 = vld [vmem:[%s8805 + $0x60] sm:$0xf]
    %v8831 = vld [vmem:[%s8805 + $0x64] sm:$0xf]
    %v8832 = vld [vmem:[%s8805 + $0x68] sm:$0xf]
    %v8833 = vld [vmem:[%s8805 + $0x6c] sm:$0xf]
    %v8834 = vld [vmem:[%s8805 + $0x70] sm:$0xf]
    %v8835 = vld [vmem:[%s8805 + $0x74] sm:$0xf]
    %v8836 = vld [vmem:[%s8805 + $0x78] sm:$0xf]
    %v8837 = vld [vmem:[%s8805 + $0x7c] sm:$0xf]
    %v8870 = vunpack.c.l.b16 %v8806
    %v8871 = vunpack.c.l.b16 %v8807
    %v8872 = vunpack.c.l.b16 %v8808
    %v8873 = vunpack.c.l.b16 %v8809
    %v8874 = vunpack.c.l.b16 %v8810
    %v8875 = vunpack.c.l.b16 %v8811
    %v8876 = vunpack.c.l.b16 %v8812
    %v8877 = vunpack.c.l.b16 %v8813
    %v8878 = vunpack.c.l.b16 %v8814
    %v8879 = vunpack.c.l.b16 %v8815
    %v8880 = vunpack.c.l.b16 %v8816
    %v8881 = vunpack.c.l.b16 %v8817
    %v8882 = vunpack.c.l.b16 %v8818
    %v8883 = vunpack.c.l.b16 %v8819
    %v8884 = vunpack.c.l.b16 %v8820
    %v8885 = vunpack.c.l.b16 %v8821
    %v8886 = vunpack.c.l.b16 %v8822
    %v8887 = vunpack.c.l.b16 %v8823
    %v8888 = vunpack.c.l.b16 %v8824
    %v8889 = vunpack.c.l.b16 %v8825
    %v8890 = vunpack.c.l.b16 %v8826
    %v8891 = vunpack.c.l.b16 %v8827
    %v8892 = vunpack.c.l.b16 %v8828
    %v8893 = vunpack.c.l.b16 %v8829
    %v8894 = vunpack.c.l.b16 %v8830
    %v8895 = vunpack.c.l.b16 %v8831
    %v8896 = vunpack.c.l.b16 %v8832
    %v8897 = vunpack.c.l.b16 %v8833
    %v8898 = vunpack.c.l.b16 %v8834
    %v8899 = vunpack.c.l.b16 %v8835
    %v8900 = vunpack.c.l.b16 %v8836
    %v8901 = vunpack.c.l.b16 %v8837
    %v8902 = vpack.c.b16 %v8871, %v8870
    %v8903 = vpack.c.b16 %v8873, %v8872
    %v8904 = vpack.c.b16 %v8875, %v8874
    %v8905 = vpack.c.b16 %v8877, %v8876
    %v8906 = vpack.c.b16 %v8879, %v8878
    %v8907 = vpack.c.b16 %v8881, %v8880
    %v8908 = vpack.c.b16 %v8883, %v8882
    %v8909 = vpack.c.b16 %v8885, %v8884
    %v8910 = vpack.c.b16 %v8887, %v8886
    %v8911 = vpack.c.b16 %v8889, %v8888
    %v8912 = vpack.c.b16 %v8891, %v8890
    %v8913 = vpack.c.b16 %v8893, %v8892
    %v8914 = vpack.c.b16 %v8895, %v8894
    %v8915 = vpack.c.b16 %v8897, %v8896
    %v8916 = vpack.c.b16 %v8899, %v8898
    %v8917 = vpack.c.b16 %v8901, %v8900
    %8934 = vmatprep.subr.bf16.mxu0 0
    %8935 = vmatpush1.bf16.msra.mxu0 %v8909
    %8936 = vmatprep.subr.bf16.mxu0 0
    %8937 = vmatpush1.bf16.msra.mxu0 %v8908
    %8938 = vmatprep.subr.bf16.mxu0 0
    %8939 = vmatpush1.bf16.msra.mxu0 %v8907
    %8940 = vmatprep.subr.bf16.mxu0 0
    %8941 = vmatpush1.bf16.msra.mxu0 %v8906
    %8942 = vmatprep.subr.bf16.mxu0 0
    %8943 = vmatpush1.bf16.msra.mxu0 %v8905
    %8944 = vmatprep.subr.bf16.mxu0 0
    %8945 = vmatpush1.bf16.msra.mxu0 %v8904
    %8946 = vmatprep.subr.bf16.mxu0 0
    %8947 = vmatpush1.bf16.msra.mxu0 %v8903
    %8948 = vmatprep.subr.bf16.mxu0 0
    %8949 = vmatpush1.bf16.msra.mxu0 %v8902
    %8950 = vmatprep.subr.bf16.mxu0 0
    %8951 = vmatpush2.bf16.msra.mxu0 %v8917
    %8952 = vmatprep.subr.bf16.mxu0 0
    %8953 = vmatpush2.bf16.msra.mxu0 %v8916
    %8954 = vmatprep.subr.bf16.mxu0 0
    %8955 = vmatpush2.bf16.msra.mxu0 %v8915
    %8956 = vmatprep.subr.bf16.mxu0 0
    %8957 = vmatpush2.bf16.msra.mxu0 %v8914
    %8958 = vmatprep.subr.bf16.mxu0 0
    %8959 = vmatpush2.bf16.msra.mxu0 %v8913
    %8960 = vmatprep.subr.bf16.mxu0 0
    %8961 = vmatpush2.bf16.msra.mxu0 %v8912
    %8962 = vmatprep.subr.bf16.mxu0 0
    %8963 = vmatpush2.bf16.msra.mxu0 %v8911
    %8964 = vmatprep.subr.bf16.mxu0 0
    %8965 = vmatpush2.bf16.msra.mxu0 %v8910
    %8966 = vmatprep.mubr.bf16.mxu0 %v8798
    %8967 = vmatmul.mubr.bf16.gmra.mxu0 %v8797
    %v8968 = vpop.f32.mrf.mxu0
    %v8969 = vadd.f32 0.0, %v8968
    %v8970 = vpop.f32.mrf.mxu0
    %v8971 = vpop.f32.mrf.mxu0
    %v8972 = vadd.f32 0.0, %v8971
    %v8973 = vpop.f32.mrf.mxu0
    %8974 = vmatprep.mubr.bf16.mxu0 %v8800
    %8975 = vmatmul.mubr.bf16.gmra.mxu0 %v8799
    %v8976 = vpop.f32.mrf.mxu0
    %v8977 = vadd.f32 0.0, %v8976
    %v8978 = vpop.f32.mrf.mxu0
    %v8979 = vpop.f32.mrf.mxu0
    %v8980 = vadd.f32 0.0, %v8979
    %v8981 = vpop.f32.mrf.mxu0
    %8982 = vmatprep.mubr.bf16.mxu0 %v8802
    %8983 = vmatmul.mubr.bf16.gmra.mxu0 %v8801
    %v8984 = vpop.f32.mrf.mxu0
    %v8985 = vadd.f32 0.0, %v8984
    %v8986 = vpop.f32.mrf.mxu0
    %v8987 = vpop.f32.mrf.mxu0
    %v8988 = vadd.f32 0.0, %v8987
    %v8989 = vpop.f32.mrf.mxu0
    %8990 = vmatprep.mubr.bf16.mxu0 %v8804
    %8991 = vmatmul.mubr.bf16.gmra.mxu0 %v8803
    %v8992 = vpop.f32.mrf.mxu0
    %v8993 = vadd.f32 0.0, %v8992
    %v8994 = vpop.f32.mrf.mxu0
    %v8995 = vpop.f32.mrf.mxu0
    %v8996 = vadd.f32 0.0, %v8995
    %v8997 = vpop.f32.mrf.mxu0
    %8998 = vdwg.mxu0
    %v8999 = vadd.f32 %v8725, %v8969
    %v9000 = vadd.f32 %v8726, %v8972
    %v9001 = vadd.f32 %v8727, %v8977
    %v9002 = vadd.f32 %v8728, %v8980
    %v9003 = vadd.f32 %v8729, %v8985
    %v9004 = vadd.f32 %v8730, %v8988
    %v9005 = vadd.f32 %v8731, %v8993
    %v9006 = vadd.f32 %v8732, %v8996
    %vm9007 = vcmp.lt.s32.totalorder %v169, 23
    %vm9008 = vcmp.lt.s32.totalorder %v170, 23
    %vm9009 = vcmp.lt.s32.totalorder %v171, 23
    %vm9010 = vcmp.lt.s32.totalorder %v172, 23
    %vm9011 = vcmp.lt.s32.totalorder %v173, 23
    %vm9012 = vcmp.lt.s32.totalorder %v174, 23
    %vm9013 = vcmp.lt.s32.totalorder %v175, 23
    %vm9014 = vcmp.lt.s32.totalorder %v176, 23
    %v9015 = vsel %vm9007, 1, 0
    %v9016 = vsel %vm9008, 1, 0
    %v9017 = vsel %vm9009, 1, 0
    %v9018 = vsel %vm9010, 1, 0
    %v9019 = vsel %vm9011, 1, 0
    %v9020 = vsel %vm9012, 1, 0
    %v9021 = vsel %vm9013, 1, 0
    %v9022 = vsel %vm9014, 1, 0
    %9023 = vset.pattern.permute.xlu0 0
    %9024 = vperm.xlu0 %9023, %v9015
    %v9025 = vpop.permute.xlu0 %9024
    %9026 = vset.pattern.permute.xlu0 0
    %9027 = vperm.xlu0 %9026, %v9016
    %v9028 = vpop.permute.xlu0 %9027
    %9029 = vset.pattern.permute.xlu0 0
    %9030 = vperm.xlu0 %9029, %v9017
    %v9031 = vpop.permute.xlu0 %9030
    %9032 = vset.pattern.permute.xlu0 0
    %9033 = vperm.xlu0 %9032, %v9018
    %v9034 = vpop.permute.xlu0 %9033
    %9035 = vset.pattern.permute.xlu0 0
    %9036 = vperm.xlu0 %9035, %v9019
    %v9037 = vpop.permute.xlu0 %9036
    %9038 = vset.pattern.permute.xlu0 0
    %9039 = vperm.xlu0 %9038, %v9020
    %v9040 = vpop.permute.xlu0 %9039
    %9041 = vset.pattern.permute.xlu0 0
    %9042 = vperm.xlu0 %9041, %v9021
    %v9043 = vpop.permute.xlu0 %9042
    %9044 = vset.pattern.permute.xlu0 0
    %9045 = vperm.xlu0 %9044, %v9022
    %v9046 = vpop.permute.xlu0 %9045
    %vm9047 = vcmp.eq.s32.totalorder %v9025, 1
    %vm9048 = vcmp.eq.s32.totalorder %v9028, 1
    %vm9049 = vcmp.eq.s32.totalorder %v9031, 1
    %vm9050 = vcmp.eq.s32.totalorder %v9034, 1
    %vm9051 = vcmp.eq.s32.totalorder %v9037, 1
    %vm9052 = vcmp.eq.s32.totalorder %v9040, 1
    %vm9053 = vcmp.eq.s32.totalorder %v9043, 1
    %vm9054 = vcmp.eq.s32.totalorder %v9046, 1
    %v9055 = vsel %vm9047, %v4816, 0.0
    %v9056 = vsel %vm9047, %v4817, 0.0
    %v9057 = vsel %vm9048, %v4814, 0.0
    %v9058 = vsel %vm9048, %v4815, 0.0
    %v9059 = vsel %vm9049, %v4812, 0.0
    %v9060 = vsel %vm9049, %v4813, 0.0
    %v9061 = vsel %vm9050, %v4810, 0.0
    %v9062 = vsel %vm9050, %v4811, 0.0
    %v9063 = vsel %vm9051, %v4808, 0.0
    %v9064 = vsel %vm9051, %v4809, 0.0
    %v9065 = vsel %vm9052, %v4806, 0.0
    %v9066 = vsel %vm9052, %v4807, 0.0
    %v9067 = vsel %vm9053, %v4820, 0.0
    %v9068 = vsel %vm9053, %v4821, 0.0
    %v9069 = vsel %vm9054, %v4818, 0.0
    %v9070 = vsel %vm9054, %v4819, 0.0
    %v9071 = vpack.c.bf16 %v9057, %v9055
    %v9072 = vpack.c.bf16 %v9058, %v9056
    %v9073 = vpack.c.bf16 %v9061, %v9059
    %v9074 = vpack.c.bf16 %v9062, %v9060
    %v9075 = vpack.c.bf16 %v9065, %v9063
    %v9076 = vpack.c.bf16 %v9066, %v9064
    %v9077 = vpack.c.bf16 %v9069, %v9067
    %v9078 = vpack.c.bf16 %v9070, %v9068
    %s9079 = scalar_lea.vmem [#allocation14], 2688
    %v9080 = vld [vmem:[%s9079] sm:$0xf]
    %v9081 = vld [vmem:[%s9079 + $0x4] sm:$0xf]
    %v9082 = vld [vmem:[%s9079 + $0x8] sm:$0xf]
    %v9083 = vld [vmem:[%s9079 + $0xc] sm:$0xf]
    %v9084 = vld [vmem:[%s9079 + $0x10] sm:$0xf]
    %v9085 = vld [vmem:[%s9079 + $0x14] sm:$0xf]
    %v9086 = vld [vmem:[%s9079 + $0x18] sm:$0xf]
    %v9087 = vld [vmem:[%s9079 + $0x1c] sm:$0xf]
    %v9088 = vld [vmem:[%s9079 + $0x20] sm:$0xf]
    %v9089 = vld [vmem:[%s9079 + $0x24] sm:$0xf]
    %v9090 = vld [vmem:[%s9079 + $0x28] sm:$0xf]
    %v9091 = vld [vmem:[%s9079 + $0x2c] sm:$0xf]
    %v9092 = vld [vmem:[%s9079 + $0x30] sm:$0xf]
    %v9093 = vld [vmem:[%s9079 + $0x34] sm:$0xf]
    %v9094 = vld [vmem:[%s9079 + $0x38] sm:$0xf]
    %v9095 = vld [vmem:[%s9079 + $0x3c] sm:$0xf]
    %v9096 = vld [vmem:[%s9079 + $0x40] sm:$0xf]
    %v9097 = vld [vmem:[%s9079 + $0x44] sm:$0xf]
    %v9098 = vld [vmem:[%s9079 + $0x48] sm:$0xf]
    %v9099 = vld [vmem:[%s9079 + $0x4c] sm:$0xf]
    %v9100 = vld [vmem:[%s9079 + $0x50] sm:$0xf]
    %v9101 = vld [vmem:[%s9079 + $0x54] sm:$0xf]
    %v9102 = vld [vmem:[%s9079 + $0x58] sm:$0xf]
    %v9103 = vld [vmem:[%s9079 + $0x5c] sm:$0xf]
    %v9104 = vld [vmem:[%s9079 + $0x60] sm:$0xf]
    %v9105 = vld [vmem:[%s9079 + $0x64] sm:$0xf]
    %v9106 = vld [vmem:[%s9079 + $0x68] sm:$0xf]
    %v9107 = vld [vmem:[%s9079 + $0x6c] sm:$0xf]
    %v9108 = vld [vmem:[%s9079 + $0x70] sm:$0xf]
    %v9109 = vld [vmem:[%s9079 + $0x74] sm:$0xf]
    %v9110 = vld [vmem:[%s9079 + $0x78] sm:$0xf]
    %v9111 = vld [vmem:[%s9079 + $0x7c] sm:$0xf]
    %v9144 = vunpack.c.l.b16 %v9080
    %v9145 = vunpack.c.l.b16 %v9081
    %v9146 = vunpack.c.l.b16 %v9082
    %v9147 = vunpack.c.l.b16 %v9083
    %v9148 = vunpack.c.l.b16 %v9084
    %v9149 = vunpack.c.l.b16 %v9085
    %v9150 = vunpack.c.l.b16 %v9086
    %v9151 = vunpack.c.l.b16 %v9087
    %v9152 = vunpack.c.l.b16 %v9088
    %v9153 = vunpack.c.l.b16 %v9089
    %v9154 = vunpack.c.l.b16 %v9090
    %v9155 = vunpack.c.l.b16 %v9091
    %v9156 = vunpack.c.l.b16 %v9092
    %v9157 = vunpack.c.l.b16 %v9093
    %v9158 = vunpack.c.l.b16 %v9094
    %v9159 = vunpack.c.l.b16 %v9095
    %v9160 = vunpack.c.l.b16 %v9096
    %v9161 = vunpack.c.l.b16 %v9097
    %v9162 = vunpack.c.l.b16 %v9098
    %v9163 = vunpack.c.l.b16 %v9099
    %v9164 = vunpack.c.l.b16 %v9100
    %v9165 = vunpack.c.l.b16 %v9101
    %v9166 = vunpack.c.l.b16 %v9102
    %v9167 = vunpack.c.l.b16 %v9103
    %v9168 = vunpack.c.l.b16 %v9104
    %v9169 = vunpack.c.l.b16 %v9105
    %v9170 = vunpack.c.l.b16 %v9106
    %v9171 = vunpack.c.l.b16 %v9107
    %v9172 = vunpack.c.l.b16 %v9108
    %v9173 = vunpack.c.l.b16 %v9109
    %v9174 = vunpack.c.l.b16 %v9110
    %v9175 = vunpack.c.l.b16 %v9111
    %v9176 = vpack.c.b16 %v9145, %v9144
    %v9177 = vpack.c.b16 %v9147, %v9146
    %v9178 = vpack.c.b16 %v9149, %v9148
    %v9179 = vpack.c.b16 %v9151, %v9150
    %v9180 = vpack.c.b16 %v9153, %v9152
    %v9181 = vpack.c.b16 %v9155, %v9154
    %v9182 = vpack.c.b16 %v9157, %v9156
    %v9183 = vpack.c.b16 %v9159, %v9158
    %v9184 = vpack.c.b16 %v9161, %v9160
    %v9185 = vpack.c.b16 %v9163, %v9162
    %v9186 = vpack.c.b16 %v9165, %v9164
    %v9187 = vpack.c.b16 %v9167, %v9166
    %v9188 = vpack.c.b16 %v9169, %v9168
    %v9189 = vpack.c.b16 %v9171, %v9170
    %v9190 = vpack.c.b16 %v9173, %v9172
    %v9191 = vpack.c.b16 %v9175, %v9174
    %9208 = vmatprep.subr.bf16.mxu0 0
    %9209 = vmatpush1.bf16.msra.mxu0 %v9183
    %9210 = vmatprep.subr.bf16.mxu0 0
    %9211 = vmatpush1.bf16.msra.mxu0 %v9182
    %9212 = vmatprep.subr.bf16.mxu0 0
    %9213 = vmatpush1.bf16.msra.mxu0 %v9181
    %9214 = vmatprep.subr.bf16.mxu0 0
    %9215 = vmatpush1.bf16.msra.mxu0 %v9180
    %9216 = vmatprep.subr.bf16.mxu0 0
    %9217 = vmatpush1.bf16.msra.mxu0 %v9179
    %9218 = vmatprep.subr.bf16.mxu0 0
    %9219 = vmatpush1.bf16.msra.mxu0 %v9178
    %9220 = vmatprep.subr.bf16.mxu0 0
    %9221 = vmatpush1.bf16.msra.mxu0 %v9177
    %9222 = vmatprep.subr.bf16.mxu0 0
    %9223 = vmatpush1.bf16.msra.mxu0 %v9176
    %9224 = vmatprep.subr.bf16.mxu0 0
    %9225 = vmatpush2.bf16.msra.mxu0 %v9191
    %9226 = vmatprep.subr.bf16.mxu0 0
    %9227 = vmatpush2.bf16.msra.mxu0 %v9190
    %9228 = vmatprep.subr.bf16.mxu0 0
    %9229 = vmatpush2.bf16.msra.mxu0 %v9189
    %9230 = vmatprep.subr.bf16.mxu0 0
    %9231 = vmatpush2.bf16.msra.mxu0 %v9188
    %9232 = vmatprep.subr.bf16.mxu0 0
    %9233 = vmatpush2.bf16.msra.mxu0 %v9187
    %9234 = vmatprep.subr.bf16.mxu0 0
    %9235 = vmatpush2.bf16.msra.mxu0 %v9186
    %9236 = vmatprep.subr.bf16.mxu0 0
    %9237 = vmatpush2.bf16.msra.mxu0 %v9185
    %9238 = vmatprep.subr.bf16.mxu0 0
    %9239 = vmatpush2.bf16.msra.mxu0 %v9184
    %9240 = vmatprep.mubr.bf16.mxu0 %v9072
    %9241 = vmatmul.mubr.bf16.gmra.mxu0 %v9071
    %v9242 = vpop.f32.mrf.mxu0
    %v9243 = vadd.f32 0.0, %v9242
    %v9244 = vpop.f32.mrf.mxu0
    %v9245 = vpop.f32.mrf.mxu0
    %v9246 = vadd.f32 0.0, %v9245
    %v9247 = vpop.f32.mrf.mxu0
    %9248 = vmatprep.mubr.bf16.mxu0 %v9074
    %9249 = vmatmul.mubr.bf16.gmra.mxu0 %v9073
    %v9250 = vpop.f32.mrf.mxu0
    %v9251 = vadd.f32 0.0, %v9250
    %v9252 = vpop.f32.mrf.mxu0
    %v9253 = vpop.f32.mrf.mxu0
    %v9254 = vadd.f32 0.0, %v9253
    %v9255 = vpop.f32.mrf.mxu0
    %9256 = vmatprep.mubr.bf16.mxu0 %v9076
    %9257 = vmatmul.mubr.bf16.gmra.mxu0 %v9075
    %v9258 = vpop.f32.mrf.mxu0
    %v9259 = vadd.f32 0.0, %v9258
    %v9260 = vpop.f32.mrf.mxu0
    %v9261 = vpop.f32.mrf.mxu0
    %v9262 = vadd.f32 0.0, %v9261
    %v9263 = vpop.f32.mrf.mxu0
    %9264 = vmatprep.mubr.bf16.mxu0 %v9078
    %9265 = vmatmul.mubr.bf16.gmra.mxu0 %v9077
    %v9266 = vpop.f32.mrf.mxu0
    %v9267 = vadd.f32 0.0, %v9266
    %v9268 = vpop.f32.mrf.mxu0
    %v9269 = vpop.f32.mrf.mxu0
    %v9270 = vadd.f32 0.0, %v9269
    %v9271 = vpop.f32.mrf.mxu0
    %9272 = vdwg.mxu0
    %v9273 = vadd.f32 %v8999, %v9243
    %v9274 = vadd.f32 %v9000, %v9246
    %v9275 = vadd.f32 %v9001, %v9251
    %v9276 = vadd.f32 %v9002, %v9254
    %v9277 = vadd.f32 %v9003, %v9259
    %v9278 = vadd.f32 %v9004, %v9262
    %v9279 = vadd.f32 %v9005, %v9267
    %v9280 = vadd.f32 %v9006, %v9270
    %vm9281 = vcmp.lt.s32.totalorder %v169, 22
    %vm9282 = vcmp.lt.s32.totalorder %v170, 22
    %vm9283 = vcmp.lt.s32.totalorder %v171, 22
    %vm9284 = vcmp.lt.s32.totalorder %v172, 22
    %vm9285 = vcmp.lt.s32.totalorder %v173, 22
    %vm9286 = vcmp.lt.s32.totalorder %v174, 22
    %vm9287 = vcmp.lt.s32.totalorder %v175, 22
    %vm9288 = vcmp.lt.s32.totalorder %v176, 22
    %v9289 = vsel %vm9281, 1, 0
    %v9290 = vsel %vm9282, 1, 0
    %v9291 = vsel %vm9283, 1, 0
    %v9292 = vsel %vm9284, 1, 0
    %v9293 = vsel %vm9285, 1, 0
    %v9294 = vsel %vm9286, 1, 0
    %v9295 = vsel %vm9287, 1, 0
    %v9296 = vsel %vm9288, 1, 0
    %9297 = vset.pattern.permute.xlu0 0
    %9298 = vperm.xlu0 %9297, %v9289
    %v9299 = vpop.permute.xlu0 %9298
    %9300 = vset.pattern.permute.xlu0 0
    %9301 = vperm.xlu0 %9300, %v9290
    %v9302 = vpop.permute.xlu0 %9301
    %9303 = vset.pattern.permute.xlu0 0
    %9304 = vperm.xlu0 %9303, %v9291
    %v9305 = vpop.permute.xlu0 %9304
    %9306 = vset.pattern.permute.xlu0 0
    %9307 = vperm.xlu0 %9306, %v9292
    %v9308 = vpop.permute.xlu0 %9307
    %9309 = vset.pattern.permute.xlu0 0
    %9310 = vperm.xlu0 %9309, %v9293
    %v9311 = vpop.permute.xlu0 %9310
    %9312 = vset.pattern.permute.xlu0 0
    %9313 = vperm.xlu0 %9312, %v9294
    %v9314 = vpop.permute.xlu0 %9313
    %9315 = vset.pattern.permute.xlu0 0
    %9316 = vperm.xlu0 %9315, %v9295
    %v9317 = vpop.permute.xlu0 %9316
    %9318 = vset.pattern.permute.xlu0 0
    %9319 = vperm.xlu0 %9318, %v9296
    %v9320 = vpop.permute.xlu0 %9319
    %vm9321 = vcmp.eq.s32.totalorder %v9299, 1
    %vm9322 = vcmp.eq.s32.totalorder %v9302, 1
    %vm9323 = vcmp.eq.s32.totalorder %v9305, 1
    %vm9324 = vcmp.eq.s32.totalorder %v9308, 1
    %vm9325 = vcmp.eq.s32.totalorder %v9311, 1
    %vm9326 = vcmp.eq.s32.totalorder %v9314, 1
    %vm9327 = vcmp.eq.s32.totalorder %v9317, 1
    %vm9328 = vcmp.eq.s32.totalorder %v9320, 1
    %v9329 = vsel %vm9321, %v5122, 0.0
    %v9330 = vsel %vm9321, %v5123, 0.0
    %v9331 = vsel %vm9322, %v5120, 0.0
    %v9332 = vsel %vm9322, %v5121, 0.0
    %v9333 = vsel %vm9323, %v5118, 0.0
    %v9334 = vsel %vm9323, %v5119, 0.0
    %v9335 = vsel %vm9324, %v5116, 0.0
    %v9336 = vsel %vm9324, %v5117, 0.0
    %v9337 = vsel %vm9325, %v5114, 0.0
    %v9338 = vsel %vm9325, %v5115, 0.0
    %v9339 = vsel %vm9326, %v5112, 0.0
    %v9340 = vsel %vm9326, %v5113, 0.0
    %v9341 = vsel %vm9327, %v5126, 0.0
    %v9342 = vsel %vm9327, %v5127, 0.0
    %v9343 = vsel %vm9328, %v5124, 0.0
    %v9344 = vsel %vm9328, %v5125, 0.0
    %v9345 = vpack.c.bf16 %v9331, %v9329
    %v9346 = vpack.c.bf16 %v9332, %v9330
    %v9347 = vpack.c.bf16 %v9335, %v9333
    %v9348 = vpack.c.bf16 %v9336, %v9334
    %v9349 = vpack.c.bf16 %v9339, %v9337
    %v9350 = vpack.c.bf16 %v9340, %v9338
    %v9351 = vpack.c.bf16 %v9343, %v9341
    %v9352 = vpack.c.bf16 %v9344, %v9342
    %s9353 = scalar_lea.vmem [#allocation14], 2816
    %v9354 = vld [vmem:[%s9353] sm:$0xf]
    %v9355 = vld [vmem:[%s9353 + $0x4] sm:$0xf]
    %v9356 = vld [vmem:[%s9353 + $0x8] sm:$0xf]
    %v9357 = vld [vmem:[%s9353 + $0xc] sm:$0xf]
    %v9358 = vld [vmem:[%s9353 + $0x10] sm:$0xf]
    %v9359 = vld [vmem:[%s9353 + $0x14] sm:$0xf]
    %v9360 = vld [vmem:[%s9353 + $0x18] sm:$0xf]
    %v9361 = vld [vmem:[%s9353 + $0x1c] sm:$0xf]
    %v9362 = vld [vmem:[%s9353 + $0x20] sm:$0xf]
    %v9363 = vld [vmem:[%s9353 + $0x24] sm:$0xf]
    %v9364 = vld [vmem:[%s9353 + $0x28] sm:$0xf]
    %v9365 = vld [vmem:[%s9353 + $0x2c] sm:$0xf]
    %v9366 = vld [vmem:[%s9353 + $0x30] sm:$0xf]
    %v9367 = vld [vmem:[%s9353 + $0x34] sm:$0xf]
    %v9368 = vld [vmem:[%s9353 + $0x38] sm:$0xf]
    %v9369 = vld [vmem:[%s9353 + $0x3c] sm:$0xf]
    %v9370 = vld [vmem:[%s9353 + $0x40] sm:$0xf]
    %v9371 = vld [vmem:[%s9353 + $0x44] sm:$0xf]
    %v9372 = vld [vmem:[%s9353 + $0x48] sm:$0xf]
    %v9373 = vld [vmem:[%s9353 + $0x4c] sm:$0xf]
    %v9374 = vld [vmem:[%s9353 + $0x50] sm:$0xf]
    %v9375 = vld [vmem:[%s9353 + $0x54] sm:$0xf]
    %v9376 = vld [vmem:[%s9353 + $0x58] sm:$0xf]
    %v9377 = vld [vmem:[%s9353 + $0x5c] sm:$0xf]
    %v9378 = vld [vmem:[%s9353 + $0x60] sm:$0xf]
    %v9379 = vld [vmem:[%s9353 + $0x64] sm:$0xf]
    %v9380 = vld [vmem:[%s9353 + $0x68] sm:$0xf]
    %v9381 = vld [vmem:[%s9353 + $0x6c] sm:$0xf]
    %v9382 = vld [vmem:[%s9353 + $0x70] sm:$0xf]
    %v9383 = vld [vmem:[%s9353 + $0x74] sm:$0xf]
    %v9384 = vld [vmem:[%s9353 + $0x78] sm:$0xf]
    %v9385 = vld [vmem:[%s9353 + $0x7c] sm:$0xf]
    %v9418 = vunpack.c.l.b16 %v9354
    %v9419 = vunpack.c.l.b16 %v9355
    %v9420 = vunpack.c.l.b16 %v9356
    %v9421 = vunpack.c.l.b16 %v9357
    %v9422 = vunpack.c.l.b16 %v9358
    %v9423 = vunpack.c.l.b16 %v9359
    %v9424 = vunpack.c.l.b16 %v9360
    %v9425 = vunpack.c.l.b16 %v9361
    %v9426 = vunpack.c.l.b16 %v9362
    %v9427 = vunpack.c.l.b16 %v9363
    %v9428 = vunpack.c.l.b16 %v9364
    %v9429 = vunpack.c.l.b16 %v9365
    %v9430 = vunpack.c.l.b16 %v9366
    %v9431 = vunpack.c.l.b16 %v9367
    %v9432 = vunpack.c.l.b16 %v9368
    %v9433 = vunpack.c.l.b16 %v9369
    %v9434 = vunpack.c.l.b16 %v9370
    %v9435 = vunpack.c.l.b16 %v9371
    %v9436 = vunpack.c.l.b16 %v9372
    %v9437 = vunpack.c.l.b16 %v9373
    %v9438 = vunpack.c.l.b16 %v9374
    %v9439 = vunpack.c.l.b16 %v9375
    %v9440 = vunpack.c.l.b16 %v9376
    %v9441 = vunpack.c.l.b16 %v9377
    %v9442 = vunpack.c.l.b16 %v9378
    %v9443 = vunpack.c.l.b16 %v9379
    %v9444 = vunpack.c.l.b16 %v9380
    %v9445 = vunpack.c.l.b16 %v9381
    %v9446 = vunpack.c.l.b16 %v9382
    %v9447 = vunpack.c.l.b16 %v9383
    %v9448 = vunpack.c.l.b16 %v9384
    %v9449 = vunpack.c.l.b16 %v9385
    %v9450 = vpack.c.b16 %v9419, %v9418
    %v9451 = vpack.c.b16 %v9421, %v9420
    %v9452 = vpack.c.b16 %v9423, %v9422
    %v9453 = vpack.c.b16 %v9425, %v9424
    %v9454 = vpack.c.b16 %v9427, %v9426
    %v9455 = vpack.c.b16 %v9429, %v9428
    %v9456 = vpack.c.b16 %v9431, %v9430
    %v9457 = vpack.c.b16 %v9433, %v9432
    %v9458 = vpack.c.b16 %v9435, %v9434
    %v9459 = vpack.c.b16 %v9437, %v9436
    %v9460 = vpack.c.b16 %v9439, %v9438
    %v9461 = vpack.c.b16 %v9441, %v9440
    %v9462 = vpack.c.b16 %v9443, %v9442
    %v9463 = vpack.c.b16 %v9445, %v9444
    %v9464 = vpack.c.b16 %v9447, %v9446
    %v9465 = vpack.c.b16 %v9449, %v9448
    %9482 = vmatprep.subr.bf16.mxu0 0
    %9483 = vmatpush1.bf16.msra.mxu0 %v9457
    %9484 = vmatprep.subr.bf16.mxu0 0
    %9485 = vmatpush1.bf16.msra.mxu0 %v9456
    %9486 = vmatprep.subr.bf16.mxu0 0
    %9487 = vmatpush1.bf16.msra.mxu0 %v9455
    %9488 = vmatprep.subr.bf16.mxu0 0
    %9489 = vmatpush1.bf16.msra.mxu0 %v9454
    %9490 = vmatprep.subr.bf16.mxu0 0
    %9491 = vmatpush1.bf16.msra.mxu0 %v9453
    %9492 = vmatprep.subr.bf16.mxu0 0
    %9493 = vmatpush1.bf16.msra.mxu0 %v9452
    %9494 = vmatprep.subr.bf16.mxu0 0
    %9495 = vmatpush1.bf16.msra.mxu0 %v9451
    %9496 = vmatprep.subr.bf16.mxu0 0
    %9497 = vmatpush1.bf16.msra.mxu0 %v9450
    %9498 = vmatprep.subr.bf16.mxu0 0
    %9499 = vmatpush2.bf16.msra.mxu0 %v9465
    %9500 = vmatprep.subr.bf16.mxu0 0
    %9501 = vmatpush2.bf16.msra.mxu0 %v9464
    %9502 = vmatprep.subr.bf16.mxu0 0
    %9503 = vmatpush2.bf16.msra.mxu0 %v9463
    %9504 = vmatprep.subr.bf16.mxu0 0
    %9505 = vmatpush2.bf16.msra.mxu0 %v9462
    %9506 = vmatprep.subr.bf16.mxu0 0
    %9507 = vmatpush2.bf16.msra.mxu0 %v9461
    %9508 = vmatprep.subr.bf16.mxu0 0
    %9509 = vmatpush2.bf16.msra.mxu0 %v9460
    %9510 = vmatprep.subr.bf16.mxu0 0
    %9511 = vmatpush2.bf16.msra.mxu0 %v9459
    %9512 = vmatprep.subr.bf16.mxu0 0
    %9513 = vmatpush2.bf16.msra.mxu0 %v9458
    %9514 = vmatprep.mubr.bf16.mxu0 %v9346
    %9515 = vmatmul.mubr.bf16.gmra.mxu0 %v9345
    %v9516 = vpop.f32.mrf.mxu0
    %v9517 = vadd.f32 0.0, %v9516
    %v9518 = vpop.f32.mrf.mxu0
    %v9519 = vpop.f32.mrf.mxu0
    %v9520 = vadd.f32 0.0, %v9519
    %v9521 = vpop.f32.mrf.mxu0
    %9522 = vmatprep.mubr.bf16.mxu0 %v9348
    %9523 = vmatmul.mubr.bf16.gmra.mxu0 %v9347
    %v9524 = vpop.f32.mrf.mxu0
    %v9525 = vadd.f32 0.0, %v9524
    %v9526 = vpop.f32.mrf.mxu0
    %v9527 = vpop.f32.mrf.mxu0
    %v9528 = vadd.f32 0.0, %v9527
    %v9529 = vpop.f32.mrf.mxu0
    %9530 = vmatprep.mubr.bf16.mxu0 %v9350
    %9531 = vmatmul.mubr.bf16.gmra.mxu0 %v9349
    %v9532 = vpop.f32.mrf.mxu0
    %v9533 = vadd.f32 0.0, %v9532
    %v9534 = vpop.f32.mrf.mxu0
    %v9535 = vpop.f32.mrf.mxu0
    %v9536 = vadd.f32 0.0, %v9535
    %v9537 = vpop.f32.mrf.mxu0
    %9538 = vmatprep.mubr.bf16.mxu0 %v9352
    %9539 = vmatmul.mubr.bf16.gmra.mxu0 %v9351
    %v9540 = vpop.f32.mrf.mxu0
    %v9541 = vadd.f32 0.0, %v9540
    %v9542 = vpop.f32.mrf.mxu0
    %v9543 = vpop.f32.mrf.mxu0
    %v9544 = vadd.f32 0.0, %v9543
    %v9545 = vpop.f32.mrf.mxu0
    %9546 = vdwg.mxu0
    %v9547 = vadd.f32 %v9273, %v9517
    %v9548 = vadd.f32 %v9274, %v9520
    %v9549 = vadd.f32 %v9275, %v9525
    %v9550 = vadd.f32 %v9276, %v9528
    %v9551 = vadd.f32 %v9277, %v9533
    %v9552 = vadd.f32 %v9278, %v9536
    %v9553 = vadd.f32 %v9279, %v9541
    %v9554 = vadd.f32 %v9280, %v9544
    %vm9555 = vcmp.lt.s32.totalorder %v169, 21
    %vm9556 = vcmp.lt.s32.totalorder %v170, 21
    %vm9557 = vcmp.lt.s32.totalorder %v171, 21
    %vm9558 = vcmp.lt.s32.totalorder %v172, 21
    %vm9559 = vcmp.lt.s32.totalorder %v173, 21
    %vm9560 = vcmp.lt.s32.totalorder %v174, 21
    %vm9561 = vcmp.lt.s32.totalorder %v175, 21
    %vm9562 = vcmp.lt.s32.totalorder %v176, 21
    %v9563 = vsel %vm9555, 1, 0
    %v9564 = vsel %vm9556, 1, 0
    %v9565 = vsel %vm9557, 1, 0
    %v9566 = vsel %vm9558, 1, 0
    %v9567 = vsel %vm9559, 1, 0
    %v9568 = vsel %vm9560, 1, 0
    %v9569 = vsel %vm9561, 1, 0
    %v9570 = vsel %vm9562, 1, 0
    %9571 = vset.pattern.permute.xlu0 0
    %9572 = vperm.xlu0 %9571, %v9563
    %v9573 = vpop.permute.xlu0 %9572
    %9574 = vset.pattern.permute.xlu0 0
    %9575 = vperm.xlu0 %9574, %v9564
    %v9576 = vpop.permute.xlu0 %9575
    %9577 = vset.pattern.permute.xlu0 0
    %9578 = vperm.xlu0 %9577, %v9565
    %v9579 = vpop.permute.xlu0 %9578
    %9580 = vset.pattern.permute.xlu0 0
    %9581 = vperm.xlu0 %9580, %v9566
    %v9582 = vpop.permute.xlu0 %9581
    %9583 = vset.pattern.permute.xlu0 0
    %9584 = vperm.xlu0 %9583, %v9567
    %v9585 = vpop.permute.xlu0 %9584
    %9586 = vset.pattern.permute.xlu0 0
    %9587 = vperm.xlu0 %9586, %v9568
    %v9588 = vpop.permute.xlu0 %9587
    %9589 = vset.pattern.permute.xlu0 0
    %9590 = vperm.xlu0 %9589, %v9569
    %v9591 = vpop.permute.xlu0 %9590
    %9592 = vset.pattern.permute.xlu0 0
    %9593 = vperm.xlu0 %9592, %v9570
    %v9594 = vpop.permute.xlu0 %9593
    %vm9595 = vcmp.eq.s32.totalorder %v9573, 1
    %vm9596 = vcmp.eq.s32.totalorder %v9576, 1
    %vm9597 = vcmp.eq.s32.totalorder %v9579, 1
    %vm9598 = vcmp.eq.s32.totalorder %v9582, 1
    %vm9599 = vcmp.eq.s32.totalorder %v9585, 1
    %vm9600 = vcmp.eq.s32.totalorder %v9588, 1
    %vm9601 = vcmp.eq.s32.totalorder %v9591, 1
    %vm9602 = vcmp.eq.s32.totalorder %v9594, 1
    %v9603 = vsel %vm9595, %v5429, 0.0
    %v9604 = vsel %vm9595, %v5430, 0.0
    %v9605 = vsel %vm9596, %v5427, 0.0
    %v9606 = vsel %vm9596, %v5428, 0.0
    %v9607 = vsel %vm9597, %v5425, 0.0
    %v9608 = vsel %vm9597, %v5426, 0.0
    %v9609 = vsel %vm9598, %v5423, 0.0
    %v9610 = vsel %vm9598, %v5424, 0.0
    %v9611 = vsel %vm9599, %v5421, 0.0
    %v9612 = vsel %vm9599, %v5422, 0.0
    %v9613 = vsel %vm9600, %v5419, 0.0
    %v9614 = vsel %vm9600, %v5420, 0.0
    %v9615 = vsel %vm9601, %v5433, 0.0
    %v9616 = vsel %vm9601, %v5434, 0.0
    %v9617 = vsel %vm9602, %v5431, 0.0
    %v9618 = vsel %vm9602, %v5432, 0.0
    %v9619 = vpack.c.bf16 %v9605, %v9603
    %v9620 = vpack.c.bf16 %v9606, %v9604
    %v9621 = vpack.c.bf16 %v9609, %v9607
    %v9622 = vpack.c.bf16 %v9610, %v9608
    %v9623 = vpack.c.bf16 %v9613, %v9611
    %v9624 = vpack.c.bf16 %v9614, %v9612
    %v9625 = vpack.c.bf16 %v9617, %v9615
    %v9626 = vpack.c.bf16 %v9618, %v9616
    %s9627 = scalar_lea.vmem [#allocation14], 2944
    %v9628 = vld [vmem:[%s9627] sm:$0xf]
    %v9629 = vld [vmem:[%s9627 + $0x4] sm:$0xf]
    %v9630 = vld [vmem:[%s9627 + $0x8] sm:$0xf]
    %v9631 = vld [vmem:[%s9627 + $0xc] sm:$0xf]
    %v9632 = vld [vmem:[%s9627 + $0x10] sm:$0xf]
    %v9633 = vld [vmem:[%s9627 + $0x14] sm:$0xf]
    %v9634 = vld [vmem:[%s9627 + $0x18] sm:$0xf]
    %v9635 = vld [vmem:[%s9627 + $0x1c] sm:$0xf]
    %v9636 = vld [vmem:[%s9627 + $0x20] sm:$0xf]
    %v9637 = vld [vmem:[%s9627 + $0x24] sm:$0xf]
    %v9638 = vld [vmem:[%s9627 + $0x28] sm:$0xf]
    %v9639 = vld [vmem:[%s9627 + $0x2c] sm:$0xf]
    %v9640 = vld [vmem:[%s9627 + $0x30] sm:$0xf]
    %v9641 = vld [vmem:[%s9627 + $0x34] sm:$0xf]
    %v9642 = vld [vmem:[%s9627 + $0x38] sm:$0xf]
    %v9643 = vld [vmem:[%s9627 + $0x3c] sm:$0xf]
    %v9644 = vld [vmem:[%s9627 + $0x40] sm:$0xf]
    %v9645 = vld [vmem:[%s9627 + $0x44] sm:$0xf]
    %v9646 = vld [vmem:[%s9627 + $0x48] sm:$0xf]
    %v9647 = vld [vmem:[%s9627 + $0x4c] sm:$0xf]
    %v9648 = vld [vmem:[%s9627 + $0x50] sm:$0xf]
    %v9649 = vld [vmem:[%s9627 + $0x54] sm:$0xf]
    %v9650 = vld [vmem:[%s9627 + $0x58] sm:$0xf]
    %v9651 = vld [vmem:[%s9627 + $0x5c] sm:$0xf]
    %v9652 = vld [vmem:[%s9627 + $0x60] sm:$0xf]
    %v9653 = vld [vmem:[%s9627 + $0x64] sm:$0xf]
    %v9654 = vld [vmem:[%s9627 + $0x68] sm:$0xf]
    %v9655 = vld [vmem:[%s9627 + $0x6c] sm:$0xf]
    %v9656 = vld [vmem:[%s9627 + $0x70] sm:$0xf]
    %v9657 = vld [vmem:[%s9627 + $0x74] sm:$0xf]
    %v9658 = vld [vmem:[%s9627 + $0x78] sm:$0xf]
    %v9659 = vld [vmem:[%s9627 + $0x7c] sm:$0xf]
    %v9692 = vunpack.c.l.b16 %v9628
    %v9693 = vunpack.c.l.b16 %v9629
    %v9694 = vunpack.c.l.b16 %v9630
    %v9695 = vunpack.c.l.b16 %v9631
    %v9696 = vunpack.c.l.b16 %v9632
    %v9697 = vunpack.c.l.b16 %v9633
    %v9698 = vunpack.c.l.b16 %v9634
    %v9699 = vunpack.c.l.b16 %v9635
    %v9700 = vunpack.c.l.b16 %v9636
    %v9701 = vunpack.c.l.b16 %v9637
    %v9702 = vunpack.c.l.b16 %v9638
    %v9703 = vunpack.c.l.b16 %v9639
    %v9704 = vunpack.c.l.b16 %v9640
    %v9705 = vunpack.c.l.b16 %v9641
    %v9706 = vunpack.c.l.b16 %v9642
    %v9707 = vunpack.c.l.b16 %v9643
    %v9708 = vunpack.c.l.b16 %v9644
    %v9709 = vunpack.c.l.b16 %v9645
    %v9710 = vunpack.c.l.b16 %v9646
    %v9711 = vunpack.c.l.b16 %v9647
    %v9712 = vunpack.c.l.b16 %v9648
    %v9713 = vunpack.c.l.b16 %v9649
    %v9714 = vunpack.c.l.b16 %v9650
    %v9715 = vunpack.c.l.b16 %v9651
    %v9716 = vunpack.c.l.b16 %v9652
    %v9717 = vunpack.c.l.b16 %v9653
    %v9718 = vunpack.c.l.b16 %v9654
    %v9719 = vunpack.c.l.b16 %v9655
    %v9720 = vunpack.c.l.b16 %v9656
    %v9721 = vunpack.c.l.b16 %v9657
    %v9722 = vunpack.c.l.b16 %v9658
    %v9723 = vunpack.c.l.b16 %v9659
    %v9724 = vpack.c.b16 %v9693, %v9692
    %v9725 = vpack.c.b16 %v9695, %v9694
    %v9726 = vpack.c.b16 %v9697, %v9696
    %v9727 = vpack.c.b16 %v9699, %v9698
    %v9728 = vpack.c.b16 %v9701, %v9700
    %v9729 = vpack.c.b16 %v9703, %v9702
    %v9730 = vpack.c.b16 %v9705, %v9704
    %v9731 = vpack.c.b16 %v9707, %v9706
    %v9732 = vpack.c.b16 %v9709, %v9708
    %v9733 = vpack.c.b16 %v9711, %v9710
    %v9734 = vpack.c.b16 %v9713, %v9712
    %v9735 = vpack.c.b16 %v9715, %v9714
    %v9736 = vpack.c.b16 %v9717, %v9716
    %v9737 = vpack.c.b16 %v9719, %v9718
    %v9738 = vpack.c.b16 %v9721, %v9720
    %v9739 = vpack.c.b16 %v9723, %v9722
    %9756 = vmatprep.subr.bf16.mxu0 0
    %9757 = vmatpush1.bf16.msra.mxu0 %v9731
    %9758 = vmatprep.subr.bf16.mxu0 0
    %9759 = vmatpush1.bf16.msra.mxu0 %v9730
    %9760 = vmatprep.subr.bf16.mxu0 0
    %9761 = vmatpush1.bf16.msra.mxu0 %v9729
    %9762 = vmatprep.subr.bf16.mxu0 0
    %9763 = vmatpush1.bf16.msra.mxu0 %v9728
    %9764 = vmatprep.subr.bf16.mxu0 0
    %9765 = vmatpush1.bf16.msra.mxu0 %v9727
    %9766 = vmatprep.subr.bf16.mxu0 0
    %9767 = vmatpush1.bf16.msra.mxu0 %v9726
    %9768 = vmatprep.subr.bf16.mxu0 0
    %9769 = vmatpush1.bf16.msra.mxu0 %v9725
    %9770 = vmatprep.subr.bf16.mxu0 0
    %9771 = vmatpush1.bf16.msra.mxu0 %v9724
    %9772 = vmatprep.subr.bf16.mxu0 0
    %9773 = vmatpush2.bf16.msra.mxu0 %v9739
    %9774 = vmatprep.subr.bf16.mxu0 0
    %9775 = vmatpush2.bf16.msra.mxu0 %v9738
    %9776 = vmatprep.subr.bf16.mxu0 0
    %9777 = vmatpush2.bf16.msra.mxu0 %v9737
    %9778 = vmatprep.subr.bf16.mxu0 0
    %9779 = vmatpush2.bf16.msra.mxu0 %v9736
    %9780 = vmatprep.subr.bf16.mxu0 0
    %9781 = vmatpush2.bf16.msra.mxu0 %v9735
    %9782 = vmatprep.subr.bf16.mxu0 0
    %9783 = vmatpush2.bf16.msra.mxu0 %v9734
    %9784 = vmatprep.subr.bf16.mxu0 0
    %9785 = vmatpush2.bf16.msra.mxu0 %v9733
    %9786 = vmatprep.subr.bf16.mxu0 0
    %9787 = vmatpush2.bf16.msra.mxu0 %v9732
    %9788 = vmatprep.mubr.bf16.mxu0 %v9620
    %9789 = vmatmul.mubr.bf16.gmra.mxu0 %v9619
    %v9790 = vpop.f32.mrf.mxu0
    %v9791 = vadd.f32 0.0, %v9790
    %v9792 = vpop.f32.mrf.mxu0
    %v9793 = vpop.f32.mrf.mxu0
    %v9794 = vadd.f32 0.0, %v9793
    %v9795 = vpop.f32.mrf.mxu0
    %9796 = vmatprep.mubr.bf16.mxu0 %v9622
    %9797 = vmatmul.mubr.bf16.gmra.mxu0 %v9621
    %v9798 = vpop.f32.mrf.mxu0
    %v9799 = vadd.f32 0.0, %v9798
    %v9800 = vpop.f32.mrf.mxu0
    %v9801 = vpop.f32.mrf.mxu0
    %v9802 = vadd.f32 0.0, %v9801
    %v9803 = vpop.f32.mrf.mxu0
    %9804 = vmatprep.mubr.bf16.mxu0 %v9624
    %9805 = vmatmul.mubr.bf16.gmra.mxu0 %v9623
    %v9806 = vpop.f32.mrf.mxu0
    %v9807 = vadd.f32 0.0, %v9806
    %v9808 = vpop.f32.mrf.mxu0
    %v9809 = vpop.f32.mrf.mxu0
    %v9810 = vadd.f32 0.0, %v9809
    %v9811 = vpop.f32.mrf.mxu0
    %9812 = vmatprep.mubr.bf16.mxu0 %v9626
    %9813 = vmatmul.mubr.bf16.gmra.mxu0 %v9625
    %v9814 = vpop.f32.mrf.mxu0
    %v9815 = vadd.f32 0.0, %v9814
    %v9816 = vpop.f32.mrf.mxu0
    %v9817 = vpop.f32.mrf.mxu0
    %v9818 = vadd.f32 0.0, %v9817
    %v9819 = vpop.f32.mrf.mxu0
    %9820 = vdwg.mxu0
    %v9821 = vadd.f32 %v9547, %v9791
    %v9822 = vadd.f32 %v9548, %v9794
    %v9823 = vadd.f32 %v9549, %v9799
    %v9824 = vadd.f32 %v9550, %v9802
    %v9825 = vadd.f32 %v9551, %v9807
    %v9826 = vadd.f32 %v9552, %v9810
    %v9827 = vadd.f32 %v9553, %v9815
    %v9828 = vadd.f32 %v9554, %v9818
    %vm9829 = vcmp.lt.s32.totalorder %v169, 20
    %vm9830 = vcmp.lt.s32.totalorder %v170, 20
    %vm9831 = vcmp.lt.s32.totalorder %v171, 20
    %vm9832 = vcmp.lt.s32.totalorder %v172, 20
    %vm9833 = vcmp.lt.s32.totalorder %v173, 20
    %vm9834 = vcmp.lt.s32.totalorder %v174, 20
    %vm9835 = vcmp.lt.s32.totalorder %v175, 20
    %vm9836 = vcmp.lt.s32.totalorder %v176, 20
    %v9837 = vsel %vm9829, 1, 0
    %v9838 = vsel %vm9830, 1, 0
    %v9839 = vsel %vm9831, 1, 0
    %v9840 = vsel %vm9832, 1, 0
    %v9841 = vsel %vm9833, 1, 0
    %v9842 = vsel %vm9834, 1, 0
    %v9843 = vsel %vm9835, 1, 0
    %v9844 = vsel %vm9836, 1, 0
    %9845 = vset.pattern.permute.xlu0 0
    %9846 = vperm.xlu0 %9845, %v9837
    %v9847 = vpop.permute.xlu0 %9846
    %9848 = vset.pattern.permute.xlu0 0
    %9849 = vperm.xlu0 %9848, %v9838
    %v9850 = vpop.permute.xlu0 %9849
    %9851 = vset.pattern.permute.xlu0 0
    %9852 = vperm.xlu0 %9851, %v9839
    %v9853 = vpop.permute.xlu0 %9852
    %9854 = vset.pattern.permute.xlu0 0
    %9855 = vperm.xlu0 %9854, %v9840
    %v9856 = vpop.permute.xlu0 %9855
    %9857 = vset.pattern.permute.xlu0 0
    %9858 = vperm.xlu0 %9857, %v9841
    %v9859 = vpop.permute.xlu0 %9858
    %9860 = vset.pattern.permute.xlu0 0
    %9861 = vperm.xlu0 %9860, %v9842
    %v9862 = vpop.permute.xlu0 %9861
    %9863 = vset.pattern.permute.xlu0 0
    %9864 = vperm.xlu0 %9863, %v9843
    %v9865 = vpop.permute.xlu0 %9864
    %9866 = vset.pattern.permute.xlu0 0
    %9867 = vperm.xlu0 %9866, %v9844
    %v9868 = vpop.permute.xlu0 %9867
    %vm9869 = vcmp.eq.s32.totalorder %v9847, 1
    %vm9870 = vcmp.eq.s32.totalorder %v9850, 1
    %vm9871 = vcmp.eq.s32.totalorder %v9853, 1
    %vm9872 = vcmp.eq.s32.totalorder %v9856, 1
    %vm9873 = vcmp.eq.s32.totalorder %v9859, 1
    %vm9874 = vcmp.eq.s32.totalorder %v9862, 1
    %vm9875 = vcmp.eq.s32.totalorder %v9865, 1
    %vm9876 = vcmp.eq.s32.totalorder %v9868, 1
    %v9877 = vsel %vm9869, %v3334, 0.0
    %v9878 = vsel %vm9869, %v3335, 0.0
    %v9879 = vsel %vm9870, %v3332, 0.0
    %v9880 = vsel %vm9870, %v3333, 0.0
    %v9881 = vsel %vm9871, %v3330, 0.0
    %v9882 = vsel %vm9871, %v3331, 0.0
    %v9883 = vsel %vm9872, %v3328, 0.0
    %v9884 = vsel %vm9872, %v3329, 0.0
    %v9885 = vsel %vm9873, %v3326, 0.0
    %v9886 = vsel %vm9873, %v3327, 0.0
    %v9887 = vsel %vm9874, %v3324, 0.0
    %v9888 = vsel %vm9874, %v3325, 0.0
    %v9889 = vsel %vm9875, %v3338, 0.0
    %v9890 = vsel %vm9875, %v3339, 0.0
    %v9891 = vsel %vm9876, %v3336, 0.0
    %v9892 = vsel %vm9876, %v3337, 0.0
    %v9893 = vpack.c.bf16 %v9879, %v9877
    %v9894 = vpack.c.bf16 %v9880, %v9878
    %v9895 = vpack.c.bf16 %v9883, %v9881
    %v9896 = vpack.c.bf16 %v9884, %v9882
    %v9897 = vpack.c.bf16 %v9887, %v9885
    %v9898 = vpack.c.bf16 %v9888, %v9886
    %v9899 = vpack.c.bf16 %v9891, %v9889
    %v9900 = vpack.c.bf16 %v9892, %v9890
    %s9901 = scalar_lea.vmem [#allocation14], 3072
    %v9902 = vld [vmem:[%s9901] sm:$0xf]
    %v9903 = vld [vmem:[%s9901 + $0x4] sm:$0xf]
    %v9904 = vld [vmem:[%s9901 + $0x8] sm:$0xf]
    %v9905 = vld [vmem:[%s9901 + $0xc] sm:$0xf]
    %v9906 = vld [vmem:[%s9901 + $0x10] sm:$0xf]
    %v9907 = vld [vmem:[%s9901 + $0x14] sm:$0xf]
    %v9908 = vld [vmem:[%s9901 + $0x18] sm:$0xf]
    %v9909 = vld [vmem:[%s9901 + $0x1c] sm:$0xf]
    %v9910 = vld [vmem:[%s9901 + $0x20] sm:$0xf]
    %v9911 = vld [vmem:[%s9901 + $0x24] sm:$0xf]
    %v9912 = vld [vmem:[%s9901 + $0x28] sm:$0xf]
    %v9913 = vld [vmem:[%s9901 + $0x2c] sm:$0xf]
    %v9914 = vld [vmem:[%s9901 + $0x30] sm:$0xf]
    %v9915 = vld [vmem:[%s9901 + $0x34] sm:$0xf]
    %v9916 = vld [vmem:[%s9901 + $0x38] sm:$0xf]
    %v9917 = vld [vmem:[%s9901 + $0x3c] sm:$0xf]
    %v9918 = vld [vmem:[%s9901 + $0x40] sm:$0xf]
    %v9919 = vld [vmem:[%s9901 + $0x44] sm:$0xf]
    %v9920 = vld [vmem:[%s9901 + $0x48] sm:$0xf]
    %v9921 = vld [vmem:[%s9901 + $0x4c] sm:$0xf]
    %v9922 = vld [vmem:[%s9901 + $0x50] sm:$0xf]
    %v9923 = vld [vmem:[%s9901 + $0x54] sm:$0xf]
    %v9924 = vld [vmem:[%s9901 + $0x58] sm:$0xf]
    %v9925 = vld [vmem:[%s9901 + $0x5c] sm:$0xf]
    %v9926 = vld [vmem:[%s9901 + $0x60] sm:$0xf]
    %v9927 = vld [vmem:[%s9901 + $0x64] sm:$0xf]
    %v9928 = vld [vmem:[%s9901 + $0x68] sm:$0xf]
    %v9929 = vld [vmem:[%s9901 + $0x6c] sm:$0xf]
    %v9930 = vld [vmem:[%s9901 + $0x70] sm:$0xf]
    %v9931 = vld [vmem:[%s9901 + $0x74] sm:$0xf]
    %v9932 = vld [vmem:[%s9901 + $0x78] sm:$0xf]
    %v9933 = vld [vmem:[%s9901 + $0x7c] sm:$0xf]
    %v9966 = vunpack.c.l.b16 %v9902
    %v9967 = vunpack.c.l.b16 %v9903
    %v9968 = vunpack.c.l.b16 %v9904
    %v9969 = vunpack.c.l.b16 %v9905
    %v9970 = vunpack.c.l.b16 %v9906
    %v9971 = vunpack.c.l.b16 %v9907
    %v9972 = vunpack.c.l.b16 %v9908
    %v9973 = vunpack.c.l.b16 %v9909
    %v9974 = vunpack.c.l.b16 %v9910
    %v9975 = vunpack.c.l.b16 %v9911
    %v9976 = vunpack.c.l.b16 %v9912
    %v9977 = vunpack.c.l.b16 %v9913
    %v9978 = vunpack.c.l.b16 %v9914
    %v9979 = vunpack.c.l.b16 %v9915
    %v9980 = vunpack.c.l.b16 %v9916
    %v9981 = vunpack.c.l.b16 %v9917
    %v9982 = vunpack.c.l.b16 %v9918
    %v9983 = vunpack.c.l.b16 %v9919
    %v9984 = vunpack.c.l.b16 %v9920
    %v9985 = vunpack.c.l.b16 %v9921
    %v9986 = vunpack.c.l.b16 %v9922
    %v9987 = vunpack.c.l.b16 %v9923
    %v9988 = vunpack.c.l.b16 %v9924
    %v9989 = vunpack.c.l.b16 %v9925
    %v9990 = vunpack.c.l.b16 %v9926
    %v9991 = vunpack.c.l.b16 %v9927
    %v9992 = vunpack.c.l.b16 %v9928
    %v9993 = vunpack.c.l.b16 %v9929
    %v9994 = vunpack.c.l.b16 %v9930
    %v9995 = vunpack.c.l.b16 %v9931
    %v9996 = vunpack.c.l.b16 %v9932
    %v9997 = vunpack.c.l.b16 %v9933
    %v9998 = vpack.c.b16 %v9967, %v9966
    %v9999 = vpack.c.b16 %v9969, %v9968
    %v10000 = vpack.c.b16 %v9971, %v9970
    %v10001 = vpack.c.b16 %v9973, %v9972
    %v10002 = vpack.c.b16 %v9975, %v9974
    %v10003 = vpack.c.b16 %v9977, %v9976
    %v10004 = vpack.c.b16 %v9979, %v9978
    %v10005 = vpack.c.b16 %v9981, %v9980
    %v10006 = vpack.c.b16 %v9983, %v9982
    %v10007 = vpack.c.b16 %v9985, %v9984
    %v10008 = vpack.c.b16 %v9987, %v9986
    %v10009 = vpack.c.b16 %v9989, %v9988
    %v10010 = vpack.c.b16 %v9991, %v9990
    %v10011 = vpack.c.b16 %v9993, %v9992
    %v10012 = vpack.c.b16 %v9995, %v9994
    %v10013 = vpack.c.b16 %v9997, %v9996
    %10030 = vmatprep.subr.bf16.mxu0 0
    %10031 = vmatpush1.bf16.msra.mxu0 %v10005
    %10032 = vmatprep.subr.bf16.mxu0 0
    %10033 = vmatpush1.bf16.msra.mxu0 %v10004
    %10034 = vmatprep.subr.bf16.mxu0 0
    %10035 = vmatpush1.bf16.msra.mxu0 %v10003
    %10036 = vmatprep.subr.bf16.mxu0 0
    %10037 = vmatpush1.bf16.msra.mxu0 %v10002
    %10038 = vmatprep.subr.bf16.mxu0 0
    %10039 = vmatpush1.bf16.msra.mxu0 %v10001
    %10040 = vmatprep.subr.bf16.mxu0 0
    %10041 = vmatpush1.bf16.msra.mxu0 %v10000
    %10042 = vmatprep.subr.bf16.mxu0 0
    %10043 = vmatpush1.bf16.msra.mxu0 %v9999
    %10044 = vmatprep.subr.bf16.mxu0 0
    %10045 = vmatpush1.bf16.msra.mxu0 %v9998
    %10046 = vmatprep.subr.bf16.mxu0 0
    %10047 = vmatpush2.bf16.msra.mxu0 %v10013
    %10048 = vmatprep.subr.bf16.mxu0 0
    %10049 = vmatpush2.bf16.msra.mxu0 %v10012
    %10050 = vmatprep.subr.bf16.mxu0 0
    %10051 = vmatpush2.bf16.msra.mxu0 %v10011
    %10052 = vmatprep.subr.bf16.mxu0 0
    %10053 = vmatpush2.bf16.msra.mxu0 %v10010
    %10054 = vmatprep.subr.bf16.mxu0 0
    %10055 = vmatpush2.bf16.msra.mxu0 %v10009
    %10056 = vmatprep.subr.bf16.mxu0 0
    %10057 = vmatpush2.bf16.msra.mxu0 %v10008
    %10058 = vmatprep.subr.bf16.mxu0 0
    %10059 = vmatpush2.bf16.msra.mxu0 %v10007
    %10060 = vmatprep.subr.bf16.mxu0 0
    %10061 = vmatpush2.bf16.msra.mxu0 %v10006
    %10062 = vmatprep.mubr.bf16.mxu0 %v9894
    %10063 = vmatmul.mubr.bf16.gmra.mxu0 %v9893
    %v10064 = vpop.f32.mrf.mxu0
    %v10065 = vadd.f32 0.0, %v10064
    %v10066 = vpop.f32.mrf.mxu0
    %v10067 = vpop.f32.mrf.mxu0
    %v10068 = vadd.f32 0.0, %v10067
    %v10069 = vpop.f32.mrf.mxu0
    %10070 = vmatprep.mubr.bf16.mxu0 %v9896
    %10071 = vmatmul.mubr.bf16.gmra.mxu0 %v9895
    %v10072 = vpop.f32.mrf.mxu0
    %v10073 = vadd.f32 0.0, %v10072
    %v10074 = vpop.f32.mrf.mxu0
    %v10075 = vpop.f32.mrf.mxu0
    %v10076 = vadd.f32 0.0, %v10075
    %v10077 = vpop.f32.mrf.mxu0
    %10078 = vmatprep.mubr.bf16.mxu0 %v9898
    %10079 = vmatmul.mubr.bf16.gmra.mxu0 %v9897
    %v10080 = vpop.f32.mrf.mxu0
    %v10081 = vadd.f32 0.0, %v10080
    %v10082 = vpop.f32.mrf.mxu0
    %v10083 = vpop.f32.mrf.mxu0
    %v10084 = vadd.f32 0.0, %v10083
    %v10085 = vpop.f32.mrf.mxu0
    %10086 = vmatprep.mubr.bf16.mxu0 %v9900
    %10087 = vmatmul.mubr.bf16.gmra.mxu0 %v9899
    %v10088 = vpop.f32.mrf.mxu0
    %v10089 = vadd.f32 0.0, %v10088
    %v10090 = vpop.f32.mrf.mxu0
    %v10091 = vpop.f32.mrf.mxu0
    %v10092 = vadd.f32 0.0, %v10091
    %v10093 = vpop.f32.mrf.mxu0
    %10094 = vdwg.mxu0
    %v10095 = vadd.f32 %v9821, %v10065
    %v10096 = vadd.f32 %v9822, %v10068
    %v10097 = vadd.f32 %v9823, %v10073
    %v10098 = vadd.f32 %v9824, %v10076
    %v10099 = vadd.f32 %v9825, %v10081
    %v10100 = vadd.f32 %v9826, %v10084
    %v10101 = vadd.f32 %v9827, %v10089
    %v10102 = vadd.f32 %v9828, %v10092
    %v10103 = vld [vmem:[#allocation16] sm:$0x1]
    %v10105 = vlaneseq
    %v10106 = vshrl.u32 %v10105, 7
    %v10107 = vsub.s32 0, %v10106
    %v10108 = vrot.slane %v10103, %v10107
    %v10110 = vadd.f32 %v10095, %v10108
    %v10111 = vadd.f32 %v10096, %v10108
    %v10112 = vadd.f32 %v10097, %v10108
    %v10113 = vadd.f32 %v10098, %v10108
    %v10114 = vadd.f32 %v10099, %v10108
    %v10115 = vadd.f32 %v10100, %v10108
    %v10116 = vadd.f32 %v10101, %v10108
    %v10117 = vadd.f32 %v10102, %v10108
    %v10118 = vmul.f32 %v10110, %v1016
    %v10119 = vmul.f32 %v10111, %v1021
    %v10120 = vmul.f32 %v10112, %v1026
    %v10121 = vmul.f32 %v10113, %v1031
    %v10122 = vmul.f32 %v10114, %v1036
    %v10123 = vmul.f32 %v10115, %v1041
    %v10124 = vmul.f32 %v10116, %v1046
    %v10125 = vmul.f32 %v10117, %v1051
    %10126 = vst [vmem:[#allocation17] sm:$0xff] %v10118
    %10127 = vst [vmem:[#allocation17 + $0x8] sm:$0xff] %v10119
    %10128 = vst [vmem:[#allocation17 + $0x10] sm:$0xff] %v10120
    %10129 = vst [vmem:[#allocation17 + $0x18] sm:$0xff] %v10121
    %10130 = vst [vmem:[#allocation17 + $0x20] sm:$0xff] %v10122
    %10131 = vst [vmem:[#allocation17 + $0x28] sm:$0xff] %v10123
    %10132 = vst [vmem:[#allocation17 + $0x30] sm:$0xff] %v10124
    %10133 = vst [vmem:[#allocation17 + $0x38] sm:$0xff] %v10125
    // Predicated region
    $region86: #{tpu_custom_call.1} parent=1 // pred_check
      _
    $region87: #{tpu_custom_call.1} parent=1 // pred_check_branch
      %10135 = sbr.rel (0) target = $region89
    $region88: #{tpu_custom_call.1} parent=1 // pred_region
      %s10137 = ssub.s32 1024, 1024
      %10138 = vsyncadd [#allocation4], %s10137
      %s10139 = sshll.u32 [#allocation17], 4
      %s10140 = int_to_ptr.vmem [resolvable:$true] %s10139
      %10145 = dma.vmem_to_hbm [thread:$0]  %s10140, 1024, %s12, [#allocation4], 128, 128, 8
    $region89: #{tpu_custom_call.1} parent=1 // pred_fallthru
      _
    // Predicated region
    $region90: #{tpu_custom_call.1} parent=1 // pred_check
      _
    $region91: #{tpu_custom_call.1} parent=1 // pred_check_branch
      %10147 = sbr.rel (0) target = $region93
    $region92: #{tpu_custom_call.1} parent=1 // pred_region
      %10148 = dma.done [#allocation4], 1024
    $region93: #{tpu_custom_call.1} parent=1 // pred_fallthru
      _
    %10149 = vsyncpa [#allocation3], 1
    %10150 = vsyncpa [#allocation6], 1
    %10151 = vsyncpa [#allocation9], 1
    %10152 = vsyncpa [#allocation12], 1
    %10153 = vsyncpa [#allocation15], 1
    %10154 = vsyncpa [#allocation4], 1

</llo_original>
